<compile_context>
chip_gen: v7x
topology: tpu7x:2x2x1
jax: 0.10.0
libtpu: 0.0.40
codegen_flags: <defaults>
</compile_context>

<pallas_src>
import math

import jax
import jax.numpy as jnp
import numpy as np
from jax import lax
from jax.experimental import pallas as pl
from jax.experimental.pallas import tpu as pltpu

_BN_EPS = 1e-5


# ---------------------------------------------------------------------------
# Fused Pallas kernel: conv1+BN1+ReLU -> conv2+BN2 -> +residual -> ReLU
# (one grid step per batch sample)
# ---------------------------------------------------------------------------
def _basic_block_kernel(xpad_ref, w1_ref, b1_ref, w2_ref, b2_ref, o_ref, y1pad_ref):
    """
    xpad_ref : (1, H+2, W+2, C)  zero-padded input sample, compute dtype (bf16)
    w1_ref   : (9, C, P)         conv1 weights with eval-BN1 folded in, compute dtype
    b1_ref   : (1, P)            folded BN1 bias, f32
    w2_ref   : (9, P, P)         conv2 weights with eval-BN2 folded in, compute dtype
    b2_ref   : (1, P)            folded BN2 bias, f32
    o_ref    : (1, H, W, P)      block output, input dtype
    y1pad_ref: (H+2, W+2, P)     VMEM scratch: zero-padded intermediate activation
    """
    H, W, P = o_ref.shape[1], o_ref.shape[2], o_ref.shape[3]
    C = xpad_ref.shape[3]
    f32 = jnp.float32

    # ---- conv1 (3x3, pad=1, bias-free) + folded eval-BN1 + ReLU -------------
    # 9 accumulating MXU dots on shifted slices of the padded sample (no im2col).
    acc1 = jnp.zeros((H * W, P), f32)
    for kh in range(3):
        for kw in range(3):
            xs = xpad_ref[0, kh:kh + H, kw:kw + W, :].reshape(H * W, C)
            acc1 = acc1 + jnp.dot(xs, w1_ref[kh * 3 + kw],
                                  preferred_element_type=f32)
    y1 = jnp.maximum(acc1 + b1_ref[...], 0.0)                     # (H*W, P), f32

    # Stage intermediate activation zero-padded in VMEM (never touches HBM).
    # Re-zero every grid step: scratch persists across steps and each megacore TC
    # has its own copy, so a one-time init would be unsafe.
    y1pad_ref[...] = jnp.zeros(y1pad_ref.shape, y1pad_ref.dtype)
    y1pad_ref[1:H + 1, 1:W + 1, :] = y1.reshape(H, W, P).astype(y1pad_ref.dtype)

    # ---- conv2 (3x3, pad=1) + folded eval-BN2 + residual + ReLU --------------
    acc2 = jnp.zeros((H * W, P), f32)
    for kh in range(3):
        for kw in range(3):
            ys = y1pad_ref[kh:kh + H, kw:kw + W, :].reshape(H * W, P)
            acc2 = acc2 + jnp.dot(ys, w2_ref[kh * 3 + kw],
                                  preferred_element_type=f32)
    residual = xpad_ref[0, 1:H + 1, 1:W + 1, :].reshape(H * W, C).astype(f32)
    out = jnp.maximum(acc2 + b2_ref[...] + residual, 0.0)
    o_ref[0] = out.reshape(H, W, P).astype(o_ref.dtype)


# ---------------------------------------------------------------------------
# Wrapper: BN folding, layout glue (NCHW<->NHWC, halo pad), pallas_call
# ---------------------------------------------------------------------------
def basic_block_forward(x_nchw, params, compute_dtype=jnp.bfloat16):
    """BasicBlock forward (stride=1, downsample=None), eval-mode BatchNorm.

    params = (w1_hwio, (g1, beta1, mean1, var1), w2_hwio, (g2, beta2, mean2, var2))
    w*_hwio: (3, 3, Cin, Cout) bias-free conv weights.
    """
    N, C, H, W = x_nchw.shape
    w1, bn1, w2, bn2 = params
    P = w1.shape[-1]
    assert w1.shape == (3, 3, C, P) and w2.shape == (3, 3, P, P)
    assert C == P, "downsample=None requires inplanes == planes"
    # TODO(synk): stride != 1 and the optional `downsample` branch of BasicBlock are
    # not implemented (the spec's defaults instantiate stride=1, downsample=None).

    def fold_bn(w, bn):
        gamma, beta, mean, var = bn
        scale = gamma.astype(jnp.float32) * lax.rsqrt(var.astype(jnp.float32) + _BN_EPS)
        w_f = w.astype(jnp.float32) * scale[None, None, None, :]
        b_f = beta.astype(jnp.float32) - mean.astype(jnp.float32) * scale
        cin, cout = w.shape[2], w.shape[3]
        return (w_f.reshape(9, cin, cout).astype(compute_dtype),   # casts hoisted here
                b_f.reshape(1, cout).astype(jnp.float32))

    w1f, b1f = fold_bn(w1, bn1)
    w2f, b2f = fold_bn(w2, bn2)

    # NCHW -> NHWC (C = lane axis; multiple of 128 at production sizes), bf16, halo pad.
    x_nhwc = jnp.transpose(x_nchw, (0, 2, 3, 1)).astype(compute_dtype)
    xpad = jnp.pad(x_nhwc, ((0, 0), (1, 1), (1, 1), (0, 0)))

    # Per-sample VMEM footprint at realistic ACGPN sizes (64x64x256, bf16) is only a
    # few MiB double-buffered, well inside the default scoped VMEM limit on v5e/v6e/v7x,
    # so no vmem_limit_bytes override is needed.
    out = pl.pallas_call(
        _basic_block_kernel,
        out_shape=jax.ShapeDtypeStruct((N, H, W, P), x_nchw.dtype),
        grid=(N,),
        in_specs=[
            pl.BlockSpec((1, H + 2, W + 2, C), lambda n: (n, 0, 0, 0)),  # padded sample
            pl.BlockSpec((9, C, P), lambda n: (0, 0, 0)),                # folded w1 (resident)
            pl.BlockSpec((1, P), lambda n: (0, 0)),                      # folded b1
            pl.BlockSpec((9, P, P), lambda n: (0, 0, 0)),                # folded w2 (resident)
            pl.BlockSpec((1, P), lambda n: (0, 0)),                      # folded b2
        ],
        out_specs=pl.BlockSpec((1, H, W, P), lambda n: (n, 0, 0, 0)),
        scratch_shapes=[pltpu.VMEM((H + 2, W + 2, P), compute_dtype)],
        compiler_params=pltpu.CompilerParams(
            dimension_semantics=("parallel",)),   # v7x: split samples across the 2 TCs
    )(xpad, w1f, b1f, w2f, b2f)

    return jnp.transpose(out, (0, 3, 1, 2))       # NHWC -> NCHW, dtype == input dtype


# ---------------------------------------------------------------------------
# Pure-JAX reference (for correctness check)
# ---------------------------------------------------------------------------
def _ref_bn_eval(x_nchw, bn, eps=_BN_EPS):
    gamma, beta, mean, var = bn
    inv = gamma * lax.rsqrt(var + eps)
    return x_nchw * inv[None, :, None, None] + (beta - mean * inv)[None, :, None, None]


def _ref_conv3x3(x_nchw, w_hwio):
    return lax.conv_general_dilated(
        x_nchw, w_hwio, window_strides=(1, 1), padding=((1, 1), (1, 1)),
        dimension_numbers=("NCHW", "HWIO", "NCHW"))


def ref_forward(x_nchw, params):
    w1, bn1, w2, bn2 = params
    out = jnp.maximum(_ref_bn_eval(_ref_conv3x3(x_nchw, w1), bn1), 0.0)
    out = _ref_bn_eval(_ref_conv3x3(out, w2), bn2)
    return jnp.maximum(out + x_nchw, 0.0)


# ---------------------------------------------------------------------------
if __name__ == "__main__":
    N, C, H, W = 2, 4, 16, 16          # inplanes = planes = 4, stride = 1, no downsample

    key = jax.random.PRNGKey(0)
    key, kx = jax.random.split(key)
    x = jax.random.normal(kx, (N, C, H, W), jnp.float32)

    def make_bn(k):
        kg, kb, km, kv = jax.random.split(k, 4)
        gamma = 1.0 + 0.1 * jax.random.normal(kg, (C,), jnp.float32)
        beta = 0.1 * jax.random.normal(kb, (C,), jnp.float32)
        mean = 0.1 * jax.random.normal(km, (C,), jnp.float32)
        var = jax.random.uniform(kv, (C,), jnp.float32, 0.5, 1.5)
        return gamma, beta, mean, var

    scale = 1.0 / math.sqrt(9 * C)
    key, k1, k2, k3, k4 = jax.random.split(key, 5)
    w1 = jax.random.normal(k1, (3, 3, C, C), jnp.float32) * scale
    w2 = jax.random.normal(k2, (3, 3, C, C), jnp.float32) * scale
    params = (w1, make_bn(k3), w2, make_bn(k4))

    out = jax.jit(basic_block_forward)(x, params)
    out = jax.block_until_ready(out)

    ref = jax.block_until_ready(ref_forward(x, params))
    # bf16 activations/weights with f32 accumulation -> ~1e-2-scale deviations.
    np.testing.assert_allclose(np.asarray(out), np.asarray(ref), rtol=5e-2, atol=5e-2)
    assert out.shape == x.shape and out.dtype == x.dtype

    print("KERNEL_OK")
</pallas_src>

<mosaic_0001>
module attributes {stable_mosaic.version = 11 : i64} {
  func.func @_basic_block_kernel(%arg0: i32, %arg1: memref<1x18x18x4xbf16, #tpu.memory_space<vmem>>, %arg2: memref<9x4x4xbf16, #tpu.memory_space<vmem>>, %arg3: memref<1x4xf32, #tpu.memory_space<vmem>>, %arg4: memref<9x4x4xbf16, #tpu.memory_space<vmem>>, %arg5: memref<1x4xf32, #tpu.memory_space<vmem>>, %arg6: memref<1x16x16x4xf32, #tpu.memory_space<vmem>>, %arg7: memref<18x18x4xbf16, #tpu.memory_space<vmem>>) attributes {dimension_semantics = [#tpu.dimension_semantics<parallel>], iteration_bounds = array<i64: 2>, scalar_prefetch = 0 : i64, scratch_operands = 1 : i64, tpu.core_type = #tpu.core_type<tc>, window_params = [{transform_indices = @transform_0, window_bounds = array<i64: 1, 18, 18, 4>}, {pipeline_mode = #tpu.pipeline_mode<synchronous>, transform_indices = @transform_1, window_bounds = array<i64: 9, 4, 4>}, {pipeline_mode = #tpu.pipeline_mode<synchronous>, transform_indices = @transform_2, window_bounds = array<i64: 1, 4>}, {pipeline_mode = #tpu.pipeline_mode<synchronous>, transform_indices = @transform_3, window_bounds = array<i64: 9, 4, 4>}, {pipeline_mode = #tpu.pipeline_mode<synchronous>, transform_indices = @transform_4, window_bounds = array<i64: 1, 4>}, {transform_indices = @transform_5, window_bounds = array<i64: 1, 16, 16, 4>}]} {
    %cst = arith.constant 0.000000e+00 : f32
    %0 = vector.broadcast %cst : f32 to vector<256x4xf32>
    %c0 = arith.constant 0 : index
    %c0_0 = arith.constant 0 : index
    %c0_1 = arith.constant 0 : index
    %c0_2 = arith.constant 0 : index
    %1 = vector.load %arg1[%c0, %c0_0, %c0_1, %c0_2] : memref<1x18x18x4xbf16, #tpu.memory_space<vmem>>, vector<1x16x16x4xbf16>
    %2 = vector.shape_cast %1 : vector<1x16x16x4xbf16> to vector<16x16x4xbf16>
    %3 = vector.shape_cast %2 : vector<16x16x4xbf16> to vector<256x4xbf16>
    %c0_3 = arith.constant 0 : index
    %c0_4 = arith.constant 0 : index
    %c0_5 = arith.constant 0 : index
    %4 = vector.load %arg2[%c0_3, %c0_4, %c0_5] : memref<9x4x4xbf16, #tpu.memory_space<vmem>>, vector<1x4x4xbf16>
    %5 = vector.shape_cast %4 : vector<1x4x4xbf16> to vector<4x4xbf16>
    %cst_6 = arith.constant dense<0.000000e+00> : vector<256x4xf32>
    %6 = tpu.matmul %3, %5, %cst_6 {dimension_numbers = #tpu.dot_dimension_numbers<[1], [0], [0], [1], [0, 0, 1, 1], [], []>} : vector<256x4xbf16>, vector<4x4xbf16>, vector<256x4xf32> -> vector<256x4xf32>
    %7 = arith.addf %0, %6 : vector<256x4xf32>
    %c0_7 = arith.constant 0 : index
    %c0_8 = arith.constant 0 : index
    %c1 = arith.constant 1 : index
    %c0_9 = arith.constant 0 : index
    %8 = vector.load %arg1[%c0_7, %c0_8, %c1, %c0_9] : memref<1x18x18x4xbf16, #tpu.memory_space<vmem>>, vector<1x16x16x4xbf16>
    %9 = vector.shape_cast %8 : vector<1x16x16x4xbf16> to vector<16x16x4xbf16>
    %10 = vector.shape_cast %9 : vector<16x16x4xbf16> to vector<256x4xbf16>
    %c1_10 = arith.constant 1 : index
    %c0_11 = arith.constant 0 : index
    %c0_12 = arith.constant 0 : index
    %11 = vector.load %arg2[%c1_10, %c0_11, %c0_12] : memref<9x4x4xbf16, #tpu.memory_space<vmem>>, vector<1x4x4xbf16>
    %12 = vector.shape_cast %11 : vector<1x4x4xbf16> to vector<4x4xbf16>
    %cst_13 = arith.constant dense<0.000000e+00> : vector<256x4xf32>
    %13 = tpu.matmul %10, %12, %cst_13 {dimension_numbers = #tpu.dot_dimension_numbers<[1], [0], [0], [1], [0, 0, 1, 1], [], []>} : vector<256x4xbf16>, vector<4x4xbf16>, vector<256x4xf32> -> vector<256x4xf32>
    %14 = arith.addf %7, %13 : vector<256x4xf32>
    %c0_14 = arith.constant 0 : index
    %c0_15 = arith.constant 0 : index
    %c2 = arith.constant 2 : index
    %c0_16 = arith.constant 0 : index
    %15 = vector.load %arg1[%c0_14, %c0_15, %c2, %c0_16] : memref<1x18x18x4xbf16, #tpu.memory_space<vmem>>, vector<1x16x16x4xbf16>
    %16 = vector.shape_cast %15 : vector<1x16x16x4xbf16> to vector<16x16x4xbf16>
    %17 = vector.shape_cast %16 : vector<16x16x4xbf16> to vector<256x4xbf16>
    %c2_17 = arith.constant 2 : index
    %c0_18 = arith.constant 0 : index
    %c0_19 = arith.constant 0 : index
    %18 = vector.load %arg2[%c2_17, %c0_18, %c0_19] : memref<9x4x4xbf16, #tpu.memory_space<vmem>>, vector<1x4x4xbf16>
    %19 = vector.shape_cast %18 : vector<1x4x4xbf16> to vector<4x4xbf16>
    %cst_20 = arith.constant dense<0.000000e+00> : vector<256x4xf32>
    %20 = tpu.matmul %17, %19, %cst_20 {dimension_numbers = #tpu.dot_dimension_numbers<[1], [0], [0], [1], [0, 0, 1, 1], [], []>} : vector<256x4xbf16>, vector<4x4xbf16>, vector<256x4xf32> -> vector<256x4xf32>
    %21 = arith.addf %14, %20 : vector<256x4xf32>
    %c0_21 = arith.constant 0 : index
    %c1_22 = arith.constant 1 : index
    %c0_23 = arith.constant 0 : index
    %c0_24 = arith.constant 0 : index
    %22 = vector.load %arg1[%c0_21, %c1_22, %c0_23, %c0_24] : memref<1x18x18x4xbf16, #tpu.memory_space<vmem>>, vector<1x16x16x4xbf16>
    %23 = vector.shape_cast %22 : vector<1x16x16x4xbf16> to vector<16x16x4xbf16>
    %24 = vector.shape_cast %23 : vector<16x16x4xbf16> to vector<256x4xbf16>
    %c3 = arith.constant 3 : index
    %c0_25 = arith.constant 0 : index
    %c0_26 = arith.constant 0 : index
    %25 = vector.load %arg2[%c3, %c0_25, %c0_26] : memref<9x4x4xbf16, #tpu.memory_space<vmem>>, vector<1x4x4xbf16>
    %26 = vector.shape_cast %25 : vector<1x4x4xbf16> to vector<4x4xbf16>
    %cst_27 = arith.constant dense<0.000000e+00> : vector<256x4xf32>
    %27 = tpu.matmul %24, %26, %cst_27 {dimension_numbers = #tpu.dot_dimension_numbers<[1], [0], [0], [1], [0, 0, 1, 1], [], []>} : vector<256x4xbf16>, vector<4x4xbf16>, vector<256x4xf32> -> vector<256x4xf32>
    %28 = arith.addf %21, %27 : vector<256x4xf32>
    %c0_28 = arith.constant 0 : index
    %c1_29 = arith.constant 1 : index
    %c1_30 = arith.constant 1 : index
    %c0_31 = arith.constant 0 : index
    %29 = vector.load %arg1[%c0_28, %c1_29, %c1_30, %c0_31] : memref<1x18x18x4xbf16, #tpu.memory_space<vmem>>, vector<1x16x16x4xbf16>
    %30 = vector.shape_cast %29 : vector<1x16x16x4xbf16> to vector<16x16x4xbf16>
    %31 = vector.shape_cast %30 : vector<16x16x4xbf16> to vector<256x4xbf16>
    %c4 = arith.constant 4 : index
    %c0_32 = arith.constant 0 : index
    %c0_33 = arith.constant 0 : index
    %32 = vector.load %arg2[%c4, %c0_32, %c0_33] : memref<9x4x4xbf16, #tpu.memory_space<vmem>>, vector<1x4x4xbf16>
    %33 = vector.shape_cast %32 : vector<1x4x4xbf16> to vector<4x4xbf16>
    %cst_34 = arith.constant dense<0.000000e+00> : vector<256x4xf32>
    %34 = tpu.matmul %31, %33, %cst_34 {dimension_numbers = #tpu.dot_dimension_numbers<[1], [0], [0], [1], [0, 0, 1, 1], [], []>} : vector<256x4xbf16>, vector<4x4xbf16>, vector<256x4xf32> -> vector<256x4xf32>
    %35 = arith.addf %28, %34 : vector<256x4xf32>
    %c0_35 = arith.constant 0 : index
    %c1_36 = arith.constant 1 : index
    %c2_37 = arith.constant 2 : index
    %c0_38 = arith.constant 0 : index
    %36 = vector.load %arg1[%c0_35, %c1_36, %c2_37, %c0_38] : memref<1x18x18x4xbf16, #tpu.memory_space<vmem>>, vector<1x16x16x4xbf16>
    %37 = vector.shape_cast %36 : vector<1x16x16x4xbf16> to vector<16x16x4xbf16>
    %38 = vector.shape_cast %37 : vector<16x16x4xbf16> to vector<256x4xbf16>
    %c5 = arith.constant 5 : index
    %c0_39 = arith.constant 0 : index
    %c0_40 = arith.constant 0 : index
    %39 = vector.load %arg2[%c5, %c0_39, %c0_40] : memref<9x4x4xbf16, #tpu.memory_space<vmem>>, vector<1x4x4xbf16>
    %40 = vector.shape_cast %39 : vector<1x4x4xbf16> to vector<4x4xbf16>
    %cst_41 = arith.constant dense<0.000000e+00> : vector<256x4xf32>
    %41 = tpu.matmul %38, %40, %cst_41 {dimension_numbers = #tpu.dot_dimension_numbers<[1], [0], [0], [1], [0, 0, 1, 1], [], []>} : vector<256x4xbf16>, vector<4x4xbf16>, vector<256x4xf32> -> vector<256x4xf32>
    %42 = arith.addf %35, %41 : vector<256x4xf32>
    %c0_42 = arith.constant 0 : index
    %c2_43 = arith.constant 2 : index
    %c0_44 = arith.constant 0 : index
    %c0_45 = arith.constant 0 : index
    %43 = vector.load %arg1[%c0_42, %c2_43, %c0_44, %c0_45] : memref<1x18x18x4xbf16, #tpu.memory_space<vmem>>, vector<1x16x16x4xbf16>
    %44 = vector.shape_cast %43 : vector<1x16x16x4xbf16> to vector<16x16x4xbf16>
    %45 = vector.shape_cast %44 : vector<16x16x4xbf16> to vector<256x4xbf16>
    %c6 = arith.constant 6 : index
    %c0_46 = arith.constant 0 : index
    %c0_47 = arith.constant 0 : index
    %46 = vector.load %arg2[%c6, %c0_46, %c0_47] : memref<9x4x4xbf16, #tpu.memory_space<vmem>>, vector<1x4x4xbf16>
    %47 = vector.shape_cast %46 : vector<1x4x4xbf16> to vector<4x4xbf16>
    %cst_48 = arith.constant dense<0.000000e+00> : vector<256x4xf32>
    %48 = tpu.matmul %45, %47, %cst_48 {dimension_numbers = #tpu.dot_dimension_numbers<[1], [0], [0], [1], [0, 0, 1, 1], [], []>} : vector<256x4xbf16>, vector<4x4xbf16>, vector<256x4xf32> -> vector<256x4xf32>
    %49 = arith.addf %42, %48 : vector<256x4xf32>
    %c0_49 = arith.constant 0 : index
    %c2_50 = arith.constant 2 : index
    %c1_51 = arith.constant 1 : index
    %c0_52 = arith.constant 0 : index
    %50 = vector.load %arg1[%c0_49, %c2_50, %c1_51, %c0_52] : memref<1x18x18x4xbf16, #tpu.memory_space<vmem>>, vector<1x16x16x4xbf16>
    %51 = vector.shape_cast %50 : vector<1x16x16x4xbf16> to vector<16x16x4xbf16>
    %52 = vector.shape_cast %51 : vector<16x16x4xbf16> to vector<256x4xbf16>
    %c7 = arith.constant 7 : index
    %c0_53 = arith.constant 0 : index
    %c0_54 = arith.constant 0 : index
    %53 = vector.load %arg2[%c7, %c0_53, %c0_54] : memref<9x4x4xbf16, #tpu.memory_space<vmem>>, vector<1x4x4xbf16>
    %54 = vector.shape_cast %53 : vector<1x4x4xbf16> to vector<4x4xbf16>
    %cst_55 = arith.constant dense<0.000000e+00> : vector<256x4xf32>
    %55 = tpu.matmul %52, %54, %cst_55 {dimension_numbers = #tpu.dot_dimension_numbers<[1], [0], [0], [1], [0, 0, 1, 1], [], []>} : vector<256x4xbf16>, vector<4x4xbf16>, vector<256x4xf32> -> vector<256x4xf32>
    %56 = arith.addf %49, %55 : vector<256x4xf32>
    %c0_56 = arith.constant 0 : index
    %c2_57 = arith.constant 2 : index
    %c2_58 = arith.constant 2 : index
    %c0_59 = arith.constant 0 : index
    %57 = vector.load %arg1[%c0_56, %c2_57, %c2_58, %c0_59] : memref<1x18x18x4xbf16, #tpu.memory_space<vmem>>, vector<1x16x16x4xbf16>
    %58 = vector.shape_cast %57 : vector<1x16x16x4xbf16> to vector<16x16x4xbf16>
    %59 = vector.shape_cast %58 : vector<16x16x4xbf16> to vector<256x4xbf16>
    %c8 = arith.constant 8 : index
    %c0_60 = arith.constant 0 : index
    %c0_61 = arith.constant 0 : index
    %60 = vector.load %arg2[%c8, %c0_60, %c0_61] : memref<9x4x4xbf16, #tpu.memory_space<vmem>>, vector<1x4x4xbf16>
    %61 = vector.shape_cast %60 : vector<1x4x4xbf16> to vector<4x4xbf16>
    %cst_62 = arith.constant dense<0.000000e+00> : vector<256x4xf32>
    %62 = tpu.matmul %59, %61, %cst_62 {dimension_numbers = #tpu.dot_dimension_numbers<[1], [0], [0], [1], [0, 0, 1, 1], [], []>} : vector<256x4xbf16>, vector<4x4xbf16>, vector<256x4xf32> -> vector<256x4xf32>
    %63 = arith.addf %56, %62 : vector<256x4xf32>
    %c0_63 = arith.constant 0 : index
    %c0_64 = arith.constant 0 : index
    %64 = vector.load %arg3[%c0_63, %c0_64] : memref<1x4xf32, #tpu.memory_space<vmem>>, vector<1x4xf32>
    %65 = vector.broadcast %64 : vector<1x4xf32> to vector<256x4xf32>
    %66 = arith.addf %63, %65 : vector<256x4xf32>
    %cst_65 = arith.constant 0.000000e+00 : f32
    %67 = vector.broadcast %cst_65 : f32 to vector<256x4xf32>
    %68 = arith.maximumf %66, %67 : vector<256x4xf32>
    %cst_66 = arith.constant 0.000000e+00 : bf16
    %69 = vector.broadcast %cst_66 : bf16 to vector<18x18x4xbf16>
    %c0_67 = arith.constant 0 : index
    %c0_68 = arith.constant 0 : index
    %c0_69 = arith.constant 0 : index
    %70 = vector.load %arg7[%c0_67, %c0_68, %c0_69] : memref<18x18x4xbf16, #tpu.memory_space<vmem>>, vector<18x18x4xbf16>
    tpu.vector_store %arg7[%c0_67, %c0_68, %c0_69], %69 {strides = array<i32>} : memref<18x18x4xbf16, #tpu.memory_space<vmem>>, vector<18x18x4xbf16>,
    %71 = vector.shape_cast %68 : vector<256x4xf32> to vector<16x16x4xf32>
    %72 = arith.truncf %71 : vector<16x16x4xf32> to vector<16x16x4xbf16>
    %c1_70 = arith.constant 1 : index
    %c1_71 = arith.constant 1 : index
    %c0_72 = arith.constant 0 : index
    %73 = vector.load %arg7[%c1_70, %c1_71, %c0_72] : memref<18x18x4xbf16, #tpu.memory_space<vmem>>, vector<16x16x4xbf16>
    tpu.vector_store %arg7[%c1_70, %c1_71, %c0_72], %72 {strides = array<i32>} : memref<18x18x4xbf16, #tpu.memory_space<vmem>>, vector<16x16x4xbf16>,
    %cst_73 = arith.constant 0.000000e+00 : f32
    %74 = vector.broadcast %cst_73 : f32 to vector<256x4xf32>
    %c0_74 = arith.constant 0 : index
    %c0_75 = arith.constant 0 : index
    %c0_76 = arith.constant 0 : index
    %75 = vector.load %arg7[%c0_74, %c0_75, %c0_76] : memref<18x18x4xbf16, #tpu.memory_space<vmem>>, vector<16x16x4xbf16>
    %76 = vector.shape_cast %75 : vector<16x16x4xbf16> to vector<256x4xbf16>
    %c0_77 = arith.constant 0 : index
    %c0_78 = arith.constant 0 : index
    %c0_79 = arith.constant 0 : index
    %77 = vector.load %arg4[%c0_77, %c0_78, %c0_79] : memref<9x4x4xbf16, #tpu.memory_space<vmem>>, vector<1x4x4xbf16>
    %78 = vector.shape_cast %77 : vector<1x4x4xbf16> to vector<4x4xbf16>
    %cst_80 = arith.constant dense<0.000000e+00> : vector<256x4xf32>
    %79 = tpu.matmul %76, %78, %cst_80 {dimension_numbers = #tpu.dot_dimension_numbers<[1], [0], [0], [1], [0, 0, 1, 1], [], []>} : vector<256x4xbf16>, vector<4x4xbf16>, vector<256x4xf32> -> vector<256x4xf32>
    %80 = arith.addf %74, %79 : vector<256x4xf32>
    %c0_81 = arith.constant 0 : index
    %c1_82 = arith.constant 1 : index
    %c0_83 = arith.constant 0 : index
    %81 = vector.load %arg7[%c0_81, %c1_82, %c0_83] : memref<18x18x4xbf16, #tpu.memory_space<vmem>>, vector<16x16x4xbf16>
    %82 = vector.shape_cast %81 : vector<16x16x4xbf16> to vector<256x4xbf16>
    %c1_84 = arith.constant 1 : index
    %c0_85 = arith.constant 0 : index
    %c0_86 = arith.constant 0 : index
    %83 = vector.load %arg4[%c1_84, %c0_85, %c0_86] : memref<9x4x4xbf16, #tpu.memory_space<vmem>>, vector<1x4x4xbf16>
    %84 = vector.shape_cast %83 : vector<1x4x4xbf16> to vector<4x4xbf16>
    %cst_87 = arith.constant dense<0.000000e+00> : vector<256x4xf32>
    %85 = tpu.matmul %82, %84, %cst_87 {dimension_numbers = #tpu.dot_dimension_numbers<[1], [0], [0], [1], [0, 0, 1, 1], [], []>} : vector<256x4xbf16>, vector<4x4xbf16>, vector<256x4xf32> -> vector<256x4xf32>
    %86 = arith.addf %80, %85 : vector<256x4xf32>
    %c0_88 = arith.constant 0 : index
    %c2_89 = arith.constant 2 : index
    %c0_90 = arith.constant 0 : index
    %87 = vector.load %arg7[%c0_88, %c2_89, %c0_90] : memref<18x18x4xbf16, #tpu.memory_space<vmem>>, vector<16x16x4xbf16>
    %88 = vector.shape_cast %87 : vector<16x16x4xbf16> to vector<256x4xbf16>
    %c2_91 = arith.constant 2 : index
    %c0_92 = arith.constant 0 : index
    %c0_93 = arith.constant 0 : index
    %89 = vector.load %arg4[%c2_91, %c0_92, %c0_93] : memref<9x4x4xbf16, #tpu.memory_space<vmem>>, vector<1x4x4xbf16>
    %90 = vector.shape_cast %89 : vector<1x4x4xbf16> to vector<4x4xbf16>
    %cst_94 = arith.constant dense<0.000000e+00> : vector<256x4xf32>
    %91 = tpu.matmul %88, %90, %cst_94 {dimension_numbers = #tpu.dot_dimension_numbers<[1], [0], [0], [1], [0, 0, 1, 1], [], []>} : vector<256x4xbf16>, vector<4x4xbf16>, vector<256x4xf32> -> vector<256x4xf32>
    %92 = arith.addf %86, %91 : vector<256x4xf32>
    %c1_95 = arith.constant 1 : index
    %c0_96 = arith.constant 0 : index
    %c0_97 = arith.constant 0 : index
    %93 = vector.load %arg7[%c1_95, %c0_96, %c0_97] : memref<18x18x4xbf16, #tpu.memory_space<vmem>>, vector<16x16x4xbf16>
    %94 = vector.shape_cast %93 : vector<16x16x4xbf16> to vector<256x4xbf16>
    %c3_98 = arith.constant 3 : index
    %c0_99 = arith.constant 0 : index
    %c0_100 = arith.constant 0 : index
    %95 = vector.load %arg4[%c3_98, %c0_99, %c0_100] : memref<9x4x4xbf16, #tpu.memory_space<vmem>>, vector<1x4x4xbf16>
    %96 = vector.shape_cast %95 : vector<1x4x4xbf16> to vector<4x4xbf16>
    %cst_101 = arith.constant dense<0.000000e+00> : vector<256x4xf32>
    %97 = tpu.matmul %94, %96, %cst_101 {dimension_numbers = #tpu.dot_dimension_numbers<[1], [0], [0], [1], [0, 0, 1, 1], [], []>} : vector<256x4xbf16>, vector<4x4xbf16>, vector<256x4xf32> -> vector<256x4xf32>
    %98 = arith.addf %92, %97 : vector<256x4xf32>
    %c1_102 = arith.constant 1 : index
    %c1_103 = arith.constant 1 : index
    %c0_104 = arith.constant 0 : index
    %99 = vector.load %arg7[%c1_102, %c1_103, %c0_104] : memref<18x18x4xbf16, #tpu.memory_space<vmem>>, vector<16x16x4xbf16>
    %100 = vector.shape_cast %99 : vector<16x16x4xbf16> to vector<256x4xbf16>
    %c4_105 = arith.constant 4 : index
    %c0_106 = arith.constant 0 : index
    %c0_107 = arith.constant 0 : index
    %101 = vector.load %arg4[%c4_105, %c0_106, %c0_107] : memref<9x4x4xbf16, #tpu.memory_space<vmem>>, vector<1x4x4xbf16>
    %102 = vector.shape_cast %101 : vector<1x4x4xbf16> to vector<4x4xbf16>
    %cst_108 = arith.constant dense<0.000000e+00> : vector<256x4xf32>
    %103 = tpu.matmul %100, %102, %cst_108 {dimension_numbers = #tpu.dot_dimension_numbers<[1], [0], [0], [1], [0, 0, 1, 1], [], []>} : vector<256x4xbf16>, vector<4x4xbf16>, vector<256x4xf32> -> vector<256x4xf32>
    %104 = arith.addf %98, %103 : vector<256x4xf32>
    %c1_109 = arith.constant 1 : index
    %c2_110 = arith.constant 2 : index
    %c0_111 = arith.constant 0 : index
    %105 = vector.load %arg7[%c1_109, %c2_110, %c0_111] : memref<18x18x4xbf16, #tpu.memory_space<vmem>>, vector<16x16x4xbf16>
    %106 = vector.shape_cast %105 : vector<16x16x4xbf16> to vector<256x4xbf16>
    %c5_112 = arith.constant 5 : index
    %c0_113 = arith.constant 0 : index
    %c0_114 = arith.constant 0 : index
    %107 = vector.load %arg4[%c5_112, %c0_113, %c0_114] : memref<9x4x4xbf16, #tpu.memory_space<vmem>>, vector<1x4x4xbf16>
    %108 = vector.shape_cast %107 : vector<1x4x4xbf16> to vector<4x4xbf16>
    %cst_115 = arith.constant dense<0.000000e+00> : vector<256x4xf32>
    %109 = tpu.matmul %106, %108, %cst_115 {dimension_numbers = #tpu.dot_dimension_numbers<[1], [0], [0], [1], [0, 0, 1, 1], [], []>} : vector<256x4xbf16>, vector<4x4xbf16>, vector<256x4xf32> -> vector<256x4xf32>
    %110 = arith.addf %104, %109 : vector<256x4xf32>
    %c2_116 = arith.constant 2 : index
    %c0_117 = arith.constant 0 : index
    %c0_118 = arith.constant 0 : index
    %111 = vector.load %arg7[%c2_116, %c0_117, %c0_118] : memref<18x18x4xbf16, #tpu.memory_space<vmem>>, vector<16x16x4xbf16>
    %112 = vector.shape_cast %111 : vector<16x16x4xbf16> to vector<256x4xbf16>
    %c6_119 = arith.constant 6 : index
    %c0_120 = arith.constant 0 : index
    %c0_121 = arith.constant 0 : index
    %113 = vector.load %arg4[%c6_119, %c0_120, %c0_121] : memref<9x4x4xbf16, #tpu.memory_space<vmem>>, vector<1x4x4xbf16>
    %114 = vector.shape_cast %113 : vector<1x4x4xbf16> to vector<4x4xbf16>
    %cst_122 = arith.constant dense<0.000000e+00> : vector<256x4xf32>
    %115 = tpu.matmul %112, %114, %cst_122 {dimension_numbers = #tpu.dot_dimension_numbers<[1], [0], [0], [1], [0, 0, 1, 1], [], []>} : vector<256x4xbf16>, vector<4x4xbf16>, vector<256x4xf32> -> vector<256x4xf32>
    %116 = arith.addf %110, %115 : vector<256x4xf32>
    %c2_123 = arith.constant 2 : index
    %c1_124 = arith.constant 1 : index
    %c0_125 = arith.constant 0 : index
    %117 = vector.load %arg7[%c2_123, %c1_124, %c0_125] : memref<18x18x4xbf16, #tpu.memory_space<vmem>>, vector<16x16x4xbf16>
    %118 = vector.shape_cast %117 : vector<16x16x4xbf16> to vector<256x4xbf16>
    %c7_126 = arith.constant 7 : index
    %c0_127 = arith.constant 0 : index
    %c0_128 = arith.constant 0 : index
    %119 = vector.load %arg4[%c7_126, %c0_127, %c0_128] : memref<9x4x4xbf16, #tpu.memory_space<vmem>>, vector<1x4x4xbf16>
    %120 = vector.shape_cast %119 : vector<1x4x4xbf16> to vector<4x4xbf16>
    %cst_129 = arith.constant dense<0.000000e+00> : vector<256x4xf32>
    %121 = tpu.matmul %118, %120, %cst_129 {dimension_numbers = #tpu.dot_dimension_numbers<[1], [0], [0], [1], [0, 0, 1, 1], [], []>} : vector<256x4xbf16>, vector<4x4xbf16>, vector<256x4xf32> -> vector<256x4xf32>
    %122 = arith.addf %116, %121 : vector<256x4xf32>
    %c2_130 = arith.constant 2 : index
    %c2_131 = arith.constant 2 : index
    %c0_132 = arith.constant 0 : index
    %123 = vector.load %arg7[%c2_130, %c2_131, %c0_132] : memref<18x18x4xbf16, #tpu.memory_space<vmem>>, vector<16x16x4xbf16>
    %124 = vector.shape_cast %123 : vector<16x16x4xbf16> to vector<256x4xbf16>
    %c8_133 = arith.constant 8 : index
    %c0_134 = arith.constant 0 : index
    %c0_135 = arith.constant 0 : index
    %125 = vector.load %arg4[%c8_133, %c0_134, %c0_135] : memref<9x4x4xbf16, #tpu.memory_space<vmem>>, vector<1x4x4xbf16>
    %126 = vector.shape_cast %125 : vector<1x4x4xbf16> to vector<4x4xbf16>
    %cst_136 = arith.constant dense<0.000000e+00> : vector<256x4xf32>
    %127 = tpu.matmul %124, %126, %cst_136 {dimension_numbers = #tpu.dot_dimension_numbers<[1], [0], [0], [1], [0, 0, 1, 1], [], []>} : vector<256x4xbf16>, vector<4x4xbf16>, vector<256x4xf32> -> vector<256x4xf32>
    %128 = arith.addf %122, %127 : vector<256x4xf32>
    %c0_137 = arith.constant 0 : index
    %c1_138 = arith.constant 1 : index
    %c1_139 = arith.constant 1 : index
    %c0_140 = arith.constant 0 : index
    %129 = vector.load %arg1[%c0_137, %c1_138, %c1_139, %c0_140] : memref<1x18x18x4xbf16, #tpu.memory_space<vmem>>, vector<1x16x16x4xbf16>
    %130 = vector.shape_cast %129 : vector<1x16x16x4xbf16> to vector<16x16x4xbf16>
    %131 = vector.shape_cast %130 : vector<16x16x4xbf16> to vector<256x4xbf16>
    %132 = arith.extf %131 : vector<256x4xbf16> to vector<256x4xf32>
    %c0_141 = arith.constant 0 : index
    %c0_142 = arith.constant 0 : index
    %133 = vector.load %arg5[%c0_141, %c0_142] : memref<1x4xf32, #tpu.memory_space<vmem>>, vector<1x4xf32>
    %134 = vector.broadcast %133 : vector<1x4xf32> to vector<256x4xf32>
    %135 = arith.addf %128, %134 : vector<256x4xf32>
    %136 = arith.addf %135, %132 : vector<256x4xf32>
    %cst_143 = arith.constant 0.000000e+00 : f32
    %137 = vector.broadcast %cst_143 : f32 to vector<256x4xf32>
    %138 = arith.maximumf %136, %137 : vector<256x4xf32>
    %139 = vector.shape_cast %138 : vector<256x4xf32> to vector<16x16x4xf32>
    %c0_144 = arith.constant 0 : index
    %c0_145 = arith.constant 0 : index
    %c0_146 = arith.constant 0 : index
    %c0_147 = arith.constant 0 : index
    %140 = vector.load %arg6[%c0_144, %c0_145, %c0_146, %c0_147] : memref<1x16x16x4xf32, #tpu.memory_space<vmem>>, vector<1x16x16x4xf32>
    %141 = vector.shape_cast %140 : vector<1x16x16x4xf32> to vector<16x16x4xf32>
    %142 = vector.shape_cast %139 : vector<16x16x4xf32> to vector<1x16x16x4xf32>
    tpu.vector_store %arg6[%c0_144, %c0_145, %c0_146, %c0_147], %142 {strides = array<i32>} : memref<1x16x16x4xf32, #tpu.memory_space<vmem>>, vector<1x16x16x4xf32>,
    return
  }
  func.func @transform_0(%arg0: i32) -> (i32, i32, i32, i32) {
    %c0_i32 = arith.constant 0 : i32
    %c0_i32_0 = arith.constant 0 : i32
    %c0_i32_1 = arith.constant 0 : i32
    %c0_i32_2 = arith.constant 0 : i32
    return %arg0, %c0_i32, %c0_i32_0, %c0_i32_1 : i32, i32, i32, i32
  }
  func.func @transform_1(%arg0: i32) -> (i32, i32, i32) {
    %c0_i32 = arith.constant 0 : i32
    %c0_i32_0 = arith.constant 0 : i32
    %c0_i32_1 = arith.constant 0 : i32
    %c0_i32_2 = arith.constant 0 : i32
    return %c0_i32, %c0_i32_0, %c0_i32_1 : i32, i32, i32
  }
  func.func @transform_2(%arg0: i32) -> (i32, i32) {
    %c0_i32 = arith.constant 0 : i32
    %c0_i32_0 = arith.constant 0 : i32
    %c0_i32_1 = arith.constant 0 : i32
    return %c0_i32, %c0_i32_0 : i32, i32
  }
  func.func @transform_3(%arg0: i32) -> (i32, i32, i32) {
    %c0_i32 = arith.constant 0 : i32
    %c0_i32_0 = arith.constant 0 : i32
    %c0_i32_1 = arith.constant 0 : i32
    %c0_i32_2 = arith.constant 0 : i32
    return %c0_i32, %c0_i32_0, %c0_i32_1 : i32, i32, i32
  }
  func.func @transform_4(%arg0: i32) -> (i32, i32) {
    %c0_i32 = arith.constant 0 : i32
    %c0_i32_0 = arith.constant 0 : i32
    %c0_i32_1 = arith.constant 0 : i32
    return %c0_i32, %c0_i32_0 : i32, i32
  }
  func.func @transform_5(%arg0: i32) -> (i32, i32, i32, i32) {
    %c0_i32 = arith.constant 0 : i32
    %c0_i32_0 = arith.constant 0 : i32
    %c0_i32_1 = arith.constant 0 : i32
    %c0_i32_2 = arith.constant 0 : i32
    return %arg0, %c0_i32, %c0_i32_0, %c0_i32_1 : i32, i32, i32, i32
  }
}

</mosaic_0001>

<llo_original>
// kernel: basic_block_forward.1
$region0: #{basic_block_forward.1}
  #allocation0 [shape = 'u32[]', space=smem, size = 0x4, offset = 0x4, fixed_abs, tag = 'smem constant byte address 0x4 - core index']
  #allocation1 [shape = 'u32[144,128]{1,0:T(1,128)}', space=vmem, size = 0x12000, scoped, tag = 'internal scratch']
  #allocation2 [shape = 'bf16[18,18,4]{2,1,0:T(8,128)(2,1)}', space=vmem, size = 0x1b000, scoped, tag = 'scratch operand']
  %s0 = inlined_call_operand.vmem [shape: bf16[2,18,18,4], index: 0, kind: input, shape index: {}]
  %s1 = inlined_call_operand.vmem [shape: bf16[9,4,4], index: 1, kind: input, shape index: {}]
  %s2 = inlined_call_operand.vmem [shape: f32[1,4], index: 2, kind: input, shape index: {}]
  %s3 = inlined_call_operand.vmem [shape: bf16[9,4,4], index: 3, kind: input, shape index: {}]
  %s4 = inlined_call_operand.vmem [shape: f32[1,4], index: 4, kind: input, shape index: {}]
  %s5 = inlined_call_operand.vmem [shape: f32[2,16,16,4], index: 5, kind: output, shape index: {}]
  %s6 = sld [smem:[#allocation0]]
  $region53: #{basic_block_forward.1} parent=0
    _
  %s8 = ssub.s32 1, %s6
  %s9 = scalar_select 0, %s8, %s6
  loop: start=0, step=1, limit=4
  $region2: #{basic_block_forward.1} parent=0 // loop_pre_header
    _
  $region3: #{basic_block_forward.1} parent=0 // loop_header
    %s11 = sphi 0, %s15
    %p12 = scmp.ge.s32.totalorder %s11, 4
    %s21 = sphi 0, %s23
    %s24 = sphi 0, %s21
    %s25 = sphi 0, %s24
    %s41 = sphi 0, %s25
    %s45 = sphi 0, %s45
    %s47 = sphi 0, %s45
    %s48 = sphi 0, %s47
    %s62 = sphi 0, %s48
    %s66 = sphi 0, %s66
    %s68 = sphi 0, %s66
    %s69 = sphi 0, %s68
    %s83 = sphi 0, %s69
    %s87 = sphi 0, %s87
    %s89 = sphi 0, %s87
    %s90 = sphi 0, %s89
    %s104 = sphi 0, %s90
    %s108 = sphi 0, %s108
    %s110 = sphi 0, %s108
    %s111 = sphi 0, %s110
    %s125 = sphi 0, %s111
    %s131 = sphi 0, %s133
    %s134 = sphi 0, %s131
    %s135 = sphi 0, %s134
    %s151 = sphi 0, %s135
  $region4: #{basic_block_forward.1} parent=0 // loop_header_branch
    %14 = sbr.rel (%p12) target = $region8
  $region5: #{basic_block_forward.1} parent=0 // loop_body
    %s16 = ssub.s32 %s11, 1
    %s17 = ssub.s32 %s11, 2
    %s18 = sadd.s32 %s11, 1
    %s19 = ssub.s32 %s11, %s18
    %p20 = scmp.eq.s32.totalorder %s19, 0
    %s22 = sadd.s32 %s21, 1
    %s23 = scalar_select %p20, %s21, %s22
    %p26 = pneg %p20
    %p27 = scmp.eq.s32.totalorder %s11, 1
    %p28 = por %p26, %p27
    %p29 = scmp.ne.s32.totalorder %s21, %s24
    %p30 = scmp.eq.s32.totalorder %s11, 0
    %p31 = por %p29, %p30
    %p32 = scmp.ne.s32.totalorder %s21, %s24
    %p33 = scmp.eq.s32.totalorder %s16, 1
    %p34 = por %p32, %p33
    %p35 = scmp.ne.s32.totalorder %s24, %s25
    %p36 = scmp.eq.s32.totalorder %s16, 0
    %p37 = por %p35, %p36
    %p38 = scmp.ne.s32.totalorder %s24, %s25
    %p39 = scmp.eq.s32.totalorder %s17, 1
    %p40 = por %p38, %p39
    %p42 = scmp.ne.s32.totalorder %s25, %s41
    %p43 = scmp.eq.s32.totalorder %s17, 0
    %p44 = por %p42, %p43
    %s46 = sadd.s32 %s45, 1
    %p49 = scmp.eq.s32.totalorder %s11, 1
    %p50 = scmp.ne.s32.totalorder %s45, %s47
    %p51 = scmp.eq.s32.totalorder %s11, 0
    %p52 = por %p50, %p51
    %p53 = scmp.ne.s32.totalorder %s45, %s47
    %p54 = scmp.eq.s32.totalorder %s16, 1
    %p55 = por %p53, %p54
    %p56 = scmp.ne.s32.totalorder %s47, %s48
    %p57 = scmp.eq.s32.totalorder %s16, 0
    %p58 = por %p56, %p57
    %p59 = scmp.ne.s32.totalorder %s47, %s48
    %p60 = scmp.eq.s32.totalorder %s17, 1
    %p61 = por %p59, %p60
    %p63 = scmp.ne.s32.totalorder %s48, %s62
    %p64 = scmp.eq.s32.totalorder %s17, 0
    %p65 = por %p63, %p64
    %s67 = sadd.s32 %s66, 1
    %p70 = scmp.eq.s32.totalorder %s11, 1
    %p71 = scmp.ne.s32.totalorder %s66, %s68
    %p72 = scmp.eq.s32.totalorder %s11, 0
    %p73 = por %p71, %p72
    %p74 = scmp.ne.s32.totalorder %s66, %s68
    %p75 = scmp.eq.s32.totalorder %s16, 1
    %p76 = por %p74, %p75
    %p77 = scmp.ne.s32.totalorder %s68, %s69
    %p78 = scmp.eq.s32.totalorder %s16, 0
    %p79 = por %p77, %p78
    %p80 = scmp.ne.s32.totalorder %s68, %s69
    %p81 = scmp.eq.s32.totalorder %s17, 1
    %p82 = por %p80, %p81
    %p84 = scmp.ne.s32.totalorder %s69, %s83
    %p85 = scmp.eq.s32.totalorder %s17, 0
    %p86 = por %p84, %p85
    %s88 = sadd.s32 %s87, 1
    %p91 = scmp.eq.s32.totalorder %s11, 1
    %p92 = scmp.ne.s32.totalorder %s87, %s89
    %p93 = scmp.eq.s32.totalorder %s11, 0
    %p94 = por %p92, %p93
    %p95 = scmp.ne.s32.totalorder %s87, %s89
    %p96 = scmp.eq.s32.totalorder %s16, 1
    %p97 = por %p95, %p96
    %p98 = scmp.ne.s32.totalorder %s89, %s90
    %p99 = scmp.eq.s32.totalorder %s16, 0
    %p100 = por %p98, %p99
    %p101 = scmp.ne.s32.totalorder %s89, %s90
    %p102 = scmp.eq.s32.totalorder %s17, 1
    %p103 = por %p101, %p102
    %p105 = scmp.ne.s32.totalorder %s90, %s104
    %p106 = scmp.eq.s32.totalorder %s17, 0
    %p107 = por %p105, %p106
    %s109 = sadd.s32 %s108, 1
    %p112 = scmp.eq.s32.totalorder %s11, 1
    %p113 = scmp.ne.s32.totalorder %s108, %s110
    %p114 = scmp.eq.s32.totalorder %s11, 0
    %p115 = por %p113, %p114
    %p116 = scmp.ne.s32.totalorder %s108, %s110
    %p117 = scmp.eq.s32.totalorder %s16, 1
    %p118 = por %p116, %p117
    %p119 = scmp.ne.s32.totalorder %s110, %s111
    %p120 = scmp.eq.s32.totalorder %s16, 0
    %p121 = por %p119, %p120
    %p122 = scmp.ne.s32.totalorder %s110, %s111
    %p123 = scmp.eq.s32.totalorder %s17, 1
    %p124 = por %p122, %p123
    %p126 = scmp.ne.s32.totalorder %s111, %s125
    %p127 = scmp.eq.s32.totalorder %s17, 0
    %p128 = por %p126, %p127
    %s129 = ssub.s32 %s11, %s18
    %p130 = scmp.eq.s32.totalorder %s129, 0
    %s132 = sadd.s32 %s131, 1
    %s133 = scalar_select %p130, %s131, %s132
    %p136 = pneg %p130
    %p137 = scmp.eq.s32.totalorder %s11, 1
    %p138 = por %p136, %p137
    %p139 = scmp.ne.s32.totalorder %s131, %s134
    %p140 = scmp.eq.s32.totalorder %s11, 0
    %p141 = por %p139, %p140
    %p142 = scmp.ne.s32.totalorder %s131, %s134
    %p143 = scmp.eq.s32.totalorder %s16, 1
    %p144 = por %p142, %p143
    %p145 = scmp.ne.s32.totalorder %s134, %s135
    %p146 = scmp.eq.s32.totalorder %s16, 0
    %p147 = por %p145, %p146
    %p148 = scmp.ne.s32.totalorder %s134, %s135
    %p149 = scmp.eq.s32.totalorder %s17, 1
    %p150 = por %p148, %p149
    %p152 = scmp.ne.s32.totalorder %s135, %s151
    %p153 = scmp.eq.s32.totalorder %s17, 0
    %p154 = por %p152, %p153
    %p155 = scmp.le.s32.totalorder 1, %s11
    %p156 = scmp.lt.s32.totalorder %s11, 3
    %p157 = pnand %p155, %p156
    %p158 = pneg %p157
    // Predicated region
    $region9: #{basic_block_forward.1} parent=5 // pred_check
      _
    $region10: #{basic_block_forward.1} parent=5 // pred_check_branch
      %160 = sbr.rel (%p157) target = $region12
    $region11: #{basic_block_forward.1} parent=5 // pred_region
      %s161 = ssub.s32 %s11, 1
      // Predicated region
      $region13: #{basic_block_forward.1} parent=11 // pred_check
        %p162 = pneg %p58
      $region14: #{basic_block_forward.1} parent=11 // pred_check_branch
        %164 = sbr.rel (%p162) target = $region16
      $region15: #{basic_block_forward.1} parent=11 // pred_region
        _
      $region16: #{basic_block_forward.1} parent=11 // pred_fallthru
        _
      // Predicated region
      $region17: #{basic_block_forward.1} parent=11 // pred_check
        %p165 = pneg %p79
      $region18: #{basic_block_forward.1} parent=11 // pred_check_branch
        %167 = sbr.rel (%p165) target = $region20
      $region19: #{basic_block_forward.1} parent=11 // pred_region
        _
      $region20: #{basic_block_forward.1} parent=11 // pred_fallthru
        _
      // Predicated region
      $region21: #{basic_block_forward.1} parent=11 // pred_check
        %p168 = pneg %p100
      $region22: #{basic_block_forward.1} parent=11 // pred_check_branch
        %170 = sbr.rel (%p168) target = $region24
      $region23: #{basic_block_forward.1} parent=11 // pred_region
        _
      $region24: #{basic_block_forward.1} parent=11 // pred_fallthru
        _
      // Predicated region
      $region25: #{basic_block_forward.1} parent=11 // pred_check
        %p171 = pneg %p121
      $region26: #{basic_block_forward.1} parent=11 // pred_check_branch
        %173 = sbr.rel (%p171) target = $region28
      $region27: #{basic_block_forward.1} parent=11 // pred_region
        _
      $region28: #{basic_block_forward.1} parent=11 // pred_fallthru
        _
    $region12: #{basic_block_forward.1} parent=5 // pred_fallthru
      _
    %p174 = scmp.lt.s32.totalorder %s11, 2
    // Predicated region
    $region29: #{basic_block_forward.1} parent=5 // pred_check
      %p175 = pneg %p174
    $region30: #{basic_block_forward.1} parent=5 // pred_check_branch
      %177 = sbr.rel (%p175) target = $region32
    $region31: #{basic_block_forward.1} parent=5 // pred_region
      // Predicated region
      $region33: #{basic_block_forward.1} parent=31 // pred_check
        %p178 = pneg %p31
      $region34: #{basic_block_forward.1} parent=31 // pred_check_branch
        %180 = sbr.rel (%p178) target = $region36
      $region35: #{basic_block_forward.1} parent=31 // pred_region
        %p181 = scmp.lt.s32.totalorder %s11, 1
        %s182 = scalar_select %p181, %s11, 1
        %s183 = smul.addr %s182, 54
        %s184 = smul.addr %s183, 4
        %s185 = scalar_lea.vmem %s0, %s184
      $region36: #{basic_block_forward.1} parent=31 // pred_fallthru
        _
    $region32: #{basic_block_forward.1} parent=5 // pred_fallthru
      _
    %p186 = scmp.le.s32.totalorder 1, %s11
    %p187 = scmp.lt.s32.totalorder %s11, 3
    %p188 = pnand %p186, %p187
    %p189 = pneg %p188
    // Predicated region
    $region37: #{basic_block_forward.1} parent=5 // pred_check
      _
    $region38: #{basic_block_forward.1} parent=5 // pred_check_branch
      %191 = sbr.rel (%p188) target = $region40
    $region39: #{basic_block_forward.1} parent=5 // pred_region
      %s192 = ssub.s32 %s11, 1
      %p193 = scmp.lt.s32.totalorder %s16, 1
      %s194 = scalar_select %p193, %s16, 1
      %s195 = smul.addr %s194, 54
      %s196 = smul.addr %s195, 4
      %s197 = scalar_lea.vmem %s0, %s196
      %p198 = pneg %p37
      %p199 = pneg %p34
      %p200 = pneg %p58
      %p201 = pneg %p55
      %p202 = pneg %p79
      %p203 = pneg %p76
      %p204 = pneg %p100
      %p205 = pneg %p97
      %p206 = pneg %p121
      %p207 = pneg %p118
      %p208 = pneg %p147
      %p209 = pneg %p144
      %p210 = scmp.lt.s32.totalorder %s16, 1
      %s211 = scalar_select %p210, %s16, 1
      %s212 = smul.addr %s211, 32
      %s213 = smul.addr %s212, 8
      %s214 = scalar_lea.vmem %s5, %s213
      %p215 = scmp.lt.s32.totalorder %s16, 1
      %s216 = scalar_select %p215, %s16, 1
      %s217 = smul.addr %s216, 54
      %s218 = smul.addr %s217, 4
      %s219 = scalar_lea.vmem %s0, %s218
      %p220 = scmp.lt.s32.totalorder %s16, 1
      %s221 = scalar_select %p220, %s16, 1
      %s222 = smul.addr %s221, 32
      %s223 = smul.addr %s222, 8
      %s224 = scalar_lea.vmem %s5, %s223
      %v226 = vld [vmem:[%s219] sm:$0xf]
      %v227 = vld [vmem:[%s219 + $0x4] sm:$0xf]
      %v228 = vld [vmem:[%s219 + $0xc] sm:$0xf]
      %v229 = vld [vmem:[%s219 + $0x10] sm:$0xf]
      %v230 = vld [vmem:[%s219 + $0x18] sm:$0xf]
      %v231 = vld [vmem:[%s219 + $0x1c] sm:$0xf]
      %v232 = vld [vmem:[%s219 + $0x24] sm:$0xf]
      %v233 = vld [vmem:[%s219 + $0x28] sm:$0xf]
      %v234 = vld [vmem:[%s219 + $0x30] sm:$0xf]
      %v235 = vld [vmem:[%s219 + $0x34] sm:$0xf]
      %v236 = vld [vmem:[%s219 + $0x3c] sm:$0xf]
      %v237 = vld [vmem:[%s219 + $0x40] sm:$0xf]
      %v238 = vld [vmem:[%s219 + $0x48] sm:$0xf]
      %v239 = vld [vmem:[%s219 + $0x4c] sm:$0xf]
      %v240 = vld [vmem:[%s219 + $0x54] sm:$0xf]
      %v241 = vld [vmem:[%s219 + $0x58] sm:$0xf]
      %v242 = vld [vmem:[%s219 + $0x60] sm:$0xf]
      %v243 = vld [vmem:[%s219 + $0x64] sm:$0xf]
      %v244 = vld [vmem:[%s219 + $0x6c] sm:$0xf]
      %v245 = vld [vmem:[%s219 + $0x70] sm:$0xf]
      %v246 = vld [vmem:[%s219 + $0x78] sm:$0xf]
      %v247 = vld [vmem:[%s219 + $0x7c] sm:$0xf]
      %v248 = vld [vmem:[%s219 + $0x84] sm:$0xf]
      %v249 = vld [vmem:[%s219 + $0x88] sm:$0xf]
      %v250 = vld [vmem:[%s219 + $0x90] sm:$0xf]
      %v251 = vld [vmem:[%s219 + $0x94] sm:$0xf]
      %v252 = vld [vmem:[%s219 + $0x9c] sm:$0xf]
      %v253 = vld [vmem:[%s219 + $0xa0] sm:$0xf]
      %v254 = vld [vmem:[%s219 + $0xa8] sm:$0xf]
      %v255 = vld [vmem:[%s219 + $0xac] sm:$0xf]
      %v256 = vld [vmem:[%s219 + $0xb4] sm:$0xf]
      %v257 = vld [vmem:[%s219 + $0xb8] sm:$0xf]
      %v258 = vld [vmem:[%s1] sm:$0x3]
      %v259 = vld [vmem:[%s219 + $0x8] sm:$0x1]
      %v260 = vld [vmem:[%s219 + $0x14] sm:$0x1]
      %v261 = vld [vmem:[%s219 + $0x20] sm:$0x1]
      %v262 = vld [vmem:[%s219 + $0x2c] sm:$0x1]
      %v263 = vld [vmem:[%s219 + $0x38] sm:$0x1]
      %v264 = vld [vmem:[%s219 + $0x44] sm:$0x1]
      %v265 = vld [vmem:[%s219 + $0x50] sm:$0x1]
      %v266 = vld [vmem:[%s219 + $0x5c] sm:$0x1]
      %v267 = vld [vmem:[%s219 + $0x68] sm:$0x1]
      %v268 = vld [vmem:[%s219 + $0x74] sm:$0x1]
      %v269 = vld [vmem:[%s219 + $0x80] sm:$0x1]
      %v270 = vld [vmem:[%s219 + $0x8c] sm:$0x1]
      %v271 = vld [vmem:[%s219 + $0x98] sm:$0x1]
      %v272 = vld [vmem:[%s219 + $0xa4] sm:$0x1]
      %v273 = vld [vmem:[%s219 + $0xb0] sm:$0x1]
      %v274 = vld [vmem:[%s219 + $0xbc] sm:$0x1]
      %vm275 = vsmask.f32 3328
      %vm276 = vsmask.f32 7440
      %vm277 = vmor %vm275, %vm276
      %v279 = vshrl.u32 %v226, 16
      %v281 = vrot.slane %v279, 4
      %v282 = vshll.u32 %v226, 16
      %v284 = vrot.slane %v282, 5
      %v285 = vor.u32 %v281, %v284
      %v286 = vrot.slane %v285, 4
      %v288 = vshll.u32 %v227, 16
      %v290 = vrot.slane %v288, 5
      %v291 = vsel %vm277, %v286, %v290
      %v292 = vshrl.u32 %v227, 16
      %v294 = vrot.slane %v292, 4
      %v295 = vor.u32 %v294, %v290
      %v296 = vrot.slane %v295, 4
      %v298 = vshll.u32 %v259, 16
      %v300 = vrot.slane %v298, 5
      %v301 = vsel %vm277, %v296, %v300
      %v303 = vshrl.u32 %v228, 16
      %v305 = vrot.slane %v303, 4
      %v306 = vshll.u32 %v228, 16
      %v308 = vrot.slane %v306, 5
      %v309 = vor.u32 %v305, %v308
      %v310 = vrot.slane %v309, 4
      %v312 = vshll.u32 %v229, 16
      %v314 = vrot.slane %v312, 5
      %v315 = vsel %vm277, %v310, %v314
      %v316 = vshrl.u32 %v229, 16
      %v318 = vrot.slane %v316, 4
      %v319 = vor.u32 %v318, %v314
      %v320 = vrot.slane %v319, 4
      %v322 = vshll.u32 %v260, 16
      %v324 = vrot.slane %v322, 5
      %v325 = vsel %vm277, %v320, %v324
      %v327 = vshrl.u32 %v230, 16
      %v329 = vrot.slane %v327, 4
      %v330 = vshll.u32 %v230, 16
      %v332 = vrot.slane %v330, 5
      %v333 = vor.u32 %v329, %v332
      %v334 = vrot.slane %v333, 4
      %v336 = vshll.u32 %v231, 16
      %v338 = vrot.slane %v336, 5
      %v339 = vsel %vm277, %v334, %v338
      %v340 = vshrl.u32 %v231, 16
      %v342 = vrot.slane %v340, 4
      %v343 = vor.u32 %v342, %v338
      %v344 = vrot.slane %v343, 4
      %v346 = vshll.u32 %v261, 16
      %v348 = vrot.slane %v346, 5
      %v349 = vsel %vm277, %v344, %v348
      %v351 = vshrl.u32 %v232, 16
      %v353 = vrot.slane %v351, 4
      %v354 = vshll.u32 %v232, 16
      %v356 = vrot.slane %v354, 5
      %v357 = vor.u32 %v353, %v356
      %v358 = vrot.slane %v357, 4
      %v360 = vshll.u32 %v233, 16
      %v362 = vrot.slane %v360, 5
      %v363 = vsel %vm277, %v358, %v362
      %v364 = vshrl.u32 %v233, 16
      %v366 = vrot.slane %v364, 4
      %v367 = vor.u32 %v366, %v362
      %v368 = vrot.slane %v367, 4
      %v370 = vshll.u32 %v262, 16
      %v372 = vrot.slane %v370, 5
      %v373 = vsel %vm277, %v368, %v372
      %v375 = vshrl.u32 %v234, 16
      %v377 = vrot.slane %v375, 4
      %v378 = vshll.u32 %v234, 16
      %v380 = vrot.slane %v378, 5
      %v381 = vor.u32 %v377, %v380
      %v382 = vrot.slane %v381, 4
      %v384 = vshll.u32 %v235, 16
      %v386 = vrot.slane %v384, 5
      %v387 = vsel %vm277, %v382, %v386
      %v388 = vshrl.u32 %v235, 16
      %v390 = vrot.slane %v388, 4
      %v391 = vor.u32 %v390, %v386
      %v392 = vrot.slane %v391, 4
      %v394 = vshll.u32 %v263, 16
      %v396 = vrot.slane %v394, 5
      %v397 = vsel %vm277, %v392, %v396
      %v399 = vshrl.u32 %v236, 16
      %v401 = vrot.slane %v399, 4
      %v402 = vshll.u32 %v236, 16
      %v404 = vrot.slane %v402, 5
      %v405 = vor.u32 %v401, %v404
      %v406 = vrot.slane %v405, 4
      %v408 = vshll.u32 %v237, 16
      %v410 = vrot.slane %v408, 5
      %v411 = vsel %vm277, %v406, %v410
      %v412 = vshrl.u32 %v237, 16
      %v414 = vrot.slane %v412, 4
      %v415 = vor.u32 %v414, %v410
      %v416 = vrot.slane %v415, 4
      %v418 = vshll.u32 %v264, 16
      %v420 = vrot.slane %v418, 5
      %v421 = vsel %vm277, %v416, %v420
      %v423 = vshrl.u32 %v238, 16
      %v425 = vrot.slane %v423, 4
      %v426 = vshll.u32 %v238, 16
      %v428 = vrot.slane %v426, 5
      %v429 = vor.u32 %v425, %v428
      %v430 = vrot.slane %v429, 4
      %v432 = vshll.u32 %v239, 16
      %v434 = vrot.slane %v432, 5
      %v435 = vsel %vm277, %v430, %v434
      %v436 = vshrl.u32 %v239, 16
      %v438 = vrot.slane %v436, 4
      %v439 = vor.u32 %v438, %v434
      %v440 = vrot.slane %v439, 4
      %v442 = vshll.u32 %v265, 16
      %v444 = vrot.slane %v442, 5
      %v445 = vsel %vm277, %v440, %v444
      %v447 = vshrl.u32 %v240, 16
      %v449 = vrot.slane %v447, 4
      %v450 = vshll.u32 %v240, 16
      %v452 = vrot.slane %v450, 5
      %v453 = vor.u32 %v449, %v452
      %v454 = vrot.slane %v453, 4
      %v456 = vshll.u32 %v241, 16
      %v458 = vrot.slane %v456, 5
      %v459 = vsel %vm277, %v454, %v458
      %v460 = vshrl.u32 %v241, 16
      %v462 = vrot.slane %v460, 4
      %v463 = vor.u32 %v462, %v458
      %v464 = vrot.slane %v463, 4
      %v466 = vshll.u32 %v266, 16
      %v468 = vrot.slane %v466, 5
      %v469 = vsel %vm277, %v464, %v468
      %v471 = vshrl.u32 %v242, 16
      %v473 = vrot.slane %v471, 4
      %v474 = vshll.u32 %v242, 16
      %v476 = vrot.slane %v474, 5
      %v477 = vor.u32 %v473, %v476
      %v478 = vrot.slane %v477, 4
      %v480 = vshll.u32 %v243, 16
      %v482 = vrot.slane %v480, 5
      %v483 = vsel %vm277, %v478, %v482
      %v484 = vshrl.u32 %v243, 16
      %v486 = vrot.slane %v484, 4
      %v487 = vor.u32 %v486, %v482
      %v488 = vrot.slane %v487, 4
      %v490 = vshll.u32 %v267, 16
      %v492 = vrot.slane %v490, 5
      %v493 = vsel %vm277, %v488, %v492
      %v495 = vshrl.u32 %v244, 16
      %v497 = vrot.slane %v495, 4
      %v498 = vshll.u32 %v244, 16
      %v500 = vrot.slane %v498, 5
      %v501 = vor.u32 %v497, %v500
      %v502 = vrot.slane %v501, 4
      %v504 = vshll.u32 %v245, 16
      %v506 = vrot.slane %v504, 5
      %v507 = vsel %vm277, %v502, %v506
      %v508 = vshrl.u32 %v245, 16
      %v510 = vrot.slane %v508, 4
      %v511 = vor.u32 %v510, %v506
      %v512 = vrot.slane %v511, 4
      %v514 = vshll.u32 %v268, 16
      %v516 = vrot.slane %v514, 5
      %v517 = vsel %vm277, %v512, %v516
      %v519 = vshrl.u32 %v246, 16
      %v521 = vrot.slane %v519, 4
      %v522 = vshll.u32 %v246, 16
      %v524 = vrot.slane %v522, 5
      %v525 = vor.u32 %v521, %v524
      %v526 = vrot.slane %v525, 4
      %v528 = vshll.u32 %v247, 16
      %v530 = vrot.slane %v528, 5
      %v531 = vsel %vm277, %v526, %v530
      %v532 = vshrl.u32 %v247, 16
      %v534 = vrot.slane %v532, 4
      %v535 = vor.u32 %v534, %v530
      %v536 = vrot.slane %v535, 4
      %v538 = vshll.u32 %v269, 16
      %v540 = vrot.slane %v538, 5
      %v541 = vsel %vm277, %v536, %v540
      %v543 = vshrl.u32 %v248, 16
      %v545 = vrot.slane %v543, 4
      %v546 = vshll.u32 %v248, 16
      %v548 = vrot.slane %v546, 5
      %v549 = vor.u32 %v545, %v548
      %v550 = vrot.slane %v549, 4
      %v552 = vshll.u32 %v249, 16
      %v554 = vrot.slane %v552, 5
      %v555 = vsel %vm277, %v550, %v554
      %v556 = vshrl.u32 %v249, 16
      %v558 = vrot.slane %v556, 4
      %v559 = vor.u32 %v558, %v554
      %v560 = vrot.slane %v559, 4
      %v562 = vshll.u32 %v270, 16
      %v564 = vrot.slane %v562, 5
      %v565 = vsel %vm277, %v560, %v564
      %v567 = vshrl.u32 %v250, 16
      %v569 = vrot.slane %v567, 4
      %v570 = vshll.u32 %v250, 16
      %v572 = vrot.slane %v570, 5
      %v573 = vor.u32 %v569, %v572
      %v574 = vrot.slane %v573, 4
      %v576 = vshll.u32 %v251, 16
      %v578 = vrot.slane %v576, 5
      %v579 = vsel %vm277, %v574, %v578
      %v580 = vshrl.u32 %v251, 16
      %v582 = vrot.slane %v580, 4
      %v583 = vor.u32 %v582, %v578
      %v584 = vrot.slane %v583, 4
      %v586 = vshll.u32 %v271, 16
      %v588 = vrot.slane %v586, 5
      %v589 = vsel %vm277, %v584, %v588
      %v591 = vshrl.u32 %v252, 16
      %v593 = vrot.slane %v591, 4
      %v594 = vshll.u32 %v252, 16
      %v596 = vrot.slane %v594, 5
      %v597 = vor.u32 %v593, %v596
      %v598 = vrot.slane %v597, 4
      %v600 = vshll.u32 %v253, 16
      %v602 = vrot.slane %v600, 5
      %v603 = vsel %vm277, %v598, %v602
      %v604 = vshrl.u32 %v253, 16
      %v606 = vrot.slane %v604, 4
      %v607 = vor.u32 %v606, %v602
      %v608 = vrot.slane %v607, 4
      %v610 = vshll.u32 %v272, 16
      %v612 = vrot.slane %v610, 5
      %v613 = vsel %vm277, %v608, %v612
      %v615 = vshrl.u32 %v254, 16
      %v617 = vrot.slane %v615, 4
      %v618 = vshll.u32 %v254, 16
      %v620 = vrot.slane %v618, 5
      %v621 = vor.u32 %v617, %v620
      %v622 = vrot.slane %v621, 4
      %v624 = vshll.u32 %v255, 16
      %v626 = vrot.slane %v624, 5
      %v627 = vsel %vm277, %v622, %v626
      %v628 = vshrl.u32 %v255, 16
      %v630 = vrot.slane %v628, 4
      %v631 = vor.u32 %v630, %v626
      %v632 = vrot.slane %v631, 4
      %v634 = vshll.u32 %v273, 16
      %v636 = vrot.slane %v634, 5
      %v637 = vsel %vm277, %v632, %v636
      %v639 = vshrl.u32 %v256, 16
      %v641 = vrot.slane %v639, 4
      %v642 = vshll.u32 %v256, 16
      %v644 = vrot.slane %v642, 5
      %v645 = vor.u32 %v641, %v644
      %v646 = vrot.slane %v645, 4
      %v648 = vshll.u32 %v257, 16
      %v650 = vrot.slane %v648, 5
      %v651 = vsel %vm277, %v646, %v650
      %v652 = vshrl.u32 %v257, 16
      %v654 = vrot.slane %v652, 4
      %v655 = vor.u32 %v654, %v650
      %v656 = vrot.slane %v655, 4
      %v658 = vshll.u32 %v274, 16
      %v660 = vrot.slane %v658, 5
      %v661 = vsel %vm277, %v656, %v660
      %s662 = scalar_lea.vmem %s1, 2
      %v663 = vld [vmem:[%s662] sm:$0x3]
      %v664 = vunpack.c.l.b16 %v291
      %v665 = vunpack.c.l.b16 %v301
      %v666 = vunpack.c.l.b16 %v315
      %v667 = vunpack.c.l.b16 %v325
      %v668 = vunpack.c.l.b16 %v339
      %v669 = vunpack.c.l.b16 %v349
      %v670 = vunpack.c.l.b16 %v363
      %v671 = vunpack.c.l.b16 %v373
      %v672 = vunpack.c.l.b16 %v387
      %v673 = vunpack.c.l.b16 %v397
      %v674 = vunpack.c.l.b16 %v411
      %v675 = vunpack.c.l.b16 %v421
      %v676 = vunpack.c.l.b16 %v435
      %v677 = vunpack.c.l.b16 %v445
      %v678 = vunpack.c.l.b16 %v459
      %v679 = vunpack.c.l.b16 %v469
      %v680 = vunpack.c.l.b16 %v483
      %v681 = vunpack.c.l.b16 %v493
      %v682 = vunpack.c.l.b16 %v507
      %v683 = vunpack.c.l.b16 %v517
      %v684 = vunpack.c.l.b16 %v531
      %v685 = vunpack.c.l.b16 %v541
      %v686 = vunpack.c.l.b16 %v555
      %v687 = vunpack.c.l.b16 %v565
      %v688 = vunpack.c.l.b16 %v579
      %v689 = vunpack.c.l.b16 %v589
      %v690 = vunpack.c.l.b16 %v603
      %v691 = vunpack.c.l.b16 %v613
      %v692 = vunpack.c.l.b16 %v627
      %v693 = vunpack.c.l.b16 %v637
      %v694 = vunpack.c.l.b16 %v651
      %v695 = vunpack.c.l.b16 %v661
      %v696 = vpack.c.b16 %v665, %v664
      %v697 = vpack.c.b16 %v667, %v666
      %v698 = vpack.c.b16 %v669, %v668
      %v699 = vpack.c.b16 %v671, %v670
      %v700 = vpack.c.b16 %v673, %v672
      %v701 = vpack.c.b16 %v675, %v674
      %v702 = vpack.c.b16 %v677, %v676
      %v703 = vpack.c.b16 %v679, %v678
      %v704 = vpack.c.b16 %v681, %v680
      %v705 = vpack.c.b16 %v683, %v682
      %v706 = vpack.c.b16 %v685, %v684
      %v707 = vpack.c.b16 %v687, %v686
      %v708 = vpack.c.b16 %v689, %v688
      %v709 = vpack.c.b16 %v691, %v690
      %v710 = vpack.c.b16 %v693, %v692
      %v711 = vpack.c.b16 %v695, %v694
      %vm712 = vcmask 31744
      %v714 = vsel %vm712, %v696, 0
      %v717 = vsel %vm712, %v697, 0
      %v720 = vsel %vm712, %v698, 0
      %v723 = vsel %vm712, %v699, 0
      %v726 = vsel %vm712, %v700, 0
      %v729 = vsel %vm712, %v701, 0
      %v732 = vsel %vm712, %v702, 0
      %v735 = vsel %vm712, %v703, 0
      %v738 = vsel %vm712, %v704, 0
      %v741 = vsel %vm712, %v705, 0
      %v744 = vsel %vm712, %v706, 0
      %v747 = vsel %vm712, %v707, 0
      %v750 = vsel %vm712, %v708, 0
      %v753 = vsel %vm712, %v709, 0
      %v756 = vsel %vm712, %v710, 0
      %v759 = vsel %vm712, %v711, 0
      %vm761 = vcmask 1041408
      %v763 = vsel %vm761, %v663, 0
      %765 = vmatprep.subr.bf16.mxu0 0
      %766 = vmatpush1.bf16.msra.mxu0 %v763
      %767 = vmatprep.subr.bf16.mxu0 0
      %768 = vmatpush1.bf16.msra.mxu0 0
      %769 = vmatprep.subr.bf16.mxu0 0
      %770 = vmatpush1.bf16.msra.mxu0 0
      %771 = vmatprep.subr.bf16.mxu0 0
      %772 = vmatpush1.bf16.msra.mxu0 0
      %773 = vmatprep.subr.bf16.mxu0 0
      %774 = vmatpush1.bf16.msra.mxu0 0
      %775 = vmatprep.subr.bf16.mxu0 0
      %776 = vmatpush1.bf16.msra.mxu0 0
      %777 = vmatprep.subr.bf16.mxu0 0
      %778 = vmatpush1.bf16.msra.mxu0 0
      %779 = vmatprep.subr.bf16.mxu0 0
      %780 = vmatpush1.bf16.msra.mxu0 0
      %781 = vmatprep.subr.bf16.mxu0 0
      %782 = vmatpush1.bf16.msra.mxu0 0
      %783 = vmatprep.subr.bf16.mxu0 0
      %784 = vmatpush1.bf16.msra.mxu0 0
      %785 = vmatprep.subr.bf16.mxu0 0
      %786 = vmatpush1.bf16.msra.mxu0 0
      %787 = vmatprep.subr.bf16.mxu0 0
      %788 = vmatpush1.bf16.msra.mxu0 0
      %789 = vmatprep.subr.bf16.mxu0 0
      %790 = vmatpush1.bf16.msra.mxu0 0
      %791 = vmatprep.subr.bf16.mxu0 0
      %792 = vmatpush1.bf16.msra.mxu0 0
      %793 = vmatprep.subr.bf16.mxu0 0
      %794 = vmatpush1.bf16.msra.mxu0 0
      %795 = vmatprep.subr.bf16.mxu0 0
      %796 = vmatpush1.bf16.msra.mxu0 0
      %797 = vmatprep.mubr.bf16.mxu0 0
      %798 = vmatmul.mubr.bf16.gmra.mrb[0].mxu0 %v714
      %v799 = vpop.f32.mrb[0].mxu0
      %v800 = vadd.f32 0.0, %v799
      %v801 = vpop.f32.mrb[0].mxu0
      %v802 = vpop.f32.mrb[0].mxu0
      %v803 = vadd.f32 0.0, %v802
      %v804 = vpop.f32.mrb[0].mxu0
      %805 = vmatprep.mubr.bf16.mxu0 0
      %806 = vmatmul.mubr.bf16.gmra.mrb[0].mxu0 %v717
      %v807 = vpop.f32.mrb[0].mxu0
      %v808 = vadd.f32 0.0, %v807
      %v809 = vpop.f32.mrb[0].mxu0
      %v810 = vpop.f32.mrb[0].mxu0
      %v811 = vadd.f32 0.0, %v810
      %v812 = vpop.f32.mrb[0].mxu0
      %813 = vmatprep.mubr.bf16.mxu0 0
      %814 = vmatmul.mubr.bf16.gmra.mrb[0].mxu0 %v720
      %v815 = vpop.f32.mrb[0].mxu0
      %v816 = vadd.f32 0.0, %v815
      %v817 = vpop.f32.mrb[0].mxu0
      %v818 = vpop.f32.mrb[0].mxu0
      %v819 = vadd.f32 0.0, %v818
      %v820 = vpop.f32.mrb[0].mxu0
      %821 = vmatprep.mubr.bf16.mxu0 0
      %822 = vmatmul.mubr.bf16.gmra.mrb[0].mxu0 %v723
      %v823 = vpop.f32.mrb[0].mxu0
      %v824 = vadd.f32 0.0, %v823
      %v825 = vpop.f32.mrb[0].mxu0
      %v826 = vpop.f32.mrb[0].mxu0
      %v827 = vadd.f32 0.0, %v826
      %v828 = vpop.f32.mrb[0].mxu0
      %829 = vmatprep.mubr.bf16.mxu0 0
      %830 = vmatmul.mubr.bf16.gmra.mrb[0].mxu0 %v726
      %v831 = vpop.f32.mrb[0].mxu0
      %v832 = vadd.f32 0.0, %v831
      %v833 = vpop.f32.mrb[0].mxu0
      %v834 = vpop.f32.mrb[0].mxu0
      %v835 = vadd.f32 0.0, %v834
      %v836 = vpop.f32.mrb[0].mxu0
      %837 = vmatprep.mubr.bf16.mxu0 0
      %838 = vmatmul.mubr.bf16.gmra.mrb[0].mxu0 %v729
      %v839 = vpop.f32.mrb[0].mxu0
      %v840 = vadd.f32 0.0, %v839
      %v841 = vpop.f32.mrb[0].mxu0
      %v842 = vpop.f32.mrb[0].mxu0
      %v843 = vadd.f32 0.0, %v842
      %v844 = vpop.f32.mrb[0].mxu0
      %845 = vmatprep.mubr.bf16.mxu0 0
      %846 = vmatmul.mubr.bf16.gmra.mrb[0].mxu0 %v732
      %v847 = vpop.f32.mrb[0].mxu0
      %v848 = vadd.f32 0.0, %v847
      %v849 = vpop.f32.mrb[0].mxu0
      %v850 = vpop.f32.mrb[0].mxu0
      %v851 = vadd.f32 0.0, %v850
      %v852 = vpop.f32.mrb[0].mxu0
      %853 = vmatprep.mubr.bf16.mxu0 0
      %854 = vmatmul.mubr.bf16.gmra.mrb[0].mxu0 %v735
      %v855 = vpop.f32.mrb[0].mxu0
      %v856 = vadd.f32 0.0, %v855
      %v857 = vpop.f32.mrb[0].mxu0
      %v858 = vpop.f32.mrb[0].mxu0
      %v859 = vadd.f32 0.0, %v858
      %v860 = vpop.f32.mrb[0].mxu0
      %861 = vmatprep.mubr.bf16.mxu0 0
      %862 = vmatmul.mubr.bf16.gmra.mrb[0].mxu0 %v738
      %v863 = vpop.f32.mrb[0].mxu0
      %v864 = vadd.f32 0.0, %v863
      %v865 = vpop.f32.mrb[0].mxu0
      %v866 = vpop.f32.mrb[0].mxu0
      %v867 = vadd.f32 0.0, %v866
      %v868 = vpop.f32.mrb[0].mxu0
      %869 = vmatprep.mubr.bf16.mxu0 0
      %870 = vmatmul.mubr.bf16.gmra.mrb[0].mxu0 %v741
      %v871 = vpop.f32.mrb[0].mxu0
      %v872 = vadd.f32 0.0, %v871
      %v873 = vpop.f32.mrb[0].mxu0
      %v874 = vpop.f32.mrb[0].mxu0
      %v875 = vadd.f32 0.0, %v874
      %v876 = vpop.f32.mrb[0].mxu0
      %877 = vmatprep.mubr.bf16.mxu0 0
      %878 = vmatmul.mubr.bf16.gmra.mrb[0].mxu0 %v744
      %v879 = vpop.f32.mrb[0].mxu0
      %v880 = vadd.f32 0.0, %v879
      %v881 = vpop.f32.mrb[0].mxu0
      %v882 = vpop.f32.mrb[0].mxu0
      %v883 = vadd.f32 0.0, %v882
      %v884 = vpop.f32.mrb[0].mxu0
      %885 = vmatprep.mubr.bf16.mxu0 0
      %886 = vmatmul.mubr.bf16.gmra.mrb[0].mxu0 %v747
      %v887 = vpop.f32.mrb[0].mxu0
      %v888 = vadd.f32 0.0, %v887
      %v889 = vpop.f32.mrb[0].mxu0
      %v890 = vpop.f32.mrb[0].mxu0
      %v891 = vadd.f32 0.0, %v890
      %v892 = vpop.f32.mrb[0].mxu0
      %893 = vmatprep.mubr.bf16.mxu0 0
      %894 = vmatmul.mubr.bf16.gmra.mrb[0].mxu0 %v750
      %v895 = vpop.f32.mrb[0].mxu0
      %v896 = vadd.f32 0.0, %v895
      %v897 = vpop.f32.mrb[0].mxu0
      %v898 = vpop.f32.mrb[0].mxu0
      %v899 = vadd.f32 0.0, %v898
      %v900 = vpop.f32.mrb[0].mxu0
      %901 = vmatprep.mubr.bf16.mxu0 0
      %902 = vmatmul.mubr.bf16.gmra.mrb[0].mxu0 %v753
      %v903 = vpop.f32.mrb[0].mxu0
      %v904 = vadd.f32 0.0, %v903
      %v905 = vpop.f32.mrb[0].mxu0
      %v906 = vpop.f32.mrb[0].mxu0
      %v907 = vadd.f32 0.0, %v906
      %v908 = vpop.f32.mrb[0].mxu0
      %909 = vmatprep.mubr.bf16.mxu0 0
      %910 = vmatmul.mubr.bf16.gmra.mrb[0].mxu0 %v756
      %v911 = vpop.f32.mrb[0].mxu0
      %v912 = vadd.f32 0.0, %v911
      %v913 = vpop.f32.mrb[0].mxu0
      %v914 = vpop.f32.mrb[0].mxu0
      %v915 = vadd.f32 0.0, %v914
      %v916 = vpop.f32.mrb[0].mxu0
      %917 = vmatprep.mubr.bf16.mxu0 0
      %918 = vmatmul.mubr.bf16.gmra.mrb[0].mxu0 %v759
      %v919 = vpop.f32.mrb[0].mxu0
      %v920 = vadd.f32 0.0, %v919
      %v921 = vpop.f32.mrb[0].mxu0
      %v922 = vpop.f32.mrb[0].mxu0
      %v923 = vadd.f32 0.0, %v922
      %v924 = vpop.f32.mrb[0].mxu0
      %925 = vdwg.mxu0
      %v958 = vunpack.c.l.b16 %v226
      %v959 = vunpack.c.l.b16 %v227
      %v960 = vunpack.c.l.b16 %v228
      %v961 = vunpack.c.l.b16 %v229
      %v962 = vunpack.c.l.b16 %v230
      %v963 = vunpack.c.l.b16 %v231
      %v964 = vunpack.c.l.b16 %v232
      %v965 = vunpack.c.l.b16 %v233
      %v966 = vunpack.c.l.b16 %v234
      %v967 = vunpack.c.l.b16 %v235
      %v968 = vunpack.c.l.b16 %v236
      %v969 = vunpack.c.l.b16 %v237
      %v970 = vunpack.c.l.b16 %v238
      %v971 = vunpack.c.l.b16 %v239
      %v972 = vunpack.c.l.b16 %v240
      %v973 = vunpack.c.l.b16 %v241
      %v974 = vunpack.c.l.b16 %v242
      %v975 = vunpack.c.l.b16 %v243
      %v976 = vunpack.c.l.b16 %v244
      %v977 = vunpack.c.l.b16 %v245
      %v978 = vunpack.c.l.b16 %v246
      %v979 = vunpack.c.l.b16 %v247
      %v980 = vunpack.c.l.b16 %v248
      %v981 = vunpack.c.l.b16 %v249
      %v982 = vunpack.c.l.b16 %v250
      %v983 = vunpack.c.l.b16 %v251
      %v984 = vunpack.c.l.b16 %v252
      %v985 = vunpack.c.l.b16 %v253
      %v986 = vunpack.c.l.b16 %v254
      %v987 = vunpack.c.l.b16 %v255
      %v988 = vunpack.c.l.b16 %v256
      %v989 = vunpack.c.l.b16 %v257
      %v990 = vpack.c.b16 %v959, %v958
      %v991 = vpack.c.b16 %v961, %v960
      %v992 = vpack.c.b16 %v963, %v962
      %v993 = vpack.c.b16 %v965, %v964
      %v994 = vpack.c.b16 %v967, %v966
      %v995 = vpack.c.b16 %v969, %v968
      %v996 = vpack.c.b16 %v971, %v970
      %v997 = vpack.c.b16 %v973, %v972
      %v998 = vpack.c.b16 %v975, %v974
      %v999 = vpack.c.b16 %v977, %v976
      %v1000 = vpack.c.b16 %v979, %v978
      %v1001 = vpack.c.b16 %v981, %v980
      %v1002 = vpack.c.b16 %v983, %v982
      %v1003 = vpack.c.b16 %v985, %v984
      %v1004 = vpack.c.b16 %v987, %v986
      %v1005 = vpack.c.b16 %v989, %v988
      %v1007 = vsel %vm712, %v990, 0
      %v1010 = vsel %vm712, %v991, 0
      %v1013 = vsel %vm712, %v992, 0
      %v1016 = vsel %vm712, %v993, 0
      %v1019 = vsel %vm712, %v994, 0
      %v1022 = vsel %vm712, %v995, 0
      %v1025 = vsel %vm712, %v996, 0
      %v1028 = vsel %vm712, %v997, 0
      %v1031 = vsel %vm712, %v998, 0
      %v1034 = vsel %vm712, %v999, 0
      %v1037 = vsel %vm712, %v1000, 0
      %v1040 = vsel %vm712, %v1001, 0
      %v1043 = vsel %vm712, %v1002, 0
      %v1046 = vsel %vm712, %v1003, 0
      %v1049 = vsel %vm712, %v1004, 0
      %v1052 = vsel %vm712, %v1005, 0
      %v1055 = vsel %vm761, %v258, 0
      %1057 = vmatprep.subr.bf16.mxu0 0
      %1058 = vmatpush1.bf16.msra.mxu0 %v1055
      %1059 = vmatprep.subr.bf16.mxu0 0
      %1060 = vmatpush1.bf16.msra.mxu0 0
      %1061 = vmatprep.subr.bf16.mxu0 0
      %1062 = vmatpush1.bf16.msra.mxu0 0
      %1063 = vmatprep.subr.bf16.mxu0 0
      %1064 = vmatpush1.bf16.msra.mxu0 0
      %1065 = vmatprep.subr.bf16.mxu0 0
      %1066 = vmatpush1.bf16.msra.mxu0 0
      %1067 = vmatprep.subr.bf16.mxu0 0
      %1068 = vmatpush1.bf16.msra.mxu0 0
      %1069 = vmatprep.subr.bf16.mxu0 0
      %1070 = vmatpush1.bf16.msra.mxu0 0
      %1071 = vmatprep.subr.bf16.mxu0 0
      %1072 = vmatpush1.bf16.msra.mxu0 0
      %1073 = vmatprep.subr.bf16.mxu0 0
      %1074 = vmatpush1.bf16.msra.mxu0 0
      %1075 = vmatprep.subr.bf16.mxu0 0
      %1076 = vmatpush1.bf16.msra.mxu0 0
      %1077 = vmatprep.subr.bf16.mxu0 0
      %1078 = vmatpush1.bf16.msra.mxu0 0
      %1079 = vmatprep.subr.bf16.mxu0 0
      %1080 = vmatpush1.bf16.msra.mxu0 0
      %1081 = vmatprep.subr.bf16.mxu0 0
      %1082 = vmatpush1.bf16.msra.mxu0 0
      %1083 = vmatprep.subr.bf16.mxu0 0
      %1084 = vmatpush1.bf16.msra.mxu0 0
      %1085 = vmatprep.subr.bf16.mxu0 0
      %1086 = vmatpush1.bf16.msra.mxu0 0
      %1087 = vmatprep.subr.bf16.mxu0 0
      %1088 = vmatpush1.bf16.msra.mxu0 0
      %1089 = vmatprep.mubr.bf16.mxu0 0
      %1090 = vmatmul.mubr.bf16.gmra.mrb[0].mxu0 %v1007
      %v1091 = vpop.f32.mrb[0].mxu0
      %v1092 = vadd.f32 %v800, %v1091
      %v1093 = vpop.f32.mrb[0].mxu0
      %v1094 = vpop.f32.mrb[0].mxu0
      %v1095 = vadd.f32 %v803, %v1094
      %v1096 = vpop.f32.mrb[0].mxu0
      %1097 = vmatprep.mubr.bf16.mxu0 0
      %1098 = vmatmul.mubr.bf16.gmra.mrb[0].mxu0 %v1010
      %v1099 = vpop.f32.mrb[0].mxu0
      %v1100 = vadd.f32 %v808, %v1099
      %v1101 = vpop.f32.mrb[0].mxu0
      %v1102 = vpop.f32.mrb[0].mxu0
      %v1103 = vadd.f32 %v811, %v1102
      %v1104 = vpop.f32.mrb[0].mxu0
      %1105 = vmatprep.mubr.bf16.mxu0 0
      %1106 = vmatmul.mubr.bf16.gmra.mrb[0].mxu0 %v1013
      %v1107 = vpop.f32.mrb[0].mxu0
      %v1108 = vadd.f32 %v816, %v1107
      %v1109 = vpop.f32.mrb[0].mxu0
      %v1110 = vpop.f32.mrb[0].mxu0
      %v1111 = vadd.f32 %v819, %v1110
      %v1112 = vpop.f32.mrb[0].mxu0
      %1113 = vmatprep.mubr.bf16.mxu0 0
      %1114 = vmatmul.mubr.bf16.gmra.mrb[0].mxu0 %v1016
      %v1115 = vpop.f32.mrb[0].mxu0
      %v1116 = vadd.f32 %v824, %v1115
      %v1117 = vpop.f32.mrb[0].mxu0
      %v1118 = vpop.f32.mrb[0].mxu0
      %v1119 = vadd.f32 %v827, %v1118
      %v1120 = vpop.f32.mrb[0].mxu0
      %1121 = vmatprep.mubr.bf16.mxu0 0
      %1122 = vmatmul.mubr.bf16.gmra.mrb[0].mxu0 %v1019
      %v1123 = vpop.f32.mrb[0].mxu0
      %v1124 = vadd.f32 %v832, %v1123
      %v1125 = vpop.f32.mrb[0].mxu0
      %v1126 = vpop.f32.mrb[0].mxu0
      %v1127 = vadd.f32 %v835, %v1126
      %v1128 = vpop.f32.mrb[0].mxu0
      %1129 = vmatprep.mubr.bf16.mxu0 0
      %1130 = vmatmul.mubr.bf16.gmra.mrb[0].mxu0 %v1022
      %v1131 = vpop.f32.mrb[0].mxu0
      %v1132 = vadd.f32 %v840, %v1131
      %v1133 = vpop.f32.mrb[0].mxu0
      %v1134 = vpop.f32.mrb[0].mxu0
      %v1135 = vadd.f32 %v843, %v1134
      %v1136 = vpop.f32.mrb[0].mxu0
      %1137 = vmatprep.mubr.bf16.mxu0 0
      %1138 = vmatmul.mubr.bf16.gmra.mrb[0].mxu0 %v1025
      %v1139 = vpop.f32.mrb[0].mxu0
      %v1140 = vadd.f32 %v848, %v1139
      %v1141 = vpop.f32.mrb[0].mxu0
      %v1142 = vpop.f32.mrb[0].mxu0
      %v1143 = vadd.f32 %v851, %v1142
      %v1144 = vpop.f32.mrb[0].mxu0
      %1145 = vmatprep.mubr.bf16.mxu0 0
      %1146 = vmatmul.mubr.bf16.gmra.mrb[0].mxu0 %v1028
      %v1147 = vpop.f32.mrb[0].mxu0
      %v1148 = vadd.f32 %v856, %v1147
      %v1149 = vpop.f32.mrb[0].mxu0
      %v1150 = vpop.f32.mrb[0].mxu0
      %v1151 = vadd.f32 %v859, %v1150
      %v1152 = vpop.f32.mrb[0].mxu0
      %1153 = vmatprep.mubr.bf16.mxu0 0
      %1154 = vmatmul.mubr.bf16.gmra.mrb[0].mxu0 %v1031
      %v1155 = vpop.f32.mrb[0].mxu0
      %v1156 = vadd.f32 %v864, %v1155
      %v1157 = vpop.f32.mrb[0].mxu0
      %v1158 = vpop.f32.mrb[0].mxu0
      %v1159 = vadd.f32 %v867, %v1158
      %v1160 = vpop.f32.mrb[0].mxu0
      %1161 = vmatprep.mubr.bf16.mxu0 0
      %1162 = vmatmul.mubr.bf16.gmra.mrb[0].mxu0 %v1034
      %v1163 = vpop.f32.mrb[0].mxu0
      %v1164 = vadd.f32 %v872, %v1163
      %v1165 = vpop.f32.mrb[0].mxu0
      %v1166 = vpop.f32.mrb[0].mxu0
      %v1167 = vadd.f32 %v875, %v1166
      %v1168 = vpop.f32.mrb[0].mxu0
      %1169 = vmatprep.mubr.bf16.mxu0 0
      %1170 = vmatmul.mubr.bf16.gmra.mrb[0].mxu0 %v1037
      %v1171 = vpop.f32.mrb[0].mxu0
      %v1172 = vadd.f32 %v880, %v1171
      %v1173 = vpop.f32.mrb[0].mxu0
      %v1174 = vpop.f32.mrb[0].mxu0
      %v1175 = vadd.f32 %v883, %v1174
      %v1176 = vpop.f32.mrb[0].mxu0
      %1177 = vmatprep.mubr.bf16.mxu0 0
      %1178 = vmatmul.mubr.bf16.gmra.mrb[0].mxu0 %v1040
      %v1179 = vpop.f32.mrb[0].mxu0
      %v1180 = vadd.f32 %v888, %v1179
      %v1181 = vpop.f32.mrb[0].mxu0
      %v1182 = vpop.f32.mrb[0].mxu0
      %v1183 = vadd.f32 %v891, %v1182
      %v1184 = vpop.f32.mrb[0].mxu0
      %1185 = vmatprep.mubr.bf16.mxu0 0
      %1186 = vmatmul.mubr.bf16.gmra.mrb[0].mxu0 %v1043
      %v1187 = vpop.f32.mrb[0].mxu0
      %v1188 = vadd.f32 %v896, %v1187
      %v1189 = vpop.f32.mrb[0].mxu0
      %v1190 = vpop.f32.mrb[0].mxu0
      %v1191 = vadd.f32 %v899, %v1190
      %v1192 = vpop.f32.mrb[0].mxu0
      %1193 = vmatprep.mubr.bf16.mxu0 0
      %1194 = vmatmul.mubr.bf16.gmra.mrb[0].mxu0 %v1046
      %v1195 = vpop.f32.mrb[0].mxu0
      %v1196 = vadd.f32 %v904, %v1195
      %v1197 = vpop.f32.mrb[0].mxu0
      %v1198 = vpop.f32.mrb[0].mxu0
      %v1199 = vadd.f32 %v907, %v1198
      %v1200 = vpop.f32.mrb[0].mxu0
      %1201 = vmatprep.mubr.bf16.mxu0 0
      %1202 = vmatmul.mubr.bf16.gmra.mrb[0].mxu0 %v1049
      %v1203 = vpop.f32.mrb[0].mxu0
      %v1204 = vadd.f32 %v912, %v1203
      %v1205 = vpop.f32.mrb[0].mxu0
      %v1206 = vpop.f32.mrb[0].mxu0
      %v1207 = vadd.f32 %v915, %v1206
      %v1208 = vpop.f32.mrb[0].mxu0
      %1209 = vmatprep.mubr.bf16.mxu0 0
      %1210 = vmatmul.mubr.bf16.gmra.mrb[0].mxu0 %v1052
      %v1211 = vpop.f32.mrb[0].mxu0
      %v1212 = vadd.f32 %v920, %v1211
      %v1213 = vpop.f32.mrb[0].mxu0
      %v1214 = vpop.f32.mrb[0].mxu0
      %v1215 = vadd.f32 %v923, %v1214
      %v1216 = vpop.f32.mrb[0].mxu0
      %1217 = vdwg.mxu0
      %v1218 = vld [vmem:[%s219] sm:$0xe]
      %v1219 = vld [vmem:[%s219 + $0xc] sm:$0xe]
      %v1220 = vld [vmem:[%s219 + $0x18] sm:$0xe]
      %v1221 = vld [vmem:[%s219 + $0x24] sm:$0xe]
      %v1222 = vld [vmem:[%s219 + $0x30] sm:$0xe]
      %v1223 = vld [vmem:[%s219 + $0x3c] sm:$0xe]
      %v1224 = vld [vmem:[%s219 + $0x48] sm:$0xe]
      %v1225 = vld [vmem:[%s219 + $0x54] sm:$0xe]
      %v1226 = vld [vmem:[%s219 + $0x60] sm:$0xe]
      %v1227 = vld [vmem:[%s219 + $0x6c] sm:$0xe]
      %v1228 = vld [vmem:[%s219 + $0x78] sm:$0xe]
      %v1229 = vld [vmem:[%s219 + $0x84] sm:$0xe]
      %v1230 = vld [vmem:[%s219 + $0x90] sm:$0xe]
      %v1231 = vld [vmem:[%s219 + $0x9c] sm:$0xe]
      %v1232 = vld [vmem:[%s219 + $0xa8] sm:$0xe]
      %v1233 = vld [vmem:[%s219 + $0xb4] sm:$0xe]
      %vm1266 = vcmask 1042432
      %vm1267 = vcmask 1046532
      %vm1268 = vmor %vm1266, %vm1267
      %v1269 = vrot.slane %v1218, 5
      %v1270 = vrot.slane %v1269, 4
      %v1271 = vrot.slane %v227, 5
      %v1272 = vsel %vm1268, %v1270, %v1271
      %v1273 = vrot.slane %v1271, 4
      %v1274 = vrot.slane %v259, 5
      %v1275 = vsel %vm1268, %v1273, %v1274
      %v1276 = vrot.slane %v1219, 5
      %v1277 = vrot.slane %v1276, 4
      %v1278 = vrot.slane %v229, 5
      %v1279 = vsel %vm1268, %v1277, %v1278
      %v1280 = vrot.slane %v1278, 4
      %v1281 = vrot.slane %v260, 5
      %v1282 = vsel %vm1268, %v1280, %v1281
      %v1283 = vrot.slane %v1220, 5
      %v1284 = vrot.slane %v1283, 4
      %v1285 = vrot.slane %v231, 5
      %v1286 = vsel %vm1268, %v1284, %v1285
      %v1287 = vrot.slane %v1285, 4
      %v1288 = vrot.slane %v261, 5
      %v1289 = vsel %vm1268, %v1287, %v1288
      %v1290 = vrot.slane %v1221, 5
      %v1291 = vrot.slane %v1290, 4
      %v1292 = vrot.slane %v233, 5
      %v1293 = vsel %vm1268, %v1291, %v1292
      %v1294 = vrot.slane %v1292, 4
      %v1295 = vrot.slane %v262, 5
      %v1296 = vsel %vm1268, %v1294, %v1295
      %v1297 = vrot.slane %v1222, 5
      %v1298 = vrot.slane %v1297, 4
      %v1299 = vrot.slane %v235, 5
      %v1300 = vsel %vm1268, %v1298, %v1299
      %v1301 = vrot.slane %v1299, 4
      %v1302 = vrot.slane %v263, 5
      %v1303 = vsel %vm1268, %v1301, %v1302
      %v1304 = vrot.slane %v1223, 5
      %v1305 = vrot.slane %v1304, 4
      %v1306 = vrot.slane %v237, 5
      %v1307 = vsel %vm1268, %v1305, %v1306
      %v1308 = vrot.slane %v1306, 4
      %v1309 = vrot.slane %v264, 5
      %v1310 = vsel %vm1268, %v1308, %v1309
      %v1311 = vrot.slane %v1224, 5
      %v1312 = vrot.slane %v1311, 4
      %v1313 = vrot.slane %v239, 5
      %v1314 = vsel %vm1268, %v1312, %v1313
      %v1315 = vrot.slane %v1313, 4
      %v1316 = vrot.slane %v265, 5
      %v1317 = vsel %vm1268, %v1315, %v1316
      %v1318 = vrot.slane %v1225, 5
      %v1319 = vrot.slane %v1318, 4
      %v1320 = vrot.slane %v241, 5
      %v1321 = vsel %vm1268, %v1319, %v1320
      %v1322 = vrot.slane %v1320, 4
      %v1323 = vrot.slane %v266, 5
      %v1324 = vsel %vm1268, %v1322, %v1323
      %v1325 = vrot.slane %v1226, 5
      %v1326 = vrot.slane %v1325, 4
      %v1327 = vrot.slane %v243, 5
      %v1328 = vsel %vm1268, %v1326, %v1327
      %v1329 = vrot.slane %v1327, 4
      %v1330 = vrot.slane %v267, 5
      %v1331 = vsel %vm1268, %v1329, %v1330
      %v1332 = vrot.slane %v1227, 5
      %v1333 = vrot.slane %v1332, 4
      %v1334 = vrot.slane %v245, 5
      %v1335 = vsel %vm1268, %v1333, %v1334
      %v1336 = vrot.slane %v1334, 4
      %v1337 = vrot.slane %v268, 5
      %v1338 = vsel %vm1268, %v1336, %v1337
      %v1339 = vrot.slane %v1228, 5
      %v1340 = vrot.slane %v1339, 4
      %v1341 = vrot.slane %v247, 5
      %v1342 = vsel %vm1268, %v1340, %v1341
      %v1343 = vrot.slane %v1341, 4
      %v1344 = vrot.slane %v269, 5
      %v1345 = vsel %vm1268, %v1343, %v1344
      %v1346 = vrot.slane %v1229, 5
      %v1347 = vrot.slane %v1346, 4
      %v1348 = vrot.slane %v249, 5
      %v1349 = vsel %vm1268, %v1347, %v1348
      %v1350 = vrot.slane %v1348, 4
      %v1351 = vrot.slane %v270, 5
      %v1352 = vsel %vm1268, %v1350, %v1351
      %v1353 = vrot.slane %v1230, 5
      %v1354 = vrot.slane %v1353, 4
      %v1355 = vrot.slane %v251, 5
      %v1356 = vsel %vm1268, %v1354, %v1355
      %v1357 = vrot.slane %v1355, 4
      %v1358 = vrot.slane %v271, 5
      %v1359 = vsel %vm1268, %v1357, %v1358
      %v1360 = vrot.slane %v1231, 5
      %v1361 = vrot.slane %v1360, 4
      %v1362 = vrot.slane %v253, 5
      %v1363 = vsel %vm1268, %v1361, %v1362
      %v1364 = vrot.slane %v1362, 4
      %v1365 = vrot.slane %v272, 5
      %v1366 = vsel %vm1268, %v1364, %v1365
      %v1367 = vrot.slane %v1232, 5
      %v1368 = vrot.slane %v1367, 4
      %v1369 = vrot.slane %v255, 5
      %v1370 = vsel %vm1268, %v1368, %v1369
      %v1371 = vrot.slane %v1369, 4
      %v1372 = vrot.slane %v273, 5
      %v1373 = vsel %vm1268, %v1371, %v1372
      %v1374 = vrot.slane %v1233, 5
      %v1375 = vrot.slane %v1374, 4
      %v1376 = vrot.slane %v257, 5
      %v1377 = vsel %vm1268, %v1375, %v1376
      %v1378 = vrot.slane %v1376, 4
      %v1379 = vrot.slane %v274, 5
      %v1380 = vsel %vm1268, %v1378, %v1379
      %s1381 = scalar_lea.vmem %s1, 4
      %v1382 = vld [vmem:[%s1381] sm:$0x3]
      %v1383 = vunpack.c.l.b16 %v1272
      %v1384 = vunpack.c.l.b16 %v1275
      %v1385 = vunpack.c.l.b16 %v1279
      %v1386 = vunpack.c.l.b16 %v1282
      %v1387 = vunpack.c.l.b16 %v1286
      %v1388 = vunpack.c.l.b16 %v1289
      %v1389 = vunpack.c.l.b16 %v1293
      %v1390 = vunpack.c.l.b16 %v1296
      %v1391 = vunpack.c.l.b16 %v1300
      %v1392 = vunpack.c.l.b16 %v1303
      %v1393 = vunpack.c.l.b16 %v1307
      %v1394 = vunpack.c.l.b16 %v1310
      %v1395 = vunpack.c.l.b16 %v1314
      %v1396 = vunpack.c.l.b16 %v1317
      %v1397 = vunpack.c.l.b16 %v1321
      %v1398 = vunpack.c.l.b16 %v1324
      %v1399 = vunpack.c.l.b16 %v1328
      %v1400 = vunpack.c.l.b16 %v1331
      %v1401 = vunpack.c.l.b16 %v1335
      %v1402 = vunpack.c.l.b16 %v1338
      %v1403 = vunpack.c.l.b16 %v1342
      %v1404 = vunpack.c.l.b16 %v1345
      %v1405 = vunpack.c.l.b16 %v1349
      %v1406 = vunpack.c.l.b16 %v1352
      %v1407 = vunpack.c.l.b16 %v1356
      %v1408 = vunpack.c.l.b16 %v1359
      %v1409 = vunpack.c.l.b16 %v1363
      %v1410 = vunpack.c.l.b16 %v1366
      %v1411 = vunpack.c.l.b16 %v1370
      %v1412 = vunpack.c.l.b16 %v1373
      %v1413 = vunpack.c.l.b16 %v1377
      %v1414 = vunpack.c.l.b16 %v1380
      %v1415 = vpack.c.b16 %v1384, %v1383
      %v1416 = vpack.c.b16 %v1386, %v1385
      %v1417 = vpack.c.b16 %v1388, %v1387
      %v1418 = vpack.c.b16 %v1390, %v1389
      %v1419 = vpack.c.b16 %v1392, %v1391
      %v1420 = vpack.c.b16 %v1394, %v1393
      %v1421 = vpack.c.b16 %v1396, %v1395
      %v1422 = vpack.c.b16 %v1398, %v1397
      %v1423 = vpack.c.b16 %v1400, %v1399
      %v1424 = vpack.c.b16 %v1402, %v1401
      %v1425 = vpack.c.b16 %v1404, %v1403
      %v1426 = vpack.c.b16 %v1406, %v1405
      %v1427 = vpack.c.b16 %v1408, %v1407
      %v1428 = vpack.c.b16 %v1410, %v1409
      %v1429 = vpack.c.b16 %v1412, %v1411
      %v1430 = vpack.c.b16 %v1414, %v1413
      %v1432 = vsel %vm712, %v1415, 0
      %v1435 = vsel %vm712, %v1416, 0
      %v1438 = vsel %vm712, %v1417, 0
      %v1441 = vsel %vm712, %v1418, 0
      %v1444 = vsel %vm712, %v1419, 0
      %v1447 = vsel %vm712, %v1420, 0
      %v1450 = vsel %vm712, %v1421, 0
      %v1453 = vsel %vm712, %v1422, 0
      %v1456 = vsel %vm712, %v1423, 0
      %v1459 = vsel %vm712, %v1424, 0
      %v1462 = vsel %vm712, %v1425, 0
      %v1465 = vsel %vm712, %v1426, 0
      %v1468 = vsel %vm712, %v1427, 0
      %v1471 = vsel %vm712, %v1428, 0
      %v1474 = vsel %vm712, %v1429, 0
      %v1477 = vsel %vm712, %v1430, 0
      %v1480 = vsel %vm761, %v1382, 0
      %1482 = vmatprep.subr.bf16.mxu0 0
      %1483 = vmatpush1.bf16.msra.mxu0 %v1480
      %1484 = vmatprep.subr.bf16.mxu0 0
      %1485 = vmatpush1.bf16.msra.mxu0 0
      %1486 = vmatprep.subr.bf16.mxu0 0
      %1487 = vmatpush1.bf16.msra.mxu0 0
      %1488 = vmatprep.subr.bf16.mxu0 0
      %1489 = vmatpush1.bf16.msra.mxu0 0
      %1490 = vmatprep.subr.bf16.mxu0 0
      %1491 = vmatpush1.bf16.msra.mxu0 0
      %1492 = vmatprep.subr.bf16.mxu0 0
      %1493 = vmatpush1.bf16.msra.mxu0 0
      %1494 = vmatprep.subr.bf16.mxu0 0
      %1495 = vmatpush1.bf16.msra.mxu0 0
      %1496 = vmatprep.subr.bf16.mxu0 0
      %1497 = vmatpush1.bf16.msra.mxu0 0
      %1498 = vmatprep.subr.bf16.mxu0 0
      %1499 = vmatpush1.bf16.msra.mxu0 0
      %1500 = vmatprep.subr.bf16.mxu0 0
      %1501 = vmatpush1.bf16.msra.mxu0 0
      %1502 = vmatprep.subr.bf16.mxu0 0
      %1503 = vmatpush1.bf16.msra.mxu0 0
      %1504 = vmatprep.subr.bf16.mxu0 0
      %1505 = vmatpush1.bf16.msra.mxu0 0
      %1506 = vmatprep.subr.bf16.mxu0 0
      %1507 = vmatpush1.bf16.msra.mxu0 0
      %1508 = vmatprep.subr.bf16.mxu0 0
      %1509 = vmatpush1.bf16.msra.mxu0 0
      %1510 = vmatprep.subr.bf16.mxu0 0
      %1511 = vmatpush1.bf16.msra.mxu0 0
      %1512 = vmatprep.subr.bf16.mxu0 0
      %1513 = vmatpush1.bf16.msra.mxu0 0
      %1514 = vmatprep.mubr.bf16.mxu0 0
      %1515 = vmatmul.mubr.bf16.gmra.mrb[0].mxu0 %v1432
      %v1516 = vpop.f32.mrb[0].mxu0
      %v1517 = vadd.f32 0.0, %v1516
      %v1518 = vpop.f32.mrb[0].mxu0
      %v1519 = vpop.f32.mrb[0].mxu0
      %v1520 = vadd.f32 0.0, %v1519
      %v1521 = vpop.f32.mrb[0].mxu0
      %1522 = vmatprep.mubr.bf16.mxu0 0
      %1523 = vmatmul.mubr.bf16.gmra.mrb[0].mxu0 %v1435
      %v1524 = vpop.f32.mrb[0].mxu0
      %v1525 = vadd.f32 0.0, %v1524
      %v1526 = vpop.f32.mrb[0].mxu0
      %v1527 = vpop.f32.mrb[0].mxu0
      %v1528 = vadd.f32 0.0, %v1527
      %v1529 = vpop.f32.mrb[0].mxu0
      %1530 = vmatprep.mubr.bf16.mxu0 0
      %1531 = vmatmul.mubr.bf16.gmra.mrb[0].mxu0 %v1438
      %v1532 = vpop.f32.mrb[0].mxu0
      %v1533 = vadd.f32 0.0, %v1532
      %v1534 = vpop.f32.mrb[0].mxu0
      %v1535 = vpop.f32.mrb[0].mxu0
      %v1536 = vadd.f32 0.0, %v1535
      %v1537 = vpop.f32.mrb[0].mxu0
      %1538 = vmatprep.mubr.bf16.mxu0 0
      %1539 = vmatmul.mubr.bf16.gmra.mrb[0].mxu0 %v1441
      %v1540 = vpop.f32.mrb[0].mxu0
      %v1541 = vadd.f32 0.0, %v1540
      %v1542 = vpop.f32.mrb[0].mxu0
      %v1543 = vpop.f32.mrb[0].mxu0
      %v1544 = vadd.f32 0.0, %v1543
      %v1545 = vpop.f32.mrb[0].mxu0
      %1546 = vmatprep.mubr.bf16.mxu0 0
      %1547 = vmatmul.mubr.bf16.gmra.mrb[0].mxu0 %v1444
      %v1548 = vpop.f32.mrb[0].mxu0
      %v1549 = vadd.f32 0.0, %v1548
      %v1550 = vpop.f32.mrb[0].mxu0
      %v1551 = vpop.f32.mrb[0].mxu0
      %v1552 = vadd.f32 0.0, %v1551
      %v1553 = vpop.f32.mrb[0].mxu0
      %1554 = vmatprep.mubr.bf16.mxu0 0
      %1555 = vmatmul.mubr.bf16.gmra.mrb[0].mxu0 %v1447
      %v1556 = vpop.f32.mrb[0].mxu0
      %v1557 = vadd.f32 0.0, %v1556
      %v1558 = vpop.f32.mrb[0].mxu0
      %v1559 = vpop.f32.mrb[0].mxu0
      %v1560 = vadd.f32 0.0, %v1559
      %v1561 = vpop.f32.mrb[0].mxu0
      %1562 = vmatprep.mubr.bf16.mxu0 0
      %1563 = vmatmul.mubr.bf16.gmra.mrb[0].mxu0 %v1450
      %v1564 = vpop.f32.mrb[0].mxu0
      %v1565 = vadd.f32 0.0, %v1564
      %v1566 = vpop.f32.mrb[0].mxu0
      %v1567 = vpop.f32.mrb[0].mxu0
      %v1568 = vadd.f32 0.0, %v1567
      %v1569 = vpop.f32.mrb[0].mxu0
      %1570 = vmatprep.mubr.bf16.mxu0 0
      %1571 = vmatmul.mubr.bf16.gmra.mrb[0].mxu0 %v1453
      %v1572 = vpop.f32.mrb[0].mxu0
      %v1573 = vadd.f32 0.0, %v1572
      %v1574 = vpop.f32.mrb[0].mxu0
      %v1575 = vpop.f32.mrb[0].mxu0
      %v1576 = vadd.f32 0.0, %v1575
      %v1577 = vpop.f32.mrb[0].mxu0
      %1578 = vmatprep.mubr.bf16.mxu0 0
      %1579 = vmatmul.mubr.bf16.gmra.mrb[0].mxu0 %v1456
      %v1580 = vpop.f32.mrb[0].mxu0
      %v1581 = vadd.f32 0.0, %v1580
      %v1582 = vpop.f32.mrb[0].mxu0
      %v1583 = vpop.f32.mrb[0].mxu0
      %v1584 = vadd.f32 0.0, %v1583
      %v1585 = vpop.f32.mrb[0].mxu0
      %1586 = vmatprep.mubr.bf16.mxu0 0
      %1587 = vmatmul.mubr.bf16.gmra.mrb[0].mxu0 %v1459
      %v1588 = vpop.f32.mrb[0].mxu0
      %v1589 = vadd.f32 0.0, %v1588
      %v1590 = vpop.f32.mrb[0].mxu0
      %v1591 = vpop.f32.mrb[0].mxu0
      %v1592 = vadd.f32 0.0, %v1591
      %v1593 = vpop.f32.mrb[0].mxu0
      %1594 = vmatprep.mubr.bf16.mxu0 0
      %1595 = vmatmul.mubr.bf16.gmra.mrb[0].mxu0 %v1462
      %v1596 = vpop.f32.mrb[0].mxu0
      %v1597 = vadd.f32 0.0, %v1596
      %v1598 = vpop.f32.mrb[0].mxu0
      %v1599 = vpop.f32.mrb[0].mxu0
      %v1600 = vadd.f32 0.0, %v1599
      %v1601 = vpop.f32.mrb[0].mxu0
      %1602 = vmatprep.mubr.bf16.mxu0 0
      %1603 = vmatmul.mubr.bf16.gmra.mrb[0].mxu0 %v1465
      %v1604 = vpop.f32.mrb[0].mxu0
      %v1605 = vadd.f32 0.0, %v1604
      %v1606 = vpop.f32.mrb[0].mxu0
      %v1607 = vpop.f32.mrb[0].mxu0
      %v1608 = vadd.f32 0.0, %v1607
      %v1609 = vpop.f32.mrb[0].mxu0
      %1610 = vmatprep.mubr.bf16.mxu0 0
      %1611 = vmatmul.mubr.bf16.gmra.mrb[0].mxu0 %v1468
      %v1612 = vpop.f32.mrb[0].mxu0
      %v1613 = vadd.f32 0.0, %v1612
      %v1614 = vpop.f32.mrb[0].mxu0
      %v1615 = vpop.f32.mrb[0].mxu0
      %v1616 = vadd.f32 0.0, %v1615
      %v1617 = vpop.f32.mrb[0].mxu0
      %1618 = vmatprep.mubr.bf16.mxu0 0
      %1619 = vmatmul.mubr.bf16.gmra.mrb[0].mxu0 %v1471
      %v1620 = vpop.f32.mrb[0].mxu0
      %v1621 = vadd.f32 0.0, %v1620
      %v1622 = vpop.f32.mrb[0].mxu0
      %v1623 = vpop.f32.mrb[0].mxu0
      %v1624 = vadd.f32 0.0, %v1623
      %v1625 = vpop.f32.mrb[0].mxu0
      %1626 = vmatprep.mubr.bf16.mxu0 0
      %1627 = vmatmul.mubr.bf16.gmra.mrb[0].mxu0 %v1474
      %v1628 = vpop.f32.mrb[0].mxu0
      %v1629 = vadd.f32 0.0, %v1628
      %v1630 = vpop.f32.mrb[0].mxu0
      %v1631 = vpop.f32.mrb[0].mxu0
      %v1632 = vadd.f32 0.0, %v1631
      %v1633 = vpop.f32.mrb[0].mxu0
      %1634 = vmatprep.mubr.bf16.mxu0 0
      %1635 = vmatmul.mubr.bf16.gmra.mrb[0].mxu0 %v1477
      %v1636 = vpop.f32.mrb[0].mxu0
      %v1637 = vadd.f32 0.0, %v1636
      %v1638 = vpop.f32.mrb[0].mxu0
      %v1639 = vpop.f32.mrb[0].mxu0
      %v1640 = vadd.f32 0.0, %v1639
      %v1641 = vpop.f32.mrb[0].mxu0
      %1642 = vdwg.mxu0
      %v1643 = vadd.f32 %v1092, %v1517
      %v1644 = vadd.f32 %v1095, %v1520
      %v1645 = vadd.f32 %v1100, %v1525
      %v1646 = vadd.f32 %v1103, %v1528
      %v1647 = vadd.f32 %v1108, %v1533
      %v1648 = vadd.f32 %v1111, %v1536
      %v1649 = vadd.f32 %v1116, %v1541
      %v1650 = vadd.f32 %v1119, %v1544
      %v1651 = vadd.f32 %v1124, %v1549
      %v1652 = vadd.f32 %v1127, %v1552
      %v1653 = vadd.f32 %v1132, %v1557
      %v1654 = vadd.f32 %v1135, %v1560
      %v1655 = vadd.f32 %v1140, %v1565
      %v1656 = vadd.f32 %v1143, %v1568
      %v1657 = vadd.f32 %v1148, %v1573
      %v1658 = vadd.f32 %v1151, %v1576
      %v1659 = vadd.f32 %v1156, %v1581
      %v1660 = vadd.f32 %v1159, %v1584
      %v1661 = vadd.f32 %v1164, %v1589
      %v1662 = vadd.f32 %v1167, %v1592
      %v1663 = vadd.f32 %v1172, %v1597
      %v1664 = vadd.f32 %v1175, %v1600
      %v1665 = vadd.f32 %v1180, %v1605
      %v1666 = vadd.f32 %v1183, %v1608
      %v1667 = vadd.f32 %v1188, %v1613
      %v1668 = vadd.f32 %v1191, %v1616
      %v1669 = vadd.f32 %v1196, %v1621
      %v1670 = vadd.f32 %v1199, %v1624
      %v1671 = vadd.f32 %v1204, %v1629
      %v1672 = vadd.f32 %v1207, %v1632
      %v1673 = vadd.f32 %v1212, %v1637
      %v1674 = vadd.f32 %v1215, %v1640
      %s1675 = scalar_lea.vmem %s219, 12
      %v1676 = vld [vmem:[%s1675] sm:$0xf]
      %v1677 = vld [vmem:[%s1675 + $0x4] sm:$0xf]
      %v1678 = vld [vmem:[%s1675 + $0xc] sm:$0xf]
      %v1679 = vld [vmem:[%s1675 + $0x10] sm:$0xf]
      %v1680 = vld [vmem:[%s1675 + $0x18] sm:$0xf]
      %v1681 = vld [vmem:[%s1675 + $0x1c] sm:$0xf]
      %v1682 = vld [vmem:[%s1675 + $0x24] sm:$0xf]
      %v1683 = vld [vmem:[%s1675 + $0x28] sm:$0xf]
      %v1684 = vld [vmem:[%s1675 + $0x30] sm:$0xf]
      %v1685 = vld [vmem:[%s1675 + $0x34] sm:$0xf]
      %v1686 = vld [vmem:[%s1675 + $0x3c] sm:$0xf]
      %v1687 = vld [vmem:[%s1675 + $0x40] sm:$0xf]
      %v1688 = vld [vmem:[%s1675 + $0x48] sm:$0xf]
      %v1689 = vld [vmem:[%s1675 + $0x4c] sm:$0xf]
      %v1690 = vld [vmem:[%s1675 + $0x54] sm:$0xf]
      %v1691 = vld [vmem:[%s1675 + $0x58] sm:$0xf]
      %v1692 = vld [vmem:[%s1675 + $0x60] sm:$0xf]
      %v1693 = vld [vmem:[%s1675 + $0x64] sm:$0xf]
      %v1694 = vld [vmem:[%s1675 + $0x6c] sm:$0xf]
      %v1695 = vld [vmem:[%s1675 + $0x70] sm:$0xf]
      %v1696 = vld [vmem:[%s1675 + $0x78] sm:$0xf]
      %v1697 = vld [vmem:[%s1675 + $0x7c] sm:$0xf]
      %v1698 = vld [vmem:[%s1675 + $0x84] sm:$0xf]
      %v1699 = vld [vmem:[%s1675 + $0x88] sm:$0xf]
      %v1700 = vld [vmem:[%s1675 + $0x90] sm:$0xf]
      %v1701 = vld [vmem:[%s1675 + $0x94] sm:$0xf]
      %v1702 = vld [vmem:[%s1675 + $0x9c] sm:$0xf]
      %v1703 = vld [vmem:[%s1675 + $0xa0] sm:$0xf]
      %v1704 = vld [vmem:[%s1675 + $0xa8] sm:$0xf]
      %v1705 = vld [vmem:[%s1675 + $0xac] sm:$0xf]
      %v1706 = vld [vmem:[%s1675 + $0xb4] sm:$0xf]
      %v1707 = vld [vmem:[%s1675 + $0xb8] sm:$0xf]
      %s1708 = scalar_lea.vmem %s1, 6
      %v1709 = vld [vmem:[%s1708] sm:$0x3]
      %v1742 = vunpack.c.l.b16 %v1676
      %v1743 = vunpack.c.l.b16 %v1677
      %v1744 = vunpack.c.l.b16 %v1678
      %v1745 = vunpack.c.l.b16 %v1679
      %v1746 = vunpack.c.l.b16 %v1680
      %v1747 = vunpack.c.l.b16 %v1681
      %v1748 = vunpack.c.l.b16 %v1682
      %v1749 = vunpack.c.l.b16 %v1683
      %v1750 = vunpack.c.l.b16 %v1684
      %v1751 = vunpack.c.l.b16 %v1685
      %v1752 = vunpack.c.l.b16 %v1686
      %v1753 = vunpack.c.l.b16 %v1687
      %v1754 = vunpack.c.l.b16 %v1688
      %v1755 = vunpack.c.l.b16 %v1689
      %v1756 = vunpack.c.l.b16 %v1690
      %v1757 = vunpack.c.l.b16 %v1691
      %v1758 = vunpack.c.l.b16 %v1692
      %v1759 = vunpack.c.l.b16 %v1693
      %v1760 = vunpack.c.l.b16 %v1694
      %v1761 = vunpack.c.l.b16 %v1695
      %v1762 = vunpack.c.l.b16 %v1696
      %v1763 = vunpack.c.l.b16 %v1697
      %v1764 = vunpack.c.l.b16 %v1698
      %v1765 = vunpack.c.l.b16 %v1699
      %v1766 = vunpack.c.l.b16 %v1700
      %v1767 = vunpack.c.l.b16 %v1701
      %v1768 = vunpack.c.l.b16 %v1702
      %v1769 = vunpack.c.l.b16 %v1703
      %v1770 = vunpack.c.l.b16 %v1704
      %v1771 = vunpack.c.l.b16 %v1705
      %v1772 = vunpack.c.l.b16 %v1706
      %v1773 = vunpack.c.l.b16 %v1707
      %v1774 = vpack.c.b16 %v1743, %v1742
      %v1775 = vpack.c.b16 %v1745, %v1744
      %v1776 = vpack.c.b16 %v1747, %v1746
      %v1777 = vpack.c.b16 %v1749, %v1748
      %v1778 = vpack.c.b16 %v1751, %v1750
      %v1779 = vpack.c.b16 %v1753, %v1752
      %v1780 = vpack.c.b16 %v1755, %v1754
      %v1781 = vpack.c.b16 %v1757, %v1756
      %v1782 = vpack.c.b16 %v1759, %v1758
      %v1783 = vpack.c.b16 %v1761, %v1760
      %v1784 = vpack.c.b16 %v1763, %v1762
      %v1785 = vpack.c.b16 %v1765, %v1764
      %v1786 = vpack.c.b16 %v1767, %v1766
      %v1787 = vpack.c.b16 %v1769, %v1768
      %v1788 = vpack.c.b16 %v1771, %v1770
      %v1789 = vpack.c.b16 %v1773, %v1772
      %v1791 = vsel %vm712, %v1774, 0
      %v1794 = vsel %vm712, %v1775, 0
      %v1797 = vsel %vm712, %v1776, 0
      %v1800 = vsel %vm712, %v1777, 0
      %v1803 = vsel %vm712, %v1778, 0
      %v1806 = vsel %vm712, %v1779, 0
      %v1809 = vsel %vm712, %v1780, 0
      %v1812 = vsel %vm712, %v1781, 0
      %v1815 = vsel %vm712, %v1782, 0
      %v1818 = vsel %vm712, %v1783, 0
      %v1821 = vsel %vm712, %v1784, 0
      %v1824 = vsel %vm712, %v1785, 0
      %v1827 = vsel %vm712, %v1786, 0
      %v1830 = vsel %vm712, %v1787, 0
      %v1833 = vsel %vm712, %v1788, 0
      %v1836 = vsel %vm712, %v1789, 0
      %v1839 = vsel %vm761, %v1709, 0
      %1841 = vmatprep.subr.bf16.mxu0 0
      %1842 = vmatpush1.bf16.msra.mxu0 %v1839
      %1843 = vmatprep.subr.bf16.mxu0 0
      %1844 = vmatpush1.bf16.msra.mxu0 0
      %1845 = vmatprep.subr.bf16.mxu0 0
      %1846 = vmatpush1.bf16.msra.mxu0 0
      %1847 = vmatprep.subr.bf16.mxu0 0
      %1848 = vmatpush1.bf16.msra.mxu0 0
      %1849 = vmatprep.subr.bf16.mxu0 0
      %1850 = vmatpush1.bf16.msra.mxu0 0
      %1851 = vmatprep.subr.bf16.mxu0 0
      %1852 = vmatpush1.bf16.msra.mxu0 0
      %1853 = vmatprep.subr.bf16.mxu0 0
      %1854 = vmatpush1.bf16.msra.mxu0 0
      %1855 = vmatprep.subr.bf16.mxu0 0
      %1856 = vmatpush1.bf16.msra.mxu0 0
      %1857 = vmatprep.subr.bf16.mxu0 0
      %1858 = vmatpush1.bf16.msra.mxu0 0
      %1859 = vmatprep.subr.bf16.mxu0 0
      %1860 = vmatpush1.bf16.msra.mxu0 0
      %1861 = vmatprep.subr.bf16.mxu0 0
      %1862 = vmatpush1.bf16.msra.mxu0 0
      %1863 = vmatprep.subr.bf16.mxu0 0
      %1864 = vmatpush1.bf16.msra.mxu0 0
      %1865 = vmatprep.subr.bf16.mxu0 0
      %1866 = vmatpush1.bf16.msra.mxu0 0
      %1867 = vmatprep.subr.bf16.mxu0 0
      %1868 = vmatpush1.bf16.msra.mxu0 0
      %1869 = vmatprep.subr.bf16.mxu0 0
      %1870 = vmatpush1.bf16.msra.mxu0 0
      %1871 = vmatprep.subr.bf16.mxu0 0
      %1872 = vmatpush1.bf16.msra.mxu0 0
      %1873 = vmatprep.mubr.bf16.mxu0 0
      %1874 = vmatmul.mubr.bf16.gmra.mrb[0].mxu0 %v1791
      %v1875 = vpop.f32.mrb[0].mxu0
      %v1876 = vadd.f32 0.0, %v1875
      %v1877 = vpop.f32.mrb[0].mxu0
      %v1878 = vpop.f32.mrb[0].mxu0
      %v1879 = vadd.f32 0.0, %v1878
      %v1880 = vpop.f32.mrb[0].mxu0
      %1881 = vmatprep.mubr.bf16.mxu0 0
      %1882 = vmatmul.mubr.bf16.gmra.mrb[0].mxu0 %v1794
      %v1883 = vpop.f32.mrb[0].mxu0
      %v1884 = vadd.f32 0.0, %v1883
      %v1885 = vpop.f32.mrb[0].mxu0
      %v1886 = vpop.f32.mrb[0].mxu0
      %v1887 = vadd.f32 0.0, %v1886
      %v1888 = vpop.f32.mrb[0].mxu0
      %1889 = vmatprep.mubr.bf16.mxu0 0
      %1890 = vmatmul.mubr.bf16.gmra.mrb[0].mxu0 %v1797
      %v1891 = vpop.f32.mrb[0].mxu0
      %v1892 = vadd.f32 0.0, %v1891
      %v1893 = vpop.f32.mrb[0].mxu0
      %v1894 = vpop.f32.mrb[0].mxu0
      %v1895 = vadd.f32 0.0, %v1894
      %v1896 = vpop.f32.mrb[0].mxu0
      %1897 = vmatprep.mubr.bf16.mxu0 0
      %1898 = vmatmul.mubr.bf16.gmra.mrb[0].mxu0 %v1800
      %v1899 = vpop.f32.mrb[0].mxu0
      %v1900 = vadd.f32 0.0, %v1899
      %v1901 = vpop.f32.mrb[0].mxu0
      %v1902 = vpop.f32.mrb[0].mxu0
      %v1903 = vadd.f32 0.0, %v1902
      %v1904 = vpop.f32.mrb[0].mxu0
      %1905 = vmatprep.mubr.bf16.mxu0 0
      %1906 = vmatmul.mubr.bf16.gmra.mrb[0].mxu0 %v1803
      %v1907 = vpop.f32.mrb[0].mxu0
      %v1908 = vadd.f32 0.0, %v1907
      %v1909 = vpop.f32.mrb[0].mxu0
      %v1910 = vpop.f32.mrb[0].mxu0
      %v1911 = vadd.f32 0.0, %v1910
      %v1912 = vpop.f32.mrb[0].mxu0
      %1913 = vmatprep.mubr.bf16.mxu0 0
      %1914 = vmatmul.mubr.bf16.gmra.mrb[0].mxu0 %v1806
      %v1915 = vpop.f32.mrb[0].mxu0
      %v1916 = vadd.f32 0.0, %v1915
      %v1917 = vpop.f32.mrb[0].mxu0
      %v1918 = vpop.f32.mrb[0].mxu0
      %v1919 = vadd.f32 0.0, %v1918
      %v1920 = vpop.f32.mrb[0].mxu0
      %1921 = vmatprep.mubr.bf16.mxu0 0
      %1922 = vmatmul.mubr.bf16.gmra.mrb[0].mxu0 %v1809
      %v1923 = vpop.f32.mrb[0].mxu0
      %v1924 = vadd.f32 0.0, %v1923
      %v1925 = vpop.f32.mrb[0].mxu0
      %v1926 = vpop.f32.mrb[0].mxu0
      %v1927 = vadd.f32 0.0, %v1926
      %v1928 = vpop.f32.mrb[0].mxu0
      %1929 = vmatprep.mubr.bf16.mxu0 0
      %1930 = vmatmul.mubr.bf16.gmra.mrb[0].mxu0 %v1812
      %v1931 = vpop.f32.mrb[0].mxu0
      %v1932 = vadd.f32 0.0, %v1931
      %v1933 = vpop.f32.mrb[0].mxu0
      %v1934 = vpop.f32.mrb[0].mxu0
      %v1935 = vadd.f32 0.0, %v1934
      %v1936 = vpop.f32.mrb[0].mxu0
      %1937 = vmatprep.mubr.bf16.mxu0 0
      %1938 = vmatmul.mubr.bf16.gmra.mrb[0].mxu0 %v1815
      %v1939 = vpop.f32.mrb[0].mxu0
      %v1940 = vadd.f32 0.0, %v1939
      %v1941 = vpop.f32.mrb[0].mxu0
      %v1942 = vpop.f32.mrb[0].mxu0
      %v1943 = vadd.f32 0.0, %v1942
      %v1944 = vpop.f32.mrb[0].mxu0
      %1945 = vmatprep.mubr.bf16.mxu0 0
      %1946 = vmatmul.mubr.bf16.gmra.mrb[0].mxu0 %v1818
      %v1947 = vpop.f32.mrb[0].mxu0
      %v1948 = vadd.f32 0.0, %v1947
      %v1949 = vpop.f32.mrb[0].mxu0
      %v1950 = vpop.f32.mrb[0].mxu0
      %v1951 = vadd.f32 0.0, %v1950
      %v1952 = vpop.f32.mrb[0].mxu0
      %1953 = vmatprep.mubr.bf16.mxu0 0
      %1954 = vmatmul.mubr.bf16.gmra.mrb[0].mxu0 %v1821
      %v1955 = vpop.f32.mrb[0].mxu0
      %v1956 = vadd.f32 0.0, %v1955
      %v1957 = vpop.f32.mrb[0].mxu0
      %v1958 = vpop.f32.mrb[0].mxu0
      %v1959 = vadd.f32 0.0, %v1958
      %v1960 = vpop.f32.mrb[0].mxu0
      %1961 = vmatprep.mubr.bf16.mxu0 0
      %1962 = vmatmul.mubr.bf16.gmra.mrb[0].mxu0 %v1824
      %v1963 = vpop.f32.mrb[0].mxu0
      %v1964 = vadd.f32 0.0, %v1963
      %v1965 = vpop.f32.mrb[0].mxu0
      %v1966 = vpop.f32.mrb[0].mxu0
      %v1967 = vadd.f32 0.0, %v1966
      %v1968 = vpop.f32.mrb[0].mxu0
      %1969 = vmatprep.mubr.bf16.mxu0 0
      %1970 = vmatmul.mubr.bf16.gmra.mrb[0].mxu0 %v1827
      %v1971 = vpop.f32.mrb[0].mxu0
      %v1972 = vadd.f32 0.0, %v1971
      %v1973 = vpop.f32.mrb[0].mxu0
      %v1974 = vpop.f32.mrb[0].mxu0
      %v1975 = vadd.f32 0.0, %v1974
      %v1976 = vpop.f32.mrb[0].mxu0
      %1977 = vmatprep.mubr.bf16.mxu0 0
      %1978 = vmatmul.mubr.bf16.gmra.mrb[0].mxu0 %v1830
      %v1979 = vpop.f32.mrb[0].mxu0
      %v1980 = vadd.f32 0.0, %v1979
      %v1981 = vpop.f32.mrb[0].mxu0
      %v1982 = vpop.f32.mrb[0].mxu0
      %v1983 = vadd.f32 0.0, %v1982
      %v1984 = vpop.f32.mrb[0].mxu0
      %1985 = vmatprep.mubr.bf16.mxu0 0
      %1986 = vmatmul.mubr.bf16.gmra.mrb[0].mxu0 %v1833
      %v1987 = vpop.f32.mrb[0].mxu0
      %v1988 = vadd.f32 0.0, %v1987
      %v1989 = vpop.f32.mrb[0].mxu0
      %v1990 = vpop.f32.mrb[0].mxu0
      %v1991 = vadd.f32 0.0, %v1990
      %v1992 = vpop.f32.mrb[0].mxu0
      %1993 = vmatprep.mubr.bf16.mxu0 0
      %1994 = vmatmul.mubr.bf16.gmra.mrb[0].mxu0 %v1836
      %v1995 = vpop.f32.mrb[0].mxu0
      %v1996 = vadd.f32 0.0, %v1995
      %v1997 = vpop.f32.mrb[0].mxu0
      %v1998 = vpop.f32.mrb[0].mxu0
      %v1999 = vadd.f32 0.0, %v1998
      %v2000 = vpop.f32.mrb[0].mxu0
      %2001 = vdwg.mxu0
      %v2002 = vadd.f32 %v1643, %v1876
      %v2003 = vadd.f32 %v1644, %v1879
      %v2004 = vadd.f32 %v1645, %v1884
      %v2005 = vadd.f32 %v1646, %v1887
      %v2006 = vadd.f32 %v1647, %v1892
      %v2007 = vadd.f32 %v1648, %v1895
      %v2008 = vadd.f32 %v1649, %v1900
      %v2009 = vadd.f32 %v1650, %v1903
      %v2010 = vadd.f32 %v1651, %v1908
      %v2011 = vadd.f32 %v1652, %v1911
      %v2012 = vadd.f32 %v1653, %v1916
      %v2013 = vadd.f32 %v1654, %v1919
      %v2014 = vadd.f32 %v1655, %v1924
      %v2015 = vadd.f32 %v1656, %v1927
      %v2016 = vadd.f32 %v1657, %v1932
      %v2017 = vadd.f32 %v1658, %v1935
      %v2018 = vadd.f32 %v1659, %v1940
      %v2019 = vadd.f32 %v1660, %v1943
      %v2020 = vadd.f32 %v1661, %v1948
      %v2021 = vadd.f32 %v1662, %v1951
      %v2022 = vadd.f32 %v1663, %v1956
      %v2023 = vadd.f32 %v1664, %v1959
      %v2024 = vadd.f32 %v1665, %v1964
      %v2025 = vadd.f32 %v1666, %v1967
      %v2026 = vadd.f32 %v1667, %v1972
      %v2027 = vadd.f32 %v1668, %v1975
      %v2028 = vadd.f32 %v1669, %v1980
      %v2029 = vadd.f32 %v1670, %v1983
      %v2030 = vadd.f32 %v1671, %v1988
      %v2031 = vadd.f32 %v1672, %v1991
      %v2032 = vadd.f32 %v1673, %v1996
      %v2033 = vadd.f32 %v1674, %v1999
      %v2034 = vld [vmem:[%s1675] sm:$0xf]
      %v2035 = vld [vmem:[%s1675 + $0x4] sm:$0xf]
      %v2036 = vld [vmem:[%s1675 + $0x8] sm:$0x1]
      %v2037 = vld [vmem:[%s1675 + $0xc] sm:$0xf]
      %v2038 = vld [vmem:[%s1675 + $0x10] sm:$0xf]
      %v2039 = vld [vmem:[%s1675 + $0x14] sm:$0x1]
      %v2040 = vld [vmem:[%s1675 + $0x18] sm:$0xf]
      %v2041 = vld [vmem:[%s1675 + $0x1c] sm:$0xf]
      %v2042 = vld [vmem:[%s1675 + $0x20] sm:$0x1]
      %v2043 = vld [vmem:[%s1675 + $0x24] sm:$0xf]
      %v2044 = vld [vmem:[%s1675 + $0x28] sm:$0xf]
      %v2045 = vld [vmem:[%s1675 + $0x2c] sm:$0x1]
      %v2046 = vld [vmem:[%s1675 + $0x30] sm:$0xf]
      %v2047 = vld [vmem:[%s1675 + $0x34] sm:$0xf]
      %v2048 = vld [vmem:[%s1675 + $0x38] sm:$0x1]
      %v2049 = vld [vmem:[%s1675 + $0x3c] sm:$0xf]
      %v2050 = vld [vmem:[%s1675 + $0x40] sm:$0xf]
      %v2051 = vld [vmem:[%s1675 + $0x44] sm:$0x1]
      %v2052 = vld [vmem:[%s1675 + $0x48] sm:$0xf]
      %v2053 = vld [vmem:[%s1675 + $0x4c] sm:$0xf]
      %v2054 = vld [vmem:[%s1675 + $0x50] sm:$0x1]
      %v2055 = vld [vmem:[%s1675 + $0x54] sm:$0xf]
      %v2056 = vld [vmem:[%s1675 + $0x58] sm:$0xf]
      %v2057 = vld [vmem:[%s1675 + $0x5c] sm:$0x1]
      %v2058 = vld [vmem:[%s1675 + $0x60] sm:$0xf]
      %v2059 = vld [vmem:[%s1675 + $0x64] sm:$0xf]
      %v2060 = vld [vmem:[%s1675 + $0x68] sm:$0x1]
      %v2061 = vld [vmem:[%s1675 + $0x6c] sm:$0xf]
      %v2062 = vld [vmem:[%s1675 + $0x70] sm:$0xf]
      %v2063 = vld [vmem:[%s1675 + $0x74] sm:$0x1]
      %v2064 = vld [vmem:[%s1675 + $0x78] sm:$0xf]
      %v2065 = vld [vmem:[%s1675 + $0x7c] sm:$0xf]
      %v2066 = vld [vmem:[%s1675 + $0x80] sm:$0x1]
      %v2067 = vld [vmem:[%s1675 + $0x84] sm:$0xf]
      %v2068 = vld [vmem:[%s1675 + $0x88] sm:$0xf]
      %v2069 = vld [vmem:[%s1675 + $0x8c] sm:$0x1]
      %v2070 = vld [vmem:[%s1675 + $0x90] sm:$0xf]
      %v2071 = vld [vmem:[%s1675 + $0x94] sm:$0xf]
      %v2072 = vld [vmem:[%s1675 + $0x98] sm:$0x1]
      %v2073 = vld [vmem:[%s1675 + $0x9c] sm:$0xf]
      %v2074 = vld [vmem:[%s1675 + $0xa0] sm:$0xf]
      %v2075 = vld [vmem:[%s1675 + $0xa4] sm:$0x1]
      %v2076 = vld [vmem:[%s1675 + $0xa8] sm:$0xf]
      %v2077 = vld [vmem:[%s1675 + $0xac] sm:$0xf]
      %v2078 = vld [vmem:[%s1675 + $0xb0] sm:$0x1]
      %v2079 = vld [vmem:[%s1675 + $0xb4] sm:$0xf]
      %v2080 = vld [vmem:[%s1675 + $0xb8] sm:$0xf]
      %v2081 = vld [vmem:[%s1675 + $0xbc] sm:$0x1]
      %v2083 = vshrl.u32 %v2034, 16
      %v2085 = vrot.slane %v2083, 4
      %v2086 = vshll.u32 %v2034, 16
      %v2088 = vrot.slane %v2086, 5
      %v2089 = vor.u32 %v2085, %v2088
      %v2090 = vrot.slane %v2089, 4
      %v2092 = vshll.u32 %v2035, 16
      %v2094 = vrot.slane %v2092, 5
      %v2095 = vsel %vm277, %v2090, %v2094
      %v2096 = vshrl.u32 %v2035, 16
      %v2098 = vrot.slane %v2096, 4
      %v2099 = vor.u32 %v2098, %v2094
      %v2100 = vrot.slane %v2099, 4
      %v2102 = vshll.u32 %v2036, 16
      %v2104 = vrot.slane %v2102, 5
      %v2105 = vsel %vm277, %v2100, %v2104
      %v2107 = vshrl.u32 %v2037, 16
      %v2109 = vrot.slane %v2107, 4
      %v2110 = vshll.u32 %v2037, 16
      %v2112 = vrot.slane %v2110, 5
      %v2113 = vor.u32 %v2109, %v2112
      %v2114 = vrot.slane %v2113, 4
      %v2116 = vshll.u32 %v2038, 16
      %v2118 = vrot.slane %v2116, 5
      %v2119 = vsel %vm277, %v2114, %v2118
      %v2120 = vshrl.u32 %v2038, 16
      %v2122 = vrot.slane %v2120, 4
      %v2123 = vor.u32 %v2122, %v2118
      %v2124 = vrot.slane %v2123, 4
      %v2126 = vshll.u32 %v2039, 16
      %v2128 = vrot.slane %v2126, 5
      %v2129 = vsel %vm277, %v2124, %v2128
      %v2131 = vshrl.u32 %v2040, 16
      %v2133 = vrot.slane %v2131, 4
      %v2134 = vshll.u32 %v2040, 16
      %v2136 = vrot.slane %v2134, 5
      %v2137 = vor.u32 %v2133, %v2136
      %v2138 = vrot.slane %v2137, 4
      %v2140 = vshll.u32 %v2041, 16
      %v2142 = vrot.slane %v2140, 5
      %v2143 = vsel %vm277, %v2138, %v2142
      %v2144 = vshrl.u32 %v2041, 16
      %v2146 = vrot.slane %v2144, 4
      %v2147 = vor.u32 %v2146, %v2142
      %v2148 = vrot.slane %v2147, 4
      %v2150 = vshll.u32 %v2042, 16
      %v2152 = vrot.slane %v2150, 5
      %v2153 = vsel %vm277, %v2148, %v2152
      %v2155 = vshrl.u32 %v2043, 16
      %v2157 = vrot.slane %v2155, 4
      %v2158 = vshll.u32 %v2043, 16
      %v2160 = vrot.slane %v2158, 5
      %v2161 = vor.u32 %v2157, %v2160
      %v2162 = vrot.slane %v2161, 4
      %v2164 = vshll.u32 %v2044, 16
      %v2166 = vrot.slane %v2164, 5
      %v2167 = vsel %vm277, %v2162, %v2166
      %v2168 = vshrl.u32 %v2044, 16
      %v2170 = vrot.slane %v2168, 4
      %v2171 = vor.u32 %v2170, %v2166
      %v2172 = vrot.slane %v2171, 4
      %v2174 = vshll.u32 %v2045, 16
      %v2176 = vrot.slane %v2174, 5
      %v2177 = vsel %vm277, %v2172, %v2176
      %v2179 = vshrl.u32 %v2046, 16
      %v2181 = vrot.slane %v2179, 4
      %v2182 = vshll.u32 %v2046, 16
      %v2184 = vrot.slane %v2182, 5
      %v2185 = vor.u32 %v2181, %v2184
      %v2186 = vrot.slane %v2185, 4
      %v2188 = vshll.u32 %v2047, 16
      %v2190 = vrot.slane %v2188, 5
      %v2191 = vsel %vm277, %v2186, %v2190
      %v2192 = vshrl.u32 %v2047, 16
      %v2194 = vrot.slane %v2192, 4
      %v2195 = vor.u32 %v2194, %v2190
      %v2196 = vrot.slane %v2195, 4
      %v2198 = vshll.u32 %v2048, 16
      %v2200 = vrot.slane %v2198, 5
      %v2201 = vsel %vm277, %v2196, %v2200
      %v2203 = vshrl.u32 %v2049, 16
      %v2205 = vrot.slane %v2203, 4
      %v2206 = vshll.u32 %v2049, 16
      %v2208 = vrot.slane %v2206, 5
      %v2209 = vor.u32 %v2205, %v2208
      %v2210 = vrot.slane %v2209, 4
      %v2212 = vshll.u32 %v2050, 16
      %v2214 = vrot.slane %v2212, 5
      %v2215 = vsel %vm277, %v2210, %v2214
      %v2216 = vshrl.u32 %v2050, 16
      %v2218 = vrot.slane %v2216, 4
      %v2219 = vor.u32 %v2218, %v2214
      %v2220 = vrot.slane %v2219, 4
      %v2222 = vshll.u32 %v2051, 16
      %v2224 = vrot.slane %v2222, 5
      %v2225 = vsel %vm277, %v2220, %v2224
      %v2227 = vshrl.u32 %v2052, 16
      %v2229 = vrot.slane %v2227, 4
      %v2230 = vshll.u32 %v2052, 16
      %v2232 = vrot.slane %v2230, 5
      %v2233 = vor.u32 %v2229, %v2232
      %v2234 = vrot.slane %v2233, 4
      %v2236 = vshll.u32 %v2053, 16
      %v2238 = vrot.slane %v2236, 5
      %v2239 = vsel %vm277, %v2234, %v2238
      %v2240 = vshrl.u32 %v2053, 16
      %v2242 = vrot.slane %v2240, 4
      %v2243 = vor.u32 %v2242, %v2238
      %v2244 = vrot.slane %v2243, 4
      %v2246 = vshll.u32 %v2054, 16
      %v2248 = vrot.slane %v2246, 5
      %v2249 = vsel %vm277, %v2244, %v2248
      %v2251 = vshrl.u32 %v2055, 16
      %v2253 = vrot.slane %v2251, 4
      %v2254 = vshll.u32 %v2055, 16
      %v2256 = vrot.slane %v2254, 5
      %v2257 = vor.u32 %v2253, %v2256
      %v2258 = vrot.slane %v2257, 4
      %v2260 = vshll.u32 %v2056, 16
      %v2262 = vrot.slane %v2260, 5
      %v2263 = vsel %vm277, %v2258, %v2262
      %v2264 = vshrl.u32 %v2056, 16
      %v2266 = vrot.slane %v2264, 4
      %v2267 = vor.u32 %v2266, %v2262
      %v2268 = vrot.slane %v2267, 4
      %v2270 = vshll.u32 %v2057, 16
      %v2272 = vrot.slane %v2270, 5
      %v2273 = vsel %vm277, %v2268, %v2272
      %v2275 = vshrl.u32 %v2058, 16
      %v2277 = vrot.slane %v2275, 4
      %v2278 = vshll.u32 %v2058, 16
      %v2280 = vrot.slane %v2278, 5
      %v2281 = vor.u32 %v2277, %v2280
      %v2282 = vrot.slane %v2281, 4
      %v2284 = vshll.u32 %v2059, 16
      %v2286 = vrot.slane %v2284, 5
      %v2287 = vsel %vm277, %v2282, %v2286
      %v2288 = vshrl.u32 %v2059, 16
      %v2290 = vrot.slane %v2288, 4
      %v2291 = vor.u32 %v2290, %v2286
      %v2292 = vrot.slane %v2291, 4
      %v2294 = vshll.u32 %v2060, 16
      %v2296 = vrot.slane %v2294, 5
      %v2297 = vsel %vm277, %v2292, %v2296
      %v2299 = vshrl.u32 %v2061, 16
      %v2301 = vrot.slane %v2299, 4
      %v2302 = vshll.u32 %v2061, 16
      %v2304 = vrot.slane %v2302, 5
      %v2305 = vor.u32 %v2301, %v2304
      %v2306 = vrot.slane %v2305, 4
      %v2308 = vshll.u32 %v2062, 16
      %v2310 = vrot.slane %v2308, 5
      %v2311 = vsel %vm277, %v2306, %v2310
      %v2312 = vshrl.u32 %v2062, 16
      %v2314 = vrot.slane %v2312, 4
      %v2315 = vor.u32 %v2314, %v2310
      %v2316 = vrot.slane %v2315, 4
      %v2318 = vshll.u32 %v2063, 16
      %v2320 = vrot.slane %v2318, 5
      %v2321 = vsel %vm277, %v2316, %v2320
      %v2323 = vshrl.u32 %v2064, 16
      %v2325 = vrot.slane %v2323, 4
      %v2326 = vshll.u32 %v2064, 16
      %v2328 = vrot.slane %v2326, 5
      %v2329 = vor.u32 %v2325, %v2328
      %v2330 = vrot.slane %v2329, 4
      %v2332 = vshll.u32 %v2065, 16
      %v2334 = vrot.slane %v2332, 5
      %v2335 = vsel %vm277, %v2330, %v2334
      %v2336 = vshrl.u32 %v2065, 16
      %v2338 = vrot.slane %v2336, 4
      %v2339 = vor.u32 %v2338, %v2334
      %v2340 = vrot.slane %v2339, 4
      %v2342 = vshll.u32 %v2066, 16
      %v2344 = vrot.slane %v2342, 5
      %v2345 = vsel %vm277, %v2340, %v2344
      %v2347 = vshrl.u32 %v2067, 16
      %v2349 = vrot.slane %v2347, 4
      %v2350 = vshll.u32 %v2067, 16
      %v2352 = vrot.slane %v2350, 5
      %v2353 = vor.u32 %v2349, %v2352
      %v2354 = vrot.slane %v2353, 4
      %v2356 = vshll.u32 %v2068, 16
      %v2358 = vrot.slane %v2356, 5
      %v2359 = vsel %vm277, %v2354, %v2358
      %v2360 = vshrl.u32 %v2068, 16
      %v2362 = vrot.slane %v2360, 4
      %v2363 = vor.u32 %v2362, %v2358
      %v2364 = vrot.slane %v2363, 4
      %v2366 = vshll.u32 %v2069, 16
      %v2368 = vrot.slane %v2366, 5
      %v2369 = vsel %vm277, %v2364, %v2368
      %v2371 = vshrl.u32 %v2070, 16
      %v2373 = vrot.slane %v2371, 4
      %v2374 = vshll.u32 %v2070, 16
      %v2376 = vrot.slane %v2374, 5
      %v2377 = vor.u32 %v2373, %v2376
      %v2378 = vrot.slane %v2377, 4
      %v2380 = vshll.u32 %v2071, 16
      %v2382 = vrot.slane %v2380, 5
      %v2383 = vsel %vm277, %v2378, %v2382
      %v2384 = vshrl.u32 %v2071, 16
      %v2386 = vrot.slane %v2384, 4
      %v2387 = vor.u32 %v2386, %v2382
      %v2388 = vrot.slane %v2387, 4
      %v2390 = vshll.u32 %v2072, 16
      %v2392 = vrot.slane %v2390, 5
      %v2393 = vsel %vm277, %v2388, %v2392
      %v2395 = vshrl.u32 %v2073, 16
      %v2397 = vrot.slane %v2395, 4
      %v2398 = vshll.u32 %v2073, 16
      %v2400 = vrot.slane %v2398, 5
      %v2401 = vor.u32 %v2397, %v2400
      %v2402 = vrot.slane %v2401, 4
      %v2404 = vshll.u32 %v2074, 16
      %v2406 = vrot.slane %v2404, 5
      %v2407 = vsel %vm277, %v2402, %v2406
      %v2408 = vshrl.u32 %v2074, 16
      %v2410 = vrot.slane %v2408, 4
      %v2411 = vor.u32 %v2410, %v2406
      %v2412 = vrot.slane %v2411, 4
      %v2414 = vshll.u32 %v2075, 16
      %v2416 = vrot.slane %v2414, 5
      %v2417 = vsel %vm277, %v2412, %v2416
      %v2419 = vshrl.u32 %v2076, 16
      %v2421 = vrot.slane %v2419, 4
      %v2422 = vshll.u32 %v2076, 16
      %v2424 = vrot.slane %v2422, 5
      %v2425 = vor.u32 %v2421, %v2424
      %v2426 = vrot.slane %v2425, 4
      %v2428 = vshll.u32 %v2077, 16
      %v2430 = vrot.slane %v2428, 5
      %v2431 = vsel %vm277, %v2426, %v2430
      %v2432 = vshrl.u32 %v2077, 16
      %v2434 = vrot.slane %v2432, 4
      %v2435 = vor.u32 %v2434, %v2430
      %v2436 = vrot.slane %v2435, 4
      %v2438 = vshll.u32 %v2078, 16
      %v2440 = vrot.slane %v2438, 5
      %v2441 = vsel %vm277, %v2436, %v2440
      %v2443 = vshrl.u32 %v2079, 16
      %v2445 = vrot.slane %v2443, 4
      %v2446 = vshll.u32 %v2079, 16
      %v2448 = vrot.slane %v2446, 5
      %v2449 = vor.u32 %v2445, %v2448
      %v2450 = vrot.slane %v2449, 4
      %v2452 = vshll.u32 %v2080, 16
      %v2454 = vrot.slane %v2452, 5
      %v2455 = vsel %vm277, %v2450, %v2454
      %v2456 = vshrl.u32 %v2080, 16
      %v2458 = vrot.slane %v2456, 4
      %v2459 = vor.u32 %v2458, %v2454
      %v2460 = vrot.slane %v2459, 4
      %v2462 = vshll.u32 %v2081, 16
      %v2464 = vrot.slane %v2462, 5
      %v2465 = vsel %vm277, %v2460, %v2464
      %s2466 = scalar_lea.vmem %s1, 8
      %v2467 = vld [vmem:[%s2466] sm:$0x3]
      %v2468 = vunpack.c.l.b16 %v2095
      %v2469 = vunpack.c.l.b16 %v2105
      %v2470 = vunpack.c.l.b16 %v2119
      %v2471 = vunpack.c.l.b16 %v2129
      %v2472 = vunpack.c.l.b16 %v2143
      %v2473 = vunpack.c.l.b16 %v2153
      %v2474 = vunpack.c.l.b16 %v2167
      %v2475 = vunpack.c.l.b16 %v2177
      %v2476 = vunpack.c.l.b16 %v2191
      %v2477 = vunpack.c.l.b16 %v2201
      %v2478 = vunpack.c.l.b16 %v2215
      %v2479 = vunpack.c.l.b16 %v2225
      %v2480 = vunpack.c.l.b16 %v2239
      %v2481 = vunpack.c.l.b16 %v2249
      %v2482 = vunpack.c.l.b16 %v2263
      %v2483 = vunpack.c.l.b16 %v2273
      %v2484 = vunpack.c.l.b16 %v2287
      %v2485 = vunpack.c.l.b16 %v2297
      %v2486 = vunpack.c.l.b16 %v2311
      %v2487 = vunpack.c.l.b16 %v2321
      %v2488 = vunpack.c.l.b16 %v2335
      %v2489 = vunpack.c.l.b16 %v2345
      %v2490 = vunpack.c.l.b16 %v2359
      %v2491 = vunpack.c.l.b16 %v2369
      %v2492 = vunpack.c.l.b16 %v2383
      %v2493 = vunpack.c.l.b16 %v2393
      %v2494 = vunpack.c.l.b16 %v2407
      %v2495 = vunpack.c.l.b16 %v2417
      %v2496 = vunpack.c.l.b16 %v2431
      %v2497 = vunpack.c.l.b16 %v2441
      %v2498 = vunpack.c.l.b16 %v2455
      %v2499 = vunpack.c.l.b16 %v2465
      %v2500 = vpack.c.b16 %v2469, %v2468
      %v2501 = vpack.c.b16 %v2471, %v2470
      %v2502 = vpack.c.b16 %v2473, %v2472
      %v2503 = vpack.c.b16 %v2475, %v2474
      %v2504 = vpack.c.b16 %v2477, %v2476
      %v2505 = vpack.c.b16 %v2479, %v2478
      %v2506 = vpack.c.b16 %v2481, %v2480
      %v2507 = vpack.c.b16 %v2483, %v2482
      %v2508 = vpack.c.b16 %v2485, %v2484
      %v2509 = vpack.c.b16 %v2487, %v2486
      %v2510 = vpack.c.b16 %v2489, %v2488
      %v2511 = vpack.c.b16 %v2491, %v2490
      %v2512 = vpack.c.b16 %v2493, %v2492
      %v2513 = vpack.c.b16 %v2495, %v2494
      %v2514 = vpack.c.b16 %v2497, %v2496
      %v2515 = vpack.c.b16 %v2499, %v2498
      %v2517 = vsel %vm712, %v2500, 0
      %v2520 = vsel %vm712, %v2501, 0
      %v2523 = vsel %vm712, %v2502, 0
      %v2526 = vsel %vm712, %v2503, 0
      %v2529 = vsel %vm712, %v2504, 0
      %v2532 = vsel %vm712, %v2505, 0
      %v2535 = vsel %vm712, %v2506, 0
      %v2538 = vsel %vm712, %v2507, 0
      %v2541 = vsel %vm712, %v2508, 0
      %v2544 = vsel %vm712, %v2509, 0
      %v2547 = vsel %vm712, %v2510, 0
      %v2550 = vsel %vm712, %v2511, 0
      %v2553 = vsel %vm712, %v2512, 0
      %v2556 = vsel %vm712, %v2513, 0
      %v2559 = vsel %vm712, %v2514, 0
      %v2562 = vsel %vm712, %v2515, 0
      %v2565 = vsel %vm761, %v2467, 0
      %2567 = vmatprep.subr.bf16.mxu0 0
      %2568 = vmatpush1.bf16.msra.mxu0 %v2565
      %2569 = vmatprep.subr.bf16.mxu0 0
      %2570 = vmatpush1.bf16.msra.mxu0 0
      %2571 = vmatprep.subr.bf16.mxu0 0
      %2572 = vmatpush1.bf16.msra.mxu0 0
      %2573 = vmatprep.subr.bf16.mxu0 0
      %2574 = vmatpush1.bf16.msra.mxu0 0
      %2575 = vmatprep.subr.bf16.mxu0 0
      %2576 = vmatpush1.bf16.msra.mxu0 0
      %2577 = vmatprep.subr.bf16.mxu0 0
      %2578 = vmatpush1.bf16.msra.mxu0 0
      %2579 = vmatprep.subr.bf16.mxu0 0
      %2580 = vmatpush1.bf16.msra.mxu0 0
      %2581 = vmatprep.subr.bf16.mxu0 0
      %2582 = vmatpush1.bf16.msra.mxu0 0
      %2583 = vmatprep.subr.bf16.mxu0 0
      %2584 = vmatpush1.bf16.msra.mxu0 0
      %2585 = vmatprep.subr.bf16.mxu0 0
      %2586 = vmatpush1.bf16.msra.mxu0 0
      %2587 = vmatprep.subr.bf16.mxu0 0
      %2588 = vmatpush1.bf16.msra.mxu0 0
      %2589 = vmatprep.subr.bf16.mxu0 0
      %2590 = vmatpush1.bf16.msra.mxu0 0
      %2591 = vmatprep.subr.bf16.mxu0 0
      %2592 = vmatpush1.bf16.msra.mxu0 0
      %2593 = vmatprep.subr.bf16.mxu0 0
      %2594 = vmatpush1.bf16.msra.mxu0 0
      %2595 = vmatprep.subr.bf16.mxu0 0
      %2596 = vmatpush1.bf16.msra.mxu0 0
      %2597 = vmatprep.subr.bf16.mxu0 0
      %2598 = vmatpush1.bf16.msra.mxu0 0
      %2599 = vmatprep.mubr.bf16.mxu0 0
      %2600 = vmatmul.mubr.bf16.gmra.mrb[0].mxu0 %v2517
      %v2601 = vpop.f32.mrb[0].mxu0
      %v2602 = vadd.f32 0.0, %v2601
      %v2603 = vpop.f32.mrb[0].mxu0
      %v2604 = vpop.f32.mrb[0].mxu0
      %v2605 = vadd.f32 0.0, %v2604
      %v2606 = vpop.f32.mrb[0].mxu0
      %2607 = vmatprep.mubr.bf16.mxu0 0
      %2608 = vmatmul.mubr.bf16.gmra.mrb[0].mxu0 %v2520
      %v2609 = vpop.f32.mrb[0].mxu0
      %v2610 = vadd.f32 0.0, %v2609
      %v2611 = vpop.f32.mrb[0].mxu0
      %v2612 = vpop.f32.mrb[0].mxu0
      %v2613 = vadd.f32 0.0, %v2612
      %v2614 = vpop.f32.mrb[0].mxu0
      %2615 = vmatprep.mubr.bf16.mxu0 0
      %2616 = vmatmul.mubr.bf16.gmra.mrb[0].mxu0 %v2523
      %v2617 = vpop.f32.mrb[0].mxu0
      %v2618 = vadd.f32 0.0, %v2617
      %v2619 = vpop.f32.mrb[0].mxu0
      %v2620 = vpop.f32.mrb[0].mxu0
      %v2621 = vadd.f32 0.0, %v2620
      %v2622 = vpop.f32.mrb[0].mxu0
      %2623 = vmatprep.mubr.bf16.mxu0 0
      %2624 = vmatmul.mubr.bf16.gmra.mrb[0].mxu0 %v2526
      %v2625 = vpop.f32.mrb[0].mxu0
      %v2626 = vadd.f32 0.0, %v2625
      %v2627 = vpop.f32.mrb[0].mxu0
      %v2628 = vpop.f32.mrb[0].mxu0
      %v2629 = vadd.f32 0.0, %v2628
      %v2630 = vpop.f32.mrb[0].mxu0
      %2631 = vmatprep.mubr.bf16.mxu0 0
      %2632 = vmatmul.mubr.bf16.gmra.mrb[0].mxu0 %v2529
      %v2633 = vpop.f32.mrb[0].mxu0
      %v2634 = vadd.f32 0.0, %v2633
      %v2635 = vpop.f32.mrb[0].mxu0
      %v2636 = vpop.f32.mrb[0].mxu0
      %v2637 = vadd.f32 0.0, %v2636
      %v2638 = vpop.f32.mrb[0].mxu0
      %2639 = vmatprep.mubr.bf16.mxu0 0
      %2640 = vmatmul.mubr.bf16.gmra.mrb[0].mxu0 %v2532
      %v2641 = vpop.f32.mrb[0].mxu0
      %v2642 = vadd.f32 0.0, %v2641
      %v2643 = vpop.f32.mrb[0].mxu0
      %v2644 = vpop.f32.mrb[0].mxu0
      %v2645 = vadd.f32 0.0, %v2644
      %v2646 = vpop.f32.mrb[0].mxu0
      %2647 = vmatprep.mubr.bf16.mxu0 0
      %2648 = vmatmul.mubr.bf16.gmra.mrb[0].mxu0 %v2535
      %v2649 = vpop.f32.mrb[0].mxu0
      %v2650 = vadd.f32 0.0, %v2649
      %v2651 = vpop.f32.mrb[0].mxu0
      %v2652 = vpop.f32.mrb[0].mxu0
      %v2653 = vadd.f32 0.0, %v2652
      %v2654 = vpop.f32.mrb[0].mxu0
      %2655 = vmatprep.mubr.bf16.mxu0 0
      %2656 = vmatmul.mubr.bf16.gmra.mrb[0].mxu0 %v2538
      %v2657 = vpop.f32.mrb[0].mxu0
      %v2658 = vadd.f32 0.0, %v2657
      %v2659 = vpop.f32.mrb[0].mxu0
      %v2660 = vpop.f32.mrb[0].mxu0
      %v2661 = vadd.f32 0.0, %v2660
      %v2662 = vpop.f32.mrb[0].mxu0
      %2663 = vmatprep.mubr.bf16.mxu0 0
      %2664 = vmatmul.mubr.bf16.gmra.mrb[0].mxu0 %v2541
      %v2665 = vpop.f32.mrb[0].mxu0
      %v2666 = vadd.f32 0.0, %v2665
      %v2667 = vpop.f32.mrb[0].mxu0
      %v2668 = vpop.f32.mrb[0].mxu0
      %v2669 = vadd.f32 0.0, %v2668
      %v2670 = vpop.f32.mrb[0].mxu0
      %2671 = vmatprep.mubr.bf16.mxu0 0
      %2672 = vmatmul.mubr.bf16.gmra.mrb[0].mxu0 %v2544
      %v2673 = vpop.f32.mrb[0].mxu0
      %v2674 = vadd.f32 0.0, %v2673
      %v2675 = vpop.f32.mrb[0].mxu0
      %v2676 = vpop.f32.mrb[0].mxu0
      %v2677 = vadd.f32 0.0, %v2676
      %v2678 = vpop.f32.mrb[0].mxu0
      %2679 = vmatprep.mubr.bf16.mxu0 0
      %2680 = vmatmul.mubr.bf16.gmra.mrb[0].mxu0 %v2547
      %v2681 = vpop.f32.mrb[0].mxu0
      %v2682 = vadd.f32 0.0, %v2681
      %v2683 = vpop.f32.mrb[0].mxu0
      %v2684 = vpop.f32.mrb[0].mxu0
      %v2685 = vadd.f32 0.0, %v2684
      %v2686 = vpop.f32.mrb[0].mxu0
      %2687 = vmatprep.mubr.bf16.mxu0 0
      %2688 = vmatmul.mubr.bf16.gmra.mrb[0].mxu0 %v2550
      %v2689 = vpop.f32.mrb[0].mxu0
      %v2690 = vadd.f32 0.0, %v2689
      %v2691 = vpop.f32.mrb[0].mxu0
      %v2692 = vpop.f32.mrb[0].mxu0
      %v2693 = vadd.f32 0.0, %v2692
      %v2694 = vpop.f32.mrb[0].mxu0
      %2695 = vmatprep.mubr.bf16.mxu0 0
      %2696 = vmatmul.mubr.bf16.gmra.mrb[0].mxu0 %v2553
      %v2697 = vpop.f32.mrb[0].mxu0
      %v2698 = vadd.f32 0.0, %v2697
      %v2699 = vpop.f32.mrb[0].mxu0
      %v2700 = vpop.f32.mrb[0].mxu0
      %v2701 = vadd.f32 0.0, %v2700
      %v2702 = vpop.f32.mrb[0].mxu0
      %2703 = vmatprep.mubr.bf16.mxu0 0
      %2704 = vmatmul.mubr.bf16.gmra.mrb[0].mxu0 %v2556
      %v2705 = vpop.f32.mrb[0].mxu0
      %v2706 = vadd.f32 0.0, %v2705
      %v2707 = vpop.f32.mrb[0].mxu0
      %v2708 = vpop.f32.mrb[0].mxu0
      %v2709 = vadd.f32 0.0, %v2708
      %v2710 = vpop.f32.mrb[0].mxu0
      %2711 = vmatprep.mubr.bf16.mxu0 0
      %2712 = vmatmul.mubr.bf16.gmra.mrb[0].mxu0 %v2559
      %v2713 = vpop.f32.mrb[0].mxu0
      %v2714 = vadd.f32 0.0, %v2713
      %v2715 = vpop.f32.mrb[0].mxu0
      %v2716 = vpop.f32.mrb[0].mxu0
      %v2717 = vadd.f32 0.0, %v2716
      %v2718 = vpop.f32.mrb[0].mxu0
      %2719 = vmatprep.mubr.bf16.mxu0 0
      %2720 = vmatmul.mubr.bf16.gmra.mrb[0].mxu0 %v2562
      %v2721 = vpop.f32.mrb[0].mxu0
      %v2722 = vadd.f32 0.0, %v2721
      %v2723 = vpop.f32.mrb[0].mxu0
      %v2724 = vpop.f32.mrb[0].mxu0
      %v2725 = vadd.f32 0.0, %v2724
      %v2726 = vpop.f32.mrb[0].mxu0
      %2727 = vdwg.mxu0
      %v2728 = vadd.f32 %v2002, %v2602
      %v2729 = vadd.f32 %v2003, %v2605
      %v2730 = vadd.f32 %v2004, %v2610
      %v2731 = vadd.f32 %v2005, %v2613
      %v2732 = vadd.f32 %v2006, %v2618
      %v2733 = vadd.f32 %v2007, %v2621
      %v2734 = vadd.f32 %v2008, %v2626
      %v2735 = vadd.f32 %v2009, %v2629
      %v2736 = vadd.f32 %v2010, %v2634
      %v2737 = vadd.f32 %v2011, %v2637
      %v2738 = vadd.f32 %v2012, %v2642
      %v2739 = vadd.f32 %v2013, %v2645
      %v2740 = vadd.f32 %v2014, %v2650
      %v2741 = vadd.f32 %v2015, %v2653
      %v2742 = vadd.f32 %v2016, %v2658
      %v2743 = vadd.f32 %v2017, %v2661
      %v2744 = vadd.f32 %v2018, %v2666
      %v2745 = vadd.f32 %v2019, %v2669
      %v2746 = vadd.f32 %v2020, %v2674
      %v2747 = vadd.f32 %v2021, %v2677
      %v2748 = vadd.f32 %v2022, %v2682
      %v2749 = vadd.f32 %v2023, %v2685
      %v2750 = vadd.f32 %v2024, %v2690
      %v2751 = vadd.f32 %v2025, %v2693
      %v2752 = vadd.f32 %v2026, %v2698
      %v2753 = vadd.f32 %v2027, %v2701
      %v2754 = vadd.f32 %v2028, %v2706
      %v2755 = vadd.f32 %v2029, %v2709
      %v2756 = vadd.f32 %v2030, %v2714
      %v2757 = vadd.f32 %v2031, %v2717
      %v2758 = vadd.f32 %v2032, %v2722
      %v2759 = vadd.f32 %v2033, %v2725
      %v2760 = vld [vmem:[%s1675] sm:$0xe]
      %v2761 = vld [vmem:[%s1675 + $0xc] sm:$0xe]
      %v2762 = vld [vmem:[%s1675 + $0x18] sm:$0xe]
      %v2763 = vld [vmem:[%s1675 + $0x24] sm:$0xe]
      %v2764 = vld [vmem:[%s1675 + $0x30] sm:$0xe]
      %v2765 = vld [vmem:[%s1675 + $0x3c] sm:$0xe]
      %v2766 = vld [vmem:[%s1675 + $0x48] sm:$0xe]
      %v2767 = vld [vmem:[%s1675 + $0x54] sm:$0xe]
      %v2768 = vld [vmem:[%s1675 + $0x60] sm:$0xe]
      %v2769 = vld [vmem:[%s1675 + $0x6c] sm:$0xe]
      %v2770 = vld [vmem:[%s1675 + $0x78] sm:$0xe]
      %v2771 = vld [vmem:[%s1675 + $0x84] sm:$0xe]
      %v2772 = vld [vmem:[%s1675 + $0x90] sm:$0xe]
      %v2773 = vld [vmem:[%s1675 + $0x9c] sm:$0xe]
      %v2774 = vld [vmem:[%s1675 + $0xa8] sm:$0xe]
      %v2775 = vld [vmem:[%s1675 + $0xb4] sm:$0xe]
      %v2824 = vrot.slane %v2760, 5
      %v2825 = vrot.slane %v2824, 4
      %v2826 = vrot.slane %v2035, 5
      %v2827 = vsel %vm1268, %v2825, %v2826
      %v2828 = vrot.slane %v2826, 4
      %v2829 = vrot.slane %v2036, 5
      %v2830 = vsel %vm1268, %v2828, %v2829
      %v2831 = vrot.slane %v2761, 5
      %v2832 = vrot.slane %v2831, 4
      %v2833 = vrot.slane %v2038, 5
      %v2834 = vsel %vm1268, %v2832, %v2833
      %v2835 = vrot.slane %v2833, 4
      %v2836 = vrot.slane %v2039, 5
      %v2837 = vsel %vm1268, %v2835, %v2836
      %v2838 = vrot.slane %v2762, 5
      %v2839 = vrot.slane %v2838, 4
      %v2840 = vrot.slane %v2041, 5
      %v2841 = vsel %vm1268, %v2839, %v2840
      %v2842 = vrot.slane %v2840, 4
      %v2843 = vrot.slane %v2042, 5
      %v2844 = vsel %vm1268, %v2842, %v2843
      %v2845 = vrot.slane %v2763, 5
      %v2846 = vrot.slane %v2845, 4
      %v2847 = vrot.slane %v2044, 5
      %v2848 = vsel %vm1268, %v2846, %v2847
      %v2849 = vrot.slane %v2847, 4
      %v2850 = vrot.slane %v2045, 5
      %v2851 = vsel %vm1268, %v2849, %v2850
      %v2852 = vrot.slane %v2764, 5
      %v2853 = vrot.slane %v2852, 4
      %v2854 = vrot.slane %v2047, 5
      %v2855 = vsel %vm1268, %v2853, %v2854
      %v2856 = vrot.slane %v2854, 4
      %v2857 = vrot.slane %v2048, 5
      %v2858 = vsel %vm1268, %v2856, %v2857
      %v2859 = vrot.slane %v2765, 5
      %v2860 = vrot.slane %v2859, 4
      %v2861 = vrot.slane %v2050, 5
      %v2862 = vsel %vm1268, %v2860, %v2861
      %v2863 = vrot.slane %v2861, 4
      %v2864 = vrot.slane %v2051, 5
      %v2865 = vsel %vm1268, %v2863, %v2864
      %v2866 = vrot.slane %v2766, 5
      %v2867 = vrot.slane %v2866, 4
      %v2868 = vrot.slane %v2053, 5
      %v2869 = vsel %vm1268, %v2867, %v2868
      %v2870 = vrot.slane %v2868, 4
      %v2871 = vrot.slane %v2054, 5
      %v2872 = vsel %vm1268, %v2870, %v2871
      %v2873 = vrot.slane %v2767, 5
      %v2874 = vrot.slane %v2873, 4
      %v2875 = vrot.slane %v2056, 5
      %v2876 = vsel %vm1268, %v2874, %v2875
      %v2877 = vrot.slane %v2875, 4
      %v2878 = vrot.slane %v2057, 5
      %v2879 = vsel %vm1268, %v2877, %v2878
      %v2880 = vrot.slane %v2768, 5
      %v2881 = vrot.slane %v2880, 4
      %v2882 = vrot.slane %v2059, 5
      %v2883 = vsel %vm1268, %v2881, %v2882
      %v2884 = vrot.slane %v2882, 4
      %v2885 = vrot.slane %v2060, 5
      %v2886 = vsel %vm1268, %v2884, %v2885
      %v2887 = vrot.slane %v2769, 5
      %v2888 = vrot.slane %v2887, 4
      %v2889 = vrot.slane %v2062, 5
      %v2890 = vsel %vm1268, %v2888, %v2889
      %v2891 = vrot.slane %v2889, 4
      %v2892 = vrot.slane %v2063, 5
      %v2893 = vsel %vm1268, %v2891, %v2892
      %v2894 = vrot.slane %v2770, 5
      %v2895 = vrot.slane %v2894, 4
      %v2896 = vrot.slane %v2065, 5
      %v2897 = vsel %vm1268, %v2895, %v2896
      %v2898 = vrot.slane %v2896, 4
      %v2899 = vrot.slane %v2066, 5
      %v2900 = vsel %vm1268, %v2898, %v2899
      %v2901 = vrot.slane %v2771, 5
      %v2902 = vrot.slane %v2901, 4
      %v2903 = vrot.slane %v2068, 5
      %v2904 = vsel %vm1268, %v2902, %v2903
      %v2905 = vrot.slane %v2903, 4
      %v2906 = vrot.slane %v2069, 5
      %v2907 = vsel %vm1268, %v2905, %v2906
      %v2908 = vrot.slane %v2772, 5
      %v2909 = vrot.slane %v2908, 4
      %v2910 = vrot.slane %v2071, 5
      %v2911 = vsel %vm1268, %v2909, %v2910
      %v2912 = vrot.slane %v2910, 4
      %v2913 = vrot.slane %v2072, 5
      %v2914 = vsel %vm1268, %v2912, %v2913
      %v2915 = vrot.slane %v2773, 5
      %v2916 = vrot.slane %v2915, 4
      %v2917 = vrot.slane %v2074, 5
      %v2918 = vsel %vm1268, %v2916, %v2917
      %v2919 = vrot.slane %v2917, 4
      %v2920 = vrot.slane %v2075, 5
      %v2921 = vsel %vm1268, %v2919, %v2920
      %v2922 = vrot.slane %v2774, 5
      %v2923 = vrot.slane %v2922, 4
      %v2924 = vrot.slane %v2077, 5
      %v2925 = vsel %vm1268, %v2923, %v2924
      %v2926 = vrot.slane %v2924, 4
      %v2927 = vrot.slane %v2078, 5
      %v2928 = vsel %vm1268, %v2926, %v2927
      %v2929 = vrot.slane %v2775, 5
      %v2930 = vrot.slane %v2929, 4
      %v2931 = vrot.slane %v2080, 5
      %v2932 = vsel %vm1268, %v2930, %v2931
      %v2933 = vrot.slane %v2931, 4
      %v2934 = vrot.slane %v2081, 5
      %v2935 = vsel %vm1268, %v2933, %v2934
      %s2936 = scalar_lea.vmem %s1, 10
      %v2937 = vld [vmem:[%s2936] sm:$0x3]
      %v2938 = vunpack.c.l.b16 %v2827
      %v2939 = vunpack.c.l.b16 %v2830
      %v2940 = vunpack.c.l.b16 %v2834
      %v2941 = vunpack.c.l.b16 %v2837
      %v2942 = vunpack.c.l.b16 %v2841
      %v2943 = vunpack.c.l.b16 %v2844
      %v2944 = vunpack.c.l.b16 %v2848
      %v2945 = vunpack.c.l.b16 %v2851
      %v2946 = vunpack.c.l.b16 %v2855
      %v2947 = vunpack.c.l.b16 %v2858
      %v2948 = vunpack.c.l.b16 %v2862
      %v2949 = vunpack.c.l.b16 %v2865
      %v2950 = vunpack.c.l.b16 %v2869
      %v2951 = vunpack.c.l.b16 %v2872
      %v2952 = vunpack.c.l.b16 %v2876
      %v2953 = vunpack.c.l.b16 %v2879
      %v2954 = vunpack.c.l.b16 %v2883
      %v2955 = vunpack.c.l.b16 %v2886
      %v2956 = vunpack.c.l.b16 %v2890
      %v2957 = vunpack.c.l.b16 %v2893
      %v2958 = vunpack.c.l.b16 %v2897
      %v2959 = vunpack.c.l.b16 %v2900
      %v2960 = vunpack.c.l.b16 %v2904
      %v2961 = vunpack.c.l.b16 %v2907
      %v2962 = vunpack.c.l.b16 %v2911
      %v2963 = vunpack.c.l.b16 %v2914
      %v2964 = vunpack.c.l.b16 %v2918
      %v2965 = vunpack.c.l.b16 %v2921
      %v2966 = vunpack.c.l.b16 %v2925
      %v2967 = vunpack.c.l.b16 %v2928
      %v2968 = vunpack.c.l.b16 %v2932
      %v2969 = vunpack.c.l.b16 %v2935
      %v2970 = vpack.c.b16 %v2939, %v2938
      %v2971 = vpack.c.b16 %v2941, %v2940
      %v2972 = vpack.c.b16 %v2943, %v2942
      %v2973 = vpack.c.b16 %v2945, %v2944
      %v2974 = vpack.c.b16 %v2947, %v2946
      %v2975 = vpack.c.b16 %v2949, %v2948
      %v2976 = vpack.c.b16 %v2951, %v2950
      %v2977 = vpack.c.b16 %v2953, %v2952
      %v2978 = vpack.c.b16 %v2955, %v2954
      %v2979 = vpack.c.b16 %v2957, %v2956
      %v2980 = vpack.c.b16 %v2959, %v2958
      %v2981 = vpack.c.b16 %v2961, %v2960
      %v2982 = vpack.c.b16 %v2963, %v2962
      %v2983 = vpack.c.b16 %v2965, %v2964
      %v2984 = vpack.c.b16 %v2967, %v2966
      %v2985 = vpack.c.b16 %v2969, %v2968
      %v2987 = vsel %vm712, %v2970, 0
      %v2990 = vsel %vm712, %v2971, 0
      %v2993 = vsel %vm712, %v2972, 0
      %v2996 = vsel %vm712, %v2973, 0
      %v2999 = vsel %vm712, %v2974, 0
      %v3002 = vsel %vm712, %v2975, 0
      %v3005 = vsel %vm712, %v2976, 0
      %v3008 = vsel %vm712, %v2977, 0
      %v3011 = vsel %vm712, %v2978, 0
      %v3014 = vsel %vm712, %v2979, 0
      %v3017 = vsel %vm712, %v2980, 0
      %v3020 = vsel %vm712, %v2981, 0
      %v3023 = vsel %vm712, %v2982, 0
      %v3026 = vsel %vm712, %v2983, 0
      %v3029 = vsel %vm712, %v2984, 0
      %v3032 = vsel %vm712, %v2985, 0
      %v3035 = vsel %vm761, %v2937, 0
      %3037 = vmatprep.subr.bf16.mxu0 0
      %3038 = vmatpush1.bf16.msra.mxu0 %v3035
      %3039 = vmatprep.subr.bf16.mxu0 0
      %3040 = vmatpush1.bf16.msra.mxu0 0
      %3041 = vmatprep.subr.bf16.mxu0 0
      %3042 = vmatpush1.bf16.msra.mxu0 0
      %3043 = vmatprep.subr.bf16.mxu0 0
      %3044 = vmatpush1.bf16.msra.mxu0 0
      %3045 = vmatprep.subr.bf16.mxu0 0
      %3046 = vmatpush1.bf16.msra.mxu0 0
      %3047 = vmatprep.subr.bf16.mxu0 0
      %3048 = vmatpush1.bf16.msra.mxu0 0
      %3049 = vmatprep.subr.bf16.mxu0 0
      %3050 = vmatpush1.bf16.msra.mxu0 0
      %3051 = vmatprep.subr.bf16.mxu0 0
      %3052 = vmatpush1.bf16.msra.mxu0 0
      %3053 = vmatprep.subr.bf16.mxu0 0
      %3054 = vmatpush1.bf16.msra.mxu0 0
      %3055 = vmatprep.subr.bf16.mxu0 0
      %3056 = vmatpush1.bf16.msra.mxu0 0
      %3057 = vmatprep.subr.bf16.mxu0 0
      %3058 = vmatpush1.bf16.msra.mxu0 0
      %3059 = vmatprep.subr.bf16.mxu0 0
      %3060 = vmatpush1.bf16.msra.mxu0 0
      %3061 = vmatprep.subr.bf16.mxu0 0
      %3062 = vmatpush1.bf16.msra.mxu0 0
      %3063 = vmatprep.subr.bf16.mxu0 0
      %3064 = vmatpush1.bf16.msra.mxu0 0
      %3065 = vmatprep.subr.bf16.mxu0 0
      %3066 = vmatpush1.bf16.msra.mxu0 0
      %3067 = vmatprep.subr.bf16.mxu0 0
      %3068 = vmatpush1.bf16.msra.mxu0 0
      %3069 = vmatprep.mubr.bf16.mxu0 0
      %3070 = vmatmul.mubr.bf16.gmra.mrb[0].mxu0 %v2987
      %v3071 = vpop.f32.mrb[0].mxu0
      %v3072 = vadd.f32 0.0, %v3071
      %v3073 = vpop.f32.mrb[0].mxu0
      %v3074 = vpop.f32.mrb[0].mxu0
      %v3075 = vadd.f32 0.0, %v3074
      %v3076 = vpop.f32.mrb[0].mxu0
      %3077 = vmatprep.mubr.bf16.mxu0 0
      %3078 = vmatmul.mubr.bf16.gmra.mrb[0].mxu0 %v2990
      %v3079 = vpop.f32.mrb[0].mxu0
      %v3080 = vadd.f32 0.0, %v3079
      %v3081 = vpop.f32.mrb[0].mxu0
      %v3082 = vpop.f32.mrb[0].mxu0
      %v3083 = vadd.f32 0.0, %v3082
      %v3084 = vpop.f32.mrb[0].mxu0
      %3085 = vmatprep.mubr.bf16.mxu0 0
      %3086 = vmatmul.mubr.bf16.gmra.mrb[0].mxu0 %v2993
      %v3087 = vpop.f32.mrb[0].mxu0
      %v3088 = vadd.f32 0.0, %v3087
      %v3089 = vpop.f32.mrb[0].mxu0
      %v3090 = vpop.f32.mrb[0].mxu0
      %v3091 = vadd.f32 0.0, %v3090
      %v3092 = vpop.f32.mrb[0].mxu0
      %3093 = vmatprep.mubr.bf16.mxu0 0
      %3094 = vmatmul.mubr.bf16.gmra.mrb[0].mxu0 %v2996
      %v3095 = vpop.f32.mrb[0].mxu0
      %v3096 = vadd.f32 0.0, %v3095
      %v3097 = vpop.f32.mrb[0].mxu0
      %v3098 = vpop.f32.mrb[0].mxu0
      %v3099 = vadd.f32 0.0, %v3098
      %v3100 = vpop.f32.mrb[0].mxu0
      %3101 = vmatprep.mubr.bf16.mxu0 0
      %3102 = vmatmul.mubr.bf16.gmra.mrb[0].mxu0 %v2999
      %v3103 = vpop.f32.mrb[0].mxu0
      %v3104 = vadd.f32 0.0, %v3103
      %v3105 = vpop.f32.mrb[0].mxu0
      %v3106 = vpop.f32.mrb[0].mxu0
      %v3107 = vadd.f32 0.0, %v3106
      %v3108 = vpop.f32.mrb[0].mxu0
      %3109 = vmatprep.mubr.bf16.mxu0 0
      %3110 = vmatmul.mubr.bf16.gmra.mrb[0].mxu0 %v3002
      %v3111 = vpop.f32.mrb[0].mxu0
      %v3112 = vadd.f32 0.0, %v3111
      %v3113 = vpop.f32.mrb[0].mxu0
      %v3114 = vpop.f32.mrb[0].mxu0
      %v3115 = vadd.f32 0.0, %v3114
      %v3116 = vpop.f32.mrb[0].mxu0
      %3117 = vmatprep.mubr.bf16.mxu0 0
      %3118 = vmatmul.mubr.bf16.gmra.mrb[0].mxu0 %v3005
      %v3119 = vpop.f32.mrb[0].mxu0
      %v3120 = vadd.f32 0.0, %v3119
      %v3121 = vpop.f32.mrb[0].mxu0
      %v3122 = vpop.f32.mrb[0].mxu0
      %v3123 = vadd.f32 0.0, %v3122
      %v3124 = vpop.f32.mrb[0].mxu0
      %3125 = vmatprep.mubr.bf16.mxu0 0
      %3126 = vmatmul.mubr.bf16.gmra.mrb[0].mxu0 %v3008
      %v3127 = vpop.f32.mrb[0].mxu0
      %v3128 = vadd.f32 0.0, %v3127
      %v3129 = vpop.f32.mrb[0].mxu0
      %v3130 = vpop.f32.mrb[0].mxu0
      %v3131 = vadd.f32 0.0, %v3130
      %v3132 = vpop.f32.mrb[0].mxu0
      %3133 = vmatprep.mubr.bf16.mxu0 0
      %3134 = vmatmul.mubr.bf16.gmra.mrb[0].mxu0 %v3011
      %v3135 = vpop.f32.mrb[0].mxu0
      %v3136 = vadd.f32 0.0, %v3135
      %v3137 = vpop.f32.mrb[0].mxu0
      %v3138 = vpop.f32.mrb[0].mxu0
      %v3139 = vadd.f32 0.0, %v3138
      %v3140 = vpop.f32.mrb[0].mxu0
      %3141 = vmatprep.mubr.bf16.mxu0 0
      %3142 = vmatmul.mubr.bf16.gmra.mrb[0].mxu0 %v3014
      %v3143 = vpop.f32.mrb[0].mxu0
      %v3144 = vadd.f32 0.0, %v3143
      %v3145 = vpop.f32.mrb[0].mxu0
      %v3146 = vpop.f32.mrb[0].mxu0
      %v3147 = vadd.f32 0.0, %v3146
      %v3148 = vpop.f32.mrb[0].mxu0
      %3149 = vmatprep.mubr.bf16.mxu0 0
      %3150 = vmatmul.mubr.bf16.gmra.mrb[0].mxu0 %v3017
      %v3151 = vpop.f32.mrb[0].mxu0
      %v3152 = vadd.f32 0.0, %v3151
      %v3153 = vpop.f32.mrb[0].mxu0
      %v3154 = vpop.f32.mrb[0].mxu0
      %v3155 = vadd.f32 0.0, %v3154
      %v3156 = vpop.f32.mrb[0].mxu0
      %3157 = vmatprep.mubr.bf16.mxu0 0
      %3158 = vmatmul.mubr.bf16.gmra.mrb[0].mxu0 %v3020
      %v3159 = vpop.f32.mrb[0].mxu0
      %v3160 = vadd.f32 0.0, %v3159
      %v3161 = vpop.f32.mrb[0].mxu0
      %v3162 = vpop.f32.mrb[0].mxu0
      %v3163 = vadd.f32 0.0, %v3162
      %v3164 = vpop.f32.mrb[0].mxu0
      %3165 = vmatprep.mubr.bf16.mxu0 0
      %3166 = vmatmul.mubr.bf16.gmra.mrb[0].mxu0 %v3023
      %v3167 = vpop.f32.mrb[0].mxu0
      %v3168 = vadd.f32 0.0, %v3167
      %v3169 = vpop.f32.mrb[0].mxu0
      %v3170 = vpop.f32.mrb[0].mxu0
      %v3171 = vadd.f32 0.0, %v3170
      %v3172 = vpop.f32.mrb[0].mxu0
      %3173 = vmatprep.mubr.bf16.mxu0 0
      %3174 = vmatmul.mubr.bf16.gmra.mrb[0].mxu0 %v3026
      %v3175 = vpop.f32.mrb[0].mxu0
      %v3176 = vadd.f32 0.0, %v3175
      %v3177 = vpop.f32.mrb[0].mxu0
      %v3178 = vpop.f32.mrb[0].mxu0
      %v3179 = vadd.f32 0.0, %v3178
      %v3180 = vpop.f32.mrb[0].mxu0
      %3181 = vmatprep.mubr.bf16.mxu0 0
      %3182 = vmatmul.mubr.bf16.gmra.mrb[0].mxu0 %v3029
      %v3183 = vpop.f32.mrb[0].mxu0
      %v3184 = vadd.f32 0.0, %v3183
      %v3185 = vpop.f32.mrb[0].mxu0
      %v3186 = vpop.f32.mrb[0].mxu0
      %v3187 = vadd.f32 0.0, %v3186
      %v3188 = vpop.f32.mrb[0].mxu0
      %3189 = vmatprep.mubr.bf16.mxu0 0
      %3190 = vmatmul.mubr.bf16.gmra.mrb[0].mxu0 %v3032
      %v3191 = vpop.f32.mrb[0].mxu0
      %v3192 = vadd.f32 0.0, %v3191
      %v3193 = vpop.f32.mrb[0].mxu0
      %v3194 = vpop.f32.mrb[0].mxu0
      %v3195 = vadd.f32 0.0, %v3194
      %v3196 = vpop.f32.mrb[0].mxu0
      %3197 = vdwg.mxu0
      %v3198 = vadd.f32 %v2728, %v3072
      %v3199 = vadd.f32 %v2729, %v3075
      %v3200 = vadd.f32 %v2730, %v3080
      %v3201 = vadd.f32 %v2731, %v3083
      %v3202 = vadd.f32 %v2732, %v3088
      %v3203 = vadd.f32 %v2733, %v3091
      %v3204 = vadd.f32 %v2734, %v3096
      %v3205 = vadd.f32 %v2735, %v3099
      %v3206 = vadd.f32 %v2736, %v3104
      %v3207 = vadd.f32 %v2737, %v3107
      %v3208 = vadd.f32 %v2738, %v3112
      %v3209 = vadd.f32 %v2739, %v3115
      %v3210 = vadd.f32 %v2740, %v3120
      %v3211 = vadd.f32 %v2741, %v3123
      %v3212 = vadd.f32 %v2742, %v3128
      %v3213 = vadd.f32 %v2743, %v3131
      %v3214 = vadd.f32 %v2744, %v3136
      %v3215 = vadd.f32 %v2745, %v3139
      %v3216 = vadd.f32 %v2746, %v3144
      %v3217 = vadd.f32 %v2747, %v3147
      %v3218 = vadd.f32 %v2748, %v3152
      %v3219 = vadd.f32 %v2749, %v3155
      %v3220 = vadd.f32 %v2750, %v3160
      %v3221 = vadd.f32 %v2751, %v3163
      %v3222 = vadd.f32 %v2752, %v3168
      %v3223 = vadd.f32 %v2753, %v3171
      %v3224 = vadd.f32 %v2754, %v3176
      %v3225 = vadd.f32 %v2755, %v3179
      %v3226 = vadd.f32 %v2756, %v3184
      %v3227 = vadd.f32 %v2757, %v3187
      %v3228 = vadd.f32 %v2758, %v3192
      %v3229 = vadd.f32 %v2759, %v3195
      %s3230 = scalar_lea.vmem %s219, 24
      %v3231 = vld [vmem:[%s3230] sm:$0xf]
      %v3232 = vld [vmem:[%s3230 + $0x4] sm:$0xf]
      %v3233 = vld [vmem:[%s3230 + $0xc] sm:$0xf]
      %v3234 = vld [vmem:[%s3230 + $0x10] sm:$0xf]
      %v3235 = vld [vmem:[%s3230 + $0x18] sm:$0xf]
      %v3236 = vld [vmem:[%s3230 + $0x1c] sm:$0xf]
      %v3237 = vld [vmem:[%s3230 + $0x24] sm:$0xf]
      %v3238 = vld [vmem:[%s3230 + $0x28] sm:$0xf]
      %v3239 = vld [vmem:[%s3230 + $0x30] sm:$0xf]
      %v3240 = vld [vmem:[%s3230 + $0x34] sm:$0xf]
      %v3241 = vld [vmem:[%s3230 + $0x3c] sm:$0xf]
      %v3242 = vld [vmem:[%s3230 + $0x40] sm:$0xf]
      %v3243 = vld [vmem:[%s3230 + $0x48] sm:$0xf]
      %v3244 = vld [vmem:[%s3230 + $0x4c] sm:$0xf]
      %v3245 = vld [vmem:[%s3230 + $0x54] sm:$0xf]
      %v3246 = vld [vmem:[%s3230 + $0x58] sm:$0xf]
      %v3247 = vld [vmem:[%s3230 + $0x60] sm:$0xf]
      %v3248 = vld [vmem:[%s3230 + $0x64] sm:$0xf]
      %v3249 = vld [vmem:[%s3230 + $0x6c] sm:$0xf]
      %v3250 = vld [vmem:[%s3230 + $0x70] sm:$0xf]
      %v3251 = vld [vmem:[%s3230 + $0x78] sm:$0xf]
      %v3252 = vld [vmem:[%s3230 + $0x7c] sm:$0xf]
      %v3253 = vld [vmem:[%s3230 + $0x84] sm:$0xf]
      %v3254 = vld [vmem:[%s3230 + $0x88] sm:$0xf]
      %v3255 = vld [vmem:[%s3230 + $0x90] sm:$0xf]
      %v3256 = vld [vmem:[%s3230 + $0x94] sm:$0xf]
      %v3257 = vld [vmem:[%s3230 + $0x9c] sm:$0xf]
      %v3258 = vld [vmem:[%s3230 + $0xa0] sm:$0xf]
      %v3259 = vld [vmem:[%s3230 + $0xa8] sm:$0xf]
      %v3260 = vld [vmem:[%s3230 + $0xac] sm:$0xf]
      %v3261 = vld [vmem:[%s3230 + $0xb4] sm:$0xf]
      %v3262 = vld [vmem:[%s3230 + $0xb8] sm:$0xf]
      %s3263 = scalar_lea.vmem %s1, 12
      %v3264 = vld [vmem:[%s3263] sm:$0x3]
      %v3297 = vunpack.c.l.b16 %v3231
      %v3298 = vunpack.c.l.b16 %v3232
      %v3299 = vunpack.c.l.b16 %v3233
      %v3300 = vunpack.c.l.b16 %v3234
      %v3301 = vunpack.c.l.b16 %v3235
      %v3302 = vunpack.c.l.b16 %v3236
      %v3303 = vunpack.c.l.b16 %v3237
      %v3304 = vunpack.c.l.b16 %v3238
      %v3305 = vunpack.c.l.b16 %v3239
      %v3306 = vunpack.c.l.b16 %v3240
      %v3307 = vunpack.c.l.b16 %v3241
      %v3308 = vunpack.c.l.b16 %v3242
      %v3309 = vunpack.c.l.b16 %v3243
      %v3310 = vunpack.c.l.b16 %v3244
      %v3311 = vunpack.c.l.b16 %v3245
      %v3312 = vunpack.c.l.b16 %v3246
      %v3313 = vunpack.c.l.b16 %v3247
      %v3314 = vunpack.c.l.b16 %v3248
      %v3315 = vunpack.c.l.b16 %v3249
      %v3316 = vunpack.c.l.b16 %v3250
      %v3317 = vunpack.c.l.b16 %v3251
      %v3318 = vunpack.c.l.b16 %v3252
      %v3319 = vunpack.c.l.b16 %v3253
      %v3320 = vunpack.c.l.b16 %v3254
      %v3321 = vunpack.c.l.b16 %v3255
      %v3322 = vunpack.c.l.b16 %v3256
      %v3323 = vunpack.c.l.b16 %v3257
      %v3324 = vunpack.c.l.b16 %v3258
      %v3325 = vunpack.c.l.b16 %v3259
      %v3326 = vunpack.c.l.b16 %v3260
      %v3327 = vunpack.c.l.b16 %v3261
      %v3328 = vunpack.c.l.b16 %v3262
      %v3329 = vpack.c.b16 %v3298, %v3297
      %v3330 = vpack.c.b16 %v3300, %v3299
      %v3331 = vpack.c.b16 %v3302, %v3301
      %v3332 = vpack.c.b16 %v3304, %v3303
      %v3333 = vpack.c.b16 %v3306, %v3305
      %v3334 = vpack.c.b16 %v3308, %v3307
      %v3335 = vpack.c.b16 %v3310, %v3309
      %v3336 = vpack.c.b16 %v3312, %v3311
      %v3337 = vpack.c.b16 %v3314, %v3313
      %v3338 = vpack.c.b16 %v3316, %v3315
      %v3339 = vpack.c.b16 %v3318, %v3317
      %v3340 = vpack.c.b16 %v3320, %v3319
      %v3341 = vpack.c.b16 %v3322, %v3321
      %v3342 = vpack.c.b16 %v3324, %v3323
      %v3343 = vpack.c.b16 %v3326, %v3325
      %v3344 = vpack.c.b16 %v3328, %v3327
      %v3346 = vsel %vm712, %v3329, 0
      %v3349 = vsel %vm712, %v3330, 0
      %v3352 = vsel %vm712, %v3331, 0
      %v3355 = vsel %vm712, %v3332, 0
      %v3358 = vsel %vm712, %v3333, 0
      %v3361 = vsel %vm712, %v3334, 0
      %v3364 = vsel %vm712, %v3335, 0
      %v3367 = vsel %vm712, %v3336, 0
      %v3370 = vsel %vm712, %v3337, 0
      %v3373 = vsel %vm712, %v3338, 0
      %v3376 = vsel %vm712, %v3339, 0
      %v3379 = vsel %vm712, %v3340, 0
      %v3382 = vsel %vm712, %v3341, 0
      %v3385 = vsel %vm712, %v3342, 0
      %v3388 = vsel %vm712, %v3343, 0
      %v3391 = vsel %vm712, %v3344, 0
      %v3394 = vsel %vm761, %v3264, 0
      %3396 = vmatprep.subr.bf16.mxu0 0
      %3397 = vmatpush1.bf16.msra.mxu0 %v3394
      %3398 = vmatprep.subr.bf16.mxu0 0
      %3399 = vmatpush1.bf16.msra.mxu0 0
      %3400 = vmatprep.subr.bf16.mxu0 0
      %3401 = vmatpush1.bf16.msra.mxu0 0
      %3402 = vmatprep.subr.bf16.mxu0 0
      %3403 = vmatpush1.bf16.msra.mxu0 0
      %3404 = vmatprep.subr.bf16.mxu0 0
      %3405 = vmatpush1.bf16.msra.mxu0 0
      %3406 = vmatprep.subr.bf16.mxu0 0
      %3407 = vmatpush1.bf16.msra.mxu0 0
      %3408 = vmatprep.subr.bf16.mxu0 0
      %3409 = vmatpush1.bf16.msra.mxu0 0
      %3410 = vmatprep.subr.bf16.mxu0 0
      %3411 = vmatpush1.bf16.msra.mxu0 0
      %3412 = vmatprep.subr.bf16.mxu0 0
      %3413 = vmatpush1.bf16.msra.mxu0 0
      %3414 = vmatprep.subr.bf16.mxu0 0
      %3415 = vmatpush1.bf16.msra.mxu0 0
      %3416 = vmatprep.subr.bf16.mxu0 0
      %3417 = vmatpush1.bf16.msra.mxu0 0
      %3418 = vmatprep.subr.bf16.mxu0 0
      %3419 = vmatpush1.bf16.msra.mxu0 0
      %3420 = vmatprep.subr.bf16.mxu0 0
      %3421 = vmatpush1.bf16.msra.mxu0 0
      %3422 = vmatprep.subr.bf16.mxu0 0
      %3423 = vmatpush1.bf16.msra.mxu0 0
      %3424 = vmatprep.subr.bf16.mxu0 0
      %3425 = vmatpush1.bf16.msra.mxu0 0
      %3426 = vmatprep.subr.bf16.mxu0 0
      %3427 = vmatpush1.bf16.msra.mxu0 0
      %3428 = vmatprep.mubr.bf16.mxu0 0
      %3429 = vmatmul.mubr.bf16.gmra.mrb[0].mxu0 %v3346
      %v3430 = vpop.f32.mrb[0].mxu0
      %v3431 = vadd.f32 0.0, %v3430
      %v3432 = vpop.f32.mrb[0].mxu0
      %v3433 = vpop.f32.mrb[0].mxu0
      %v3434 = vadd.f32 0.0, %v3433
      %v3435 = vpop.f32.mrb[0].mxu0
      %3436 = vmatprep.mubr.bf16.mxu0 0
      %3437 = vmatmul.mubr.bf16.gmra.mrb[0].mxu0 %v3349
      %v3438 = vpop.f32.mrb[0].mxu0
      %v3439 = vadd.f32 0.0, %v3438
      %v3440 = vpop.f32.mrb[0].mxu0
      %v3441 = vpop.f32.mrb[0].mxu0
      %v3442 = vadd.f32 0.0, %v3441
      %v3443 = vpop.f32.mrb[0].mxu0
      %3444 = vmatprep.mubr.bf16.mxu0 0
      %3445 = vmatmul.mubr.bf16.gmra.mrb[0].mxu0 %v3352
      %v3446 = vpop.f32.mrb[0].mxu0
      %v3447 = vadd.f32 0.0, %v3446
      %v3448 = vpop.f32.mrb[0].mxu0
      %v3449 = vpop.f32.mrb[0].mxu0
      %v3450 = vadd.f32 0.0, %v3449
      %v3451 = vpop.f32.mrb[0].mxu0
      %3452 = vmatprep.mubr.bf16.mxu0 0
      %3453 = vmatmul.mubr.bf16.gmra.mrb[0].mxu0 %v3355
      %v3454 = vpop.f32.mrb[0].mxu0
      %v3455 = vadd.f32 0.0, %v3454
      %v3456 = vpop.f32.mrb[0].mxu0
      %v3457 = vpop.f32.mrb[0].mxu0
      %v3458 = vadd.f32 0.0, %v3457
      %v3459 = vpop.f32.mrb[0].mxu0
      %3460 = vmatprep.mubr.bf16.mxu0 0
      %3461 = vmatmul.mubr.bf16.gmra.mrb[0].mxu0 %v3358
      %v3462 = vpop.f32.mrb[0].mxu0
      %v3463 = vadd.f32 0.0, %v3462
      %v3464 = vpop.f32.mrb[0].mxu0
      %v3465 = vpop.f32.mrb[0].mxu0
      %v3466 = vadd.f32 0.0, %v3465
      %v3467 = vpop.f32.mrb[0].mxu0
      %3468 = vmatprep.mubr.bf16.mxu0 0
      %3469 = vmatmul.mubr.bf16.gmra.mrb[0].mxu0 %v3361
      %v3470 = vpop.f32.mrb[0].mxu0
      %v3471 = vadd.f32 0.0, %v3470
      %v3472 = vpop.f32.mrb[0].mxu0
      %v3473 = vpop.f32.mrb[0].mxu0
      %v3474 = vadd.f32 0.0, %v3473
      %v3475 = vpop.f32.mrb[0].mxu0
      %3476 = vmatprep.mubr.bf16.mxu0 0
      %3477 = vmatmul.mubr.bf16.gmra.mrb[0].mxu0 %v3364
      %v3478 = vpop.f32.mrb[0].mxu0
      %v3479 = vadd.f32 0.0, %v3478
      %v3480 = vpop.f32.mrb[0].mxu0
      %v3481 = vpop.f32.mrb[0].mxu0
      %v3482 = vadd.f32 0.0, %v3481
      %v3483 = vpop.f32.mrb[0].mxu0
      %3484 = vmatprep.mubr.bf16.mxu0 0
      %3485 = vmatmul.mubr.bf16.gmra.mrb[0].mxu0 %v3367
      %v3486 = vpop.f32.mrb[0].mxu0
      %v3487 = vadd.f32 0.0, %v3486
      %v3488 = vpop.f32.mrb[0].mxu0
      %v3489 = vpop.f32.mrb[0].mxu0
      %v3490 = vadd.f32 0.0, %v3489
      %v3491 = vpop.f32.mrb[0].mxu0
      %3492 = vmatprep.mubr.bf16.mxu0 0
      %3493 = vmatmul.mubr.bf16.gmra.mrb[0].mxu0 %v3370
      %v3494 = vpop.f32.mrb[0].mxu0
      %v3495 = vadd.f32 0.0, %v3494
      %v3496 = vpop.f32.mrb[0].mxu0
      %v3497 = vpop.f32.mrb[0].mxu0
      %v3498 = vadd.f32 0.0, %v3497
      %v3499 = vpop.f32.mrb[0].mxu0
      %3500 = vmatprep.mubr.bf16.mxu0 0
      %3501 = vmatmul.mubr.bf16.gmra.mrb[0].mxu0 %v3373
      %v3502 = vpop.f32.mrb[0].mxu0
      %v3503 = vadd.f32 0.0, %v3502
      %v3504 = vpop.f32.mrb[0].mxu0
      %v3505 = vpop.f32.mrb[0].mxu0
      %v3506 = vadd.f32 0.0, %v3505
      %v3507 = vpop.f32.mrb[0].mxu0
      %3508 = vmatprep.mubr.bf16.mxu0 0
      %3509 = vmatmul.mubr.bf16.gmra.mrb[0].mxu0 %v3376
      %v3510 = vpop.f32.mrb[0].mxu0
      %v3511 = vadd.f32 0.0, %v3510
      %v3512 = vpop.f32.mrb[0].mxu0
      %v3513 = vpop.f32.mrb[0].mxu0
      %v3514 = vadd.f32 0.0, %v3513
      %v3515 = vpop.f32.mrb[0].mxu0
      %3516 = vmatprep.mubr.bf16.mxu0 0
      %3517 = vmatmul.mubr.bf16.gmra.mrb[0].mxu0 %v3379
      %v3518 = vpop.f32.mrb[0].mxu0
      %v3519 = vadd.f32 0.0, %v3518
      %v3520 = vpop.f32.mrb[0].mxu0
      %v3521 = vpop.f32.mrb[0].mxu0
      %v3522 = vadd.f32 0.0, %v3521
      %v3523 = vpop.f32.mrb[0].mxu0
      %3524 = vmatprep.mubr.bf16.mxu0 0
      %3525 = vmatmul.mubr.bf16.gmra.mrb[0].mxu0 %v3382
      %v3526 = vpop.f32.mrb[0].mxu0
      %v3527 = vadd.f32 0.0, %v3526
      %v3528 = vpop.f32.mrb[0].mxu0
      %v3529 = vpop.f32.mrb[0].mxu0
      %v3530 = vadd.f32 0.0, %v3529
      %v3531 = vpop.f32.mrb[0].mxu0
      %3532 = vmatprep.mubr.bf16.mxu0 0
      %3533 = vmatmul.mubr.bf16.gmra.mrb[0].mxu0 %v3385
      %v3534 = vpop.f32.mrb[0].mxu0
      %v3535 = vadd.f32 0.0, %v3534
      %v3536 = vpop.f32.mrb[0].mxu0
      %v3537 = vpop.f32.mrb[0].mxu0
      %v3538 = vadd.f32 0.0, %v3537
      %v3539 = vpop.f32.mrb[0].mxu0
      %3540 = vmatprep.mubr.bf16.mxu0 0
      %3541 = vmatmul.mubr.bf16.gmra.mrb[0].mxu0 %v3388
      %v3542 = vpop.f32.mrb[0].mxu0
      %v3543 = vadd.f32 0.0, %v3542
      %v3544 = vpop.f32.mrb[0].mxu0
      %v3545 = vpop.f32.mrb[0].mxu0
      %v3546 = vadd.f32 0.0, %v3545
      %v3547 = vpop.f32.mrb[0].mxu0
      %3548 = vmatprep.mubr.bf16.mxu0 0
      %3549 = vmatmul.mubr.bf16.gmra.mrb[0].mxu0 %v3391
      %v3550 = vpop.f32.mrb[0].mxu0
      %v3551 = vadd.f32 0.0, %v3550
      %v3552 = vpop.f32.mrb[0].mxu0
      %v3553 = vpop.f32.mrb[0].mxu0
      %v3554 = vadd.f32 0.0, %v3553
      %v3555 = vpop.f32.mrb[0].mxu0
      %3556 = vdwg.mxu0
      %v3557 = vadd.f32 %v3198, %v3431
      %v3558 = vadd.f32 %v3199, %v3434
      %v3559 = vadd.f32 %v3200, %v3439
      %v3560 = vadd.f32 %v3201, %v3442
      %v3561 = vadd.f32 %v3202, %v3447
      %v3562 = vadd.f32 %v3203, %v3450
      %v3563 = vadd.f32 %v3204, %v3455
      %v3564 = vadd.f32 %v3205, %v3458
      %v3565 = vadd.f32 %v3206, %v3463
      %v3566 = vadd.f32 %v3207, %v3466
      %v3567 = vadd.f32 %v3208, %v3471
      %v3568 = vadd.f32 %v3209, %v3474
      %v3569 = vadd.f32 %v3210, %v3479
      %v3570 = vadd.f32 %v3211, %v3482
      %v3571 = vadd.f32 %v3212, %v3487
      %v3572 = vadd.f32 %v3213, %v3490
      %v3573 = vadd.f32 %v3214, %v3495
      %v3574 = vadd.f32 %v3215, %v3498
      %v3575 = vadd.f32 %v3216, %v3503
      %v3576 = vadd.f32 %v3217, %v3506
      %v3577 = vadd.f32 %v3218, %v3511
      %v3578 = vadd.f32 %v3219, %v3514
      %v3579 = vadd.f32 %v3220, %v3519
      %v3580 = vadd.f32 %v3221, %v3522
      %v3581 = vadd.f32 %v3222, %v3527
      %v3582 = vadd.f32 %v3223, %v3530
      %v3583 = vadd.f32 %v3224, %v3535
      %v3584 = vadd.f32 %v3225, %v3538
      %v3585 = vadd.f32 %v3226, %v3543
      %v3586 = vadd.f32 %v3227, %v3546
      %v3587 = vadd.f32 %v3228, %v3551
      %v3588 = vadd.f32 %v3229, %v3554
      %v3589 = vld [vmem:[%s3230] sm:$0xf]
      %v3590 = vld [vmem:[%s3230 + $0x4] sm:$0xf]
      %v3591 = vld [vmem:[%s3230 + $0x8] sm:$0x1]
      %v3592 = vld [vmem:[%s3230 + $0xc] sm:$0xf]
      %v3593 = vld [vmem:[%s3230 + $0x10] sm:$0xf]
      %v3594 = vld [vmem:[%s3230 + $0x14] sm:$0x1]
      %v3595 = vld [vmem:[%s3230 + $0x18] sm:$0xf]
      %v3596 = vld [vmem:[%s3230 + $0x1c] sm:$0xf]
      %v3597 = vld [vmem:[%s3230 + $0x20] sm:$0x1]
      %v3598 = vld [vmem:[%s3230 + $0x24] sm:$0xf]
      %v3599 = vld [vmem:[%s3230 + $0x28] sm:$0xf]
      %v3600 = vld [vmem:[%s3230 + $0x2c] sm:$0x1]
      %v3601 = vld [vmem:[%s3230 + $0x30] sm:$0xf]
      %v3602 = vld [vmem:[%s3230 + $0x34] sm:$0xf]
      %v3603 = vld [vmem:[%s3230 + $0x38] sm:$0x1]
      %v3604 = vld [vmem:[%s3230 + $0x3c] sm:$0xf]
      %v3605 = vld [vmem:[%s3230 + $0x40] sm:$0xf]
      %v3606 = vld [vmem:[%s3230 + $0x44] sm:$0x1]
      %v3607 = vld [vmem:[%s3230 + $0x48] sm:$0xf]
      %v3608 = vld [vmem:[%s3230 + $0x4c] sm:$0xf]
      %v3609 = vld [vmem:[%s3230 + $0x50] sm:$0x1]
      %v3610 = vld [vmem:[%s3230 + $0x54] sm:$0xf]
      %v3611 = vld [vmem:[%s3230 + $0x58] sm:$0xf]
      %v3612 = vld [vmem:[%s3230 + $0x5c] sm:$0x1]
      %v3613 = vld [vmem:[%s3230 + $0x60] sm:$0xf]
      %v3614 = vld [vmem:[%s3230 + $0x64] sm:$0xf]
      %v3615 = vld [vmem:[%s3230 + $0x68] sm:$0x1]
      %v3616 = vld [vmem:[%s3230 + $0x6c] sm:$0xf]
      %v3617 = vld [vmem:[%s3230 + $0x70] sm:$0xf]
      %v3618 = vld [vmem:[%s3230 + $0x74] sm:$0x1]
      %v3619 = vld [vmem:[%s3230 + $0x78] sm:$0xf]
      %v3620 = vld [vmem:[%s3230 + $0x7c] sm:$0xf]
      %v3621 = vld [vmem:[%s3230 + $0x80] sm:$0x1]
      %v3622 = vld [vmem:[%s3230 + $0x84] sm:$0xf]
      %v3623 = vld [vmem:[%s3230 + $0x88] sm:$0xf]
      %v3624 = vld [vmem:[%s3230 + $0x8c] sm:$0x1]
      %v3625 = vld [vmem:[%s3230 + $0x90] sm:$0xf]
      %v3626 = vld [vmem:[%s3230 + $0x94] sm:$0xf]
      %v3627 = vld [vmem:[%s3230 + $0x98] sm:$0x1]
      %v3628 = vld [vmem:[%s3230 + $0x9c] sm:$0xf]
      %v3629 = vld [vmem:[%s3230 + $0xa0] sm:$0xf]
      %v3630 = vld [vmem:[%s3230 + $0xa4] sm:$0x1]
      %v3631 = vld [vmem:[%s3230 + $0xa8] sm:$0xf]
      %v3632 = vld [vmem:[%s3230 + $0xac] sm:$0xf]
      %v3633 = vld [vmem:[%s3230 + $0xb0] sm:$0x1]
      %v3634 = vld [vmem:[%s3230 + $0xb4] sm:$0xf]
      %v3635 = vld [vmem:[%s3230 + $0xb8] sm:$0xf]
      %v3636 = vld [vmem:[%s3230 + $0xbc] sm:$0x1]
      %v3638 = vshrl.u32 %v3589, 16
      %v3640 = vrot.slane %v3638, 4
      %v3641 = vshll.u32 %v3589, 16
      %v3643 = vrot.slane %v3641, 5
      %v3644 = vor.u32 %v3640, %v3643
      %v3645 = vrot.slane %v3644, 4
      %v3647 = vshll.u32 %v3590, 16
      %v3649 = vrot.slane %v3647, 5
      %v3650 = vsel %vm277, %v3645, %v3649
      %v3651 = vshrl.u32 %v3590, 16
      %v3653 = vrot.slane %v3651, 4
      %v3654 = vor.u32 %v3653, %v3649
      %v3655 = vrot.slane %v3654, 4
      %v3657 = vshll.u32 %v3591, 16
      %v3659 = vrot.slane %v3657, 5
      %v3660 = vsel %vm277, %v3655, %v3659
      %v3662 = vshrl.u32 %v3592, 16
      %v3664 = vrot.slane %v3662, 4
      %v3665 = vshll.u32 %v3592, 16
      %v3667 = vrot.slane %v3665, 5
      %v3668 = vor.u32 %v3664, %v3667
      %v3669 = vrot.slane %v3668, 4
      %v3671 = vshll.u32 %v3593, 16
      %v3673 = vrot.slane %v3671, 5
      %v3674 = vsel %vm277, %v3669, %v3673
      %v3675 = vshrl.u32 %v3593, 16
      %v3677 = vrot.slane %v3675, 4
      %v3678 = vor.u32 %v3677, %v3673
      %v3679 = vrot.slane %v3678, 4
      %v3681 = vshll.u32 %v3594, 16
      %v3683 = vrot.slane %v3681, 5
      %v3684 = vsel %vm277, %v3679, %v3683
      %v3686 = vshrl.u32 %v3595, 16
      %v3688 = vrot.slane %v3686, 4
      %v3689 = vshll.u32 %v3595, 16
      %v3691 = vrot.slane %v3689, 5
      %v3692 = vor.u32 %v3688, %v3691
      %v3693 = vrot.slane %v3692, 4
      %v3695 = vshll.u32 %v3596, 16
      %v3697 = vrot.slane %v3695, 5
      %v3698 = vsel %vm277, %v3693, %v3697
      %v3699 = vshrl.u32 %v3596, 16
      %v3701 = vrot.slane %v3699, 4
      %v3702 = vor.u32 %v3701, %v3697
      %v3703 = vrot.slane %v3702, 4
      %v3705 = vshll.u32 %v3597, 16
      %v3707 = vrot.slane %v3705, 5
      %v3708 = vsel %vm277, %v3703, %v3707
      %v3710 = vshrl.u32 %v3598, 16
      %v3712 = vrot.slane %v3710, 4
      %v3713 = vshll.u32 %v3598, 16
      %v3715 = vrot.slane %v3713, 5
      %v3716 = vor.u32 %v3712, %v3715
      %v3717 = vrot.slane %v3716, 4
      %v3719 = vshll.u32 %v3599, 16
      %v3721 = vrot.slane %v3719, 5
      %v3722 = vsel %vm277, %v3717, %v3721
      %v3723 = vshrl.u32 %v3599, 16
      %v3725 = vrot.slane %v3723, 4
      %v3726 = vor.u32 %v3725, %v3721
      %v3727 = vrot.slane %v3726, 4
      %v3729 = vshll.u32 %v3600, 16
      %v3731 = vrot.slane %v3729, 5
      %v3732 = vsel %vm277, %v3727, %v3731
      %v3734 = vshrl.u32 %v3601, 16
      %v3736 = vrot.slane %v3734, 4
      %v3737 = vshll.u32 %v3601, 16
      %v3739 = vrot.slane %v3737, 5
      %v3740 = vor.u32 %v3736, %v3739
      %v3741 = vrot.slane %v3740, 4
      %v3743 = vshll.u32 %v3602, 16
      %v3745 = vrot.slane %v3743, 5
      %v3746 = vsel %vm277, %v3741, %v3745
      %v3747 = vshrl.u32 %v3602, 16
      %v3749 = vrot.slane %v3747, 4
      %v3750 = vor.u32 %v3749, %v3745
      %v3751 = vrot.slane %v3750, 4
      %v3753 = vshll.u32 %v3603, 16
      %v3755 = vrot.slane %v3753, 5
      %v3756 = vsel %vm277, %v3751, %v3755
      %v3758 = vshrl.u32 %v3604, 16
      %v3760 = vrot.slane %v3758, 4
      %v3761 = vshll.u32 %v3604, 16
      %v3763 = vrot.slane %v3761, 5
      %v3764 = vor.u32 %v3760, %v3763
      %v3765 = vrot.slane %v3764, 4
      %v3767 = vshll.u32 %v3605, 16
      %v3769 = vrot.slane %v3767, 5
      %v3770 = vsel %vm277, %v3765, %v3769
      %v3771 = vshrl.u32 %v3605, 16
      %v3773 = vrot.slane %v3771, 4
      %v3774 = vor.u32 %v3773, %v3769
      %v3775 = vrot.slane %v3774, 4
      %v3777 = vshll.u32 %v3606, 16
      %v3779 = vrot.slane %v3777, 5
      %v3780 = vsel %vm277, %v3775, %v3779
      %v3782 = vshrl.u32 %v3607, 16
      %v3784 = vrot.slane %v3782, 4
      %v3785 = vshll.u32 %v3607, 16
      %v3787 = vrot.slane %v3785, 5
      %v3788 = vor.u32 %v3784, %v3787
      %v3789 = vrot.slane %v3788, 4
      %v3791 = vshll.u32 %v3608, 16
      %v3793 = vrot.slane %v3791, 5
      %v3794 = vsel %vm277, %v3789, %v3793
      %v3795 = vshrl.u32 %v3608, 16
      %v3797 = vrot.slane %v3795, 4
      %v3798 = vor.u32 %v3797, %v3793
      %v3799 = vrot.slane %v3798, 4
      %v3801 = vshll.u32 %v3609, 16
      %v3803 = vrot.slane %v3801, 5
      %v3804 = vsel %vm277, %v3799, %v3803
      %v3806 = vshrl.u32 %v3610, 16
      %v3808 = vrot.slane %v3806, 4
      %v3809 = vshll.u32 %v3610, 16
      %v3811 = vrot.slane %v3809, 5
      %v3812 = vor.u32 %v3808, %v3811
      %v3813 = vrot.slane %v3812, 4
      %v3815 = vshll.u32 %v3611, 16
      %v3817 = vrot.slane %v3815, 5
      %v3818 = vsel %vm277, %v3813, %v3817
      %v3819 = vshrl.u32 %v3611, 16
      %v3821 = vrot.slane %v3819, 4
      %v3822 = vor.u32 %v3821, %v3817
      %v3823 = vrot.slane %v3822, 4
      %v3825 = vshll.u32 %v3612, 16
      %v3827 = vrot.slane %v3825, 5
      %v3828 = vsel %vm277, %v3823, %v3827
      %v3830 = vshrl.u32 %v3613, 16
      %v3832 = vrot.slane %v3830, 4
      %v3833 = vshll.u32 %v3613, 16
      %v3835 = vrot.slane %v3833, 5
      %v3836 = vor.u32 %v3832, %v3835
      %v3837 = vrot.slane %v3836, 4
      %v3839 = vshll.u32 %v3614, 16
      %v3841 = vrot.slane %v3839, 5
      %v3842 = vsel %vm277, %v3837, %v3841
      %v3843 = vshrl.u32 %v3614, 16
      %v3845 = vrot.slane %v3843, 4
      %v3846 = vor.u32 %v3845, %v3841
      %v3847 = vrot.slane %v3846, 4
      %v3849 = vshll.u32 %v3615, 16
      %v3851 = vrot.slane %v3849, 5
      %v3852 = vsel %vm277, %v3847, %v3851
      %v3854 = vshrl.u32 %v3616, 16
      %v3856 = vrot.slane %v3854, 4
      %v3857 = vshll.u32 %v3616, 16
      %v3859 = vrot.slane %v3857, 5
      %v3860 = vor.u32 %v3856, %v3859
      %v3861 = vrot.slane %v3860, 4
      %v3863 = vshll.u32 %v3617, 16
      %v3865 = vrot.slane %v3863, 5
      %v3866 = vsel %vm277, %v3861, %v3865
      %v3867 = vshrl.u32 %v3617, 16
      %v3869 = vrot.slane %v3867, 4
      %v3870 = vor.u32 %v3869, %v3865
      %v3871 = vrot.slane %v3870, 4
      %v3873 = vshll.u32 %v3618, 16
      %v3875 = vrot.slane %v3873, 5
      %v3876 = vsel %vm277, %v3871, %v3875
      %v3878 = vshrl.u32 %v3619, 16
      %v3880 = vrot.slane %v3878, 4
      %v3881 = vshll.u32 %v3619, 16
      %v3883 = vrot.slane %v3881, 5
      %v3884 = vor.u32 %v3880, %v3883
      %v3885 = vrot.slane %v3884, 4
      %v3887 = vshll.u32 %v3620, 16
      %v3889 = vrot.slane %v3887, 5
      %v3890 = vsel %vm277, %v3885, %v3889
      %v3891 = vshrl.u32 %v3620, 16
      %v3893 = vrot.slane %v3891, 4
      %v3894 = vor.u32 %v3893, %v3889
      %v3895 = vrot.slane %v3894, 4
      %v3897 = vshll.u32 %v3621, 16
      %v3899 = vrot.slane %v3897, 5
      %v3900 = vsel %vm277, %v3895, %v3899
      %v3902 = vshrl.u32 %v3622, 16
      %v3904 = vrot.slane %v3902, 4
      %v3905 = vshll.u32 %v3622, 16
      %v3907 = vrot.slane %v3905, 5
      %v3908 = vor.u32 %v3904, %v3907
      %v3909 = vrot.slane %v3908, 4
      %v3911 = vshll.u32 %v3623, 16
      %v3913 = vrot.slane %v3911, 5
      %v3914 = vsel %vm277, %v3909, %v3913
      %v3915 = vshrl.u32 %v3623, 16
      %v3917 = vrot.slane %v3915, 4
      %v3918 = vor.u32 %v3917, %v3913
      %v3919 = vrot.slane %v3918, 4
      %v3921 = vshll.u32 %v3624, 16
      %v3923 = vrot.slane %v3921, 5
      %v3924 = vsel %vm277, %v3919, %v3923
      %v3926 = vshrl.u32 %v3625, 16
      %v3928 = vrot.slane %v3926, 4
      %v3929 = vshll.u32 %v3625, 16
      %v3931 = vrot.slane %v3929, 5
      %v3932 = vor.u32 %v3928, %v3931
      %v3933 = vrot.slane %v3932, 4
      %v3935 = vshll.u32 %v3626, 16
      %v3937 = vrot.slane %v3935, 5
      %v3938 = vsel %vm277, %v3933, %v3937
      %v3939 = vshrl.u32 %v3626, 16
      %v3941 = vrot.slane %v3939, 4
      %v3942 = vor.u32 %v3941, %v3937
      %v3943 = vrot.slane %v3942, 4
      %v3945 = vshll.u32 %v3627, 16
      %v3947 = vrot.slane %v3945, 5
      %v3948 = vsel %vm277, %v3943, %v3947
      %v3950 = vshrl.u32 %v3628, 16
      %v3952 = vrot.slane %v3950, 4
      %v3953 = vshll.u32 %v3628, 16
      %v3955 = vrot.slane %v3953, 5
      %v3956 = vor.u32 %v3952, %v3955
      %v3957 = vrot.slane %v3956, 4
      %v3959 = vshll.u32 %v3629, 16
      %v3961 = vrot.slane %v3959, 5
      %v3962 = vsel %vm277, %v3957, %v3961
      %v3963 = vshrl.u32 %v3629, 16
      %v3965 = vrot.slane %v3963, 4
      %v3966 = vor.u32 %v3965, %v3961
      %v3967 = vrot.slane %v3966, 4
      %v3969 = vshll.u32 %v3630, 16
      %v3971 = vrot.slane %v3969, 5
      %v3972 = vsel %vm277, %v3967, %v3971
      %v3974 = vshrl.u32 %v3631, 16
      %v3976 = vrot.slane %v3974, 4
      %v3977 = vshll.u32 %v3631, 16
      %v3979 = vrot.slane %v3977, 5
      %v3980 = vor.u32 %v3976, %v3979
      %v3981 = vrot.slane %v3980, 4
      %v3983 = vshll.u32 %v3632, 16
      %v3985 = vrot.slane %v3983, 5
      %v3986 = vsel %vm277, %v3981, %v3985
      %v3987 = vshrl.u32 %v3632, 16
      %v3989 = vrot.slane %v3987, 4
      %v3990 = vor.u32 %v3989, %v3985
      %v3991 = vrot.slane %v3990, 4
      %v3993 = vshll.u32 %v3633, 16
      %v3995 = vrot.slane %v3993, 5
      %v3996 = vsel %vm277, %v3991, %v3995
      %v3998 = vshrl.u32 %v3634, 16
      %v4000 = vrot.slane %v3998, 4
      %v4001 = vshll.u32 %v3634, 16
      %v4003 = vrot.slane %v4001, 5
      %v4004 = vor.u32 %v4000, %v4003
      %v4005 = vrot.slane %v4004, 4
      %v4007 = vshll.u32 %v3635, 16
      %v4009 = vrot.slane %v4007, 5
      %v4010 = vsel %vm277, %v4005, %v4009
      %v4011 = vshrl.u32 %v3635, 16
      %v4013 = vrot.slane %v4011, 4
      %v4014 = vor.u32 %v4013, %v4009
      %v4015 = vrot.slane %v4014, 4
      %v4017 = vshll.u32 %v3636, 16
      %v4019 = vrot.slane %v4017, 5
      %v4020 = vsel %vm277, %v4015, %v4019
      %s4021 = scalar_lea.vmem %s1, 14
      %v4022 = vld [vmem:[%s4021] sm:$0x3]
      %v4023 = vunpack.c.l.b16 %v3650
      %v4024 = vunpack.c.l.b16 %v3660
      %v4025 = vunpack.c.l.b16 %v3674
      %v4026 = vunpack.c.l.b16 %v3684
      %v4027 = vunpack.c.l.b16 %v3698
      %v4028 = vunpack.c.l.b16 %v3708
      %v4029 = vunpack.c.l.b16 %v3722
      %v4030 = vunpack.c.l.b16 %v3732
      %v4031 = vunpack.c.l.b16 %v3746
      %v4032 = vunpack.c.l.b16 %v3756
      %v4033 = vunpack.c.l.b16 %v3770
      %v4034 = vunpack.c.l.b16 %v3780
      %v4035 = vunpack.c.l.b16 %v3794
      %v4036 = vunpack.c.l.b16 %v3804
      %v4037 = vunpack.c.l.b16 %v3818
      %v4038 = vunpack.c.l.b16 %v3828
      %v4039 = vunpack.c.l.b16 %v3842
      %v4040 = vunpack.c.l.b16 %v3852
      %v4041 = vunpack.c.l.b16 %v3866
      %v4042 = vunpack.c.l.b16 %v3876
      %v4043 = vunpack.c.l.b16 %v3890
      %v4044 = vunpack.c.l.b16 %v3900
      %v4045 = vunpack.c.l.b16 %v3914
      %v4046 = vunpack.c.l.b16 %v3924
      %v4047 = vunpack.c.l.b16 %v3938
      %v4048 = vunpack.c.l.b16 %v3948
      %v4049 = vunpack.c.l.b16 %v3962
      %v4050 = vunpack.c.l.b16 %v3972
      %v4051 = vunpack.c.l.b16 %v3986
      %v4052 = vunpack.c.l.b16 %v3996
      %v4053 = vunpack.c.l.b16 %v4010
      %v4054 = vunpack.c.l.b16 %v4020
      %v4055 = vpack.c.b16 %v4024, %v4023
      %v4056 = vpack.c.b16 %v4026, %v4025
      %v4057 = vpack.c.b16 %v4028, %v4027
      %v4058 = vpack.c.b16 %v4030, %v4029
      %v4059 = vpack.c.b16 %v4032, %v4031
      %v4060 = vpack.c.b16 %v4034, %v4033
      %v4061 = vpack.c.b16 %v4036, %v4035
      %v4062 = vpack.c.b16 %v4038, %v4037
      %v4063 = vpack.c.b16 %v4040, %v4039
      %v4064 = vpack.c.b16 %v4042, %v4041
      %v4065 = vpack.c.b16 %v4044, %v4043
      %v4066 = vpack.c.b16 %v4046, %v4045
      %v4067 = vpack.c.b16 %v4048, %v4047
      %v4068 = vpack.c.b16 %v4050, %v4049
      %v4069 = vpack.c.b16 %v4052, %v4051
      %v4070 = vpack.c.b16 %v4054, %v4053
      %v4072 = vsel %vm712, %v4055, 0
      %v4075 = vsel %vm712, %v4056, 0
      %v4078 = vsel %vm712, %v4057, 0
      %v4081 = vsel %vm712, %v4058, 0
      %v4084 = vsel %vm712, %v4059, 0
      %v4087 = vsel %vm712, %v4060, 0
      %v4090 = vsel %vm712, %v4061, 0
      %v4093 = vsel %vm712, %v4062, 0
      %v4096 = vsel %vm712, %v4063, 0
      %v4099 = vsel %vm712, %v4064, 0
      %v4102 = vsel %vm712, %v4065, 0
      %v4105 = vsel %vm712, %v4066, 0
      %v4108 = vsel %vm712, %v4067, 0
      %v4111 = vsel %vm712, %v4068, 0
      %v4114 = vsel %vm712, %v4069, 0
      %v4117 = vsel %vm712, %v4070, 0
      %v4120 = vsel %vm761, %v4022, 0
      %4122 = vmatprep.subr.bf16.mxu0 0
      %4123 = vmatpush1.bf16.msra.mxu0 %v4120
      %4124 = vmatprep.subr.bf16.mxu0 0
      %4125 = vmatpush1.bf16.msra.mxu0 0
      %4126 = vmatprep.subr.bf16.mxu0 0
      %4127 = vmatpush1.bf16.msra.mxu0 0
      %4128 = vmatprep.subr.bf16.mxu0 0
      %4129 = vmatpush1.bf16.msra.mxu0 0
      %4130 = vmatprep.subr.bf16.mxu0 0
      %4131 = vmatpush1.bf16.msra.mxu0 0
      %4132 = vmatprep.subr.bf16.mxu0 0
      %4133 = vmatpush1.bf16.msra.mxu0 0
      %4134 = vmatprep.subr.bf16.mxu0 0
      %4135 = vmatpush1.bf16.msra.mxu0 0
      %4136 = vmatprep.subr.bf16.mxu0 0
      %4137 = vmatpush1.bf16.msra.mxu0 0
      %4138 = vmatprep.subr.bf16.mxu0 0
      %4139 = vmatpush1.bf16.msra.mxu0 0
      %4140 = vmatprep.subr.bf16.mxu0 0
      %4141 = vmatpush1.bf16.msra.mxu0 0
      %4142 = vmatprep.subr.bf16.mxu0 0
      %4143 = vmatpush1.bf16.msra.mxu0 0
      %4144 = vmatprep.subr.bf16.mxu0 0
      %4145 = vmatpush1.bf16.msra.mxu0 0
      %4146 = vmatprep.subr.bf16.mxu0 0
      %4147 = vmatpush1.bf16.msra.mxu0 0
      %4148 = vmatprep.subr.bf16.mxu0 0
      %4149 = vmatpush1.bf16.msra.mxu0 0
      %4150 = vmatprep.subr.bf16.mxu0 0
      %4151 = vmatpush1.bf16.msra.mxu0 0
      %4152 = vmatprep.subr.bf16.mxu0 0
      %4153 = vmatpush1.bf16.msra.mxu0 0
      %4154 = vmatprep.mubr.bf16.mxu0 0
      %4155 = vmatmul.mubr.bf16.gmra.mrb[0].mxu0 %v4072
      %v4156 = vpop.f32.mrb[0].mxu0
      %v4157 = vadd.f32 0.0, %v4156
      %v4158 = vpop.f32.mrb[0].mxu0
      %v4159 = vpop.f32.mrb[0].mxu0
      %v4160 = vadd.f32 0.0, %v4159
      %v4161 = vpop.f32.mrb[0].mxu0
      %4162 = vmatprep.mubr.bf16.mxu0 0
      %4163 = vmatmul.mubr.bf16.gmra.mrb[0].mxu0 %v4075
      %v4164 = vpop.f32.mrb[0].mxu0
      %v4165 = vadd.f32 0.0, %v4164
      %v4166 = vpop.f32.mrb[0].mxu0
      %v4167 = vpop.f32.mrb[0].mxu0
      %v4168 = vadd.f32 0.0, %v4167
      %v4169 = vpop.f32.mrb[0].mxu0
      %4170 = vmatprep.mubr.bf16.mxu0 0
      %4171 = vmatmul.mubr.bf16.gmra.mrb[0].mxu0 %v4078
      %v4172 = vpop.f32.mrb[0].mxu0
      %v4173 = vadd.f32 0.0, %v4172
      %v4174 = vpop.f32.mrb[0].mxu0
      %v4175 = vpop.f32.mrb[0].mxu0
      %v4176 = vadd.f32 0.0, %v4175
      %v4177 = vpop.f32.mrb[0].mxu0
      %4178 = vmatprep.mubr.bf16.mxu0 0
      %4179 = vmatmul.mubr.bf16.gmra.mrb[0].mxu0 %v4081
      %v4180 = vpop.f32.mrb[0].mxu0
      %v4181 = vadd.f32 0.0, %v4180
      %v4182 = vpop.f32.mrb[0].mxu0
      %v4183 = vpop.f32.mrb[0].mxu0
      %v4184 = vadd.f32 0.0, %v4183
      %v4185 = vpop.f32.mrb[0].mxu0
      %4186 = vmatprep.mubr.bf16.mxu0 0
      %4187 = vmatmul.mubr.bf16.gmra.mrb[0].mxu0 %v4084
      %v4188 = vpop.f32.mrb[0].mxu0
      %v4189 = vadd.f32 0.0, %v4188
      %v4190 = vpop.f32.mrb[0].mxu0
      %v4191 = vpop.f32.mrb[0].mxu0
      %v4192 = vadd.f32 0.0, %v4191
      %v4193 = vpop.f32.mrb[0].mxu0
      %4194 = vmatprep.mubr.bf16.mxu0 0
      %4195 = vmatmul.mubr.bf16.gmra.mrb[0].mxu0 %v4087
      %v4196 = vpop.f32.mrb[0].mxu0
      %v4197 = vadd.f32 0.0, %v4196
      %v4198 = vpop.f32.mrb[0].mxu0
      %v4199 = vpop.f32.mrb[0].mxu0
      %v4200 = vadd.f32 0.0, %v4199
      %v4201 = vpop.f32.mrb[0].mxu0
      %4202 = vmatprep.mubr.bf16.mxu0 0
      %4203 = vmatmul.mubr.bf16.gmra.mrb[0].mxu0 %v4090
      %v4204 = vpop.f32.mrb[0].mxu0
      %v4205 = vadd.f32 0.0, %v4204
      %v4206 = vpop.f32.mrb[0].mxu0
      %v4207 = vpop.f32.mrb[0].mxu0
      %v4208 = vadd.f32 0.0, %v4207
      %v4209 = vpop.f32.mrb[0].mxu0
      %4210 = vmatprep.mubr.bf16.mxu0 0
      %4211 = vmatmul.mubr.bf16.gmra.mrb[0].mxu0 %v4093
      %v4212 = vpop.f32.mrb[0].mxu0
      %v4213 = vadd.f32 0.0, %v4212
      %v4214 = vpop.f32.mrb[0].mxu0
      %v4215 = vpop.f32.mrb[0].mxu0
      %v4216 = vadd.f32 0.0, %v4215
      %v4217 = vpop.f32.mrb[0].mxu0
      %4218 = vmatprep.mubr.bf16.mxu0 0
      %4219 = vmatmul.mubr.bf16.gmra.mrb[0].mxu0 %v4096
      %v4220 = vpop.f32.mrb[0].mxu0
      %v4221 = vadd.f32 0.0, %v4220
      %v4222 = vpop.f32.mrb[0].mxu0
      %v4223 = vpop.f32.mrb[0].mxu0
      %v4224 = vadd.f32 0.0, %v4223
      %v4225 = vpop.f32.mrb[0].mxu0
      %4226 = vmatprep.mubr.bf16.mxu0 0
      %4227 = vmatmul.mubr.bf16.gmra.mrb[0].mxu0 %v4099
      %v4228 = vpop.f32.mrb[0].mxu0
      %v4229 = vadd.f32 0.0, %v4228
      %v4230 = vpop.f32.mrb[0].mxu0
      %v4231 = vpop.f32.mrb[0].mxu0
      %v4232 = vadd.f32 0.0, %v4231
      %v4233 = vpop.f32.mrb[0].mxu0
      %4234 = vmatprep.mubr.bf16.mxu0 0
      %4235 = vmatmul.mubr.bf16.gmra.mrb[0].mxu0 %v4102
      %v4236 = vpop.f32.mrb[0].mxu0
      %v4237 = vadd.f32 0.0, %v4236
      %v4238 = vpop.f32.mrb[0].mxu0
      %v4239 = vpop.f32.mrb[0].mxu0
      %v4240 = vadd.f32 0.0, %v4239
      %v4241 = vpop.f32.mrb[0].mxu0
      %4242 = vmatprep.mubr.bf16.mxu0 0
      %4243 = vmatmul.mubr.bf16.gmra.mrb[0].mxu0 %v4105
      %v4244 = vpop.f32.mrb[0].mxu0
      %v4245 = vadd.f32 0.0, %v4244
      %v4246 = vpop.f32.mrb[0].mxu0
      %v4247 = vpop.f32.mrb[0].mxu0
      %v4248 = vadd.f32 0.0, %v4247
      %v4249 = vpop.f32.mrb[0].mxu0
      %4250 = vmatprep.mubr.bf16.mxu0 0
      %4251 = vmatmul.mubr.bf16.gmra.mrb[0].mxu0 %v4108
      %v4252 = vpop.f32.mrb[0].mxu0
      %v4253 = vadd.f32 0.0, %v4252
      %v4254 = vpop.f32.mrb[0].mxu0
      %v4255 = vpop.f32.mrb[0].mxu0
      %v4256 = vadd.f32 0.0, %v4255
      %v4257 = vpop.f32.mrb[0].mxu0
      %4258 = vmatprep.mubr.bf16.mxu0 0
      %4259 = vmatmul.mubr.bf16.gmra.mrb[0].mxu0 %v4111
      %v4260 = vpop.f32.mrb[0].mxu0
      %v4261 = vadd.f32 0.0, %v4260
      %v4262 = vpop.f32.mrb[0].mxu0
      %v4263 = vpop.f32.mrb[0].mxu0
      %v4264 = vadd.f32 0.0, %v4263
      %v4265 = vpop.f32.mrb[0].mxu0
      %4266 = vmatprep.mubr.bf16.mxu0 0
      %4267 = vmatmul.mubr.bf16.gmra.mrb[0].mxu0 %v4114
      %v4268 = vpop.f32.mrb[0].mxu0
      %v4269 = vadd.f32 0.0, %v4268
      %v4270 = vpop.f32.mrb[0].mxu0
      %v4271 = vpop.f32.mrb[0].mxu0
      %v4272 = vadd.f32 0.0, %v4271
      %v4273 = vpop.f32.mrb[0].mxu0
      %4274 = vmatprep.mubr.bf16.mxu0 0
      %4275 = vmatmul.mubr.bf16.gmra.mrb[0].mxu0 %v4117
      %v4276 = vpop.f32.mrb[0].mxu0
      %v4277 = vadd.f32 0.0, %v4276
      %v4278 = vpop.f32.mrb[0].mxu0
      %v4279 = vpop.f32.mrb[0].mxu0
      %v4280 = vadd.f32 0.0, %v4279
      %v4281 = vpop.f32.mrb[0].mxu0
      %4282 = vdwg.mxu0
      %v4283 = vadd.f32 %v3557, %v4157
      %v4284 = vadd.f32 %v3558, %v4160
      %v4285 = vadd.f32 %v3559, %v4165
      %v4286 = vadd.f32 %v3560, %v4168
      %v4287 = vadd.f32 %v3561, %v4173
      %v4288 = vadd.f32 %v3562, %v4176
      %v4289 = vadd.f32 %v3563, %v4181
      %v4290 = vadd.f32 %v3564, %v4184
      %v4291 = vadd.f32 %v3565, %v4189
      %v4292 = vadd.f32 %v3566, %v4192
      %v4293 = vadd.f32 %v3567, %v4197
      %v4294 = vadd.f32 %v3568, %v4200
      %v4295 = vadd.f32 %v3569, %v4205
      %v4296 = vadd.f32 %v3570, %v4208
      %v4297 = vadd.f32 %v3571, %v4213
      %v4298 = vadd.f32 %v3572, %v4216
      %v4299 = vadd.f32 %v3573, %v4221
      %v4300 = vadd.f32 %v3574, %v4224
      %v4301 = vadd.f32 %v3575, %v4229
      %v4302 = vadd.f32 %v3576, %v4232
      %v4303 = vadd.f32 %v3577, %v4237
      %v4304 = vadd.f32 %v3578, %v4240
      %v4305 = vadd.f32 %v3579, %v4245
      %v4306 = vadd.f32 %v3580, %v4248
      %v4307 = vadd.f32 %v3581, %v4253
      %v4308 = vadd.f32 %v3582, %v4256
      %v4309 = vadd.f32 %v3583, %v4261
      %v4310 = vadd.f32 %v3584, %v4264
      %v4311 = vadd.f32 %v3585, %v4269
      %v4312 = vadd.f32 %v3586, %v4272
      %v4313 = vadd.f32 %v3587, %v4277
      %v4314 = vadd.f32 %v3588, %v4280
      %v4315 = vld [vmem:[%s3230] sm:$0xe]
      %v4316 = vld [vmem:[%s3230 + $0xc] sm:$0xe]
      %v4317 = vld [vmem:[%s3230 + $0x18] sm:$0xe]
      %v4318 = vld [vmem:[%s3230 + $0x24] sm:$0xe]
      %v4319 = vld [vmem:[%s3230 + $0x30] sm:$0xe]
      %v4320 = vld [vmem:[%s3230 + $0x3c] sm:$0xe]
      %v4321 = vld [vmem:[%s3230 + $0x48] sm:$0xe]
      %v4322 = vld [vmem:[%s3230 + $0x54] sm:$0xe]
      %v4323 = vld [vmem:[%s3230 + $0x60] sm:$0xe]
      %v4324 = vld [vmem:[%s3230 + $0x6c] sm:$0xe]
      %v4325 = vld [vmem:[%s3230 + $0x78] sm:$0xe]
      %v4326 = vld [vmem:[%s3230 + $0x84] sm:$0xe]
      %v4327 = vld [vmem:[%s3230 + $0x90] sm:$0xe]
      %v4328 = vld [vmem:[%s3230 + $0x9c] sm:$0xe]
      %v4329 = vld [vmem:[%s3230 + $0xa8] sm:$0xe]
      %v4330 = vld [vmem:[%s3230 + $0xb4] sm:$0xe]
      %v4379 = vrot.slane %v4315, 5
      %v4380 = vrot.slane %v4379, 4
      %v4381 = vrot.slane %v3590, 5
      %v4382 = vsel %vm1268, %v4380, %v4381
      %v4383 = vrot.slane %v4381, 4
      %v4384 = vrot.slane %v3591, 5
      %v4385 = vsel %vm1268, %v4383, %v4384
      %v4386 = vrot.slane %v4316, 5
      %v4387 = vrot.slane %v4386, 4
      %v4388 = vrot.slane %v3593, 5
      %v4389 = vsel %vm1268, %v4387, %v4388
      %v4390 = vrot.slane %v4388, 4
      %v4391 = vrot.slane %v3594, 5
      %v4392 = vsel %vm1268, %v4390, %v4391
      %v4393 = vrot.slane %v4317, 5
      %v4394 = vrot.slane %v4393, 4
      %v4395 = vrot.slane %v3596, 5
      %v4396 = vsel %vm1268, %v4394, %v4395
      %v4397 = vrot.slane %v4395, 4
      %v4398 = vrot.slane %v3597, 5
      %v4399 = vsel %vm1268, %v4397, %v4398
      %v4400 = vrot.slane %v4318, 5
      %v4401 = vrot.slane %v4400, 4
      %v4402 = vrot.slane %v3599, 5
      %v4403 = vsel %vm1268, %v4401, %v4402
      %v4404 = vrot.slane %v4402, 4
      %v4405 = vrot.slane %v3600, 5
      %v4406 = vsel %vm1268, %v4404, %v4405
      %v4407 = vrot.slane %v4319, 5
      %v4408 = vrot.slane %v4407, 4
      %v4409 = vrot.slane %v3602, 5
      %v4410 = vsel %vm1268, %v4408, %v4409
      %v4411 = vrot.slane %v4409, 4
      %v4412 = vrot.slane %v3603, 5
      %v4413 = vsel %vm1268, %v4411, %v4412
      %v4414 = vrot.slane %v4320, 5
      %v4415 = vrot.slane %v4414, 4
      %v4416 = vrot.slane %v3605, 5
      %v4417 = vsel %vm1268, %v4415, %v4416
      %v4418 = vrot.slane %v4416, 4
      %v4419 = vrot.slane %v3606, 5
      %v4420 = vsel %vm1268, %v4418, %v4419
      %v4421 = vrot.slane %v4321, 5
      %v4422 = vrot.slane %v4421, 4
      %v4423 = vrot.slane %v3608, 5
      %v4424 = vsel %vm1268, %v4422, %v4423
      %v4425 = vrot.slane %v4423, 4
      %v4426 = vrot.slane %v3609, 5
      %v4427 = vsel %vm1268, %v4425, %v4426
      %v4428 = vrot.slane %v4322, 5
      %v4429 = vrot.slane %v4428, 4
      %v4430 = vrot.slane %v3611, 5
      %v4431 = vsel %vm1268, %v4429, %v4430
      %v4432 = vrot.slane %v4430, 4
      %v4433 = vrot.slane %v3612, 5
      %v4434 = vsel %vm1268, %v4432, %v4433
      %v4435 = vrot.slane %v4323, 5
      %v4436 = vrot.slane %v4435, 4
      %v4437 = vrot.slane %v3614, 5
      %v4438 = vsel %vm1268, %v4436, %v4437
      %v4439 = vrot.slane %v4437, 4
      %v4440 = vrot.slane %v3615, 5
      %v4441 = vsel %vm1268, %v4439, %v4440
      %v4442 = vrot.slane %v4324, 5
      %v4443 = vrot.slane %v4442, 4
      %v4444 = vrot.slane %v3617, 5
      %v4445 = vsel %vm1268, %v4443, %v4444
      %v4446 = vrot.slane %v4444, 4
      %v4447 = vrot.slane %v3618, 5
      %v4448 = vsel %vm1268, %v4446, %v4447
      %v4449 = vrot.slane %v4325, 5
      %v4450 = vrot.slane %v4449, 4
      %v4451 = vrot.slane %v3620, 5
      %v4452 = vsel %vm1268, %v4450, %v4451
      %v4453 = vrot.slane %v4451, 4
      %v4454 = vrot.slane %v3621, 5
      %v4455 = vsel %vm1268, %v4453, %v4454
      %v4456 = vrot.slane %v4326, 5
      %v4457 = vrot.slane %v4456, 4
      %v4458 = vrot.slane %v3623, 5
      %v4459 = vsel %vm1268, %v4457, %v4458
      %v4460 = vrot.slane %v4458, 4
      %v4461 = vrot.slane %v3624, 5
      %v4462 = vsel %vm1268, %v4460, %v4461
      %v4463 = vrot.slane %v4327, 5
      %v4464 = vrot.slane %v4463, 4
      %v4465 = vrot.slane %v3626, 5
      %v4466 = vsel %vm1268, %v4464, %v4465
      %v4467 = vrot.slane %v4465, 4
      %v4468 = vrot.slane %v3627, 5
      %v4469 = vsel %vm1268, %v4467, %v4468
      %v4470 = vrot.slane %v4328, 5
      %v4471 = vrot.slane %v4470, 4
      %v4472 = vrot.slane %v3629, 5
      %v4473 = vsel %vm1268, %v4471, %v4472
      %v4474 = vrot.slane %v4472, 4
      %v4475 = vrot.slane %v3630, 5
      %v4476 = vsel %vm1268, %v4474, %v4475
      %v4477 = vrot.slane %v4329, 5
      %v4478 = vrot.slane %v4477, 4
      %v4479 = vrot.slane %v3632, 5
      %v4480 = vsel %vm1268, %v4478, %v4479
      %v4481 = vrot.slane %v4479, 4
      %v4482 = vrot.slane %v3633, 5
      %v4483 = vsel %vm1268, %v4481, %v4482
      %v4484 = vrot.slane %v4330, 5
      %v4485 = vrot.slane %v4484, 4
      %v4486 = vrot.slane %v3635, 5
      %v4487 = vsel %vm1268, %v4485, %v4486
      %v4488 = vrot.slane %v4486, 4
      %v4489 = vrot.slane %v3636, 5
      %v4490 = vsel %vm1268, %v4488, %v4489
      %s4491 = scalar_lea.vmem %s1, 16
      %v4492 = vld [vmem:[%s4491] sm:$0x3]
      %v4493 = vunpack.c.l.b16 %v4382
      %v4494 = vunpack.c.l.b16 %v4385
      %v4495 = vunpack.c.l.b16 %v4389
      %v4496 = vunpack.c.l.b16 %v4392
      %v4497 = vunpack.c.l.b16 %v4396
      %v4498 = vunpack.c.l.b16 %v4399
      %v4499 = vunpack.c.l.b16 %v4403
      %v4500 = vunpack.c.l.b16 %v4406
      %v4501 = vunpack.c.l.b16 %v4410
      %v4502 = vunpack.c.l.b16 %v4413
      %v4503 = vunpack.c.l.b16 %v4417
      %v4504 = vunpack.c.l.b16 %v4420
      %v4505 = vunpack.c.l.b16 %v4424
      %v4506 = vunpack.c.l.b16 %v4427
      %v4507 = vunpack.c.l.b16 %v4431
      %v4508 = vunpack.c.l.b16 %v4434
      %v4509 = vunpack.c.l.b16 %v4438
      %v4510 = vunpack.c.l.b16 %v4441
      %v4511 = vunpack.c.l.b16 %v4445
      %v4512 = vunpack.c.l.b16 %v4448
      %v4513 = vunpack.c.l.b16 %v4452
      %v4514 = vunpack.c.l.b16 %v4455
      %v4515 = vunpack.c.l.b16 %v4459
      %v4516 = vunpack.c.l.b16 %v4462
      %v4517 = vunpack.c.l.b16 %v4466
      %v4518 = vunpack.c.l.b16 %v4469
      %v4519 = vunpack.c.l.b16 %v4473
      %v4520 = vunpack.c.l.b16 %v4476
      %v4521 = vunpack.c.l.b16 %v4480
      %v4522 = vunpack.c.l.b16 %v4483
      %v4523 = vunpack.c.l.b16 %v4487
      %v4524 = vunpack.c.l.b16 %v4490
      %v4525 = vpack.c.b16 %v4494, %v4493
      %v4526 = vpack.c.b16 %v4496, %v4495
      %v4527 = vpack.c.b16 %v4498, %v4497
      %v4528 = vpack.c.b16 %v4500, %v4499
      %v4529 = vpack.c.b16 %v4502, %v4501
      %v4530 = vpack.c.b16 %v4504, %v4503
      %v4531 = vpack.c.b16 %v4506, %v4505
      %v4532 = vpack.c.b16 %v4508, %v4507
      %v4533 = vpack.c.b16 %v4510, %v4509
      %v4534 = vpack.c.b16 %v4512, %v4511
      %v4535 = vpack.c.b16 %v4514, %v4513
      %v4536 = vpack.c.b16 %v4516, %v4515
      %v4537 = vpack.c.b16 %v4518, %v4517
      %v4538 = vpack.c.b16 %v4520, %v4519
      %v4539 = vpack.c.b16 %v4522, %v4521
      %v4540 = vpack.c.b16 %v4524, %v4523
      %v4542 = vsel %vm712, %v4525, 0
      %v4545 = vsel %vm712, %v4526, 0
      %v4548 = vsel %vm712, %v4527, 0
      %v4551 = vsel %vm712, %v4528, 0
      %v4554 = vsel %vm712, %v4529, 0
      %v4557 = vsel %vm712, %v4530, 0
      %v4560 = vsel %vm712, %v4531, 0
      %v4563 = vsel %vm712, %v4532, 0
      %v4566 = vsel %vm712, %v4533, 0
      %v4569 = vsel %vm712, %v4534, 0
      %v4572 = vsel %vm712, %v4535, 0
      %v4575 = vsel %vm712, %v4536, 0
      %v4578 = vsel %vm712, %v4537, 0
      %v4581 = vsel %vm712, %v4538, 0
      %v4584 = vsel %vm712, %v4539, 0
      %v4587 = vsel %vm712, %v4540, 0
      %v4590 = vsel %vm761, %v4492, 0
      %4592 = vmatprep.subr.bf16.mxu0 0
      %4593 = vmatpush1.bf16.msra.mxu0 %v4590
      %4594 = vmatprep.subr.bf16.mxu0 0
      %4595 = vmatpush1.bf16.msra.mxu0 0
      %4596 = vmatprep.subr.bf16.mxu0 0
      %4597 = vmatpush1.bf16.msra.mxu0 0
      %4598 = vmatprep.subr.bf16.mxu0 0
      %4599 = vmatpush1.bf16.msra.mxu0 0
      %4600 = vmatprep.subr.bf16.mxu0 0
      %4601 = vmatpush1.bf16.msra.mxu0 0
      %4602 = vmatprep.subr.bf16.mxu0 0
      %4603 = vmatpush1.bf16.msra.mxu0 0
      %4604 = vmatprep.subr.bf16.mxu0 0
      %4605 = vmatpush1.bf16.msra.mxu0 0
      %4606 = vmatprep.subr.bf16.mxu0 0
      %4607 = vmatpush1.bf16.msra.mxu0 0
      %4608 = vmatprep.subr.bf16.mxu0 0
      %4609 = vmatpush1.bf16.msra.mxu0 0
      %4610 = vmatprep.subr.bf16.mxu0 0
      %4611 = vmatpush1.bf16.msra.mxu0 0
      %4612 = vmatprep.subr.bf16.mxu0 0
      %4613 = vmatpush1.bf16.msra.mxu0 0
      %4614 = vmatprep.subr.bf16.mxu0 0
      %4615 = vmatpush1.bf16.msra.mxu0 0
      %4616 = vmatprep.subr.bf16.mxu0 0
      %4617 = vmatpush1.bf16.msra.mxu0 0
      %4618 = vmatprep.subr.bf16.mxu0 0
      %4619 = vmatpush1.bf16.msra.mxu0 0
      %4620 = vmatprep.subr.bf16.mxu0 0
      %4621 = vmatpush1.bf16.msra.mxu0 0
      %4622 = vmatprep.subr.bf16.mxu0 0
      %4623 = vmatpush1.bf16.msra.mxu0 0
      %4624 = vmatprep.mubr.bf16.mxu0 0
      %4625 = vmatmul.mubr.bf16.gmra.mrb[0].mxu0 %v4542
      %v4626 = vpop.f32.mrb[0].mxu0
      %v4627 = vadd.f32 0.0, %v4626
      %v4628 = vpop.f32.mrb[0].mxu0
      %v4629 = vpop.f32.mrb[0].mxu0
      %v4630 = vadd.f32 0.0, %v4629
      %v4631 = vpop.f32.mrb[0].mxu0
      %4632 = vmatprep.mubr.bf16.mxu0 0
      %4633 = vmatmul.mubr.bf16.gmra.mrb[0].mxu0 %v4545
      %v4634 = vpop.f32.mrb[0].mxu0
      %v4635 = vadd.f32 0.0, %v4634
      %v4636 = vpop.f32.mrb[0].mxu0
      %v4637 = vpop.f32.mrb[0].mxu0
      %v4638 = vadd.f32 0.0, %v4637
      %v4639 = vpop.f32.mrb[0].mxu0
      %4640 = vmatprep.mubr.bf16.mxu0 0
      %4641 = vmatmul.mubr.bf16.gmra.mrb[0].mxu0 %v4548
      %v4642 = vpop.f32.mrb[0].mxu0
      %v4643 = vadd.f32 0.0, %v4642
      %v4644 = vpop.f32.mrb[0].mxu0
      %v4645 = vpop.f32.mrb[0].mxu0
      %v4646 = vadd.f32 0.0, %v4645
      %v4647 = vpop.f32.mrb[0].mxu0
      %4648 = vmatprep.mubr.bf16.mxu0 0
      %4649 = vmatmul.mubr.bf16.gmra.mrb[0].mxu0 %v4551
      %v4650 = vpop.f32.mrb[0].mxu0
      %v4651 = vadd.f32 0.0, %v4650
      %v4652 = vpop.f32.mrb[0].mxu0
      %v4653 = vpop.f32.mrb[0].mxu0
      %v4654 = vadd.f32 0.0, %v4653
      %v4655 = vpop.f32.mrb[0].mxu0
      %4656 = vmatprep.mubr.bf16.mxu0 0
      %4657 = vmatmul.mubr.bf16.gmra.mrb[0].mxu0 %v4554
      %v4658 = vpop.f32.mrb[0].mxu0
      %v4659 = vadd.f32 0.0, %v4658
      %v4660 = vpop.f32.mrb[0].mxu0
      %v4661 = vpop.f32.mrb[0].mxu0
      %v4662 = vadd.f32 0.0, %v4661
      %v4663 = vpop.f32.mrb[0].mxu0
      %4664 = vmatprep.mubr.bf16.mxu0 0
      %4665 = vmatmul.mubr.bf16.gmra.mrb[0].mxu0 %v4557
      %v4666 = vpop.f32.mrb[0].mxu0
      %v4667 = vadd.f32 0.0, %v4666
      %v4668 = vpop.f32.mrb[0].mxu0
      %v4669 = vpop.f32.mrb[0].mxu0
      %v4670 = vadd.f32 0.0, %v4669
      %v4671 = vpop.f32.mrb[0].mxu0
      %4672 = vmatprep.mubr.bf16.mxu0 0
      %4673 = vmatmul.mubr.bf16.gmra.mrb[0].mxu0 %v4560
      %v4674 = vpop.f32.mrb[0].mxu0
      %v4675 = vadd.f32 0.0, %v4674
      %v4676 = vpop.f32.mrb[0].mxu0
      %v4677 = vpop.f32.mrb[0].mxu0
      %v4678 = vadd.f32 0.0, %v4677
      %v4679 = vpop.f32.mrb[0].mxu0
      %4680 = vmatprep.mubr.bf16.mxu0 0
      %4681 = vmatmul.mubr.bf16.gmra.mrb[0].mxu0 %v4563
      %v4682 = vpop.f32.mrb[0].mxu0
      %v4683 = vadd.f32 0.0, %v4682
      %v4684 = vpop.f32.mrb[0].mxu0
      %v4685 = vpop.f32.mrb[0].mxu0
      %v4686 = vadd.f32 0.0, %v4685
      %v4687 = vpop.f32.mrb[0].mxu0
      %4688 = vmatprep.mubr.bf16.mxu0 0
      %4689 = vmatmul.mubr.bf16.gmra.mrb[0].mxu0 %v4566
      %v4690 = vpop.f32.mrb[0].mxu0
      %v4691 = vadd.f32 0.0, %v4690
      %v4692 = vpop.f32.mrb[0].mxu0
      %v4693 = vpop.f32.mrb[0].mxu0
      %v4694 = vadd.f32 0.0, %v4693
      %v4695 = vpop.f32.mrb[0].mxu0
      %4696 = vmatprep.mubr.bf16.mxu0 0
      %4697 = vmatmul.mubr.bf16.gmra.mrb[0].mxu0 %v4569
      %v4698 = vpop.f32.mrb[0].mxu0
      %v4699 = vadd.f32 0.0, %v4698
      %v4700 = vpop.f32.mrb[0].mxu0
      %v4701 = vpop.f32.mrb[0].mxu0
      %v4702 = vadd.f32 0.0, %v4701
      %v4703 = vpop.f32.mrb[0].mxu0
      %4704 = vmatprep.mubr.bf16.mxu0 0
      %4705 = vmatmul.mubr.bf16.gmra.mrb[0].mxu0 %v4572
      %v4706 = vpop.f32.mrb[0].mxu0
      %v4707 = vadd.f32 0.0, %v4706
      %v4708 = vpop.f32.mrb[0].mxu0
      %v4709 = vpop.f32.mrb[0].mxu0
      %v4710 = vadd.f32 0.0, %v4709
      %v4711 = vpop.f32.mrb[0].mxu0
      %4712 = vmatprep.mubr.bf16.mxu0 0
      %4713 = vmatmul.mubr.bf16.gmra.mrb[0].mxu0 %v4575
      %v4714 = vpop.f32.mrb[0].mxu0
      %v4715 = vadd.f32 0.0, %v4714
      %v4716 = vpop.f32.mrb[0].mxu0
      %v4717 = vpop.f32.mrb[0].mxu0
      %v4718 = vadd.f32 0.0, %v4717
      %v4719 = vpop.f32.mrb[0].mxu0
      %4720 = vmatprep.mubr.bf16.mxu0 0
      %4721 = vmatmul.mubr.bf16.gmra.mrb[0].mxu0 %v4578
      %v4722 = vpop.f32.mrb[0].mxu0
      %v4723 = vadd.f32 0.0, %v4722
      %v4724 = vpop.f32.mrb[0].mxu0
      %v4725 = vpop.f32.mrb[0].mxu0
      %v4726 = vadd.f32 0.0, %v4725
      %v4727 = vpop.f32.mrb[0].mxu0
      %4728 = vmatprep.mubr.bf16.mxu0 0
      %4729 = vmatmul.mubr.bf16.gmra.mrb[0].mxu0 %v4581
      %v4730 = vpop.f32.mrb[0].mxu0
      %v4731 = vadd.f32 0.0, %v4730
      %v4732 = vpop.f32.mrb[0].mxu0
      %v4733 = vpop.f32.mrb[0].mxu0
      %v4734 = vadd.f32 0.0, %v4733
      %v4735 = vpop.f32.mrb[0].mxu0
      %4736 = vmatprep.mubr.bf16.mxu0 0
      %4737 = vmatmul.mubr.bf16.gmra.mrb[0].mxu0 %v4584
      %v4738 = vpop.f32.mrb[0].mxu0
      %v4739 = vadd.f32 0.0, %v4738
      %v4740 = vpop.f32.mrb[0].mxu0
      %v4741 = vpop.f32.mrb[0].mxu0
      %v4742 = vadd.f32 0.0, %v4741
      %v4743 = vpop.f32.mrb[0].mxu0
      %4744 = vmatprep.mubr.bf16.mxu0 0
      %4745 = vmatmul.mubr.bf16.gmra.mrb[0].mxu0 %v4587
      %v4746 = vpop.f32.mrb[0].mxu0
      %v4747 = vadd.f32 0.0, %v4746
      %v4748 = vpop.f32.mrb[0].mxu0
      %v4749 = vpop.f32.mrb[0].mxu0
      %v4750 = vadd.f32 0.0, %v4749
      %v4751 = vpop.f32.mrb[0].mxu0
      %4752 = vdwg.mxu0
      %v4753 = vadd.f32 %v4283, %v4627
      %v4754 = vadd.f32 %v4284, %v4630
      %v4755 = vadd.f32 %v4285, %v4635
      %v4756 = vadd.f32 %v4286, %v4638
      %v4757 = vadd.f32 %v4287, %v4643
      %v4758 = vadd.f32 %v4288, %v4646
      %v4759 = vadd.f32 %v4289, %v4651
      %v4760 = vadd.f32 %v4290, %v4654
      %v4761 = vadd.f32 %v4291, %v4659
      %v4762 = vadd.f32 %v4292, %v4662
      %v4763 = vadd.f32 %v4293, %v4667
      %v4764 = vadd.f32 %v4294, %v4670
      %v4765 = vadd.f32 %v4295, %v4675
      %v4766 = vadd.f32 %v4296, %v4678
      %v4767 = vadd.f32 %v4297, %v4683
      %v4768 = vadd.f32 %v4298, %v4686
      %v4769 = vadd.f32 %v4299, %v4691
      %v4770 = vadd.f32 %v4300, %v4694
      %v4771 = vadd.f32 %v4301, %v4699
      %v4772 = vadd.f32 %v4302, %v4702
      %v4773 = vadd.f32 %v4303, %v4707
      %v4774 = vadd.f32 %v4304, %v4710
      %v4775 = vadd.f32 %v4305, %v4715
      %v4776 = vadd.f32 %v4306, %v4718
      %v4777 = vadd.f32 %v4307, %v4723
      %v4778 = vadd.f32 %v4308, %v4726
      %v4779 = vadd.f32 %v4309, %v4731
      %v4780 = vadd.f32 %v4310, %v4734
      %v4781 = vadd.f32 %v4311, %v4739
      %v4782 = vadd.f32 %v4312, %v4742
      %v4783 = vadd.f32 %v4313, %v4747
      %v4784 = vadd.f32 %v4314, %v4750
      %v4785 = vld [vmem:[%s2] sm:$0x1]
      %v4787 = vlaneseq
      %v4788 = vshrl.u32 %v4787, 7
      %v4789 = vsub.s32 0, %v4788
      %v4790 = vrot.slane %v4785, %v4789
      %v4792 = vadd.f32 %v4753, %v4790
      %v4793 = vadd.f32 %v4754, %v4790
      %v4794 = vadd.f32 %v4755, %v4790
      %v4795 = vadd.f32 %v4756, %v4790
      %v4796 = vadd.f32 %v4757, %v4790
      %v4797 = vadd.f32 %v4758, %v4790
      %v4798 = vadd.f32 %v4759, %v4790
      %v4799 = vadd.f32 %v4760, %v4790
      %v4800 = vadd.f32 %v4761, %v4790
      %v4801 = vadd.f32 %v4762, %v4790
      %v4802 = vadd.f32 %v4763, %v4790
      %v4803 = vadd.f32 %v4764, %v4790
      %v4804 = vadd.f32 %v4765, %v4790
      %v4805 = vadd.f32 %v4766, %v4790
      %v4806 = vadd.f32 %v4767, %v4790
      %v4807 = vadd.f32 %v4768, %v4790
      %v4808 = vadd.f32 %v4769, %v4790
      %v4809 = vadd.f32 %v4770, %v4790
      %v4810 = vadd.f32 %v4771, %v4790
      %v4811 = vadd.f32 %v4772, %v4790
      %v4812 = vadd.f32 %v4773, %v4790
      %v4813 = vadd.f32 %v4774, %v4790
      %v4814 = vadd.f32 %v4775, %v4790
      %v4815 = vadd.f32 %v4776, %v4790
      %v4816 = vadd.f32 %v4777, %v4790
      %v4817 = vadd.f32 %v4778, %v4790
      %v4818 = vadd.f32 %v4779, %v4790
      %v4819 = vadd.f32 %v4780, %v4790
      %v4820 = vadd.f32 %v4781, %v4790
      %v4821 = vadd.f32 %v4782, %v4790
      %v4822 = vadd.f32 %v4783, %v4790
      %v4823 = vadd.f32 %v4784, %v4790
      %v4824 = vmax.f32 %v4792, 0.0
      %v4825 = vmax.f32 %v4793, 0.0
      %v4826 = vmax.f32 %v4794, 0.0
      %v4827 = vmax.f32 %v4795, 0.0
      %v4828 = vmax.f32 %v4796, 0.0
      %v4829 = vmax.f32 %v4797, 0.0
      %v4830 = vmax.f32 %v4798, 0.0
      %v4831 = vmax.f32 %v4799, 0.0
      %v4832 = vmax.f32 %v4800, 0.0
      %v4833 = vmax.f32 %v4801, 0.0
      %v4834 = vmax.f32 %v4802, 0.0
      %v4835 = vmax.f32 %v4803, 0.0
      %v4836 = vmax.f32 %v4804, 0.0
      %v4837 = vmax.f32 %v4805, 0.0
      %v4838 = vmax.f32 %v4806, 0.0
      %v4839 = vmax.f32 %v4807, 0.0
      %v4840 = vmax.f32 %v4808, 0.0
      %v4841 = vmax.f32 %v4809, 0.0
      %v4842 = vmax.f32 %v4810, 0.0
      %v4843 = vmax.f32 %v4811, 0.0
      %v4844 = vmax.f32 %v4812, 0.0
      %v4845 = vmax.f32 %v4813, 0.0
      %v4846 = vmax.f32 %v4814, 0.0
      %v4847 = vmax.f32 %v4815, 0.0
      %v4848 = vmax.f32 %v4816, 0.0
      %v4849 = vmax.f32 %v4817, 0.0
      %v4850 = vmax.f32 %v4818, 0.0
      %v4851 = vmax.f32 %v4819, 0.0
      %v4852 = vmax.f32 %v4820, 0.0
      %v4853 = vmax.f32 %v4821, 0.0
      %v4854 = vmax.f32 %v4822, 0.0
      %v4855 = vmax.f32 %v4823, 0.0
      %vm4856 = vcmask 27648
      %4857 = vst.msk [vmem:[#allocation2] sm:$0xf] %vm4856, 0
      %4858 = vst.msk [vmem:[#allocation2 + $0x4] sm:$0xf] %vm4856, 0
      %vm4859 = vcmask 24576
      %4860 = vst.msk [vmem:[#allocation2 + $0x8] sm:$0x1] %vm4859, 0
      %4861 = vst.msk [vmem:[#allocation2 + $0xc] sm:$0xf] %vm4856, 0
      %4862 = vst.msk [vmem:[#allocation2 + $0x10] sm:$0xf] %vm4856, 0
      %4863 = vst.msk [vmem:[#allocation2 + $0x14] sm:$0x1] %vm4859, 0
      %4864 = vst.msk [vmem:[#allocation2 + $0x18] sm:$0xf] %vm4856, 0
      %4865 = vst.msk [vmem:[#allocation2 + $0x1c] sm:$0xf] %vm4856, 0
      %4866 = vst.msk [vmem:[#allocation2 + $0x20] sm:$0x1] %vm4859, 0
      %4867 = vst.msk [vmem:[#allocation2 + $0x24] sm:$0xf] %vm4856, 0
      %4868 = vst.msk [vmem:[#allocation2 + $0x28] sm:$0xf] %vm4856, 0
      %4869 = vst.msk [vmem:[#allocation2 + $0x2c] sm:$0x1] %vm4859, 0
      %4870 = vst.msk [vmem:[#allocation2 + $0x30] sm:$0xf] %vm4856, 0
      %4871 = vst.msk [vmem:[#allocation2 + $0x34] sm:$0xf] %vm4856, 0
      %4872 = vst.msk [vmem:[#allocation2 + $0x38] sm:$0x1] %vm4859, 0
      %4873 = vst.msk [vmem:[#allocation2 + $0x3c] sm:$0xf] %vm4856, 0
      %4874 = vst.msk [vmem:[#allocation2 + $0x40] sm:$0xf] %vm4856, 0
      %4875 = vst.msk [vmem:[#allocation2 + $0x44] sm:$0x1] %vm4859, 0
      %4876 = vst.msk [vmem:[#allocation2 + $0x48] sm:$0xf] %vm4856, 0
      %4877 = vst.msk [vmem:[#allocation2 + $0x4c] sm:$0xf] %vm4856, 0
      %4878 = vst.msk [vmem:[#allocation2 + $0x50] sm:$0x1] %vm4859, 0
      %4879 = vst.msk [vmem:[#allocation2 + $0x54] sm:$0xf] %vm4856, 0
      %4880 = vst.msk [vmem:[#allocation2 + $0x58] sm:$0xf] %vm4856, 0
      %4881 = vst.msk [vmem:[#allocation2 + $0x5c] sm:$0x1] %vm4859, 0
      %4882 = vst.msk [vmem:[#allocation2 + $0x60] sm:$0xf] %vm4856, 0
      %4883 = vst.msk [vmem:[#allocation2 + $0x64] sm:$0xf] %vm4856, 0
      %4884 = vst.msk [vmem:[#allocation2 + $0x68] sm:$0x1] %vm4859, 0
      %4885 = vst.msk [vmem:[#allocation2 + $0x6c] sm:$0xf] %vm4856, 0
      %4886 = vst.msk [vmem:[#allocation2 + $0x70] sm:$0xf] %vm4856, 0
      %4887 = vst.msk [vmem:[#allocation2 + $0x74] sm:$0x1] %vm4859, 0
      %4888 = vst.msk [vmem:[#allocation2 + $0x78] sm:$0xf] %vm4856, 0
      %4889 = vst.msk [vmem:[#allocation2 + $0x7c] sm:$0xf] %vm4856, 0
      %4890 = vst.msk [vmem:[#allocation2 + $0x80] sm:$0x1] %vm4859, 0
      %4891 = vst.msk [vmem:[#allocation2 + $0x84] sm:$0xf] %vm4856, 0
      %4892 = vst.msk [vmem:[#allocation2 + $0x88] sm:$0xf] %vm4856, 0
      %4893 = vst.msk [vmem:[#allocation2 + $0x8c] sm:$0x1] %vm4859, 0
      %4894 = vst.msk [vmem:[#allocation2 + $0x90] sm:$0xf] %vm4856, 0
      %4895 = vst.msk [vmem:[#allocation2 + $0x94] sm:$0xf] %vm4856, 0
      %4896 = vst.msk [vmem:[#allocation2 + $0x98] sm:$0x1] %vm4859, 0
      %4897 = vst.msk [vmem:[#allocation2 + $0x9c] sm:$0xf] %vm4856, 0
      %4898 = vst.msk [vmem:[#allocation2 + $0xa0] sm:$0xf] %vm4856, 0
      %4899 = vst.msk [vmem:[#allocation2 + $0xa4] sm:$0x1] %vm4859, 0
      %4900 = vst.msk [vmem:[#allocation2 + $0xa8] sm:$0xf] %vm4856, 0
      %4901 = vst.msk [vmem:[#allocation2 + $0xac] sm:$0xf] %vm4856, 0
      %4902 = vst.msk [vmem:[#allocation2 + $0xb0] sm:$0x1] %vm4859, 0
      %4903 = vst.msk [vmem:[#allocation2 + $0xb4] sm:$0xf] %vm4856, 0
      %4904 = vst.msk [vmem:[#allocation2 + $0xb8] sm:$0xf] %vm4856, 0
      %4905 = vst.msk [vmem:[#allocation2 + $0xbc] sm:$0x1] %vm4859, 0
      %4906 = vst.msk [vmem:[#allocation2 + $0xc0] sm:$0xf] %vm4856, 0
      %4907 = vst.msk [vmem:[#allocation2 + $0xc4] sm:$0xf] %vm4856, 0
      %4908 = vst.msk [vmem:[#allocation2 + $0xc8] sm:$0x1] %vm4859, 0
      %4909 = vst.msk [vmem:[#allocation2 + $0xcc] sm:$0xf] %vm4856, 0
      %4910 = vst.msk [vmem:[#allocation2 + $0xd0] sm:$0xf] %vm4856, 0
      %4911 = vst.msk [vmem:[#allocation2 + $0xd4] sm:$0x1] %vm4859, 0
      %v4912 = vpack.c.bf16 %v4825, %v4824
      %v4913 = vpack.c.bf16 %v4827, %v4826
      %v4914 = vpack.c.bf16 %v4829, %v4828
      %v4915 = vpack.c.bf16 %v4831, %v4830
      %v4916 = vpack.c.bf16 %v4833, %v4832
      %v4917 = vpack.c.bf16 %v4835, %v4834
      %v4918 = vpack.c.bf16 %v4837, %v4836
      %v4919 = vpack.c.bf16 %v4839, %v4838
      %v4920 = vpack.c.bf16 %v4841, %v4840
      %v4921 = vpack.c.bf16 %v4843, %v4842
      %v4922 = vpack.c.bf16 %v4845, %v4844
      %v4923 = vpack.c.bf16 %v4847, %v4846
      %v4924 = vpack.c.bf16 %v4849, %v4848
      %v4925 = vpack.c.bf16 %v4851, %v4850
      %v4926 = vpack.c.bf16 %v4853, %v4852
      %v4927 = vpack.c.bf16 %v4855, %v4854
      %v4944 = vunpack.c.l.b16 %v4912
      %v4945 = vunpack.c.h.b16 %v4912
      %v4946 = vunpack.c.l.b16 %v4913
      %v4947 = vunpack.c.h.b16 %v4913
      %v4948 = vunpack.c.l.b16 %v4914
      %v4949 = vunpack.c.h.b16 %v4914
      %v4950 = vunpack.c.l.b16 %v4915
      %v4951 = vunpack.c.h.b16 %v4915
      %v4952 = vunpack.c.l.b16 %v4916
      %v4953 = vunpack.c.h.b16 %v4916
      %v4954 = vunpack.c.l.b16 %v4917
      %v4955 = vunpack.c.h.b16 %v4917
      %v4956 = vunpack.c.l.b16 %v4918
      %v4957 = vunpack.c.h.b16 %v4918
      %v4958 = vunpack.c.l.b16 %v4919
      %v4959 = vunpack.c.h.b16 %v4919
      %v4960 = vunpack.c.l.b16 %v4920
      %v4961 = vunpack.c.h.b16 %v4920
      %v4962 = vunpack.c.l.b16 %v4921
      %v4963 = vunpack.c.h.b16 %v4921
      %v4964 = vunpack.c.l.b16 %v4922
      %v4965 = vunpack.c.h.b16 %v4922
      %v4966 = vunpack.c.l.b16 %v4923
      %v4967 = vunpack.c.h.b16 %v4923
      %v4968 = vunpack.c.l.b16 %v4924
      %v4969 = vunpack.c.h.b16 %v4924
      %v4970 = vunpack.c.l.b16 %v4925
      %v4971 = vunpack.c.h.b16 %v4925
      %v4972 = vunpack.c.l.b16 %v4926
      %v4973 = vunpack.c.h.b16 %v4926
      %v4974 = vunpack.c.l.b16 %v4927
      %v4975 = vunpack.c.h.b16 %v4927
      %v4976 = vpack.c.b16 %v4944, %v4944
      %v4977 = vpack.c.b16 %v4945, %v4945
      %v4978 = vpack.c.b16 %v4946, %v4946
      %v4979 = vpack.c.b16 %v4947, %v4947
      %v4980 = vpack.c.b16 %v4948, %v4948
      %v4981 = vpack.c.b16 %v4949, %v4949
      %v4982 = vpack.c.b16 %v4950, %v4950
      %v4983 = vpack.c.b16 %v4951, %v4951
      %v4984 = vpack.c.b16 %v4952, %v4952
      %v4985 = vpack.c.b16 %v4953, %v4953
      %v4986 = vpack.c.b16 %v4954, %v4954
      %v4987 = vpack.c.b16 %v4955, %v4955
      %v4988 = vpack.c.b16 %v4956, %v4956
      %v4989 = vpack.c.b16 %v4957, %v4957
      %v4990 = vpack.c.b16 %v4958, %v4958
      %v4991 = vpack.c.b16 %v4959, %v4959
      %v4992 = vpack.c.b16 %v4960, %v4960
      %v4993 = vpack.c.b16 %v4961, %v4961
      %v4994 = vpack.c.b16 %v4962, %v4962
      %v4995 = vpack.c.b16 %v4963, %v4963
      %v4996 = vpack.c.b16 %v4964, %v4964
      %v4997 = vpack.c.b16 %v4965, %v4965
      %v4998 = vpack.c.b16 %v4966, %v4966
      %v4999 = vpack.c.b16 %v4967, %v4967
      %v5000 = vpack.c.b16 %v4968, %v4968
      %v5001 = vpack.c.b16 %v4969, %v4969
      %v5002 = vpack.c.b16 %v4970, %v4970
      %v5003 = vpack.c.b16 %v4971, %v4971
      %v5004 = vpack.c.b16 %v4972, %v4972
      %v5005 = vpack.c.b16 %v4973, %v4973
      %v5006 = vpack.c.b16 %v4974, %v4974
      %v5007 = vpack.c.b16 %v4975, %v4975
      %vm5008 = vsmask.f32 256
      %vm5009 = vsmask.f32 4368
      %vm5010 = vmor %vm5008, %vm5009
      %v5012 = vshrl.u32 %v4976, 16
      %v5014 = vrot.slane %v5012, 7
      %v5015 = vshll.u32 %v4976, 16
      %v5017 = vor.u32 %v5014, %v5015
      %v5018 = vrot.slane %v5014, 4
      %v5020 = vshrl.u32 %v4977, 16
      %v5022 = vrot.slane %v5020, 7
      %v5023 = vshll.u32 %v4977, 16
      %v5025 = vor.u32 %v5022, %v5023
      %v5026 = vsel %vm5010, %v5018, %v5025
      %v5027 = vrot.slane %v5022, 4
      %v5029 = vshrl.u32 %v4978, 16
      %v5031 = vrot.slane %v5029, 7
      %v5032 = vshll.u32 %v4978, 16
      %v5034 = vor.u32 %v5031, %v5032
      %v5035 = vrot.slane %v5031, 4
      %v5037 = vshrl.u32 %v4979, 16
      %v5039 = vrot.slane %v5037, 7
      %v5040 = vshll.u32 %v4979, 16
      %v5042 = vor.u32 %v5039, %v5040
      %v5043 = vsel %vm5010, %v5035, %v5042
      %v5044 = vrot.slane %v5039, 4
      %v5046 = vshrl.u32 %v4980, 16
      %v5048 = vrot.slane %v5046, 7
      %v5049 = vshll.u32 %v4980, 16
      %v5051 = vor.u32 %v5048, %v5049
      %v5052 = vrot.slane %v5048, 4
      %v5054 = vshrl.u32 %v4981, 16
      %v5056 = vrot.slane %v5054, 7
      %v5057 = vshll.u32 %v4981, 16
      %v5059 = vor.u32 %v5056, %v5057
      %v5060 = vsel %vm5010, %v5052, %v5059
      %v5061 = vrot.slane %v5056, 4
      %v5063 = vshrl.u32 %v4982, 16
      %v5065 = vrot.slane %v5063, 7
      %v5066 = vshll.u32 %v4982, 16
      %v5068 = vor.u32 %v5065, %v5066
      %v5069 = vrot.slane %v5065, 4
      %v5071 = vshrl.u32 %v4983, 16
      %v5073 = vrot.slane %v5071, 7
      %v5074 = vshll.u32 %v4983, 16
      %v5076 = vor.u32 %v5073, %v5074
      %v5077 = vsel %vm5010, %v5069, %v5076
      %v5078 = vrot.slane %v5073, 4
      %v5080 = vshrl.u32 %v4984, 16
      %v5082 = vrot.slane %v5080, 7
      %v5083 = vshll.u32 %v4984, 16
      %v5085 = vor.u32 %v5082, %v5083
      %v5086 = vrot.slane %v5082, 4
      %v5088 = vshrl.u32 %v4985, 16
      %v5090 = vrot.slane %v5088, 7
      %v5091 = vshll.u32 %v4985, 16
      %v5093 = vor.u32 %v5090, %v5091
      %v5094 = vsel %vm5010, %v5086, %v5093
      %v5095 = vrot.slane %v5090, 4
      %v5097 = vshrl.u32 %v4986, 16
      %v5099 = vrot.slane %v5097, 7
      %v5100 = vshll.u32 %v4986, 16
      %v5102 = vor.u32 %v5099, %v5100
      %v5103 = vrot.slane %v5099, 4
      %v5105 = vshrl.u32 %v4987, 16
      %v5107 = vrot.slane %v5105, 7
      %v5108 = vshll.u32 %v4987, 16
      %v5110 = vor.u32 %v5107, %v5108
      %v5111 = vsel %vm5010, %v5103, %v5110
      %v5112 = vrot.slane %v5107, 4
      %v5114 = vshrl.u32 %v4988, 16
      %v5116 = vrot.slane %v5114, 7
      %v5117 = vshll.u32 %v4988, 16
      %v5119 = vor.u32 %v5116, %v5117
      %v5120 = vrot.slane %v5116, 4
      %v5122 = vshrl.u32 %v4989, 16
      %v5124 = vrot.slane %v5122, 7
      %v5125 = vshll.u32 %v4989, 16
      %v5127 = vor.u32 %v5124, %v5125
      %v5128 = vsel %vm5010, %v5120, %v5127
      %v5129 = vrot.slane %v5124, 4
      %v5131 = vshrl.u32 %v4990, 16
      %v5133 = vrot.slane %v5131, 7
      %v5134 = vshll.u32 %v4990, 16
      %v5136 = vor.u32 %v5133, %v5134
      %v5137 = vrot.slane %v5133, 4
      %v5139 = vshrl.u32 %v4991, 16
      %v5141 = vrot.slane %v5139, 7
      %v5142 = vshll.u32 %v4991, 16
      %v5144 = vor.u32 %v5141, %v5142
      %v5145 = vsel %vm5010, %v5137, %v5144
      %v5146 = vrot.slane %v5141, 4
      %v5148 = vshrl.u32 %v4992, 16
      %v5150 = vrot.slane %v5148, 7
      %v5151 = vshll.u32 %v4992, 16
      %v5153 = vor.u32 %v5150, %v5151
      %v5154 = vrot.slane %v5150, 4
      %v5156 = vshrl.u32 %v4993, 16
      %v5158 = vrot.slane %v5156, 7
      %v5159 = vshll.u32 %v4993, 16
      %v5161 = vor.u32 %v5158, %v5159
      %v5162 = vsel %vm5010, %v5154, %v5161
      %v5163 = vrot.slane %v5158, 4
      %v5165 = vshrl.u32 %v4994, 16
      %v5167 = vrot.slane %v5165, 7
      %v5168 = vshll.u32 %v4994, 16
      %v5170 = vor.u32 %v5167, %v5168
      %v5171 = vrot.slane %v5167, 4
      %v5173 = vshrl.u32 %v4995, 16
      %v5175 = vrot.slane %v5173, 7
      %v5176 = vshll.u32 %v4995, 16
      %v5178 = vor.u32 %v5175, %v5176
      %v5179 = vsel %vm5010, %v5171, %v5178
      %v5180 = vrot.slane %v5175, 4
      %v5182 = vshrl.u32 %v4996, 16
      %v5184 = vrot.slane %v5182, 7
      %v5185 = vshll.u32 %v4996, 16
      %v5187 = vor.u32 %v5184, %v5185
      %v5188 = vrot.slane %v5184, 4
      %v5190 = vshrl.u32 %v4997, 16
      %v5192 = vrot.slane %v5190, 7
      %v5193 = vshll.u32 %v4997, 16
      %v5195 = vor.u32 %v5192, %v5193
      %v5196 = vsel %vm5010, %v5188, %v5195
      %v5197 = vrot.slane %v5192, 4
      %v5199 = vshrl.u32 %v4998, 16
      %v5201 = vrot.slane %v5199, 7
      %v5202 = vshll.u32 %v4998, 16
      %v5204 = vor.u32 %v5201, %v5202
      %v5205 = vrot.slane %v5201, 4
      %v5207 = vshrl.u32 %v4999, 16
      %v5209 = vrot.slane %v5207, 7
      %v5210 = vshll.u32 %v4999, 16
      %v5212 = vor.u32 %v5209, %v5210
      %v5213 = vsel %vm5010, %v5205, %v5212
      %v5214 = vrot.slane %v5209, 4
      %v5216 = vshrl.u32 %v5000, 16
      %v5218 = vrot.slane %v5216, 7
      %v5219 = vshll.u32 %v5000, 16
      %v5221 = vor.u32 %v5218, %v5219
      %v5222 = vrot.slane %v5218, 4
      %v5224 = vshrl.u32 %v5001, 16
      %v5226 = vrot.slane %v5224, 7
      %v5227 = vshll.u32 %v5001, 16
      %v5229 = vor.u32 %v5226, %v5227
      %v5230 = vsel %vm5010, %v5222, %v5229
      %v5231 = vrot.slane %v5226, 4
      %v5233 = vshrl.u32 %v5002, 16
      %v5235 = vrot.slane %v5233, 7
      %v5236 = vshll.u32 %v5002, 16
      %v5238 = vor.u32 %v5235, %v5236
      %v5239 = vrot.slane %v5235, 4
      %v5241 = vshrl.u32 %v5003, 16
      %v5243 = vrot.slane %v5241, 7
      %v5244 = vshll.u32 %v5003, 16
      %v5246 = vor.u32 %v5243, %v5244
      %v5247 = vsel %vm5010, %v5239, %v5246
      %v5248 = vrot.slane %v5243, 4
      %v5250 = vshrl.u32 %v5004, 16
      %v5252 = vrot.slane %v5250, 7
      %v5253 = vshll.u32 %v5004, 16
      %v5255 = vor.u32 %v5252, %v5253
      %v5256 = vrot.slane %v5252, 4
      %v5258 = vshrl.u32 %v5005, 16
      %v5260 = vrot.slane %v5258, 7
      %v5261 = vshll.u32 %v5005, 16
      %v5263 = vor.u32 %v5260, %v5261
      %v5264 = vsel %vm5010, %v5256, %v5263
      %v5265 = vrot.slane %v5260, 4
      %v5267 = vshrl.u32 %v5006, 16
      %v5269 = vrot.slane %v5267, 7
      %v5270 = vshll.u32 %v5006, 16
      %v5272 = vor.u32 %v5269, %v5270
      %v5273 = vrot.slane %v5269, 4
      %v5275 = vshrl.u32 %v5007, 16
      %v5277 = vrot.slane %v5275, 7
      %v5278 = vshll.u32 %v5007, 16
      %v5280 = vor.u32 %v5277, %v5278
      %v5281 = vsel %vm5010, %v5273, %v5280
      %v5282 = vrot.slane %v5277, 4
      %s5331 = scalar_lea.vmem [#allocation2], 12
      %vm5332 = vcmask 27648
      %vm5333 = vsmask.f32 7938
      %vm5334 = vmand %vm5332, %vm5333
      %v5335 = vld [vmem:[%s5331] sm:$0xf]
      %v5336 = vsel %vm5334, %v5017, %v5335
      %5337 = vst [vmem:[%s5331] sm:$0xf] %v5336
      %5338 = vst.msk [vmem:[%s5331 + $0x4] sm:$0xf] %vm4856, %v5026
      %vm5339 = vcmask 24576
      %vm5340 = vmand %vm5339, %vm5008
      %v5341 = vld [vmem:[%s5331 + $0x8] sm:$0x1]
      %v5342 = vsel %vm5340, %v5027, %v5341
      %5343 = vst [vmem:[%s5331 + $0x8] sm:$0x1] %v5342
      %v5344 = vld [vmem:[%s5331 + $0xc] sm:$0xf]
      %v5345 = vsel %vm5334, %v5034, %v5344
      %5346 = vst [vmem:[%s5331 + $0xc] sm:$0xf] %v5345
      %5347 = vst.msk [vmem:[%s5331 + $0x10] sm:$0xf] %vm4856, %v5043
      %v5348 = vld [vmem:[%s5331 + $0x14] sm:$0x1]
      %v5349 = vsel %vm5340, %v5044, %v5348
      %5350 = vst [vmem:[%s5331 + $0x14] sm:$0x1] %v5349
      %v5351 = vld [vmem:[%s5331 + $0x18] sm:$0xf]
      %v5352 = vsel %vm5334, %v5051, %v5351
      %5353 = vst [vmem:[%s5331 + $0x18] sm:$0xf] %v5352
      %5354 = vst.msk [vmem:[%s5331 + $0x1c] sm:$0xf] %vm4856, %v5060
      %v5355 = vld [vmem:[%s5331 + $0x20] sm:$0x1]
      %v5356 = vsel %vm5340, %v5061, %v5355
      %5357 = vst [vmem:[%s5331 + $0x20] sm:$0x1] %v5356
      %v5358 = vld [vmem:[%s5331 + $0x24] sm:$0xf]
      %v5359 = vsel %vm5334, %v5068, %v5358
      %5360 = vst [vmem:[%s5331 + $0x24] sm:$0xf] %v5359
      %5361 = vst.msk [vmem:[%s5331 + $0x28] sm:$0xf] %vm4856, %v5077
      %v5362 = vld [vmem:[%s5331 + $0x2c] sm:$0x1]
      %v5363 = vsel %vm5340, %v5078, %v5362
      %5364 = vst [vmem:[%s5331 + $0x2c] sm:$0x1] %v5363
      %v5365 = vld [vmem:[%s5331 + $0x30] sm:$0xf]
      %v5366 = vsel %vm5334, %v5085, %v5365
      %5367 = vst [vmem:[%s5331 + $0x30] sm:$0xf] %v5366
      %5368 = vst.msk [vmem:[%s5331 + $0x34] sm:$0xf] %vm4856, %v5094
      %v5369 = vld [vmem:[%s5331 + $0x38] sm:$0x1]
      %v5370 = vsel %vm5340, %v5095, %v5369
      %5371 = vst [vmem:[%s5331 + $0x38] sm:$0x1] %v5370
      %v5372 = vld [vmem:[%s5331 + $0x3c] sm:$0xf]
      %v5373 = vsel %vm5334, %v5102, %v5372
      %5374 = vst [vmem:[%s5331 + $0x3c] sm:$0xf] %v5373
      %5375 = vst.msk [vmem:[%s5331 + $0x40] sm:$0xf] %vm4856, %v5111
      %v5376 = vld [vmem:[%s5331 + $0x44] sm:$0x1]
      %v5377 = vsel %vm5340, %v5112, %v5376
      %5378 = vst [vmem:[%s5331 + $0x44] sm:$0x1] %v5377
      %v5379 = vld [vmem:[%s5331 + $0x48] sm:$0xf]
      %v5380 = vsel %vm5334, %v5119, %v5379
      %5381 = vst [vmem:[%s5331 + $0x48] sm:$0xf] %v5380
      %5382 = vst.msk [vmem:[%s5331 + $0x4c] sm:$0xf] %vm4856, %v5128
      %v5383 = vld [vmem:[%s5331 + $0x50] sm:$0x1]
      %v5384 = vsel %vm5340, %v5129, %v5383
      %5385 = vst [vmem:[%s5331 + $0x50] sm:$0x1] %v5384
      %v5386 = vld [vmem:[%s5331 + $0x54] sm:$0xf]
      %v5387 = vsel %vm5334, %v5136, %v5386
      %5388 = vst [vmem:[%s5331 + $0x54] sm:$0xf] %v5387
      %5389 = vst.msk [vmem:[%s5331 + $0x58] sm:$0xf] %vm4856, %v5145
      %v5390 = vld [vmem:[%s5331 + $0x5c] sm:$0x1]
      %v5391 = vsel %vm5340, %v5146, %v5390
      %5392 = vst [vmem:[%s5331 + $0x5c] sm:$0x1] %v5391
      %v5393 = vld [vmem:[%s5331 + $0x60] sm:$0xf]
      %v5394 = vsel %vm5334, %v5153, %v5393
      %5395 = vst [vmem:[%s5331 + $0x60] sm:$0xf] %v5394
      %5396 = vst.msk [vmem:[%s5331 + $0x64] sm:$0xf] %vm4856, %v5162
      %v5397 = vld [vmem:[%s5331 + $0x68] sm:$0x1]
      %v5398 = vsel %vm5340, %v5163, %v5397
      %5399 = vst [vmem:[%s5331 + $0x68] sm:$0x1] %v5398
      %v5400 = vld [vmem:[%s5331 + $0x6c] sm:$0xf]
      %v5401 = vsel %vm5334, %v5170, %v5400
      %5402 = vst [vmem:[%s5331 + $0x6c] sm:$0xf] %v5401
      %5403 = vst.msk [vmem:[%s5331 + $0x70] sm:$0xf] %vm4856, %v5179
      %v5404 = vld [vmem:[%s5331 + $0x74] sm:$0x1]
      %v5405 = vsel %vm5340, %v5180, %v5404
      %5406 = vst [vmem:[%s5331 + $0x74] sm:$0x1] %v5405
      %v5407 = vld [vmem:[%s5331 + $0x78] sm:$0xf]
      %v5408 = vsel %vm5334, %v5187, %v5407
      %5409 = vst [vmem:[%s5331 + $0x78] sm:$0xf] %v5408
      %5410 = vst.msk [vmem:[%s5331 + $0x7c] sm:$0xf] %vm4856, %v5196
      %v5411 = vld [vmem:[%s5331 + $0x80] sm:$0x1]
      %v5412 = vsel %vm5340, %v5197, %v5411
      %5413 = vst [vmem:[%s5331 + $0x80] sm:$0x1] %v5412
      %v5414 = vld [vmem:[%s5331 + $0x84] sm:$0xf]
      %v5415 = vsel %vm5334, %v5204, %v5414
      %5416 = vst [vmem:[%s5331 + $0x84] sm:$0xf] %v5415
      %5417 = vst.msk [vmem:[%s5331 + $0x88] sm:$0xf] %vm4856, %v5213
      %v5418 = vld [vmem:[%s5331 + $0x8c] sm:$0x1]
      %v5419 = vsel %vm5340, %v5214, %v5418
      %5420 = vst [vmem:[%s5331 + $0x8c] sm:$0x1] %v5419
      %v5421 = vld [vmem:[%s5331 + $0x90] sm:$0xf]
      %v5422 = vsel %vm5334, %v5221, %v5421
      %5423 = vst [vmem:[%s5331 + $0x90] sm:$0xf] %v5422
      %5424 = vst.msk [vmem:[%s5331 + $0x94] sm:$0xf] %vm4856, %v5230
      %v5425 = vld [vmem:[%s5331 + $0x98] sm:$0x1]
      %v5426 = vsel %vm5340, %v5231, %v5425
      %5427 = vst [vmem:[%s5331 + $0x98] sm:$0x1] %v5426
      %v5428 = vld [vmem:[%s5331 + $0x9c] sm:$0xf]
      %v5429 = vsel %vm5334, %v5238, %v5428
      %5430 = vst [vmem:[%s5331 + $0x9c] sm:$0xf] %v5429
      %5431 = vst.msk [vmem:[%s5331 + $0xa0] sm:$0xf] %vm4856, %v5247
      %v5432 = vld [vmem:[%s5331 + $0xa4] sm:$0x1]
      %v5433 = vsel %vm5340, %v5248, %v5432
      %5434 = vst [vmem:[%s5331 + $0xa4] sm:$0x1] %v5433
      %v5435 = vld [vmem:[%s5331 + $0xa8] sm:$0xf]
      %v5436 = vsel %vm5334, %v5255, %v5435
      %5437 = vst [vmem:[%s5331 + $0xa8] sm:$0xf] %v5436
      %5438 = vst.msk [vmem:[%s5331 + $0xac] sm:$0xf] %vm4856, %v5264
      %v5439 = vld [vmem:[%s5331 + $0xb0] sm:$0x1]
      %v5440 = vsel %vm5340, %v5265, %v5439
      %5441 = vst [vmem:[%s5331 + $0xb0] sm:$0x1] %v5440
      %v5442 = vld [vmem:[%s5331 + $0xb4] sm:$0xf]
      %v5443 = vsel %vm5334, %v5272, %v5442
      %5444 = vst [vmem:[%s5331 + $0xb4] sm:$0xf] %v5443
      %5445 = vst.msk [vmem:[%s5331 + $0xb8] sm:$0xf] %vm4856, %v5281
      %v5446 = vld [vmem:[%s5331 + $0xbc] sm:$0x1]
      %v5447 = vsel %vm5340, %v5282, %v5446
      %5448 = vst [vmem:[%s5331 + $0xbc] sm:$0x1] %v5447
      %v5449 = vld [vmem:[#allocation2] sm:$0xf]
      %v5450 = vld [vmem:[#allocation2 + $0x4] sm:$0xf]
      %v5451 = vld [vmem:[#allocation2 + $0xc] sm:$0xf]
      %v5452 = vld [vmem:[#allocation2 + $0x10] sm:$0xf]
      %v5453 = vld [vmem:[#allocation2 + $0x18] sm:$0xf]
      %v5454 = vld [vmem:[#allocation2 + $0x1c] sm:$0xf]
      %v5455 = vld [vmem:[#allocation2 + $0x24] sm:$0xf]
      %v5456 = vld [vmem:[#allocation2 + $0x28] sm:$0xf]
      %v5457 = vld [vmem:[#allocation2 + $0x30] sm:$0xf]
      %v5458 = vld [vmem:[#allocation2 + $0x34] sm:$0xf]
      %v5459 = vld [vmem:[#allocation2 + $0x3c] sm:$0xf]
      %v5460 = vld [vmem:[#allocation2 + $0x40] sm:$0xf]
      %v5461 = vld [vmem:[#allocation2 + $0x48] sm:$0xf]
      %v5462 = vld [vmem:[#allocation2 + $0x4c] sm:$0xf]
      %v5463 = vld [vmem:[#allocation2 + $0x54] sm:$0xf]
      %v5464 = vld [vmem:[#allocation2 + $0x58] sm:$0xf]
      %v5465 = vld [vmem:[#allocation2 + $0x60] sm:$0xf]
      %v5466 = vld [vmem:[#allocation2 + $0x64] sm:$0xf]
      %v5467 = vld [vmem:[#allocation2 + $0x6c] sm:$0xf]
      %v5468 = vld [vmem:[#allocation2 + $0x70] sm:$0xf]
      %v5469 = vld [vmem:[#allocation2 + $0x78] sm:$0xf]
      %v5470 = vld [vmem:[#allocation2 + $0x7c] sm:$0xf]
      %v5471 = vld [vmem:[#allocation2 + $0x84] sm:$0xf]
      %v5472 = vld [vmem:[#allocation2 + $0x88] sm:$0xf]
      %v5473 = vld [vmem:[#allocation2 + $0x90] sm:$0xf]
      %v5474 = vld [vmem:[#allocation2 + $0x94] sm:$0xf]
      %v5475 = vld [vmem:[#allocation2 + $0x9c] sm:$0xf]
      %v5476 = vld [vmem:[#allocation2 + $0xa0] sm:$0xf]
      %v5477 = vld [vmem:[#allocation2 + $0xa8] sm:$0xf]
      %v5478 = vld [vmem:[#allocation2 + $0xac] sm:$0xf]
      %v5479 = vld [vmem:[#allocation2 + $0xb4] sm:$0xf]
      %v5480 = vld [vmem:[#allocation2 + $0xb8] sm:$0xf]
      %v5481 = vld [vmem:[%s3] sm:$0x3]
      %v5482 = vld [vmem:[#allocation2 + $0x8] sm:$0x1]
      %v5483 = vld [vmem:[#allocation2 + $0x14] sm:$0x1]
      %v5484 = vld [vmem:[#allocation2 + $0x20] sm:$0x1]
      %v5485 = vld [vmem:[#allocation2 + $0x2c] sm:$0x1]
      %v5486 = vld [vmem:[#allocation2 + $0x38] sm:$0x1]
      %v5487 = vld [vmem:[#allocation2 + $0x44] sm:$0x1]
      %v5488 = vld [vmem:[#allocation2 + $0x50] sm:$0x1]
      %v5489 = vld [vmem:[#allocation2 + $0x5c] sm:$0x1]
      %v5490 = vld [vmem:[#allocation2 + $0x68] sm:$0x1]
      %v5491 = vld [vmem:[#allocation2 + $0x74] sm:$0x1]
      %v5492 = vld [vmem:[#allocation2 + $0x80] sm:$0x1]
      %v5493 = vld [vmem:[#allocation2 + $0x8c] sm:$0x1]
      %v5494 = vld [vmem:[#allocation2 + $0x98] sm:$0x1]
      %v5495 = vld [vmem:[#allocation2 + $0xa4] sm:$0x1]
      %v5496 = vld [vmem:[#allocation2 + $0xb0] sm:$0x1]
      %v5497 = vld [vmem:[#allocation2 + $0xbc] sm:$0x1]
      %v5499 = vshrl.u32 %v5449, 16
      %v5501 = vrot.slane %v5499, 4
      %v5502 = vshll.u32 %v5449, 16
      %v5504 = vrot.slane %v5502, 5
      %v5505 = vor.u32 %v5501, %v5504
      %v5506 = vrot.slane %v5505, 4
      %v5508 = vshll.u32 %v5450, 16
      %v5510 = vrot.slane %v5508, 5
      %v5511 = vsel %vm277, %v5506, %v5510
      %v5512 = vshrl.u32 %v5450, 16
      %v5514 = vrot.slane %v5512, 4
      %v5515 = vor.u32 %v5514, %v5510
      %v5516 = vrot.slane %v5515, 4
      %v5518 = vshll.u32 %v5482, 16
      %v5520 = vrot.slane %v5518, 5
      %v5521 = vsel %vm277, %v5516, %v5520
      %v5523 = vshrl.u32 %v5451, 16
      %v5525 = vrot.slane %v5523, 4
      %v5526 = vshll.u32 %v5451, 16
      %v5528 = vrot.slane %v5526, 5
      %v5529 = vor.u32 %v5525, %v5528
      %v5530 = vrot.slane %v5529, 4
      %v5532 = vshll.u32 %v5452, 16
      %v5534 = vrot.slane %v5532, 5
      %v5535 = vsel %vm277, %v5530, %v5534
      %v5536 = vshrl.u32 %v5452, 16
      %v5538 = vrot.slane %v5536, 4
      %v5539 = vor.u32 %v5538, %v5534
      %v5540 = vrot.slane %v5539, 4
      %v5542 = vshll.u32 %v5483, 16
      %v5544 = vrot.slane %v5542, 5
      %v5545 = vsel %vm277, %v5540, %v5544
      %v5547 = vshrl.u32 %v5453, 16
      %v5549 = vrot.slane %v5547, 4
      %v5550 = vshll.u32 %v5453, 16
      %v5552 = vrot.slane %v5550, 5
      %v5553 = vor.u32 %v5549, %v5552
      %v5554 = vrot.slane %v5553, 4
      %v5556 = vshll.u32 %v5454, 16
      %v5558 = vrot.slane %v5556, 5
      %v5559 = vsel %vm277, %v5554, %v5558
      %v5560 = vshrl.u32 %v5454, 16
      %v5562 = vrot.slane %v5560, 4
      %v5563 = vor.u32 %v5562, %v5558
      %v5564 = vrot.slane %v5563, 4
      %v5566 = vshll.u32 %v5484, 16
      %v5568 = vrot.slane %v5566, 5
      %v5569 = vsel %vm277, %v5564, %v5568
      %v5571 = vshrl.u32 %v5455, 16
      %v5573 = vrot.slane %v5571, 4
      %v5574 = vshll.u32 %v5455, 16
      %v5576 = vrot.slane %v5574, 5
      %v5577 = vor.u32 %v5573, %v5576
      %v5578 = vrot.slane %v5577, 4
      %v5580 = vshll.u32 %v5456, 16
      %v5582 = vrot.slane %v5580, 5
      %v5583 = vsel %vm277, %v5578, %v5582
      %v5584 = vshrl.u32 %v5456, 16
      %v5586 = vrot.slane %v5584, 4
      %v5587 = vor.u32 %v5586, %v5582
      %v5588 = vrot.slane %v5587, 4
      %v5590 = vshll.u32 %v5485, 16
      %v5592 = vrot.slane %v5590, 5
      %v5593 = vsel %vm277, %v5588, %v5592
      %v5595 = vshrl.u32 %v5457, 16
      %v5597 = vrot.slane %v5595, 4
      %v5598 = vshll.u32 %v5457, 16
      %v5600 = vrot.slane %v5598, 5
      %v5601 = vor.u32 %v5597, %v5600
      %v5602 = vrot.slane %v5601, 4
      %v5604 = vshll.u32 %v5458, 16
      %v5606 = vrot.slane %v5604, 5
      %v5607 = vsel %vm277, %v5602, %v5606
      %v5608 = vshrl.u32 %v5458, 16
      %v5610 = vrot.slane %v5608, 4
      %v5611 = vor.u32 %v5610, %v5606
      %v5612 = vrot.slane %v5611, 4
      %v5614 = vshll.u32 %v5486, 16
      %v5616 = vrot.slane %v5614, 5
      %v5617 = vsel %vm277, %v5612, %v5616
      %v5619 = vshrl.u32 %v5459, 16
      %v5621 = vrot.slane %v5619, 4
      %v5622 = vshll.u32 %v5459, 16
      %v5624 = vrot.slane %v5622, 5
      %v5625 = vor.u32 %v5621, %v5624
      %v5626 = vrot.slane %v5625, 4
      %v5628 = vshll.u32 %v5460, 16
      %v5630 = vrot.slane %v5628, 5
      %v5631 = vsel %vm277, %v5626, %v5630
      %v5632 = vshrl.u32 %v5460, 16
      %v5634 = vrot.slane %v5632, 4
      %v5635 = vor.u32 %v5634, %v5630
      %v5636 = vrot.slane %v5635, 4
      %v5638 = vshll.u32 %v5487, 16
      %v5640 = vrot.slane %v5638, 5
      %v5641 = vsel %vm277, %v5636, %v5640
      %v5643 = vshrl.u32 %v5461, 16
      %v5645 = vrot.slane %v5643, 4
      %v5646 = vshll.u32 %v5461, 16
      %v5648 = vrot.slane %v5646, 5
      %v5649 = vor.u32 %v5645, %v5648
      %v5650 = vrot.slane %v5649, 4
      %v5652 = vshll.u32 %v5462, 16
      %v5654 = vrot.slane %v5652, 5
      %v5655 = vsel %vm277, %v5650, %v5654
      %v5656 = vshrl.u32 %v5462, 16
      %v5658 = vrot.slane %v5656, 4
      %v5659 = vor.u32 %v5658, %v5654
      %v5660 = vrot.slane %v5659, 4
      %v5662 = vshll.u32 %v5488, 16
      %v5664 = vrot.slane %v5662, 5
      %v5665 = vsel %vm277, %v5660, %v5664
      %v5667 = vshrl.u32 %v5463, 16
      %v5669 = vrot.slane %v5667, 4
      %v5670 = vshll.u32 %v5463, 16
      %v5672 = vrot.slane %v5670, 5
      %v5673 = vor.u32 %v5669, %v5672
      %v5674 = vrot.slane %v5673, 4
      %v5676 = vshll.u32 %v5464, 16
      %v5678 = vrot.slane %v5676, 5
      %v5679 = vsel %vm277, %v5674, %v5678
      %v5680 = vshrl.u32 %v5464, 16
      %v5682 = vrot.slane %v5680, 4
      %v5683 = vor.u32 %v5682, %v5678
      %v5684 = vrot.slane %v5683, 4
      %v5686 = vshll.u32 %v5489, 16
      %v5688 = vrot.slane %v5686, 5
      %v5689 = vsel %vm277, %v5684, %v5688
      %v5691 = vshrl.u32 %v5465, 16
      %v5693 = vrot.slane %v5691, 4
      %v5694 = vshll.u32 %v5465, 16
      %v5696 = vrot.slane %v5694, 5
      %v5697 = vor.u32 %v5693, %v5696
      %v5698 = vrot.slane %v5697, 4
      %v5700 = vshll.u32 %v5466, 16
      %v5702 = vrot.slane %v5700, 5
      %v5703 = vsel %vm277, %v5698, %v5702
      %v5704 = vshrl.u32 %v5466, 16
      %v5706 = vrot.slane %v5704, 4
      %v5707 = vor.u32 %v5706, %v5702
      %v5708 = vrot.slane %v5707, 4
      %v5710 = vshll.u32 %v5490, 16
      %v5712 = vrot.slane %v5710, 5
      %v5713 = vsel %vm277, %v5708, %v5712
      %v5715 = vshrl.u32 %v5467, 16
      %v5717 = vrot.slane %v5715, 4
      %v5718 = vshll.u32 %v5467, 16
      %v5720 = vrot.slane %v5718, 5
      %v5721 = vor.u32 %v5717, %v5720
      %v5722 = vrot.slane %v5721, 4
      %v5724 = vshll.u32 %v5468, 16
      %v5726 = vrot.slane %v5724, 5
      %v5727 = vsel %vm277, %v5722, %v5726
      %v5728 = vshrl.u32 %v5468, 16
      %v5730 = vrot.slane %v5728, 4
      %v5731 = vor.u32 %v5730, %v5726
      %v5732 = vrot.slane %v5731, 4
      %v5734 = vshll.u32 %v5491, 16
      %v5736 = vrot.slane %v5734, 5
      %v5737 = vsel %vm277, %v5732, %v5736
      %v5739 = vshrl.u32 %v5469, 16
      %v5741 = vrot.slane %v5739, 4
      %v5742 = vshll.u32 %v5469, 16
      %v5744 = vrot.slane %v5742, 5
      %v5745 = vor.u32 %v5741, %v5744
      %v5746 = vrot.slane %v5745, 4
      %v5748 = vshll.u32 %v5470, 16
      %v5750 = vrot.slane %v5748, 5
      %v5751 = vsel %vm277, %v5746, %v5750
      %v5752 = vshrl.u32 %v5470, 16
      %v5754 = vrot.slane %v5752, 4
      %v5755 = vor.u32 %v5754, %v5750
      %v5756 = vrot.slane %v5755, 4
      %v5758 = vshll.u32 %v5492, 16
      %v5760 = vrot.slane %v5758, 5
      %v5761 = vsel %vm277, %v5756, %v5760
      %v5763 = vshrl.u32 %v5471, 16
      %v5765 = vrot.slane %v5763, 4
      %v5766 = vshll.u32 %v5471, 16
      %v5768 = vrot.slane %v5766, 5
      %v5769 = vor.u32 %v5765, %v5768
      %v5770 = vrot.slane %v5769, 4
      %v5772 = vshll.u32 %v5472, 16
      %v5774 = vrot.slane %v5772, 5
      %v5775 = vsel %vm277, %v5770, %v5774
      %v5776 = vshrl.u32 %v5472, 16
      %v5778 = vrot.slane %v5776, 4
      %v5779 = vor.u32 %v5778, %v5774
      %v5780 = vrot.slane %v5779, 4
      %v5782 = vshll.u32 %v5493, 16
      %v5784 = vrot.slane %v5782, 5
      %v5785 = vsel %vm277, %v5780, %v5784
      %v5787 = vshrl.u32 %v5473, 16
      %v5789 = vrot.slane %v5787, 4
      %v5790 = vshll.u32 %v5473, 16
      %v5792 = vrot.slane %v5790, 5
      %v5793 = vor.u32 %v5789, %v5792
      %v5794 = vrot.slane %v5793, 4
      %v5796 = vshll.u32 %v5474, 16
      %v5798 = vrot.slane %v5796, 5
      %v5799 = vsel %vm277, %v5794, %v5798
      %v5800 = vshrl.u32 %v5474, 16
      %v5802 = vrot.slane %v5800, 4
      %v5803 = vor.u32 %v5802, %v5798
      %v5804 = vrot.slane %v5803, 4
      %v5806 = vshll.u32 %v5494, 16
      %v5808 = vrot.slane %v5806, 5
      %v5809 = vsel %vm277, %v5804, %v5808
      %v5811 = vshrl.u32 %v5475, 16
      %v5813 = vrot.slane %v5811, 4
      %v5814 = vshll.u32 %v5475, 16
      %v5816 = vrot.slane %v5814, 5
      %v5817 = vor.u32 %v5813, %v5816
      %v5818 = vrot.slane %v5817, 4
      %v5820 = vshll.u32 %v5476, 16
      %v5822 = vrot.slane %v5820, 5
      %v5823 = vsel %vm277, %v5818, %v5822
      %v5824 = vshrl.u32 %v5476, 16
      %v5826 = vrot.slane %v5824, 4
      %v5827 = vor.u32 %v5826, %v5822
      %v5828 = vrot.slane %v5827, 4
      %v5830 = vshll.u32 %v5495, 16
      %v5832 = vrot.slane %v5830, 5
      %v5833 = vsel %vm277, %v5828, %v5832
      %v5835 = vshrl.u32 %v5477, 16
      %v5837 = vrot.slane %v5835, 4
      %v5838 = vshll.u32 %v5477, 16
      %v5840 = vrot.slane %v5838, 5
      %v5841 = vor.u32 %v5837, %v5840
      %v5842 = vrot.slane %v5841, 4
      %v5844 = vshll.u32 %v5478, 16
      %v5846 = vrot.slane %v5844, 5
      %v5847 = vsel %vm277, %v5842, %v5846
      %v5848 = vshrl.u32 %v5478, 16
      %v5850 = vrot.slane %v5848, 4
      %v5851 = vor.u32 %v5850, %v5846
      %v5852 = vrot.slane %v5851, 4
      %v5854 = vshll.u32 %v5496, 16
      %v5856 = vrot.slane %v5854, 5
      %v5857 = vsel %vm277, %v5852, %v5856
      %v5859 = vshrl.u32 %v5479, 16
      %v5861 = vrot.slane %v5859, 4
      %v5862 = vshll.u32 %v5479, 16
      %v5864 = vrot.slane %v5862, 5
      %v5865 = vor.u32 %v5861, %v5864
      %v5866 = vrot.slane %v5865, 4
      %v5868 = vshll.u32 %v5480, 16
      %v5870 = vrot.slane %v5868, 5
      %v5871 = vsel %vm277, %v5866, %v5870
      %v5872 = vshrl.u32 %v5480, 16
      %v5874 = vrot.slane %v5872, 4
      %v5875 = vor.u32 %v5874, %v5870
      %v5876 = vrot.slane %v5875, 4
      %v5878 = vshll.u32 %v5497, 16
      %v5880 = vrot.slane %v5878, 5
      %v5881 = vsel %vm277, %v5876, %v5880
      %s5882 = scalar_lea.vmem %s3, 2
      %v5883 = vld [vmem:[%s5882] sm:$0x3]
      %v5884 = vunpack.c.l.b16 %v5511
      %v5885 = vunpack.c.l.b16 %v5521
      %v5886 = vunpack.c.l.b16 %v5535
      %v5887 = vunpack.c.l.b16 %v5545
      %v5888 = vunpack.c.l.b16 %v5559
      %v5889 = vunpack.c.l.b16 %v5569
      %v5890 = vunpack.c.l.b16 %v5583
      %v5891 = vunpack.c.l.b16 %v5593
      %v5892 = vunpack.c.l.b16 %v5607
      %v5893 = vunpack.c.l.b16 %v5617
      %v5894 = vunpack.c.l.b16 %v5631
      %v5895 = vunpack.c.l.b16 %v5641
      %v5896 = vunpack.c.l.b16 %v5655
      %v5897 = vunpack.c.l.b16 %v5665
      %v5898 = vunpack.c.l.b16 %v5679
      %v5899 = vunpack.c.l.b16 %v5689
      %v5900 = vunpack.c.l.b16 %v5703
      %v5901 = vunpack.c.l.b16 %v5713
      %v5902 = vunpack.c.l.b16 %v5727
      %v5903 = vunpack.c.l.b16 %v5737
      %v5904 = vunpack.c.l.b16 %v5751
      %v5905 = vunpack.c.l.b16 %v5761
      %v5906 = vunpack.c.l.b16 %v5775
      %v5907 = vunpack.c.l.b16 %v5785
      %v5908 = vunpack.c.l.b16 %v5799
      %v5909 = vunpack.c.l.b16 %v5809
      %v5910 = vunpack.c.l.b16 %v5823
      %v5911 = vunpack.c.l.b16 %v5833
      %v5912 = vunpack.c.l.b16 %v5847
      %v5913 = vunpack.c.l.b16 %v5857
      %v5914 = vunpack.c.l.b16 %v5871
      %v5915 = vunpack.c.l.b16 %v5881
      %v5916 = vpack.c.b16 %v5885, %v5884
      %v5917 = vpack.c.b16 %v5887, %v5886
      %v5918 = vpack.c.b16 %v5889, %v5888
      %v5919 = vpack.c.b16 %v5891, %v5890
      %v5920 = vpack.c.b16 %v5893, %v5892
      %v5921 = vpack.c.b16 %v5895, %v5894
      %v5922 = vpack.c.b16 %v5897, %v5896
      %v5923 = vpack.c.b16 %v5899, %v5898
      %v5924 = vpack.c.b16 %v5901, %v5900
      %v5925 = vpack.c.b16 %v5903, %v5902
      %v5926 = vpack.c.b16 %v5905, %v5904
      %v5927 = vpack.c.b16 %v5907, %v5906
      %v5928 = vpack.c.b16 %v5909, %v5908
      %v5929 = vpack.c.b16 %v5911, %v5910
      %v5930 = vpack.c.b16 %v5913, %v5912
      %v5931 = vpack.c.b16 %v5915, %v5914
      %v5933 = vsel %vm712, %v5916, 0
      %v5936 = vsel %vm712, %v5917, 0
      %v5939 = vsel %vm712, %v5918, 0
      %v5942 = vsel %vm712, %v5919, 0
      %v5945 = vsel %vm712, %v5920, 0
      %v5948 = vsel %vm712, %v5921, 0
      %v5951 = vsel %vm712, %v5922, 0
      %v5954 = vsel %vm712, %v5923, 0
      %v5957 = vsel %vm712, %v5924, 0
      %v5960 = vsel %vm712, %v5925, 0
      %v5963 = vsel %vm712, %v5926, 0
      %v5966 = vsel %vm712, %v5927, 0
      %v5969 = vsel %vm712, %v5928, 0
      %v5972 = vsel %vm712, %v5929, 0
      %v5975 = vsel %vm712, %v5930, 0
      %v5978 = vsel %vm712, %v5931, 0
      %v5981 = vsel %vm761, %v5883, 0
      %5983 = vmatprep.subr.bf16.mxu0 0
      %5984 = vmatpush1.bf16.msra.mxu0 %v5981
      %5985 = vmatprep.subr.bf16.mxu0 0
      %5986 = vmatpush1.bf16.msra.mxu0 0
      %5987 = vmatprep.subr.bf16.mxu0 0
      %5988 = vmatpush1.bf16.msra.mxu0 0
      %5989 = vmatprep.subr.bf16.mxu0 0
      %5990 = vmatpush1.bf16.msra.mxu0 0
      %5991 = vmatprep.subr.bf16.mxu0 0
      %5992 = vmatpush1.bf16.msra.mxu0 0
      %5993 = vmatprep.subr.bf16.mxu0 0
      %5994 = vmatpush1.bf16.msra.mxu0 0
      %5995 = vmatprep.subr.bf16.mxu0 0
      %5996 = vmatpush1.bf16.msra.mxu0 0
      %5997 = vmatprep.subr.bf16.mxu0 0
      %5998 = vmatpush1.bf16.msra.mxu0 0
      %5999 = vmatprep.subr.bf16.mxu0 0
      %6000 = vmatpush1.bf16.msra.mxu0 0
      %6001 = vmatprep.subr.bf16.mxu0 0
      %6002 = vmatpush1.bf16.msra.mxu0 0
      %6003 = vmatprep.subr.bf16.mxu0 0
      %6004 = vmatpush1.bf16.msra.mxu0 0
      %6005 = vmatprep.subr.bf16.mxu0 0
      %6006 = vmatpush1.bf16.msra.mxu0 0
      %6007 = vmatprep.subr.bf16.mxu0 0
      %6008 = vmatpush1.bf16.msra.mxu0 0
      %6009 = vmatprep.subr.bf16.mxu0 0
      %6010 = vmatpush1.bf16.msra.mxu0 0
      %6011 = vmatprep.subr.bf16.mxu0 0
      %6012 = vmatpush1.bf16.msra.mxu0 0
      %6013 = vmatprep.subr.bf16.mxu0 0
      %6014 = vmatpush1.bf16.msra.mxu0 0
      %6015 = vmatprep.mubr.bf16.mxu0 0
      %6016 = vmatmul.mubr.bf16.gmra.mrb[0].mxu0 %v5933
      %v6017 = vpop.f32.mrb[0].mxu0
      %v6018 = vadd.f32 0.0, %v6017
      %v6019 = vpop.f32.mrb[0].mxu0
      %v6020 = vpop.f32.mrb[0].mxu0
      %v6021 = vadd.f32 0.0, %v6020
      %v6022 = vpop.f32.mrb[0].mxu0
      %6023 = vmatprep.mubr.bf16.mxu0 0
      %6024 = vmatmul.mubr.bf16.gmra.mrb[0].mxu0 %v5936
      %v6025 = vpop.f32.mrb[0].mxu0
      %v6026 = vadd.f32 0.0, %v6025
      %v6027 = vpop.f32.mrb[0].mxu0
      %v6028 = vpop.f32.mrb[0].mxu0
      %v6029 = vadd.f32 0.0, %v6028
      %v6030 = vpop.f32.mrb[0].mxu0
      %6031 = vmatprep.mubr.bf16.mxu0 0
      %6032 = vmatmul.mubr.bf16.gmra.mrb[0].mxu0 %v5939
      %v6033 = vpop.f32.mrb[0].mxu0
      %v6034 = vadd.f32 0.0, %v6033
      %v6035 = vpop.f32.mrb[0].mxu0
      %v6036 = vpop.f32.mrb[0].mxu0
      %v6037 = vadd.f32 0.0, %v6036
      %v6038 = vpop.f32.mrb[0].mxu0
      %6039 = vmatprep.mubr.bf16.mxu0 0
      %6040 = vmatmul.mubr.bf16.gmra.mrb[0].mxu0 %v5942
      %v6041 = vpop.f32.mrb[0].mxu0
      %v6042 = vadd.f32 0.0, %v6041
      %v6043 = vpop.f32.mrb[0].mxu0
      %v6044 = vpop.f32.mrb[0].mxu0
      %v6045 = vadd.f32 0.0, %v6044
      %v6046 = vpop.f32.mrb[0].mxu0
      %6047 = vmatprep.mubr.bf16.mxu0 0
      %6048 = vmatmul.mubr.bf16.gmra.mrb[0].mxu0 %v5945
      %v6049 = vpop.f32.mrb[0].mxu0
      %v6050 = vadd.f32 0.0, %v6049
      %v6051 = vpop.f32.mrb[0].mxu0
      %v6052 = vpop.f32.mrb[0].mxu0
      %v6053 = vadd.f32 0.0, %v6052
      %v6054 = vpop.f32.mrb[0].mxu0
      %6055 = vmatprep.mubr.bf16.mxu0 0
      %6056 = vmatmul.mubr.bf16.gmra.mrb[0].mxu0 %v5948
      %v6057 = vpop.f32.mrb[0].mxu0
      %v6058 = vadd.f32 0.0, %v6057
      %v6059 = vpop.f32.mrb[0].mxu0
      %v6060 = vpop.f32.mrb[0].mxu0
      %v6061 = vadd.f32 0.0, %v6060
      %v6062 = vpop.f32.mrb[0].mxu0
      %6063 = vmatprep.mubr.bf16.mxu0 0
      %6064 = vmatmul.mubr.bf16.gmra.mrb[0].mxu0 %v5951
      %v6065 = vpop.f32.mrb[0].mxu0
      %v6066 = vadd.f32 0.0, %v6065
      %v6067 = vpop.f32.mrb[0].mxu0
      %v6068 = vpop.f32.mrb[0].mxu0
      %v6069 = vadd.f32 0.0, %v6068
      %v6070 = vpop.f32.mrb[0].mxu0
      %6071 = vmatprep.mubr.bf16.mxu0 0
      %6072 = vmatmul.mubr.bf16.gmra.mrb[0].mxu0 %v5954
      %v6073 = vpop.f32.mrb[0].mxu0
      %v6074 = vadd.f32 0.0, %v6073
      %v6075 = vpop.f32.mrb[0].mxu0
      %v6076 = vpop.f32.mrb[0].mxu0
      %v6077 = vadd.f32 0.0, %v6076
      %v6078 = vpop.f32.mrb[0].mxu0
      %6079 = vmatprep.mubr.bf16.mxu0 0
      %6080 = vmatmul.mubr.bf16.gmra.mrb[0].mxu0 %v5957
      %v6081 = vpop.f32.mrb[0].mxu0
      %v6082 = vadd.f32 0.0, %v6081
      %v6083 = vpop.f32.mrb[0].mxu0
      %v6084 = vpop.f32.mrb[0].mxu0
      %v6085 = vadd.f32 0.0, %v6084
      %v6086 = vpop.f32.mrb[0].mxu0
      %6087 = vmatprep.mubr.bf16.mxu0 0
      %6088 = vmatmul.mubr.bf16.gmra.mrb[0].mxu0 %v5960
      %v6089 = vpop.f32.mrb[0].mxu0
      %v6090 = vadd.f32 0.0, %v6089
      %v6091 = vpop.f32.mrb[0].mxu0
      %v6092 = vpop.f32.mrb[0].mxu0
      %v6093 = vadd.f32 0.0, %v6092
      %v6094 = vpop.f32.mrb[0].mxu0
      %6095 = vmatprep.mubr.bf16.mxu0 0
      %6096 = vmatmul.mubr.bf16.gmra.mrb[0].mxu0 %v5963
      %v6097 = vpop.f32.mrb[0].mxu0
      %v6098 = vadd.f32 0.0, %v6097
      %v6099 = vpop.f32.mrb[0].mxu0
      %v6100 = vpop.f32.mrb[0].mxu0
      %v6101 = vadd.f32 0.0, %v6100
      %v6102 = vpop.f32.mrb[0].mxu0
      %6103 = vmatprep.mubr.bf16.mxu0 0
      %6104 = vmatmul.mubr.bf16.gmra.mrb[0].mxu0 %v5966
      %v6105 = vpop.f32.mrb[0].mxu0
      %v6106 = vadd.f32 0.0, %v6105
      %v6107 = vpop.f32.mrb[0].mxu0
      %v6108 = vpop.f32.mrb[0].mxu0
      %v6109 = vadd.f32 0.0, %v6108
      %v6110 = vpop.f32.mrb[0].mxu0
      %6111 = vmatprep.mubr.bf16.mxu0 0
      %6112 = vmatmul.mubr.bf16.gmra.mrb[0].mxu0 %v5969
      %v6113 = vpop.f32.mrb[0].mxu0
      %v6114 = vadd.f32 0.0, %v6113
      %v6115 = vpop.f32.mrb[0].mxu0
      %v6116 = vpop.f32.mrb[0].mxu0
      %v6117 = vadd.f32 0.0, %v6116
      %v6118 = vpop.f32.mrb[0].mxu0
      %6119 = vmatprep.mubr.bf16.mxu0 0
      %6120 = vmatmul.mubr.bf16.gmra.mrb[0].mxu0 %v5972
      %v6121 = vpop.f32.mrb[0].mxu0
      %v6122 = vadd.f32 0.0, %v6121
      %v6123 = vpop.f32.mrb[0].mxu0
      %v6124 = vpop.f32.mrb[0].mxu0
      %v6125 = vadd.f32 0.0, %v6124
      %v6126 = vpop.f32.mrb[0].mxu0
      %6127 = vmatprep.mubr.bf16.mxu0 0
      %6128 = vmatmul.mubr.bf16.gmra.mrb[0].mxu0 %v5975
      %v6129 = vpop.f32.mrb[0].mxu0
      %v6130 = vadd.f32 0.0, %v6129
      %v6131 = vpop.f32.mrb[0].mxu0
      %v6132 = vpop.f32.mrb[0].mxu0
      %v6133 = vadd.f32 0.0, %v6132
      %v6134 = vpop.f32.mrb[0].mxu0
      %6135 = vmatprep.mubr.bf16.mxu0 0
      %6136 = vmatmul.mubr.bf16.gmra.mrb[0].mxu0 %v5978
      %v6137 = vpop.f32.mrb[0].mxu0
      %v6138 = vadd.f32 0.0, %v6137
      %v6139 = vpop.f32.mrb[0].mxu0
      %v6140 = vpop.f32.mrb[0].mxu0
      %v6141 = vadd.f32 0.0, %v6140
      %v6142 = vpop.f32.mrb[0].mxu0
      %6143 = vdwg.mxu0
      %v6176 = vunpack.c.l.b16 %v5449
      %v6177 = vunpack.c.l.b16 %v5450
      %v6178 = vunpack.c.l.b16 %v5451
      %v6179 = vunpack.c.l.b16 %v5452
      %v6180 = vunpack.c.l.b16 %v5453
      %v6181 = vunpack.c.l.b16 %v5454
      %v6182 = vunpack.c.l.b16 %v5455
      %v6183 = vunpack.c.l.b16 %v5456
      %v6184 = vunpack.c.l.b16 %v5457
      %v6185 = vunpack.c.l.b16 %v5458
      %v6186 = vunpack.c.l.b16 %v5459
      %v6187 = vunpack.c.l.b16 %v5460
      %v6188 = vunpack.c.l.b16 %v5461
      %v6189 = vunpack.c.l.b16 %v5462
      %v6190 = vunpack.c.l.b16 %v5463
      %v6191 = vunpack.c.l.b16 %v5464
      %v6192 = vunpack.c.l.b16 %v5465
      %v6193 = vunpack.c.l.b16 %v5466
      %v6194 = vunpack.c.l.b16 %v5467
      %v6195 = vunpack.c.l.b16 %v5468
      %v6196 = vunpack.c.l.b16 %v5469
      %v6197 = vunpack.c.l.b16 %v5470
      %v6198 = vunpack.c.l.b16 %v5471
      %v6199 = vunpack.c.l.b16 %v5472
      %v6200 = vunpack.c.l.b16 %v5473
      %v6201 = vunpack.c.l.b16 %v5474
      %v6202 = vunpack.c.l.b16 %v5475
      %v6203 = vunpack.c.l.b16 %v5476
      %v6204 = vunpack.c.l.b16 %v5477
      %v6205 = vunpack.c.l.b16 %v5478
      %v6206 = vunpack.c.l.b16 %v5479
      %v6207 = vunpack.c.l.b16 %v5480
      %v6208 = vpack.c.b16 %v6177, %v6176
      %v6209 = vpack.c.b16 %v6179, %v6178
      %v6210 = vpack.c.b16 %v6181, %v6180
      %v6211 = vpack.c.b16 %v6183, %v6182
      %v6212 = vpack.c.b16 %v6185, %v6184
      %v6213 = vpack.c.b16 %v6187, %v6186
      %v6214 = vpack.c.b16 %v6189, %v6188
      %v6215 = vpack.c.b16 %v6191, %v6190
      %v6216 = vpack.c.b16 %v6193, %v6192
      %v6217 = vpack.c.b16 %v6195, %v6194
      %v6218 = vpack.c.b16 %v6197, %v6196
      %v6219 = vpack.c.b16 %v6199, %v6198
      %v6220 = vpack.c.b16 %v6201, %v6200
      %v6221 = vpack.c.b16 %v6203, %v6202
      %v6222 = vpack.c.b16 %v6205, %v6204
      %v6223 = vpack.c.b16 %v6207, %v6206
      %v6225 = vsel %vm712, %v6208, 0
      %v6228 = vsel %vm712, %v6209, 0
      %v6231 = vsel %vm712, %v6210, 0
      %v6234 = vsel %vm712, %v6211, 0
      %v6237 = vsel %vm712, %v6212, 0
      %v6240 = vsel %vm712, %v6213, 0
      %v6243 = vsel %vm712, %v6214, 0
      %v6246 = vsel %vm712, %v6215, 0
      %v6249 = vsel %vm712, %v6216, 0
      %v6252 = vsel %vm712, %v6217, 0
      %v6255 = vsel %vm712, %v6218, 0
      %v6258 = vsel %vm712, %v6219, 0
      %v6261 = vsel %vm712, %v6220, 0
      %v6264 = vsel %vm712, %v6221, 0
      %v6267 = vsel %vm712, %v6222, 0
      %v6270 = vsel %vm712, %v6223, 0
      %v6273 = vsel %vm761, %v5481, 0
      %6275 = vmatprep.subr.bf16.mxu0 0
      %6276 = vmatpush1.bf16.msra.mxu0 %v6273
      %6277 = vmatprep.subr.bf16.mxu0 0
      %6278 = vmatpush1.bf16.msra.mxu0 0
      %6279 = vmatprep.subr.bf16.mxu0 0
      %6280 = vmatpush1.bf16.msra.mxu0 0
      %6281 = vmatprep.subr.bf16.mxu0 0
      %6282 = vmatpush1.bf16.msra.mxu0 0
      %6283 = vmatprep.subr.bf16.mxu0 0
      %6284 = vmatpush1.bf16.msra.mxu0 0
      %6285 = vmatprep.subr.bf16.mxu0 0
      %6286 = vmatpush1.bf16.msra.mxu0 0
      %6287 = vmatprep.subr.bf16.mxu0 0
      %6288 = vmatpush1.bf16.msra.mxu0 0
      %6289 = vmatprep.subr.bf16.mxu0 0
      %6290 = vmatpush1.bf16.msra.mxu0 0
      %6291 = vmatprep.subr.bf16.mxu0 0
      %6292 = vmatpush1.bf16.msra.mxu0 0
      %6293 = vmatprep.subr.bf16.mxu0 0
      %6294 = vmatpush1.bf16.msra.mxu0 0
      %6295 = vmatprep.subr.bf16.mxu0 0
      %6296 = vmatpush1.bf16.msra.mxu0 0
      %6297 = vmatprep.subr.bf16.mxu0 0
      %6298 = vmatpush1.bf16.msra.mxu0 0
      %6299 = vmatprep.subr.bf16.mxu0 0
      %6300 = vmatpush1.bf16.msra.mxu0 0
      %6301 = vmatprep.subr.bf16.mxu0 0
      %6302 = vmatpush1.bf16.msra.mxu0 0
      %6303 = vmatprep.subr.bf16.mxu0 0
      %6304 = vmatpush1.bf16.msra.mxu0 0
      %6305 = vmatprep.subr.bf16.mxu0 0
      %6306 = vmatpush1.bf16.msra.mxu0 0
      %6307 = vmatprep.mubr.bf16.mxu0 0
      %6308 = vmatmul.mubr.bf16.gmra.mrb[0].mxu0 %v6225
      %v6309 = vpop.f32.mrb[0].mxu0
      %v6310 = vadd.f32 %v6018, %v6309
      %v6311 = vpop.f32.mrb[0].mxu0
      %v6312 = vpop.f32.mrb[0].mxu0
      %v6313 = vadd.f32 %v6021, %v6312
      %v6314 = vpop.f32.mrb[0].mxu0
      %6315 = vmatprep.mubr.bf16.mxu0 0
      %6316 = vmatmul.mubr.bf16.gmra.mrb[0].mxu0 %v6228
      %v6317 = vpop.f32.mrb[0].mxu0
      %v6318 = vadd.f32 %v6026, %v6317
      %v6319 = vpop.f32.mrb[0].mxu0
      %v6320 = vpop.f32.mrb[0].mxu0
      %v6321 = vadd.f32 %v6029, %v6320
      %v6322 = vpop.f32.mrb[0].mxu0
      %6323 = vmatprep.mubr.bf16.mxu0 0
      %6324 = vmatmul.mubr.bf16.gmra.mrb[0].mxu0 %v6231
      %v6325 = vpop.f32.mrb[0].mxu0
      %v6326 = vadd.f32 %v6034, %v6325
      %v6327 = vpop.f32.mrb[0].mxu0
      %v6328 = vpop.f32.mrb[0].mxu0
      %v6329 = vadd.f32 %v6037, %v6328
      %v6330 = vpop.f32.mrb[0].mxu0
      %6331 = vmatprep.mubr.bf16.mxu0 0
      %6332 = vmatmul.mubr.bf16.gmra.mrb[0].mxu0 %v6234
      %v6333 = vpop.f32.mrb[0].mxu0
      %v6334 = vadd.f32 %v6042, %v6333
      %v6335 = vpop.f32.mrb[0].mxu0
      %v6336 = vpop.f32.mrb[0].mxu0
      %v6337 = vadd.f32 %v6045, %v6336
      %v6338 = vpop.f32.mrb[0].mxu0
      %6339 = vmatprep.mubr.bf16.mxu0 0
      %6340 = vmatmul.mubr.bf16.gmra.mrb[0].mxu0 %v6237
      %v6341 = vpop.f32.mrb[0].mxu0
      %v6342 = vadd.f32 %v6050, %v6341
      %v6343 = vpop.f32.mrb[0].mxu0
      %v6344 = vpop.f32.mrb[0].mxu0
      %v6345 = vadd.f32 %v6053, %v6344
      %v6346 = vpop.f32.mrb[0].mxu0
      %6347 = vmatprep.mubr.bf16.mxu0 0
      %6348 = vmatmul.mubr.bf16.gmra.mrb[0].mxu0 %v6240
      %v6349 = vpop.f32.mrb[0].mxu0
      %v6350 = vadd.f32 %v6058, %v6349
      %v6351 = vpop.f32.mrb[0].mxu0
      %v6352 = vpop.f32.mrb[0].mxu0
      %v6353 = vadd.f32 %v6061, %v6352
      %v6354 = vpop.f32.mrb[0].mxu0
      %6355 = vmatprep.mubr.bf16.mxu0 0
      %6356 = vmatmul.mubr.bf16.gmra.mrb[0].mxu0 %v6243
      %v6357 = vpop.f32.mrb[0].mxu0
      %v6358 = vadd.f32 %v6066, %v6357
      %v6359 = vpop.f32.mrb[0].mxu0
      %v6360 = vpop.f32.mrb[0].mxu0
      %v6361 = vadd.f32 %v6069, %v6360
      %v6362 = vpop.f32.mrb[0].mxu0
      %6363 = vmatprep.mubr.bf16.mxu0 0
      %6364 = vmatmul.mubr.bf16.gmra.mrb[0].mxu0 %v6246
      %v6365 = vpop.f32.mrb[0].mxu0
      %v6366 = vadd.f32 %v6074, %v6365
      %v6367 = vpop.f32.mrb[0].mxu0
      %v6368 = vpop.f32.mrb[0].mxu0
      %v6369 = vadd.f32 %v6077, %v6368
      %v6370 = vpop.f32.mrb[0].mxu0
      %6371 = vmatprep.mubr.bf16.mxu0 0
      %6372 = vmatmul.mubr.bf16.gmra.mrb[0].mxu0 %v6249
      %v6373 = vpop.f32.mrb[0].mxu0
      %v6374 = vadd.f32 %v6082, %v6373
      %v6375 = vpop.f32.mrb[0].mxu0
      %v6376 = vpop.f32.mrb[0].mxu0
      %v6377 = vadd.f32 %v6085, %v6376
      %v6378 = vpop.f32.mrb[0].mxu0
      %6379 = vmatprep.mubr.bf16.mxu0 0
      %6380 = vmatmul.mubr.bf16.gmra.mrb[0].mxu0 %v6252
      %v6381 = vpop.f32.mrb[0].mxu0
      %v6382 = vadd.f32 %v6090, %v6381
      %v6383 = vpop.f32.mrb[0].mxu0
      %v6384 = vpop.f32.mrb[0].mxu0
      %v6385 = vadd.f32 %v6093, %v6384
      %v6386 = vpop.f32.mrb[0].mxu0
      %6387 = vmatprep.mubr.bf16.mxu0 0
      %6388 = vmatmul.mubr.bf16.gmra.mrb[0].mxu0 %v6255
      %v6389 = vpop.f32.mrb[0].mxu0
      %v6390 = vadd.f32 %v6098, %v6389
      %v6391 = vpop.f32.mrb[0].mxu0
      %v6392 = vpop.f32.mrb[0].mxu0
      %v6393 = vadd.f32 %v6101, %v6392
      %v6394 = vpop.f32.mrb[0].mxu0
      %6395 = vmatprep.mubr.bf16.mxu0 0
      %6396 = vmatmul.mubr.bf16.gmra.mrb[0].mxu0 %v6258
      %v6397 = vpop.f32.mrb[0].mxu0
      %v6398 = vadd.f32 %v6106, %v6397
      %v6399 = vpop.f32.mrb[0].mxu0
      %v6400 = vpop.f32.mrb[0].mxu0
      %v6401 = vadd.f32 %v6109, %v6400
      %v6402 = vpop.f32.mrb[0].mxu0
      %6403 = vmatprep.mubr.bf16.mxu0 0
      %6404 = vmatmul.mubr.bf16.gmra.mrb[0].mxu0 %v6261
      %v6405 = vpop.f32.mrb[0].mxu0
      %v6406 = vadd.f32 %v6114, %v6405
      %v6407 = vpop.f32.mrb[0].mxu0
      %v6408 = vpop.f32.mrb[0].mxu0
      %v6409 = vadd.f32 %v6117, %v6408
      %v6410 = vpop.f32.mrb[0].mxu0
      %6411 = vmatprep.mubr.bf16.mxu0 0
      %6412 = vmatmul.mubr.bf16.gmra.mrb[0].mxu0 %v6264
      %v6413 = vpop.f32.mrb[0].mxu0
      %v6414 = vadd.f32 %v6122, %v6413
      %v6415 = vpop.f32.mrb[0].mxu0
      %v6416 = vpop.f32.mrb[0].mxu0
      %v6417 = vadd.f32 %v6125, %v6416
      %v6418 = vpop.f32.mrb[0].mxu0
      %6419 = vmatprep.mubr.bf16.mxu0 0
      %6420 = vmatmul.mubr.bf16.gmra.mrb[0].mxu0 %v6267
      %v6421 = vpop.f32.mrb[0].mxu0
      %v6422 = vadd.f32 %v6130, %v6421
      %v6423 = vpop.f32.mrb[0].mxu0
      %v6424 = vpop.f32.mrb[0].mxu0
      %v6425 = vadd.f32 %v6133, %v6424
      %v6426 = vpop.f32.mrb[0].mxu0
      %6427 = vmatprep.mubr.bf16.mxu0 0
      %6428 = vmatmul.mubr.bf16.gmra.mrb[0].mxu0 %v6270
      %v6429 = vpop.f32.mrb[0].mxu0
      %v6430 = vadd.f32 %v6138, %v6429
      %v6431 = vpop.f32.mrb[0].mxu0
      %v6432 = vpop.f32.mrb[0].mxu0
      %v6433 = vadd.f32 %v6141, %v6432
      %v6434 = vpop.f32.mrb[0].mxu0
      %6435 = vdwg.mxu0
      %v6436 = vld [vmem:[#allocation2] sm:$0xe]
      %v6437 = vld [vmem:[#allocation2 + $0xc] sm:$0xe]
      %v6438 = vld [vmem:[#allocation2 + $0x18] sm:$0xe]
      %v6439 = vld [vmem:[#allocation2 + $0x24] sm:$0xe]
      %v6440 = vld [vmem:[#allocation2 + $0x30] sm:$0xe]
      %v6441 = vld [vmem:[#allocation2 + $0x3c] sm:$0xe]
      %v6442 = vld [vmem:[#allocation2 + $0x48] sm:$0xe]
      %v6443 = vld [vmem:[#allocation2 + $0x54] sm:$0xe]
      %v6444 = vld [vmem:[#allocation2 + $0x60] sm:$0xe]
      %v6445 = vld [vmem:[#allocation2 + $0x6c] sm:$0xe]
      %v6446 = vld [vmem:[#allocation2 + $0x78] sm:$0xe]
      %v6447 = vld [vmem:[#allocation2 + $0x84] sm:$0xe]
      %v6448 = vld [vmem:[#allocation2 + $0x90] sm:$0xe]
      %v6449 = vld [vmem:[#allocation2 + $0x9c] sm:$0xe]
      %v6450 = vld [vmem:[#allocation2 + $0xa8] sm:$0xe]
      %v6451 = vld [vmem:[#allocation2 + $0xb4] sm:$0xe]
      %v6484 = vrot.slane %v6436, 5
      %v6485 = vrot.slane %v6484, 4
      %v6486 = vrot.slane %v5450, 5
      %v6487 = vsel %vm1268, %v6485, %v6486
      %v6488 = vrot.slane %v6486, 4
      %v6489 = vrot.slane %v5482, 5
      %v6490 = vsel %vm1268, %v6488, %v6489
      %v6491 = vrot.slane %v6437, 5
      %v6492 = vrot.slane %v6491, 4
      %v6493 = vrot.slane %v5452, 5
      %v6494 = vsel %vm1268, %v6492, %v6493
      %v6495 = vrot.slane %v6493, 4
      %v6496 = vrot.slane %v5483, 5
      %v6497 = vsel %vm1268, %v6495, %v6496
      %v6498 = vrot.slane %v6438, 5
      %v6499 = vrot.slane %v6498, 4
      %v6500 = vrot.slane %v5454, 5
      %v6501 = vsel %vm1268, %v6499, %v6500
      %v6502 = vrot.slane %v6500, 4
      %v6503 = vrot.slane %v5484, 5
      %v6504 = vsel %vm1268, %v6502, %v6503
      %v6505 = vrot.slane %v6439, 5
      %v6506 = vrot.slane %v6505, 4
      %v6507 = vrot.slane %v5456, 5
      %v6508 = vsel %vm1268, %v6506, %v6507
      %v6509 = vrot.slane %v6507, 4
      %v6510 = vrot.slane %v5485, 5
      %v6511 = vsel %vm1268, %v6509, %v6510
      %v6512 = vrot.slane %v6440, 5
      %v6513 = vrot.slane %v6512, 4
      %v6514 = vrot.slane %v5458, 5
      %v6515 = vsel %vm1268, %v6513, %v6514
      %v6516 = vrot.slane %v6514, 4
      %v6517 = vrot.slane %v5486, 5
      %v6518 = vsel %vm1268, %v6516, %v6517
      %v6519 = vrot.slane %v6441, 5
      %v6520 = vrot.slane %v6519, 4
      %v6521 = vrot.slane %v5460, 5
      %v6522 = vsel %vm1268, %v6520, %v6521
      %v6523 = vrot.slane %v6521, 4
      %v6524 = vrot.slane %v5487, 5
      %v6525 = vsel %vm1268, %v6523, %v6524
      %v6526 = vrot.slane %v6442, 5
      %v6527 = vrot.slane %v6526, 4
      %v6528 = vrot.slane %v5462, 5
      %v6529 = vsel %vm1268, %v6527, %v6528
      %v6530 = vrot.slane %v6528, 4
      %v6531 = vrot.slane %v5488, 5
      %v6532 = vsel %vm1268, %v6530, %v6531
      %v6533 = vrot.slane %v6443, 5
      %v6534 = vrot.slane %v6533, 4
      %v6535 = vrot.slane %v5464, 5
      %v6536 = vsel %vm1268, %v6534, %v6535
      %v6537 = vrot.slane %v6535, 4
      %v6538 = vrot.slane %v5489, 5
      %v6539 = vsel %vm1268, %v6537, %v6538
      %v6540 = vrot.slane %v6444, 5
      %v6541 = vrot.slane %v6540, 4
      %v6542 = vrot.slane %v5466, 5
      %v6543 = vsel %vm1268, %v6541, %v6542
      %v6544 = vrot.slane %v6542, 4
      %v6545 = vrot.slane %v5490, 5
      %v6546 = vsel %vm1268, %v6544, %v6545
      %v6547 = vrot.slane %v6445, 5
      %v6548 = vrot.slane %v6547, 4
      %v6549 = vrot.slane %v5468, 5
      %v6550 = vsel %vm1268, %v6548, %v6549
      %v6551 = vrot.slane %v6549, 4
      %v6552 = vrot.slane %v5491, 5
      %v6553 = vsel %vm1268, %v6551, %v6552
      %v6554 = vrot.slane %v6446, 5
      %v6555 = vrot.slane %v6554, 4
      %v6556 = vrot.slane %v5470, 5
      %v6557 = vsel %vm1268, %v6555, %v6556
      %v6558 = vrot.slane %v6556, 4
      %v6559 = vrot.slane %v5492, 5
      %v6560 = vsel %vm1268, %v6558, %v6559
      %v6561 = vrot.slane %v6447, 5
      %v6562 = vrot.slane %v6561, 4
      %v6563 = vrot.slane %v5472, 5
      %v6564 = vsel %vm1268, %v6562, %v6563
      %v6565 = vrot.slane %v6563, 4
      %v6566 = vrot.slane %v5493, 5
      %v6567 = vsel %vm1268, %v6565, %v6566
      %v6568 = vrot.slane %v6448, 5
      %v6569 = vrot.slane %v6568, 4
      %v6570 = vrot.slane %v5474, 5
      %v6571 = vsel %vm1268, %v6569, %v6570
      %v6572 = vrot.slane %v6570, 4
      %v6573 = vrot.slane %v5494, 5
      %v6574 = vsel %vm1268, %v6572, %v6573
      %v6575 = vrot.slane %v6449, 5
      %v6576 = vrot.slane %v6575, 4
      %v6577 = vrot.slane %v5476, 5
      %v6578 = vsel %vm1268, %v6576, %v6577
      %v6579 = vrot.slane %v6577, 4
      %v6580 = vrot.slane %v5495, 5
      %v6581 = vsel %vm1268, %v6579, %v6580
      %v6582 = vrot.slane %v6450, 5
      %v6583 = vrot.slane %v6582, 4
      %v6584 = vrot.slane %v5478, 5
      %v6585 = vsel %vm1268, %v6583, %v6584
      %v6586 = vrot.slane %v6584, 4
      %v6587 = vrot.slane %v5496, 5
      %v6588 = vsel %vm1268, %v6586, %v6587
      %v6589 = vrot.slane %v6451, 5
      %v6590 = vrot.slane %v6589, 4
      %v6591 = vrot.slane %v5480, 5
      %v6592 = vsel %vm1268, %v6590, %v6591
      %v6593 = vrot.slane %v6591, 4
      %v6594 = vrot.slane %v5497, 5
      %v6595 = vsel %vm1268, %v6593, %v6594
      %s6596 = scalar_lea.vmem %s3, 4
      %v6597 = vld [vmem:[%s6596] sm:$0x3]
      %v6598 = vunpack.c.l.b16 %v6487
      %v6599 = vunpack.c.l.b16 %v6490
      %v6600 = vunpack.c.l.b16 %v6494
      %v6601 = vunpack.c.l.b16 %v6497
      %v6602 = vunpack.c.l.b16 %v6501
      %v6603 = vunpack.c.l.b16 %v6504
      %v6604 = vunpack.c.l.b16 %v6508
      %v6605 = vunpack.c.l.b16 %v6511
      %v6606 = vunpack.c.l.b16 %v6515
      %v6607 = vunpack.c.l.b16 %v6518
      %v6608 = vunpack.c.l.b16 %v6522
      %v6609 = vunpack.c.l.b16 %v6525
      %v6610 = vunpack.c.l.b16 %v6529
      %v6611 = vunpack.c.l.b16 %v6532
      %v6612 = vunpack.c.l.b16 %v6536
      %v6613 = vunpack.c.l.b16 %v6539
      %v6614 = vunpack.c.l.b16 %v6543
      %v6615 = vunpack.c.l.b16 %v6546
      %v6616 = vunpack.c.l.b16 %v6550
      %v6617 = vunpack.c.l.b16 %v6553
      %v6618 = vunpack.c.l.b16 %v6557
      %v6619 = vunpack.c.l.b16 %v6560
      %v6620 = vunpack.c.l.b16 %v6564
      %v6621 = vunpack.c.l.b16 %v6567
      %v6622 = vunpack.c.l.b16 %v6571
      %v6623 = vunpack.c.l.b16 %v6574
      %v6624 = vunpack.c.l.b16 %v6578
      %v6625 = vunpack.c.l.b16 %v6581
      %v6626 = vunpack.c.l.b16 %v6585
      %v6627 = vunpack.c.l.b16 %v6588
      %v6628 = vunpack.c.l.b16 %v6592
      %v6629 = vunpack.c.l.b16 %v6595
      %v6630 = vpack.c.b16 %v6599, %v6598
      %v6631 = vpack.c.b16 %v6601, %v6600
      %v6632 = vpack.c.b16 %v6603, %v6602
      %v6633 = vpack.c.b16 %v6605, %v6604
      %v6634 = vpack.c.b16 %v6607, %v6606
      %v6635 = vpack.c.b16 %v6609, %v6608
      %v6636 = vpack.c.b16 %v6611, %v6610
      %v6637 = vpack.c.b16 %v6613, %v6612
      %v6638 = vpack.c.b16 %v6615, %v6614
      %v6639 = vpack.c.b16 %v6617, %v6616
      %v6640 = vpack.c.b16 %v6619, %v6618
      %v6641 = vpack.c.b16 %v6621, %v6620
      %v6642 = vpack.c.b16 %v6623, %v6622
      %v6643 = vpack.c.b16 %v6625, %v6624
      %v6644 = vpack.c.b16 %v6627, %v6626
      %v6645 = vpack.c.b16 %v6629, %v6628
      %v6647 = vsel %vm712, %v6630, 0
      %v6650 = vsel %vm712, %v6631, 0
      %v6653 = vsel %vm712, %v6632, 0
      %v6656 = vsel %vm712, %v6633, 0
      %v6659 = vsel %vm712, %v6634, 0
      %v6662 = vsel %vm712, %v6635, 0
      %v6665 = vsel %vm712, %v6636, 0
      %v6668 = vsel %vm712, %v6637, 0
      %v6671 = vsel %vm712, %v6638, 0
      %v6674 = vsel %vm712, %v6639, 0
      %v6677 = vsel %vm712, %v6640, 0
      %v6680 = vsel %vm712, %v6641, 0
      %v6683 = vsel %vm712, %v6642, 0
      %v6686 = vsel %vm712, %v6643, 0
      %v6689 = vsel %vm712, %v6644, 0
      %v6692 = vsel %vm712, %v6645, 0
      %v6695 = vsel %vm761, %v6597, 0
      %6697 = vmatprep.subr.bf16.mxu0 0
      %6698 = vmatpush1.bf16.msra.mxu0 %v6695
      %6699 = vmatprep.subr.bf16.mxu0 0
      %6700 = vmatpush1.bf16.msra.mxu0 0
      %6701 = vmatprep.subr.bf16.mxu0 0
      %6702 = vmatpush1.bf16.msra.mxu0 0
      %6703 = vmatprep.subr.bf16.mxu0 0
      %6704 = vmatpush1.bf16.msra.mxu0 0
      %6705 = vmatprep.subr.bf16.mxu0 0
      %6706 = vmatpush1.bf16.msra.mxu0 0
      %6707 = vmatprep.subr.bf16.mxu0 0
      %6708 = vmatpush1.bf16.msra.mxu0 0
      %6709 = vmatprep.subr.bf16.mxu0 0
      %6710 = vmatpush1.bf16.msra.mxu0 0
      %6711 = vmatprep.subr.bf16.mxu0 0
      %6712 = vmatpush1.bf16.msra.mxu0 0
      %6713 = vmatprep.subr.bf16.mxu0 0
      %6714 = vmatpush1.bf16.msra.mxu0 0
      %6715 = vmatprep.subr.bf16.mxu0 0
      %6716 = vmatpush1.bf16.msra.mxu0 0
      %6717 = vmatprep.subr.bf16.mxu0 0
      %6718 = vmatpush1.bf16.msra.mxu0 0
      %6719 = vmatprep.subr.bf16.mxu0 0
      %6720 = vmatpush1.bf16.msra.mxu0 0
      %6721 = vmatprep.subr.bf16.mxu0 0
      %6722 = vmatpush1.bf16.msra.mxu0 0
      %6723 = vmatprep.subr.bf16.mxu0 0
      %6724 = vmatpush1.bf16.msra.mxu0 0
      %6725 = vmatprep.subr.bf16.mxu0 0
      %6726 = vmatpush1.bf16.msra.mxu0 0
      %6727 = vmatprep.subr.bf16.mxu0 0
      %6728 = vmatpush1.bf16.msra.mxu0 0
      %6729 = vmatprep.mubr.bf16.mxu0 0
      %6730 = vmatmul.mubr.bf16.gmra.mrb[0].mxu0 %v6647
      %v6731 = vpop.f32.mrb[0].mxu0
      %v6732 = vadd.f32 0.0, %v6731
      %v6733 = vpop.f32.mrb[0].mxu0
      %v6734 = vpop.f32.mrb[0].mxu0
      %v6735 = vadd.f32 0.0, %v6734
      %v6736 = vpop.f32.mrb[0].mxu0
      %6737 = vmatprep.mubr.bf16.mxu0 0
      %6738 = vmatmul.mubr.bf16.gmra.mrb[0].mxu0 %v6650
      %v6739 = vpop.f32.mrb[0].mxu0
      %v6740 = vadd.f32 0.0, %v6739
      %v6741 = vpop.f32.mrb[0].mxu0
      %v6742 = vpop.f32.mrb[0].mxu0
      %v6743 = vadd.f32 0.0, %v6742
      %v6744 = vpop.f32.mrb[0].mxu0
      %6745 = vmatprep.mubr.bf16.mxu0 0
      %6746 = vmatmul.mubr.bf16.gmra.mrb[0].mxu0 %v6653
      %v6747 = vpop.f32.mrb[0].mxu0
      %v6748 = vadd.f32 0.0, %v6747
      %v6749 = vpop.f32.mrb[0].mxu0
      %v6750 = vpop.f32.mrb[0].mxu0
      %v6751 = vadd.f32 0.0, %v6750
      %v6752 = vpop.f32.mrb[0].mxu0
      %6753 = vmatprep.mubr.bf16.mxu0 0
      %6754 = vmatmul.mubr.bf16.gmra.mrb[0].mxu0 %v6656
      %v6755 = vpop.f32.mrb[0].mxu0
      %v6756 = vadd.f32 0.0, %v6755
      %v6757 = vpop.f32.mrb[0].mxu0
      %v6758 = vpop.f32.mrb[0].mxu0
      %v6759 = vadd.f32 0.0, %v6758
      %v6760 = vpop.f32.mrb[0].mxu0
      %6761 = vmatprep.mubr.bf16.mxu0 0
      %6762 = vmatmul.mubr.bf16.gmra.mrb[0].mxu0 %v6659
      %v6763 = vpop.f32.mrb[0].mxu0
      %v6764 = vadd.f32 0.0, %v6763
      %v6765 = vpop.f32.mrb[0].mxu0
      %v6766 = vpop.f32.mrb[0].mxu0
      %v6767 = vadd.f32 0.0, %v6766
      %v6768 = vpop.f32.mrb[0].mxu0
      %6769 = vmatprep.mubr.bf16.mxu0 0
      %6770 = vmatmul.mubr.bf16.gmra.mrb[0].mxu0 %v6662
      %v6771 = vpop.f32.mrb[0].mxu0
      %v6772 = vadd.f32 0.0, %v6771
      %v6773 = vpop.f32.mrb[0].mxu0
      %v6774 = vpop.f32.mrb[0].mxu0
      %v6775 = vadd.f32 0.0, %v6774
      %v6776 = vpop.f32.mrb[0].mxu0
      %6777 = vmatprep.mubr.bf16.mxu0 0
      %6778 = vmatmul.mubr.bf16.gmra.mrb[0].mxu0 %v6665
      %v6779 = vpop.f32.mrb[0].mxu0
      %v6780 = vadd.f32 0.0, %v6779
      %v6781 = vpop.f32.mrb[0].mxu0
      %v6782 = vpop.f32.mrb[0].mxu0
      %v6783 = vadd.f32 0.0, %v6782
      %v6784 = vpop.f32.mrb[0].mxu0
      %6785 = vmatprep.mubr.bf16.mxu0 0
      %6786 = vmatmul.mubr.bf16.gmra.mrb[0].mxu0 %v6668
      %v6787 = vpop.f32.mrb[0].mxu0
      %v6788 = vadd.f32 0.0, %v6787
      %v6789 = vpop.f32.mrb[0].mxu0
      %v6790 = vpop.f32.mrb[0].mxu0
      %v6791 = vadd.f32 0.0, %v6790
      %v6792 = vpop.f32.mrb[0].mxu0
      %6793 = vmatprep.mubr.bf16.mxu0 0
      %6794 = vmatmul.mubr.bf16.gmra.mrb[0].mxu0 %v6671
      %v6795 = vpop.f32.mrb[0].mxu0
      %v6796 = vadd.f32 0.0, %v6795
      %v6797 = vpop.f32.mrb[0].mxu0
      %v6798 = vpop.f32.mrb[0].mxu0
      %v6799 = vadd.f32 0.0, %v6798
      %v6800 = vpop.f32.mrb[0].mxu0
      %6801 = vmatprep.mubr.bf16.mxu0 0
      %6802 = vmatmul.mubr.bf16.gmra.mrb[0].mxu0 %v6674
      %v6803 = vpop.f32.mrb[0].mxu0
      %v6804 = vadd.f32 0.0, %v6803
      %v6805 = vpop.f32.mrb[0].mxu0
      %v6806 = vpop.f32.mrb[0].mxu0
      %v6807 = vadd.f32 0.0, %v6806
      %v6808 = vpop.f32.mrb[0].mxu0
      %6809 = vmatprep.mubr.bf16.mxu0 0
      %6810 = vmatmul.mubr.bf16.gmra.mrb[0].mxu0 %v6677
      %v6811 = vpop.f32.mrb[0].mxu0
      %v6812 = vadd.f32 0.0, %v6811
      %v6813 = vpop.f32.mrb[0].mxu0
      %v6814 = vpop.f32.mrb[0].mxu0
      %v6815 = vadd.f32 0.0, %v6814
      %v6816 = vpop.f32.mrb[0].mxu0
      %6817 = vmatprep.mubr.bf16.mxu0 0
      %6818 = vmatmul.mubr.bf16.gmra.mrb[0].mxu0 %v6680
      %v6819 = vpop.f32.mrb[0].mxu0
      %v6820 = vadd.f32 0.0, %v6819
      %v6821 = vpop.f32.mrb[0].mxu0
      %v6822 = vpop.f32.mrb[0].mxu0
      %v6823 = vadd.f32 0.0, %v6822
      %v6824 = vpop.f32.mrb[0].mxu0
      %6825 = vmatprep.mubr.bf16.mxu0 0
      %6826 = vmatmul.mubr.bf16.gmra.mrb[0].mxu0 %v6683
      %v6827 = vpop.f32.mrb[0].mxu0
      %v6828 = vadd.f32 0.0, %v6827
      %v6829 = vpop.f32.mrb[0].mxu0
      %v6830 = vpop.f32.mrb[0].mxu0
      %v6831 = vadd.f32 0.0, %v6830
      %v6832 = vpop.f32.mrb[0].mxu0
      %6833 = vmatprep.mubr.bf16.mxu0 0
      %6834 = vmatmul.mubr.bf16.gmra.mrb[0].mxu0 %v6686
      %v6835 = vpop.f32.mrb[0].mxu0
      %v6836 = vadd.f32 0.0, %v6835
      %v6837 = vpop.f32.mrb[0].mxu0
      %v6838 = vpop.f32.mrb[0].mxu0
      %v6839 = vadd.f32 0.0, %v6838
      %v6840 = vpop.f32.mrb[0].mxu0
      %6841 = vmatprep.mubr.bf16.mxu0 0
      %6842 = vmatmul.mubr.bf16.gmra.mrb[0].mxu0 %v6689
      %v6843 = vpop.f32.mrb[0].mxu0
      %v6844 = vadd.f32 0.0, %v6843
      %v6845 = vpop.f32.mrb[0].mxu0
      %v6846 = vpop.f32.mrb[0].mxu0
      %v6847 = vadd.f32 0.0, %v6846
      %v6848 = vpop.f32.mrb[0].mxu0
      %6849 = vmatprep.mubr.bf16.mxu0 0
      %6850 = vmatmul.mubr.bf16.gmra.mrb[0].mxu0 %v6692
      %v6851 = vpop.f32.mrb[0].mxu0
      %v6852 = vadd.f32 0.0, %v6851
      %v6853 = vpop.f32.mrb[0].mxu0
      %v6854 = vpop.f32.mrb[0].mxu0
      %v6855 = vadd.f32 0.0, %v6854
      %v6856 = vpop.f32.mrb[0].mxu0
      %6857 = vdwg.mxu0
      %v6858 = vadd.f32 %v6310, %v6732
      %v6859 = vadd.f32 %v6313, %v6735
      %v6860 = vadd.f32 %v6318, %v6740
      %v6861 = vadd.f32 %v6321, %v6743
      %v6862 = vadd.f32 %v6326, %v6748
      %v6863 = vadd.f32 %v6329, %v6751
      %v6864 = vadd.f32 %v6334, %v6756
      %v6865 = vadd.f32 %v6337, %v6759
      %v6866 = vadd.f32 %v6342, %v6764
      %v6867 = vadd.f32 %v6345, %v6767
      %v6868 = vadd.f32 %v6350, %v6772
      %v6869 = vadd.f32 %v6353, %v6775
      %v6870 = vadd.f32 %v6358, %v6780
      %v6871 = vadd.f32 %v6361, %v6783
      %v6872 = vadd.f32 %v6366, %v6788
      %v6873 = vadd.f32 %v6369, %v6791
      %v6874 = vadd.f32 %v6374, %v6796
      %v6875 = vadd.f32 %v6377, %v6799
      %v6876 = vadd.f32 %v6382, %v6804
      %v6877 = vadd.f32 %v6385, %v6807
      %v6878 = vadd.f32 %v6390, %v6812
      %v6879 = vadd.f32 %v6393, %v6815
      %v6880 = vadd.f32 %v6398, %v6820
      %v6881 = vadd.f32 %v6401, %v6823
      %v6882 = vadd.f32 %v6406, %v6828
      %v6883 = vadd.f32 %v6409, %v6831
      %v6884 = vadd.f32 %v6414, %v6836
      %v6885 = vadd.f32 %v6417, %v6839
      %v6886 = vadd.f32 %v6422, %v6844
      %v6887 = vadd.f32 %v6425, %v6847
      %v6888 = vadd.f32 %v6430, %v6852
      %v6889 = vadd.f32 %v6433, %v6855
      %v6890 = vld [vmem:[%s5331] sm:$0xf]
      %v6891 = vld [vmem:[%s5331 + $0x4] sm:$0xf]
      %v6892 = vld [vmem:[%s5331 + $0xc] sm:$0xf]
      %v6893 = vld [vmem:[%s5331 + $0x10] sm:$0xf]
      %v6894 = vld [vmem:[%s5331 + $0x18] sm:$0xf]
      %v6895 = vld [vmem:[%s5331 + $0x1c] sm:$0xf]
      %v6896 = vld [vmem:[%s5331 + $0x24] sm:$0xf]
      %v6897 = vld [vmem:[%s5331 + $0x28] sm:$0xf]
      %v6898 = vld [vmem:[%s5331 + $0x30] sm:$0xf]
      %v6899 = vld [vmem:[%s5331 + $0x34] sm:$0xf]
      %v6900 = vld [vmem:[%s5331 + $0x3c] sm:$0xf]
      %v6901 = vld [vmem:[%s5331 + $0x40] sm:$0xf]
      %v6902 = vld [vmem:[%s5331 + $0x48] sm:$0xf]
      %v6903 = vld [vmem:[%s5331 + $0x4c] sm:$0xf]
      %v6904 = vld [vmem:[%s5331 + $0x54] sm:$0xf]
      %v6905 = vld [vmem:[%s5331 + $0x58] sm:$0xf]
      %v6906 = vld [vmem:[%s5331 + $0x60] sm:$0xf]
      %v6907 = vld [vmem:[%s5331 + $0x64] sm:$0xf]
      %v6908 = vld [vmem:[%s5331 + $0x6c] sm:$0xf]
      %v6909 = vld [vmem:[%s5331 + $0x70] sm:$0xf]
      %v6910 = vld [vmem:[%s5331 + $0x78] sm:$0xf]
      %v6911 = vld [vmem:[%s5331 + $0x7c] sm:$0xf]
      %v6912 = vld [vmem:[%s5331 + $0x84] sm:$0xf]
      %v6913 = vld [vmem:[%s5331 + $0x88] sm:$0xf]
      %v6914 = vld [vmem:[%s5331 + $0x90] sm:$0xf]
      %v6915 = vld [vmem:[%s5331 + $0x94] sm:$0xf]
      %v6916 = vld [vmem:[%s5331 + $0x9c] sm:$0xf]
      %v6917 = vld [vmem:[%s5331 + $0xa0] sm:$0xf]
      %v6918 = vld [vmem:[%s5331 + $0xa8] sm:$0xf]
      %v6919 = vld [vmem:[%s5331 + $0xac] sm:$0xf]
      %v6920 = vld [vmem:[%s5331 + $0xb4] sm:$0xf]
      %v6921 = vld [vmem:[%s5331 + $0xb8] sm:$0xf]
      %s6922 = scalar_lea.vmem %s3, 6
      %v6923 = vld [vmem:[%s6922] sm:$0x3]
      %v6956 = vunpack.c.l.b16 %v6890
      %v6957 = vunpack.c.l.b16 %v6891
      %v6958 = vunpack.c.l.b16 %v6892
      %v6959 = vunpack.c.l.b16 %v6893
      %v6960 = vunpack.c.l.b16 %v6894
      %v6961 = vunpack.c.l.b16 %v6895
      %v6962 = vunpack.c.l.b16 %v6896
      %v6963 = vunpack.c.l.b16 %v6897
      %v6964 = vunpack.c.l.b16 %v6898
      %v6965 = vunpack.c.l.b16 %v6899
      %v6966 = vunpack.c.l.b16 %v6900
      %v6967 = vunpack.c.l.b16 %v6901
      %v6968 = vunpack.c.l.b16 %v6902
      %v6969 = vunpack.c.l.b16 %v6903
      %v6970 = vunpack.c.l.b16 %v6904
      %v6971 = vunpack.c.l.b16 %v6905
      %v6972 = vunpack.c.l.b16 %v6906
      %v6973 = vunpack.c.l.b16 %v6907
      %v6974 = vunpack.c.l.b16 %v6908
      %v6975 = vunpack.c.l.b16 %v6909
      %v6976 = vunpack.c.l.b16 %v6910
      %v6977 = vunpack.c.l.b16 %v6911
      %v6978 = vunpack.c.l.b16 %v6912
      %v6979 = vunpack.c.l.b16 %v6913
      %v6980 = vunpack.c.l.b16 %v6914
      %v6981 = vunpack.c.l.b16 %v6915
      %v6982 = vunpack.c.l.b16 %v6916
      %v6983 = vunpack.c.l.b16 %v6917
      %v6984 = vunpack.c.l.b16 %v6918
      %v6985 = vunpack.c.l.b16 %v6919
      %v6986 = vunpack.c.l.b16 %v6920
      %v6987 = vunpack.c.l.b16 %v6921
      %v6988 = vpack.c.b16 %v6957, %v6956
      %v6989 = vpack.c.b16 %v6959, %v6958
      %v6990 = vpack.c.b16 %v6961, %v6960
      %v6991 = vpack.c.b16 %v6963, %v6962
      %v6992 = vpack.c.b16 %v6965, %v6964
      %v6993 = vpack.c.b16 %v6967, %v6966
      %v6994 = vpack.c.b16 %v6969, %v6968
      %v6995 = vpack.c.b16 %v6971, %v6970
      %v6996 = vpack.c.b16 %v6973, %v6972
      %v6997 = vpack.c.b16 %v6975, %v6974
      %v6998 = vpack.c.b16 %v6977, %v6976
      %v6999 = vpack.c.b16 %v6979, %v6978
      %v7000 = vpack.c.b16 %v6981, %v6980
      %v7001 = vpack.c.b16 %v6983, %v6982
      %v7002 = vpack.c.b16 %v6985, %v6984
      %v7003 = vpack.c.b16 %v6987, %v6986
      %v7005 = vsel %vm712, %v6988, 0
      %v7008 = vsel %vm712, %v6989, 0
      %v7011 = vsel %vm712, %v6990, 0
      %v7014 = vsel %vm712, %v6991, 0
      %v7017 = vsel %vm712, %v6992, 0
      %v7020 = vsel %vm712, %v6993, 0
      %v7023 = vsel %vm712, %v6994, 0
      %v7026 = vsel %vm712, %v6995, 0
      %v7029 = vsel %vm712, %v6996, 0
      %v7032 = vsel %vm712, %v6997, 0
      %v7035 = vsel %vm712, %v6998, 0
      %v7038 = vsel %vm712, %v6999, 0
      %v7041 = vsel %vm712, %v7000, 0
      %v7044 = vsel %vm712, %v7001, 0
      %v7047 = vsel %vm712, %v7002, 0
      %v7050 = vsel %vm712, %v7003, 0
      %v7053 = vsel %vm761, %v6923, 0
      %7055 = vmatprep.subr.bf16.mxu0 0
      %7056 = vmatpush1.bf16.msra.mxu0 %v7053
      %7057 = vmatprep.subr.bf16.mxu0 0
      %7058 = vmatpush1.bf16.msra.mxu0 0
      %7059 = vmatprep.subr.bf16.mxu0 0
      %7060 = vmatpush1.bf16.msra.mxu0 0
      %7061 = vmatprep.subr.bf16.mxu0 0
      %7062 = vmatpush1.bf16.msra.mxu0 0
      %7063 = vmatprep.subr.bf16.mxu0 0
      %7064 = vmatpush1.bf16.msra.mxu0 0
      %7065 = vmatprep.subr.bf16.mxu0 0
      %7066 = vmatpush1.bf16.msra.mxu0 0
      %7067 = vmatprep.subr.bf16.mxu0 0
      %7068 = vmatpush1.bf16.msra.mxu0 0
      %7069 = vmatprep.subr.bf16.mxu0 0
      %7070 = vmatpush1.bf16.msra.mxu0 0
      %7071 = vmatprep.subr.bf16.mxu0 0
      %7072 = vmatpush1.bf16.msra.mxu0 0
      %7073 = vmatprep.subr.bf16.mxu0 0
      %7074 = vmatpush1.bf16.msra.mxu0 0
      %7075 = vmatprep.subr.bf16.mxu0 0
      %7076 = vmatpush1.bf16.msra.mxu0 0
      %7077 = vmatprep.subr.bf16.mxu0 0
      %7078 = vmatpush1.bf16.msra.mxu0 0
      %7079 = vmatprep.subr.bf16.mxu0 0
      %7080 = vmatpush1.bf16.msra.mxu0 0
      %7081 = vmatprep.subr.bf16.mxu0 0
      %7082 = vmatpush1.bf16.msra.mxu0 0
      %7083 = vmatprep.subr.bf16.mxu0 0
      %7084 = vmatpush1.bf16.msra.mxu0 0
      %7085 = vmatprep.subr.bf16.mxu0 0
      %7086 = vmatpush1.bf16.msra.mxu0 0
      %7087 = vmatprep.mubr.bf16.mxu0 0
      %7088 = vmatmul.mubr.bf16.gmra.mrb[0].mxu0 %v7005
      %v7089 = vpop.f32.mrb[0].mxu0
      %v7090 = vadd.f32 0.0, %v7089
      %v7091 = vpop.f32.mrb[0].mxu0
      %v7092 = vpop.f32.mrb[0].mxu0
      %v7093 = vadd.f32 0.0, %v7092
      %v7094 = vpop.f32.mrb[0].mxu0
      %7095 = vmatprep.mubr.bf16.mxu0 0
      %7096 = vmatmul.mubr.bf16.gmra.mrb[0].mxu0 %v7008
      %v7097 = vpop.f32.mrb[0].mxu0
      %v7098 = vadd.f32 0.0, %v7097
      %v7099 = vpop.f32.mrb[0].mxu0
      %v7100 = vpop.f32.mrb[0].mxu0
      %v7101 = vadd.f32 0.0, %v7100
      %v7102 = vpop.f32.mrb[0].mxu0
      %7103 = vmatprep.mubr.bf16.mxu0 0
      %7104 = vmatmul.mubr.bf16.gmra.mrb[0].mxu0 %v7011
      %v7105 = vpop.f32.mrb[0].mxu0
      %v7106 = vadd.f32 0.0, %v7105
      %v7107 = vpop.f32.mrb[0].mxu0
      %v7108 = vpop.f32.mrb[0].mxu0
      %v7109 = vadd.f32 0.0, %v7108
      %v7110 = vpop.f32.mrb[0].mxu0
      %7111 = vmatprep.mubr.bf16.mxu0 0
      %7112 = vmatmul.mubr.bf16.gmra.mrb[0].mxu0 %v7014
      %v7113 = vpop.f32.mrb[0].mxu0
      %v7114 = vadd.f32 0.0, %v7113
      %v7115 = vpop.f32.mrb[0].mxu0
      %v7116 = vpop.f32.mrb[0].mxu0
      %v7117 = vadd.f32 0.0, %v7116
      %v7118 = vpop.f32.mrb[0].mxu0
      %7119 = vmatprep.mubr.bf16.mxu0 0
      %7120 = vmatmul.mubr.bf16.gmra.mrb[0].mxu0 %v7017
      %v7121 = vpop.f32.mrb[0].mxu0
      %v7122 = vadd.f32 0.0, %v7121
      %v7123 = vpop.f32.mrb[0].mxu0
      %v7124 = vpop.f32.mrb[0].mxu0
      %v7125 = vadd.f32 0.0, %v7124
      %v7126 = vpop.f32.mrb[0].mxu0
      %7127 = vmatprep.mubr.bf16.mxu0 0
      %7128 = vmatmul.mubr.bf16.gmra.mrb[0].mxu0 %v7020
      %v7129 = vpop.f32.mrb[0].mxu0
      %v7130 = vadd.f32 0.0, %v7129
      %v7131 = vpop.f32.mrb[0].mxu0
      %v7132 = vpop.f32.mrb[0].mxu0
      %v7133 = vadd.f32 0.0, %v7132
      %v7134 = vpop.f32.mrb[0].mxu0
      %7135 = vmatprep.mubr.bf16.mxu0 0
      %7136 = vmatmul.mubr.bf16.gmra.mrb[0].mxu0 %v7023
      %v7137 = vpop.f32.mrb[0].mxu0
      %v7138 = vadd.f32 0.0, %v7137
      %v7139 = vpop.f32.mrb[0].mxu0
      %v7140 = vpop.f32.mrb[0].mxu0
      %v7141 = vadd.f32 0.0, %v7140
      %v7142 = vpop.f32.mrb[0].mxu0
      %7143 = vmatprep.mubr.bf16.mxu0 0
      %7144 = vmatmul.mubr.bf16.gmra.mrb[0].mxu0 %v7026
      %v7145 = vpop.f32.mrb[0].mxu0
      %v7146 = vadd.f32 0.0, %v7145
      %v7147 = vpop.f32.mrb[0].mxu0
      %v7148 = vpop.f32.mrb[0].mxu0
      %v7149 = vadd.f32 0.0, %v7148
      %v7150 = vpop.f32.mrb[0].mxu0
      %7151 = vmatprep.mubr.bf16.mxu0 0
      %7152 = vmatmul.mubr.bf16.gmra.mrb[0].mxu0 %v7029
      %v7153 = vpop.f32.mrb[0].mxu0
      %v7154 = vadd.f32 0.0, %v7153
      %v7155 = vpop.f32.mrb[0].mxu0
      %v7156 = vpop.f32.mrb[0].mxu0
      %v7157 = vadd.f32 0.0, %v7156
      %v7158 = vpop.f32.mrb[0].mxu0
      %7159 = vmatprep.mubr.bf16.mxu0 0
      %7160 = vmatmul.mubr.bf16.gmra.mrb[0].mxu0 %v7032
      %v7161 = vpop.f32.mrb[0].mxu0
      %v7162 = vadd.f32 0.0, %v7161
      %v7163 = vpop.f32.mrb[0].mxu0
      %v7164 = vpop.f32.mrb[0].mxu0
      %v7165 = vadd.f32 0.0, %v7164
      %v7166 = vpop.f32.mrb[0].mxu0
      %7167 = vmatprep.mubr.bf16.mxu0 0
      %7168 = vmatmul.mubr.bf16.gmra.mrb[0].mxu0 %v7035
      %v7169 = vpop.f32.mrb[0].mxu0
      %v7170 = vadd.f32 0.0, %v7169
      %v7171 = vpop.f32.mrb[0].mxu0
      %v7172 = vpop.f32.mrb[0].mxu0
      %v7173 = vadd.f32 0.0, %v7172
      %v7174 = vpop.f32.mrb[0].mxu0
      %7175 = vmatprep.mubr.bf16.mxu0 0
      %7176 = vmatmul.mubr.bf16.gmra.mrb[0].mxu0 %v7038
      %v7177 = vpop.f32.mrb[0].mxu0
      %v7178 = vadd.f32 0.0, %v7177
      %v7179 = vpop.f32.mrb[0].mxu0
      %v7180 = vpop.f32.mrb[0].mxu0
      %v7181 = vadd.f32 0.0, %v7180
      %v7182 = vpop.f32.mrb[0].mxu0
      %7183 = vmatprep.mubr.bf16.mxu0 0
      %7184 = vmatmul.mubr.bf16.gmra.mrb[0].mxu0 %v7041
      %v7185 = vpop.f32.mrb[0].mxu0
      %v7186 = vadd.f32 0.0, %v7185
      %v7187 = vpop.f32.mrb[0].mxu0
      %v7188 = vpop.f32.mrb[0].mxu0
      %v7189 = vadd.f32 0.0, %v7188
      %v7190 = vpop.f32.mrb[0].mxu0
      %7191 = vmatprep.mubr.bf16.mxu0 0
      %7192 = vmatmul.mubr.bf16.gmra.mrb[0].mxu0 %v7044
      %v7193 = vpop.f32.mrb[0].mxu0
      %v7194 = vadd.f32 0.0, %v7193
      %v7195 = vpop.f32.mrb[0].mxu0
      %v7196 = vpop.f32.mrb[0].mxu0
      %v7197 = vadd.f32 0.0, %v7196
      %v7198 = vpop.f32.mrb[0].mxu0
      %7199 = vmatprep.mubr.bf16.mxu0 0
      %7200 = vmatmul.mubr.bf16.gmra.mrb[0].mxu0 %v7047
      %v7201 = vpop.f32.mrb[0].mxu0
      %v7202 = vadd.f32 0.0, %v7201
      %v7203 = vpop.f32.mrb[0].mxu0
      %v7204 = vpop.f32.mrb[0].mxu0
      %v7205 = vadd.f32 0.0, %v7204
      %v7206 = vpop.f32.mrb[0].mxu0
      %7207 = vmatprep.mubr.bf16.mxu0 0
      %7208 = vmatmul.mubr.bf16.gmra.mrb[0].mxu0 %v7050
      %v7209 = vpop.f32.mrb[0].mxu0
      %v7210 = vadd.f32 0.0, %v7209
      %v7211 = vpop.f32.mrb[0].mxu0
      %v7212 = vpop.f32.mrb[0].mxu0
      %v7213 = vadd.f32 0.0, %v7212
      %v7214 = vpop.f32.mrb[0].mxu0
      %7215 = vdwg.mxu0
      %v7216 = vadd.f32 %v6858, %v7090
      %v7217 = vadd.f32 %v6859, %v7093
      %v7218 = vadd.f32 %v6860, %v7098
      %v7219 = vadd.f32 %v6861, %v7101
      %v7220 = vadd.f32 %v6862, %v7106
      %v7221 = vadd.f32 %v6863, %v7109
      %v7222 = vadd.f32 %v6864, %v7114
      %v7223 = vadd.f32 %v6865, %v7117
      %v7224 = vadd.f32 %v6866, %v7122
      %v7225 = vadd.f32 %v6867, %v7125
      %v7226 = vadd.f32 %v6868, %v7130
      %v7227 = vadd.f32 %v6869, %v7133
      %v7228 = vadd.f32 %v6870, %v7138
      %v7229 = vadd.f32 %v6871, %v7141
      %v7230 = vadd.f32 %v6872, %v7146
      %v7231 = vadd.f32 %v6873, %v7149
      %v7232 = vadd.f32 %v6874, %v7154
      %v7233 = vadd.f32 %v6875, %v7157
      %v7234 = vadd.f32 %v6876, %v7162
      %v7235 = vadd.f32 %v6877, %v7165
      %v7236 = vadd.f32 %v6878, %v7170
      %v7237 = vadd.f32 %v6879, %v7173
      %v7238 = vadd.f32 %v6880, %v7178
      %v7239 = vadd.f32 %v6881, %v7181
      %v7240 = vadd.f32 %v6882, %v7186
      %v7241 = vadd.f32 %v6883, %v7189
      %v7242 = vadd.f32 %v6884, %v7194
      %v7243 = vadd.f32 %v6885, %v7197
      %v7244 = vadd.f32 %v6886, %v7202
      %v7245 = vadd.f32 %v6887, %v7205
      %v7246 = vadd.f32 %v6888, %v7210
      %v7247 = vadd.f32 %v6889, %v7213
      %v7248 = vld [vmem:[%s5331] sm:$0xf]
      %v7249 = vld [vmem:[%s5331 + $0x4] sm:$0xf]
      %v7250 = vld [vmem:[%s5331 + $0x8] sm:$0x1]
      %v7251 = vld [vmem:[%s5331 + $0xc] sm:$0xf]
      %v7252 = vld [vmem:[%s5331 + $0x10] sm:$0xf]
      %v7253 = vld [vmem:[%s5331 + $0x14] sm:$0x1]
      %v7254 = vld [vmem:[%s5331 + $0x18] sm:$0xf]
      %v7255 = vld [vmem:[%s5331 + $0x1c] sm:$0xf]
      %v7256 = vld [vmem:[%s5331 + $0x20] sm:$0x1]
      %v7257 = vld [vmem:[%s5331 + $0x24] sm:$0xf]
      %v7258 = vld [vmem:[%s5331 + $0x28] sm:$0xf]
      %v7259 = vld [vmem:[%s5331 + $0x2c] sm:$0x1]
      %v7260 = vld [vmem:[%s5331 + $0x30] sm:$0xf]
      %v7261 = vld [vmem:[%s5331 + $0x34] sm:$0xf]
      %v7262 = vld [vmem:[%s5331 + $0x38] sm:$0x1]
      %v7263 = vld [vmem:[%s5331 + $0x3c] sm:$0xf]
      %v7264 = vld [vmem:[%s5331 + $0x40] sm:$0xf]
      %v7265 = vld [vmem:[%s5331 + $0x44] sm:$0x1]
      %v7266 = vld [vmem:[%s5331 + $0x48] sm:$0xf]
      %v7267 = vld [vmem:[%s5331 + $0x4c] sm:$0xf]
      %v7268 = vld [vmem:[%s5331 + $0x50] sm:$0x1]
      %v7269 = vld [vmem:[%s5331 + $0x54] sm:$0xf]
      %v7270 = vld [vmem:[%s5331 + $0x58] sm:$0xf]
      %v7271 = vld [vmem:[%s5331 + $0x5c] sm:$0x1]
      %v7272 = vld [vmem:[%s5331 + $0x60] sm:$0xf]
      %v7273 = vld [vmem:[%s5331 + $0x64] sm:$0xf]
      %v7274 = vld [vmem:[%s5331 + $0x68] sm:$0x1]
      %v7275 = vld [vmem:[%s5331 + $0x6c] sm:$0xf]
      %v7276 = vld [vmem:[%s5331 + $0x70] sm:$0xf]
      %v7277 = vld [vmem:[%s5331 + $0x74] sm:$0x1]
      %v7278 = vld [vmem:[%s5331 + $0x78] sm:$0xf]
      %v7279 = vld [vmem:[%s5331 + $0x7c] sm:$0xf]
      %v7280 = vld [vmem:[%s5331 + $0x80] sm:$0x1]
      %v7281 = vld [vmem:[%s5331 + $0x84] sm:$0xf]
      %v7282 = vld [vmem:[%s5331 + $0x88] sm:$0xf]
      %v7283 = vld [vmem:[%s5331 + $0x8c] sm:$0x1]
      %v7284 = vld [vmem:[%s5331 + $0x90] sm:$0xf]
      %v7285 = vld [vmem:[%s5331 + $0x94] sm:$0xf]
      %v7286 = vld [vmem:[%s5331 + $0x98] sm:$0x1]
      %v7287 = vld [vmem:[%s5331 + $0x9c] sm:$0xf]
      %v7288 = vld [vmem:[%s5331 + $0xa0] sm:$0xf]
      %v7289 = vld [vmem:[%s5331 + $0xa4] sm:$0x1]
      %v7290 = vld [vmem:[%s5331 + $0xa8] sm:$0xf]
      %v7291 = vld [vmem:[%s5331 + $0xac] sm:$0xf]
      %v7292 = vld [vmem:[%s5331 + $0xb0] sm:$0x1]
      %v7293 = vld [vmem:[%s5331 + $0xb4] sm:$0xf]
      %v7294 = vld [vmem:[%s5331 + $0xb8] sm:$0xf]
      %v7295 = vld [vmem:[%s5331 + $0xbc] sm:$0x1]
      %v7297 = vshrl.u32 %v7248, 16
      %v7299 = vrot.slane %v7297, 4
      %v7300 = vshll.u32 %v7248, 16
      %v7302 = vrot.slane %v7300, 5
      %v7303 = vor.u32 %v7299, %v7302
      %v7304 = vrot.slane %v7303, 4
      %v7306 = vshll.u32 %v7249, 16
      %v7308 = vrot.slane %v7306, 5
      %v7309 = vsel %vm277, %v7304, %v7308
      %v7310 = vshrl.u32 %v7249, 16
      %v7312 = vrot.slane %v7310, 4
      %v7313 = vor.u32 %v7312, %v7308
      %v7314 = vrot.slane %v7313, 4
      %v7316 = vshll.u32 %v7250, 16
      %v7318 = vrot.slane %v7316, 5
      %v7319 = vsel %vm277, %v7314, %v7318
      %v7321 = vshrl.u32 %v7251, 16
      %v7323 = vrot.slane %v7321, 4
      %v7324 = vshll.u32 %v7251, 16
      %v7326 = vrot.slane %v7324, 5
      %v7327 = vor.u32 %v7323, %v7326
      %v7328 = vrot.slane %v7327, 4
      %v7330 = vshll.u32 %v7252, 16
      %v7332 = vrot.slane %v7330, 5
      %v7333 = vsel %vm277, %v7328, %v7332
      %v7334 = vshrl.u32 %v7252, 16
      %v7336 = vrot.slane %v7334, 4
      %v7337 = vor.u32 %v7336, %v7332
      %v7338 = vrot.slane %v7337, 4
      %v7340 = vshll.u32 %v7253, 16
      %v7342 = vrot.slane %v7340, 5
      %v7343 = vsel %vm277, %v7338, %v7342
      %v7345 = vshrl.u32 %v7254, 16
      %v7347 = vrot.slane %v7345, 4
      %v7348 = vshll.u32 %v7254, 16
      %v7350 = vrot.slane %v7348, 5
      %v7351 = vor.u32 %v7347, %v7350
      %v7352 = vrot.slane %v7351, 4
      %v7354 = vshll.u32 %v7255, 16
      %v7356 = vrot.slane %v7354, 5
      %v7357 = vsel %vm277, %v7352, %v7356
      %v7358 = vshrl.u32 %v7255, 16
      %v7360 = vrot.slane %v7358, 4
      %v7361 = vor.u32 %v7360, %v7356
      %v7362 = vrot.slane %v7361, 4
      %v7364 = vshll.u32 %v7256, 16
      %v7366 = vrot.slane %v7364, 5
      %v7367 = vsel %vm277, %v7362, %v7366
      %v7369 = vshrl.u32 %v7257, 16
      %v7371 = vrot.slane %v7369, 4
      %v7372 = vshll.u32 %v7257, 16
      %v7374 = vrot.slane %v7372, 5
      %v7375 = vor.u32 %v7371, %v7374
      %v7376 = vrot.slane %v7375, 4
      %v7378 = vshll.u32 %v7258, 16
      %v7380 = vrot.slane %v7378, 5
      %v7381 = vsel %vm277, %v7376, %v7380
      %v7382 = vshrl.u32 %v7258, 16
      %v7384 = vrot.slane %v7382, 4
      %v7385 = vor.u32 %v7384, %v7380
      %v7386 = vrot.slane %v7385, 4
      %v7388 = vshll.u32 %v7259, 16
      %v7390 = vrot.slane %v7388, 5
      %v7391 = vsel %vm277, %v7386, %v7390
      %v7393 = vshrl.u32 %v7260, 16
      %v7395 = vrot.slane %v7393, 4
      %v7396 = vshll.u32 %v7260, 16
      %v7398 = vrot.slane %v7396, 5
      %v7399 = vor.u32 %v7395, %v7398
      %v7400 = vrot.slane %v7399, 4
      %v7402 = vshll.u32 %v7261, 16
      %v7404 = vrot.slane %v7402, 5
      %v7405 = vsel %vm277, %v7400, %v7404
      %v7406 = vshrl.u32 %v7261, 16
      %v7408 = vrot.slane %v7406, 4
      %v7409 = vor.u32 %v7408, %v7404
      %v7410 = vrot.slane %v7409, 4
      %v7412 = vshll.u32 %v7262, 16
      %v7414 = vrot.slane %v7412, 5
      %v7415 = vsel %vm277, %v7410, %v7414
      %v7417 = vshrl.u32 %v7263, 16
      %v7419 = vrot.slane %v7417, 4
      %v7420 = vshll.u32 %v7263, 16
      %v7422 = vrot.slane %v7420, 5
      %v7423 = vor.u32 %v7419, %v7422
      %v7424 = vrot.slane %v7423, 4
      %v7426 = vshll.u32 %v7264, 16
      %v7428 = vrot.slane %v7426, 5
      %v7429 = vsel %vm277, %v7424, %v7428
      %v7430 = vshrl.u32 %v7264, 16
      %v7432 = vrot.slane %v7430, 4
      %v7433 = vor.u32 %v7432, %v7428
      %v7434 = vrot.slane %v7433, 4
      %v7436 = vshll.u32 %v7265, 16
      %v7438 = vrot.slane %v7436, 5
      %v7439 = vsel %vm277, %v7434, %v7438
      %v7441 = vshrl.u32 %v7266, 16
      %v7443 = vrot.slane %v7441, 4
      %v7444 = vshll.u32 %v7266, 16
      %v7446 = vrot.slane %v7444, 5
      %v7447 = vor.u32 %v7443, %v7446
      %v7448 = vrot.slane %v7447, 4
      %v7450 = vshll.u32 %v7267, 16
      %v7452 = vrot.slane %v7450, 5
      %v7453 = vsel %vm277, %v7448, %v7452
      %v7454 = vshrl.u32 %v7267, 16
      %v7456 = vrot.slane %v7454, 4
      %v7457 = vor.u32 %v7456, %v7452
      %v7458 = vrot.slane %v7457, 4
      %v7460 = vshll.u32 %v7268, 16
      %v7462 = vrot.slane %v7460, 5
      %v7463 = vsel %vm277, %v7458, %v7462
      %v7465 = vshrl.u32 %v7269, 16
      %v7467 = vrot.slane %v7465, 4
      %v7468 = vshll.u32 %v7269, 16
      %v7470 = vrot.slane %v7468, 5
      %v7471 = vor.u32 %v7467, %v7470
      %v7472 = vrot.slane %v7471, 4
      %v7474 = vshll.u32 %v7270, 16
      %v7476 = vrot.slane %v7474, 5
      %v7477 = vsel %vm277, %v7472, %v7476
      %v7478 = vshrl.u32 %v7270, 16
      %v7480 = vrot.slane %v7478, 4
      %v7481 = vor.u32 %v7480, %v7476
      %v7482 = vrot.slane %v7481, 4
      %v7484 = vshll.u32 %v7271, 16
      %v7486 = vrot.slane %v7484, 5
      %v7487 = vsel %vm277, %v7482, %v7486
      %v7489 = vshrl.u32 %v7272, 16
      %v7491 = vrot.slane %v7489, 4
      %v7492 = vshll.u32 %v7272, 16
      %v7494 = vrot.slane %v7492, 5
      %v7495 = vor.u32 %v7491, %v7494
      %v7496 = vrot.slane %v7495, 4
      %v7498 = vshll.u32 %v7273, 16
      %v7500 = vrot.slane %v7498, 5
      %v7501 = vsel %vm277, %v7496, %v7500
      %v7502 = vshrl.u32 %v7273, 16
      %v7504 = vrot.slane %v7502, 4
      %v7505 = vor.u32 %v7504, %v7500
      %v7506 = vrot.slane %v7505, 4
      %v7508 = vshll.u32 %v7274, 16
      %v7510 = vrot.slane %v7508, 5
      %v7511 = vsel %vm277, %v7506, %v7510
      %v7513 = vshrl.u32 %v7275, 16
      %v7515 = vrot.slane %v7513, 4
      %v7516 = vshll.u32 %v7275, 16
      %v7518 = vrot.slane %v7516, 5
      %v7519 = vor.u32 %v7515, %v7518
      %v7520 = vrot.slane %v7519, 4
      %v7522 = vshll.u32 %v7276, 16
      %v7524 = vrot.slane %v7522, 5
      %v7525 = vsel %vm277, %v7520, %v7524
      %v7526 = vshrl.u32 %v7276, 16
      %v7528 = vrot.slane %v7526, 4
      %v7529 = vor.u32 %v7528, %v7524
      %v7530 = vrot.slane %v7529, 4
      %v7532 = vshll.u32 %v7277, 16
      %v7534 = vrot.slane %v7532, 5
      %v7535 = vsel %vm277, %v7530, %v7534
      %v7537 = vshrl.u32 %v7278, 16
      %v7539 = vrot.slane %v7537, 4
      %v7540 = vshll.u32 %v7278, 16
      %v7542 = vrot.slane %v7540, 5
      %v7543 = vor.u32 %v7539, %v7542
      %v7544 = vrot.slane %v7543, 4
      %v7546 = vshll.u32 %v7279, 16
      %v7548 = vrot.slane %v7546, 5
      %v7549 = vsel %vm277, %v7544, %v7548
      %v7550 = vshrl.u32 %v7279, 16
      %v7552 = vrot.slane %v7550, 4
      %v7553 = vor.u32 %v7552, %v7548
      %v7554 = vrot.slane %v7553, 4
      %v7556 = vshll.u32 %v7280, 16
      %v7558 = vrot.slane %v7556, 5
      %v7559 = vsel %vm277, %v7554, %v7558
      %v7561 = vshrl.u32 %v7281, 16
      %v7563 = vrot.slane %v7561, 4
      %v7564 = vshll.u32 %v7281, 16
      %v7566 = vrot.slane %v7564, 5
      %v7567 = vor.u32 %v7563, %v7566
      %v7568 = vrot.slane %v7567, 4
      %v7570 = vshll.u32 %v7282, 16
      %v7572 = vrot.slane %v7570, 5
      %v7573 = vsel %vm277, %v7568, %v7572
      %v7574 = vshrl.u32 %v7282, 16
      %v7576 = vrot.slane %v7574, 4
      %v7577 = vor.u32 %v7576, %v7572
      %v7578 = vrot.slane %v7577, 4
      %v7580 = vshll.u32 %v7283, 16
      %v7582 = vrot.slane %v7580, 5
      %v7583 = vsel %vm277, %v7578, %v7582
      %v7585 = vshrl.u32 %v7284, 16
      %v7587 = vrot.slane %v7585, 4
      %v7588 = vshll.u32 %v7284, 16
      %v7590 = vrot.slane %v7588, 5
      %v7591 = vor.u32 %v7587, %v7590
      %v7592 = vrot.slane %v7591, 4
      %v7594 = vshll.u32 %v7285, 16
      %v7596 = vrot.slane %v7594, 5
      %v7597 = vsel %vm277, %v7592, %v7596
      %v7598 = vshrl.u32 %v7285, 16
      %v7600 = vrot.slane %v7598, 4
      %v7601 = vor.u32 %v7600, %v7596
      %v7602 = vrot.slane %v7601, 4
      %v7604 = vshll.u32 %v7286, 16
      %v7606 = vrot.slane %v7604, 5
      %v7607 = vsel %vm277, %v7602, %v7606
      %v7609 = vshrl.u32 %v7287, 16
      %v7611 = vrot.slane %v7609, 4
      %v7612 = vshll.u32 %v7287, 16
      %v7614 = vrot.slane %v7612, 5
      %v7615 = vor.u32 %v7611, %v7614
      %v7616 = vrot.slane %v7615, 4
      %v7618 = vshll.u32 %v7288, 16
      %v7620 = vrot.slane %v7618, 5
      %v7621 = vsel %vm277, %v7616, %v7620
      %v7622 = vshrl.u32 %v7288, 16
      %v7624 = vrot.slane %v7622, 4
      %v7625 = vor.u32 %v7624, %v7620
      %v7626 = vrot.slane %v7625, 4
      %v7628 = vshll.u32 %v7289, 16
      %v7630 = vrot.slane %v7628, 5
      %v7631 = vsel %vm277, %v7626, %v7630
      %v7633 = vshrl.u32 %v7290, 16
      %v7635 = vrot.slane %v7633, 4
      %v7636 = vshll.u32 %v7290, 16
      %v7638 = vrot.slane %v7636, 5
      %v7639 = vor.u32 %v7635, %v7638
      %v7640 = vrot.slane %v7639, 4
      %v7642 = vshll.u32 %v7291, 16
      %v7644 = vrot.slane %v7642, 5
      %v7645 = vsel %vm277, %v7640, %v7644
      %v7646 = vshrl.u32 %v7291, 16
      %v7648 = vrot.slane %v7646, 4
      %v7649 = vor.u32 %v7648, %v7644
      %v7650 = vrot.slane %v7649, 4
      %v7652 = vshll.u32 %v7292, 16
      %v7654 = vrot.slane %v7652, 5
      %v7655 = vsel %vm277, %v7650, %v7654
      %v7657 = vshrl.u32 %v7293, 16
      %v7659 = vrot.slane %v7657, 4
      %v7660 = vshll.u32 %v7293, 16
      %v7662 = vrot.slane %v7660, 5
      %v7663 = vor.u32 %v7659, %v7662
      %v7664 = vrot.slane %v7663, 4
      %v7666 = vshll.u32 %v7294, 16
      %v7668 = vrot.slane %v7666, 5
      %v7669 = vsel %vm277, %v7664, %v7668
      %v7670 = vshrl.u32 %v7294, 16
      %v7672 = vrot.slane %v7670, 4
      %v7673 = vor.u32 %v7672, %v7668
      %v7674 = vrot.slane %v7673, 4
      %v7676 = vshll.u32 %v7295, 16
      %v7678 = vrot.slane %v7676, 5
      %v7679 = vsel %vm277, %v7674, %v7678
      %s7680 = scalar_lea.vmem %s3, 8
      %v7681 = vld [vmem:[%s7680] sm:$0x3]
      %v7682 = vunpack.c.l.b16 %v7309
      %v7683 = vunpack.c.l.b16 %v7319
      %v7684 = vunpack.c.l.b16 %v7333
      %v7685 = vunpack.c.l.b16 %v7343
      %v7686 = vunpack.c.l.b16 %v7357
      %v7687 = vunpack.c.l.b16 %v7367
      %v7688 = vunpack.c.l.b16 %v7381
      %v7689 = vunpack.c.l.b16 %v7391
      %v7690 = vunpack.c.l.b16 %v7405
      %v7691 = vunpack.c.l.b16 %v7415
      %v7692 = vunpack.c.l.b16 %v7429
      %v7693 = vunpack.c.l.b16 %v7439
      %v7694 = vunpack.c.l.b16 %v7453
      %v7695 = vunpack.c.l.b16 %v7463
      %v7696 = vunpack.c.l.b16 %v7477
      %v7697 = vunpack.c.l.b16 %v7487
      %v7698 = vunpack.c.l.b16 %v7501
      %v7699 = vunpack.c.l.b16 %v7511
      %v7700 = vunpack.c.l.b16 %v7525
      %v7701 = vunpack.c.l.b16 %v7535
      %v7702 = vunpack.c.l.b16 %v7549
      %v7703 = vunpack.c.l.b16 %v7559
      %v7704 = vunpack.c.l.b16 %v7573
      %v7705 = vunpack.c.l.b16 %v7583
      %v7706 = vunpack.c.l.b16 %v7597
      %v7707 = vunpack.c.l.b16 %v7607
      %v7708 = vunpack.c.l.b16 %v7621
      %v7709 = vunpack.c.l.b16 %v7631
      %v7710 = vunpack.c.l.b16 %v7645
      %v7711 = vunpack.c.l.b16 %v7655
      %v7712 = vunpack.c.l.b16 %v7669
      %v7713 = vunpack.c.l.b16 %v7679
      %v7714 = vpack.c.b16 %v7683, %v7682
      %v7715 = vpack.c.b16 %v7685, %v7684
      %v7716 = vpack.c.b16 %v7687, %v7686
      %v7717 = vpack.c.b16 %v7689, %v7688
      %v7718 = vpack.c.b16 %v7691, %v7690
      %v7719 = vpack.c.b16 %v7693, %v7692
      %v7720 = vpack.c.b16 %v7695, %v7694
      %v7721 = vpack.c.b16 %v7697, %v7696
      %v7722 = vpack.c.b16 %v7699, %v7698
      %v7723 = vpack.c.b16 %v7701, %v7700
      %v7724 = vpack.c.b16 %v7703, %v7702
      %v7725 = vpack.c.b16 %v7705, %v7704
      %v7726 = vpack.c.b16 %v7707, %v7706
      %v7727 = vpack.c.b16 %v7709, %v7708
      %v7728 = vpack.c.b16 %v7711, %v7710
      %v7729 = vpack.c.b16 %v7713, %v7712
      %v7731 = vsel %vm712, %v7714, 0
      %v7734 = vsel %vm712, %v7715, 0
      %v7737 = vsel %vm712, %v7716, 0
      %v7740 = vsel %vm712, %v7717, 0
      %v7743 = vsel %vm712, %v7718, 0
      %v7746 = vsel %vm712, %v7719, 0
      %v7749 = vsel %vm712, %v7720, 0
      %v7752 = vsel %vm712, %v7721, 0
      %v7755 = vsel %vm712, %v7722, 0
      %v7758 = vsel %vm712, %v7723, 0
      %v7761 = vsel %vm712, %v7724, 0
      %v7764 = vsel %vm712, %v7725, 0
      %v7767 = vsel %vm712, %v7726, 0
      %v7770 = vsel %vm712, %v7727, 0
      %v7773 = vsel %vm712, %v7728, 0
      %v7776 = vsel %vm712, %v7729, 0
      %v7779 = vsel %vm761, %v7681, 0
      %7781 = vmatprep.subr.bf16.mxu0 0
      %7782 = vmatpush1.bf16.msra.mxu0 %v7779
      %7783 = vmatprep.subr.bf16.mxu0 0
      %7784 = vmatpush1.bf16.msra.mxu0 0
      %7785 = vmatprep.subr.bf16.mxu0 0
      %7786 = vmatpush1.bf16.msra.mxu0 0
      %7787 = vmatprep.subr.bf16.mxu0 0
      %7788 = vmatpush1.bf16.msra.mxu0 0
      %7789 = vmatprep.subr.bf16.mxu0 0
      %7790 = vmatpush1.bf16.msra.mxu0 0
      %7791 = vmatprep.subr.bf16.mxu0 0
      %7792 = vmatpush1.bf16.msra.mxu0 0
      %7793 = vmatprep.subr.bf16.mxu0 0
      %7794 = vmatpush1.bf16.msra.mxu0 0
      %7795 = vmatprep.subr.bf16.mxu0 0
      %7796 = vmatpush1.bf16.msra.mxu0 0
      %7797 = vmatprep.subr.bf16.mxu0 0
      %7798 = vmatpush1.bf16.msra.mxu0 0
      %7799 = vmatprep.subr.bf16.mxu0 0
      %7800 = vmatpush1.bf16.msra.mxu0 0
      %7801 = vmatprep.subr.bf16.mxu0 0
      %7802 = vmatpush1.bf16.msra.mxu0 0
      %7803 = vmatprep.subr.bf16.mxu0 0
      %7804 = vmatpush1.bf16.msra.mxu0 0
      %7805 = vmatprep.subr.bf16.mxu0 0
      %7806 = vmatpush1.bf16.msra.mxu0 0
      %7807 = vmatprep.subr.bf16.mxu0 0
      %7808 = vmatpush1.bf16.msra.mxu0 0
      %7809 = vmatprep.subr.bf16.mxu0 0
      %7810 = vmatpush1.bf16.msra.mxu0 0
      %7811 = vmatprep.subr.bf16.mxu0 0
      %7812 = vmatpush1.bf16.msra.mxu0 0
      %7813 = vmatprep.mubr.bf16.mxu0 0
      %7814 = vmatmul.mubr.bf16.gmra.mrb[0].mxu0 %v7731
      %v7815 = vpop.f32.mrb[0].mxu0
      %v7816 = vadd.f32 0.0, %v7815
      %v7817 = vpop.f32.mrb[0].mxu0
      %v7818 = vpop.f32.mrb[0].mxu0
      %v7819 = vadd.f32 0.0, %v7818
      %v7820 = vpop.f32.mrb[0].mxu0
      %7821 = vmatprep.mubr.bf16.mxu0 0
      %7822 = vmatmul.mubr.bf16.gmra.mrb[0].mxu0 %v7734
      %v7823 = vpop.f32.mrb[0].mxu0
      %v7824 = vadd.f32 0.0, %v7823
      %v7825 = vpop.f32.mrb[0].mxu0
      %v7826 = vpop.f32.mrb[0].mxu0
      %v7827 = vadd.f32 0.0, %v7826
      %v7828 = vpop.f32.mrb[0].mxu0
      %7829 = vmatprep.mubr.bf16.mxu0 0
      %7830 = vmatmul.mubr.bf16.gmra.mrb[0].mxu0 %v7737
      %v7831 = vpop.f32.mrb[0].mxu0
      %v7832 = vadd.f32 0.0, %v7831
      %v7833 = vpop.f32.mrb[0].mxu0
      %v7834 = vpop.f32.mrb[0].mxu0
      %v7835 = vadd.f32 0.0, %v7834
      %v7836 = vpop.f32.mrb[0].mxu0
      %7837 = vmatprep.mubr.bf16.mxu0 0
      %7838 = vmatmul.mubr.bf16.gmra.mrb[0].mxu0 %v7740
      %v7839 = vpop.f32.mrb[0].mxu0
      %v7840 = vadd.f32 0.0, %v7839
      %v7841 = vpop.f32.mrb[0].mxu0
      %v7842 = vpop.f32.mrb[0].mxu0
      %v7843 = vadd.f32 0.0, %v7842
      %v7844 = vpop.f32.mrb[0].mxu0
      %7845 = vmatprep.mubr.bf16.mxu0 0
      %7846 = vmatmul.mubr.bf16.gmra.mrb[0].mxu0 %v7743
      %v7847 = vpop.f32.mrb[0].mxu0
      %v7848 = vadd.f32 0.0, %v7847
      %v7849 = vpop.f32.mrb[0].mxu0
      %v7850 = vpop.f32.mrb[0].mxu0
      %v7851 = vadd.f32 0.0, %v7850
      %v7852 = vpop.f32.mrb[0].mxu0
      %7853 = vmatprep.mubr.bf16.mxu0 0
      %7854 = vmatmul.mubr.bf16.gmra.mrb[0].mxu0 %v7746
      %v7855 = vpop.f32.mrb[0].mxu0
      %v7856 = vadd.f32 0.0, %v7855
      %v7857 = vpop.f32.mrb[0].mxu0
      %v7858 = vpop.f32.mrb[0].mxu0
      %v7859 = vadd.f32 0.0, %v7858
      %v7860 = vpop.f32.mrb[0].mxu0
      %7861 = vmatprep.mubr.bf16.mxu0 0
      %7862 = vmatmul.mubr.bf16.gmra.mrb[0].mxu0 %v7749
      %v7863 = vpop.f32.mrb[0].mxu0
      %v7864 = vadd.f32 0.0, %v7863
      %v7865 = vpop.f32.mrb[0].mxu0
      %v7866 = vpop.f32.mrb[0].mxu0
      %v7867 = vadd.f32 0.0, %v7866
      %v7868 = vpop.f32.mrb[0].mxu0
      %7869 = vmatprep.mubr.bf16.mxu0 0
      %7870 = vmatmul.mubr.bf16.gmra.mrb[0].mxu0 %v7752
      %v7871 = vpop.f32.mrb[0].mxu0
      %v7872 = vadd.f32 0.0, %v7871
      %v7873 = vpop.f32.mrb[0].mxu0
      %v7874 = vpop.f32.mrb[0].mxu0
      %v7875 = vadd.f32 0.0, %v7874
      %v7876 = vpop.f32.mrb[0].mxu0
      %7877 = vmatprep.mubr.bf16.mxu0 0
      %7878 = vmatmul.mubr.bf16.gmra.mrb[0].mxu0 %v7755
      %v7879 = vpop.f32.mrb[0].mxu0
      %v7880 = vadd.f32 0.0, %v7879
      %v7881 = vpop.f32.mrb[0].mxu0
      %v7882 = vpop.f32.mrb[0].mxu0
      %v7883 = vadd.f32 0.0, %v7882
      %v7884 = vpop.f32.mrb[0].mxu0
      %7885 = vmatprep.mubr.bf16.mxu0 0
      %7886 = vmatmul.mubr.bf16.gmra.mrb[0].mxu0 %v7758
      %v7887 = vpop.f32.mrb[0].mxu0
      %v7888 = vadd.f32 0.0, %v7887
      %v7889 = vpop.f32.mrb[0].mxu0
      %v7890 = vpop.f32.mrb[0].mxu0
      %v7891 = vadd.f32 0.0, %v7890
      %v7892 = vpop.f32.mrb[0].mxu0
      %7893 = vmatprep.mubr.bf16.mxu0 0
      %7894 = vmatmul.mubr.bf16.gmra.mrb[0].mxu0 %v7761
      %v7895 = vpop.f32.mrb[0].mxu0
      %v7896 = vadd.f32 0.0, %v7895
      %v7897 = vpop.f32.mrb[0].mxu0
      %v7898 = vpop.f32.mrb[0].mxu0
      %v7899 = vadd.f32 0.0, %v7898
      %v7900 = vpop.f32.mrb[0].mxu0
      %7901 = vmatprep.mubr.bf16.mxu0 0
      %7902 = vmatmul.mubr.bf16.gmra.mrb[0].mxu0 %v7764
      %v7903 = vpop.f32.mrb[0].mxu0
      %v7904 = vadd.f32 0.0, %v7903
      %v7905 = vpop.f32.mrb[0].mxu0
      %v7906 = vpop.f32.mrb[0].mxu0
      %v7907 = vadd.f32 0.0, %v7906
      %v7908 = vpop.f32.mrb[0].mxu0
      %7909 = vmatprep.mubr.bf16.mxu0 0
      %7910 = vmatmul.mubr.bf16.gmra.mrb[0].mxu0 %v7767
      %v7911 = vpop.f32.mrb[0].mxu0
      %v7912 = vadd.f32 0.0, %v7911
      %v7913 = vpop.f32.mrb[0].mxu0
      %v7914 = vpop.f32.mrb[0].mxu0
      %v7915 = vadd.f32 0.0, %v7914
      %v7916 = vpop.f32.mrb[0].mxu0
      %7917 = vmatprep.mubr.bf16.mxu0 0
      %7918 = vmatmul.mubr.bf16.gmra.mrb[0].mxu0 %v7770
      %v7919 = vpop.f32.mrb[0].mxu0
      %v7920 = vadd.f32 0.0, %v7919
      %v7921 = vpop.f32.mrb[0].mxu0
      %v7922 = vpop.f32.mrb[0].mxu0
      %v7923 = vadd.f32 0.0, %v7922
      %v7924 = vpop.f32.mrb[0].mxu0
      %7925 = vmatprep.mubr.bf16.mxu0 0
      %7926 = vmatmul.mubr.bf16.gmra.mrb[0].mxu0 %v7773
      %v7927 = vpop.f32.mrb[0].mxu0
      %v7928 = vadd.f32 0.0, %v7927
      %v7929 = vpop.f32.mrb[0].mxu0
      %v7930 = vpop.f32.mrb[0].mxu0
      %v7931 = vadd.f32 0.0, %v7930
      %v7932 = vpop.f32.mrb[0].mxu0
      %7933 = vmatprep.mubr.bf16.mxu0 0
      %7934 = vmatmul.mubr.bf16.gmra.mrb[0].mxu0 %v7776
      %v7935 = vpop.f32.mrb[0].mxu0
      %v7936 = vadd.f32 0.0, %v7935
      %v7937 = vpop.f32.mrb[0].mxu0
      %v7938 = vpop.f32.mrb[0].mxu0
      %v7939 = vadd.f32 0.0, %v7938
      %v7940 = vpop.f32.mrb[0].mxu0
      %7941 = vdwg.mxu0
      %v7942 = vadd.f32 %v7216, %v7816
      %v7943 = vadd.f32 %v7217, %v7819
      %v7944 = vadd.f32 %v7218, %v7824
      %v7945 = vadd.f32 %v7219, %v7827
      %v7946 = vadd.f32 %v7220, %v7832
      %v7947 = vadd.f32 %v7221, %v7835
      %v7948 = vadd.f32 %v7222, %v7840
      %v7949 = vadd.f32 %v7223, %v7843
      %v7950 = vadd.f32 %v7224, %v7848
      %v7951 = vadd.f32 %v7225, %v7851
      %v7952 = vadd.f32 %v7226, %v7856
      %v7953 = vadd.f32 %v7227, %v7859
      %v7954 = vadd.f32 %v7228, %v7864
      %v7955 = vadd.f32 %v7229, %v7867
      %v7956 = vadd.f32 %v7230, %v7872
      %v7957 = vadd.f32 %v7231, %v7875
      %v7958 = vadd.f32 %v7232, %v7880
      %v7959 = vadd.f32 %v7233, %v7883
      %v7960 = vadd.f32 %v7234, %v7888
      %v7961 = vadd.f32 %v7235, %v7891
      %v7962 = vadd.f32 %v7236, %v7896
      %v7963 = vadd.f32 %v7237, %v7899
      %v7964 = vadd.f32 %v7238, %v7904
      %v7965 = vadd.f32 %v7239, %v7907
      %v7966 = vadd.f32 %v7240, %v7912
      %v7967 = vadd.f32 %v7241, %v7915
      %v7968 = vadd.f32 %v7242, %v7920
      %v7969 = vadd.f32 %v7243, %v7923
      %v7970 = vadd.f32 %v7244, %v7928
      %v7971 = vadd.f32 %v7245, %v7931
      %v7972 = vadd.f32 %v7246, %v7936
      %v7973 = vadd.f32 %v7247, %v7939
      %v7974 = vld [vmem:[%s5331] sm:$0xe]
      %v7975 = vld [vmem:[%s5331 + $0xc] sm:$0xe]
      %v7976 = vld [vmem:[%s5331 + $0x18] sm:$0xe]
      %v7977 = vld [vmem:[%s5331 + $0x24] sm:$0xe]
      %v7978 = vld [vmem:[%s5331 + $0x30] sm:$0xe]
      %v7979 = vld [vmem:[%s5331 + $0x3c] sm:$0xe]
      %v7980 = vld [vmem:[%s5331 + $0x48] sm:$0xe]
      %v7981 = vld [vmem:[%s5331 + $0x54] sm:$0xe]
      %v7982 = vld [vmem:[%s5331 + $0x60] sm:$0xe]
      %v7983 = vld [vmem:[%s5331 + $0x6c] sm:$0xe]
      %v7984 = vld [vmem:[%s5331 + $0x78] sm:$0xe]
      %v7985 = vld [vmem:[%s5331 + $0x84] sm:$0xe]
      %v7986 = vld [vmem:[%s5331 + $0x90] sm:$0xe]
      %v7987 = vld [vmem:[%s5331 + $0x9c] sm:$0xe]
      %v7988 = vld [vmem:[%s5331 + $0xa8] sm:$0xe]
      %v7989 = vld [vmem:[%s5331 + $0xb4] sm:$0xe]
      %v8038 = vrot.slane %v7974, 5
      %v8039 = vrot.slane %v8038, 4
      %v8040 = vrot.slane %v7249, 5
      %v8041 = vsel %vm1268, %v8039, %v8040
      %v8042 = vrot.slane %v8040, 4
      %v8043 = vrot.slane %v7250, 5
      %v8044 = vsel %vm1268, %v8042, %v8043
      %v8045 = vrot.slane %v7975, 5
      %v8046 = vrot.slane %v8045, 4
      %v8047 = vrot.slane %v7252, 5
      %v8048 = vsel %vm1268, %v8046, %v8047
      %v8049 = vrot.slane %v8047, 4
      %v8050 = vrot.slane %v7253, 5
      %v8051 = vsel %vm1268, %v8049, %v8050
      %v8052 = vrot.slane %v7976, 5
      %v8053 = vrot.slane %v8052, 4
      %v8054 = vrot.slane %v7255, 5
      %v8055 = vsel %vm1268, %v8053, %v8054
      %v8056 = vrot.slane %v8054, 4
      %v8057 = vrot.slane %v7256, 5
      %v8058 = vsel %vm1268, %v8056, %v8057
      %v8059 = vrot.slane %v7977, 5
      %v8060 = vrot.slane %v8059, 4
      %v8061 = vrot.slane %v7258, 5
      %v8062 = vsel %vm1268, %v8060, %v8061
      %v8063 = vrot.slane %v8061, 4
      %v8064 = vrot.slane %v7259, 5
      %v8065 = vsel %vm1268, %v8063, %v8064
      %v8066 = vrot.slane %v7978, 5
      %v8067 = vrot.slane %v8066, 4
      %v8068 = vrot.slane %v7261, 5
      %v8069 = vsel %vm1268, %v8067, %v8068
      %v8070 = vrot.slane %v8068, 4
      %v8071 = vrot.slane %v7262, 5
      %v8072 = vsel %vm1268, %v8070, %v8071
      %v8073 = vrot.slane %v7979, 5
      %v8074 = vrot.slane %v8073, 4
      %v8075 = vrot.slane %v7264, 5
      %v8076 = vsel %vm1268, %v8074, %v8075
      %v8077 = vrot.slane %v8075, 4
      %v8078 = vrot.slane %v7265, 5
      %v8079 = vsel %vm1268, %v8077, %v8078
      %v8080 = vrot.slane %v7980, 5
      %v8081 = vrot.slane %v8080, 4
      %v8082 = vrot.slane %v7267, 5
      %v8083 = vsel %vm1268, %v8081, %v8082
      %v8084 = vrot.slane %v8082, 4
      %v8085 = vrot.slane %v7268, 5
      %v8086 = vsel %vm1268, %v8084, %v8085
      %v8087 = vrot.slane %v7981, 5
      %v8088 = vrot.slane %v8087, 4
      %v8089 = vrot.slane %v7270, 5
      %v8090 = vsel %vm1268, %v8088, %v8089
      %v8091 = vrot.slane %v8089, 4
      %v8092 = vrot.slane %v7271, 5
      %v8093 = vsel %vm1268, %v8091, %v8092
      %v8094 = vrot.slane %v7982, 5
      %v8095 = vrot.slane %v8094, 4
      %v8096 = vrot.slane %v7273, 5
      %v8097 = vsel %vm1268, %v8095, %v8096
      %v8098 = vrot.slane %v8096, 4
      %v8099 = vrot.slane %v7274, 5
      %v8100 = vsel %vm1268, %v8098, %v8099
      %v8101 = vrot.slane %v7983, 5
      %v8102 = vrot.slane %v8101, 4
      %v8103 = vrot.slane %v7276, 5
      %v8104 = vsel %vm1268, %v8102, %v8103
      %v8105 = vrot.slane %v8103, 4
      %v8106 = vrot.slane %v7277, 5
      %v8107 = vsel %vm1268, %v8105, %v8106
      %v8108 = vrot.slane %v7984, 5
      %v8109 = vrot.slane %v8108, 4
      %v8110 = vrot.slane %v7279, 5
      %v8111 = vsel %vm1268, %v8109, %v8110
      %v8112 = vrot.slane %v8110, 4
      %v8113 = vrot.slane %v7280, 5
      %v8114 = vsel %vm1268, %v8112, %v8113
      %v8115 = vrot.slane %v7985, 5
      %v8116 = vrot.slane %v8115, 4
      %v8117 = vrot.slane %v7282, 5
      %v8118 = vsel %vm1268, %v8116, %v8117
      %v8119 = vrot.slane %v8117, 4
      %v8120 = vrot.slane %v7283, 5
      %v8121 = vsel %vm1268, %v8119, %v8120
      %v8122 = vrot.slane %v7986, 5
      %v8123 = vrot.slane %v8122, 4
      %v8124 = vrot.slane %v7285, 5
      %v8125 = vsel %vm1268, %v8123, %v8124
      %v8126 = vrot.slane %v8124, 4
      %v8127 = vrot.slane %v7286, 5
      %v8128 = vsel %vm1268, %v8126, %v8127
      %v8129 = vrot.slane %v7987, 5
      %v8130 = vrot.slane %v8129, 4
      %v8131 = vrot.slane %v7288, 5
      %v8132 = vsel %vm1268, %v8130, %v8131
      %v8133 = vrot.slane %v8131, 4
      %v8134 = vrot.slane %v7289, 5
      %v8135 = vsel %vm1268, %v8133, %v8134
      %v8136 = vrot.slane %v7988, 5
      %v8137 = vrot.slane %v8136, 4
      %v8138 = vrot.slane %v7291, 5
      %v8139 = vsel %vm1268, %v8137, %v8138
      %v8140 = vrot.slane %v8138, 4
      %v8141 = vrot.slane %v7292, 5
      %v8142 = vsel %vm1268, %v8140, %v8141
      %v8143 = vrot.slane %v7989, 5
      %v8144 = vrot.slane %v8143, 4
      %v8145 = vrot.slane %v7294, 5
      %v8146 = vsel %vm1268, %v8144, %v8145
      %v8147 = vrot.slane %v8145, 4
      %v8148 = vrot.slane %v7295, 5
      %v8149 = vsel %vm1268, %v8147, %v8148
      %s8150 = scalar_lea.vmem %s3, 10
      %v8151 = vld [vmem:[%s8150] sm:$0x3]
      %v8152 = vunpack.c.l.b16 %v8041
      %v8153 = vunpack.c.l.b16 %v8044
      %v8154 = vunpack.c.l.b16 %v8048
      %v8155 = vunpack.c.l.b16 %v8051
      %v8156 = vunpack.c.l.b16 %v8055
      %v8157 = vunpack.c.l.b16 %v8058
      %v8158 = vunpack.c.l.b16 %v8062
      %v8159 = vunpack.c.l.b16 %v8065
      %v8160 = vunpack.c.l.b16 %v8069
      %v8161 = vunpack.c.l.b16 %v8072
      %v8162 = vunpack.c.l.b16 %v8076
      %v8163 = vunpack.c.l.b16 %v8079
      %v8164 = vunpack.c.l.b16 %v8083
      %v8165 = vunpack.c.l.b16 %v8086
      %v8166 = vunpack.c.l.b16 %v8090
      %v8167 = vunpack.c.l.b16 %v8093
      %v8168 = vunpack.c.l.b16 %v8097
      %v8169 = vunpack.c.l.b16 %v8100
      %v8170 = vunpack.c.l.b16 %v8104
      %v8171 = vunpack.c.l.b16 %v8107
      %v8172 = vunpack.c.l.b16 %v8111
      %v8173 = vunpack.c.l.b16 %v8114
      %v8174 = vunpack.c.l.b16 %v8118
      %v8175 = vunpack.c.l.b16 %v8121
      %v8176 = vunpack.c.l.b16 %v8125
      %v8177 = vunpack.c.l.b16 %v8128
      %v8178 = vunpack.c.l.b16 %v8132
      %v8179 = vunpack.c.l.b16 %v8135
      %v8180 = vunpack.c.l.b16 %v8139
      %v8181 = vunpack.c.l.b16 %v8142
      %v8182 = vunpack.c.l.b16 %v8146
      %v8183 = vunpack.c.l.b16 %v8149
      %v8184 = vpack.c.b16 %v8153, %v8152
      %v8185 = vpack.c.b16 %v8155, %v8154
      %v8186 = vpack.c.b16 %v8157, %v8156
      %v8187 = vpack.c.b16 %v8159, %v8158
      %v8188 = vpack.c.b16 %v8161, %v8160
      %v8189 = vpack.c.b16 %v8163, %v8162
      %v8190 = vpack.c.b16 %v8165, %v8164
      %v8191 = vpack.c.b16 %v8167, %v8166
      %v8192 = vpack.c.b16 %v8169, %v8168
      %v8193 = vpack.c.b16 %v8171, %v8170
      %v8194 = vpack.c.b16 %v8173, %v8172
      %v8195 = vpack.c.b16 %v8175, %v8174
      %v8196 = vpack.c.b16 %v8177, %v8176
      %v8197 = vpack.c.b16 %v8179, %v8178
      %v8198 = vpack.c.b16 %v8181, %v8180
      %v8199 = vpack.c.b16 %v8183, %v8182
      %v8201 = vsel %vm712, %v8184, 0
      %v8204 = vsel %vm712, %v8185, 0
      %v8207 = vsel %vm712, %v8186, 0
      %v8210 = vsel %vm712, %v8187, 0
      %v8213 = vsel %vm712, %v8188, 0
      %v8216 = vsel %vm712, %v8189, 0
      %v8219 = vsel %vm712, %v8190, 0
      %v8222 = vsel %vm712, %v8191, 0
      %v8225 = vsel %vm712, %v8192, 0
      %v8228 = vsel %vm712, %v8193, 0
      %v8231 = vsel %vm712, %v8194, 0
      %v8234 = vsel %vm712, %v8195, 0
      %v8237 = vsel %vm712, %v8196, 0
      %v8240 = vsel %vm712, %v8197, 0
      %v8243 = vsel %vm712, %v8198, 0
      %v8246 = vsel %vm712, %v8199, 0
      %v8249 = vsel %vm761, %v8151, 0
      %8251 = vmatprep.subr.bf16.mxu0 0
      %8252 = vmatpush1.bf16.msra.mxu0 %v8249
      %8253 = vmatprep.subr.bf16.mxu0 0
      %8254 = vmatpush1.bf16.msra.mxu0 0
      %8255 = vmatprep.subr.bf16.mxu0 0
      %8256 = vmatpush1.bf16.msra.mxu0 0
      %8257 = vmatprep.subr.bf16.mxu0 0
      %8258 = vmatpush1.bf16.msra.mxu0 0
      %8259 = vmatprep.subr.bf16.mxu0 0
      %8260 = vmatpush1.bf16.msra.mxu0 0
      %8261 = vmatprep.subr.bf16.mxu0 0
      %8262 = vmatpush1.bf16.msra.mxu0 0
      %8263 = vmatprep.subr.bf16.mxu0 0
      %8264 = vmatpush1.bf16.msra.mxu0 0
      %8265 = vmatprep.subr.bf16.mxu0 0
      %8266 = vmatpush1.bf16.msra.mxu0 0
      %8267 = vmatprep.subr.bf16.mxu0 0
      %8268 = vmatpush1.bf16.msra.mxu0 0
      %8269 = vmatprep.subr.bf16.mxu0 0
      %8270 = vmatpush1.bf16.msra.mxu0 0
      %8271 = vmatprep.subr.bf16.mxu0 0
      %8272 = vmatpush1.bf16.msra.mxu0 0
      %8273 = vmatprep.subr.bf16.mxu0 0
      %8274 = vmatpush1.bf16.msra.mxu0 0
      %8275 = vmatprep.subr.bf16.mxu0 0
      %8276 = vmatpush1.bf16.msra.mxu0 0
      %8277 = vmatprep.subr.bf16.mxu0 0
      %8278 = vmatpush1.bf16.msra.mxu0 0
      %8279 = vmatprep.subr.bf16.mxu0 0
      %8280 = vmatpush1.bf16.msra.mxu0 0
      %8281 = vmatprep.subr.bf16.mxu0 0
      %8282 = vmatpush1.bf16.msra.mxu0 0
      %8283 = vmatprep.mubr.bf16.mxu0 0
      %8284 = vmatmul.mubr.bf16.gmra.mrb[0].mxu0 %v8201
      %v8285 = vpop.f32.mrb[0].mxu0
      %v8286 = vadd.f32 0.0, %v8285
      %v8287 = vpop.f32.mrb[0].mxu0
      %v8288 = vpop.f32.mrb[0].mxu0
      %v8289 = vadd.f32 0.0, %v8288
      %v8290 = vpop.f32.mrb[0].mxu0
      %8291 = vmatprep.mubr.bf16.mxu0 0
      %8292 = vmatmul.mubr.bf16.gmra.mrb[0].mxu0 %v8204
      %v8293 = vpop.f32.mrb[0].mxu0
      %v8294 = vadd.f32 0.0, %v8293
      %v8295 = vpop.f32.mrb[0].mxu0
      %v8296 = vpop.f32.mrb[0].mxu0
      %v8297 = vadd.f32 0.0, %v8296
      %v8298 = vpop.f32.mrb[0].mxu0
      %8299 = vmatprep.mubr.bf16.mxu0 0
      %8300 = vmatmul.mubr.bf16.gmra.mrb[0].mxu0 %v8207
      %v8301 = vpop.f32.mrb[0].mxu0
      %v8302 = vadd.f32 0.0, %v8301
      %v8303 = vpop.f32.mrb[0].mxu0
      %v8304 = vpop.f32.mrb[0].mxu0
      %v8305 = vadd.f32 0.0, %v8304
      %v8306 = vpop.f32.mrb[0].mxu0
      %8307 = vmatprep.mubr.bf16.mxu0 0
      %8308 = vmatmul.mubr.bf16.gmra.mrb[0].mxu0 %v8210
      %v8309 = vpop.f32.mrb[0].mxu0
      %v8310 = vadd.f32 0.0, %v8309
      %v8311 = vpop.f32.mrb[0].mxu0
      %v8312 = vpop.f32.mrb[0].mxu0
      %v8313 = vadd.f32 0.0, %v8312
      %v8314 = vpop.f32.mrb[0].mxu0
      %8315 = vmatprep.mubr.bf16.mxu0 0
      %8316 = vmatmul.mubr.bf16.gmra.mrb[0].mxu0 %v8213
      %v8317 = vpop.f32.mrb[0].mxu0
      %v8318 = vadd.f32 0.0, %v8317
      %v8319 = vpop.f32.mrb[0].mxu0
      %v8320 = vpop.f32.mrb[0].mxu0
      %v8321 = vadd.f32 0.0, %v8320
      %v8322 = vpop.f32.mrb[0].mxu0
      %8323 = vmatprep.mubr.bf16.mxu0 0
      %8324 = vmatmul.mubr.bf16.gmra.mrb[0].mxu0 %v8216
      %v8325 = vpop.f32.mrb[0].mxu0
      %v8326 = vadd.f32 0.0, %v8325
      %v8327 = vpop.f32.mrb[0].mxu0
      %v8328 = vpop.f32.mrb[0].mxu0
      %v8329 = vadd.f32 0.0, %v8328
      %v8330 = vpop.f32.mrb[0].mxu0
      %8331 = vmatprep.mubr.bf16.mxu0 0
      %8332 = vmatmul.mubr.bf16.gmra.mrb[0].mxu0 %v8219
      %v8333 = vpop.f32.mrb[0].mxu0
      %v8334 = vadd.f32 0.0, %v8333
      %v8335 = vpop.f32.mrb[0].mxu0
      %v8336 = vpop.f32.mrb[0].mxu0
      %v8337 = vadd.f32 0.0, %v8336
      %v8338 = vpop.f32.mrb[0].mxu0
      %8339 = vmatprep.mubr.bf16.mxu0 0
      %8340 = vmatmul.mubr.bf16.gmra.mrb[0].mxu0 %v8222
      %v8341 = vpop.f32.mrb[0].mxu0
      %v8342 = vadd.f32 0.0, %v8341
      %v8343 = vpop.f32.mrb[0].mxu0
      %v8344 = vpop.f32.mrb[0].mxu0
      %v8345 = vadd.f32 0.0, %v8344
      %v8346 = vpop.f32.mrb[0].mxu0
      %8347 = vmatprep.mubr.bf16.mxu0 0
      %8348 = vmatmul.mubr.bf16.gmra.mrb[0].mxu0 %v8225
      %v8349 = vpop.f32.mrb[0].mxu0
      %v8350 = vadd.f32 0.0, %v8349
      %v8351 = vpop.f32.mrb[0].mxu0
      %v8352 = vpop.f32.mrb[0].mxu0
      %v8353 = vadd.f32 0.0, %v8352
      %v8354 = vpop.f32.mrb[0].mxu0
      %8355 = vmatprep.mubr.bf16.mxu0 0
      %8356 = vmatmul.mubr.bf16.gmra.mrb[0].mxu0 %v8228
      %v8357 = vpop.f32.mrb[0].mxu0
      %v8358 = vadd.f32 0.0, %v8357
      %v8359 = vpop.f32.mrb[0].mxu0
      %v8360 = vpop.f32.mrb[0].mxu0
      %v8361 = vadd.f32 0.0, %v8360
      %v8362 = vpop.f32.mrb[0].mxu0
      %8363 = vmatprep.mubr.bf16.mxu0 0
      %8364 = vmatmul.mubr.bf16.gmra.mrb[0].mxu0 %v8231
      %v8365 = vpop.f32.mrb[0].mxu0
      %v8366 = vadd.f32 0.0, %v8365
      %v8367 = vpop.f32.mrb[0].mxu0
      %v8368 = vpop.f32.mrb[0].mxu0
      %v8369 = vadd.f32 0.0, %v8368
      %v8370 = vpop.f32.mrb[0].mxu0
      %8371 = vmatprep.mubr.bf16.mxu0 0
      %8372 = vmatmul.mubr.bf16.gmra.mrb[0].mxu0 %v8234
      %v8373 = vpop.f32.mrb[0].mxu0
      %v8374 = vadd.f32 0.0, %v8373
      %v8375 = vpop.f32.mrb[0].mxu0
      %v8376 = vpop.f32.mrb[0].mxu0
      %v8377 = vadd.f32 0.0, %v8376
      %v8378 = vpop.f32.mrb[0].mxu0
      %8379 = vmatprep.mubr.bf16.mxu0 0
      %8380 = vmatmul.mubr.bf16.gmra.mrb[0].mxu0 %v8237
      %v8381 = vpop.f32.mrb[0].mxu0
      %v8382 = vadd.f32 0.0, %v8381
      %v8383 = vpop.f32.mrb[0].mxu0
      %v8384 = vpop.f32.mrb[0].mxu0
      %v8385 = vadd.f32 0.0, %v8384
      %v8386 = vpop.f32.mrb[0].mxu0
      %8387 = vmatprep.mubr.bf16.mxu0 0
      %8388 = vmatmul.mubr.bf16.gmra.mrb[0].mxu0 %v8240
      %v8389 = vpop.f32.mrb[0].mxu0
      %v8390 = vadd.f32 0.0, %v8389
      %v8391 = vpop.f32.mrb[0].mxu0
      %v8392 = vpop.f32.mrb[0].mxu0
      %v8393 = vadd.f32 0.0, %v8392
      %v8394 = vpop.f32.mrb[0].mxu0
      %8395 = vmatprep.mubr.bf16.mxu0 0
      %8396 = vmatmul.mubr.bf16.gmra.mrb[0].mxu0 %v8243
      %v8397 = vpop.f32.mrb[0].mxu0
      %v8398 = vadd.f32 0.0, %v8397
      %v8399 = vpop.f32.mrb[0].mxu0
      %v8400 = vpop.f32.mrb[0].mxu0
      %v8401 = vadd.f32 0.0, %v8400
      %v8402 = vpop.f32.mrb[0].mxu0
      %8403 = vmatprep.mubr.bf16.mxu0 0
      %8404 = vmatmul.mubr.bf16.gmra.mrb[0].mxu0 %v8246
      %v8405 = vpop.f32.mrb[0].mxu0
      %v8406 = vadd.f32 0.0, %v8405
      %v8407 = vpop.f32.mrb[0].mxu0
      %v8408 = vpop.f32.mrb[0].mxu0
      %v8409 = vadd.f32 0.0, %v8408
      %v8410 = vpop.f32.mrb[0].mxu0
      %8411 = vdwg.mxu0
      %v8412 = vadd.f32 %v7942, %v8286
      %v8413 = vadd.f32 %v7943, %v8289
      %v8414 = vadd.f32 %v7944, %v8294
      %v8415 = vadd.f32 %v7945, %v8297
      %v8416 = vadd.f32 %v7946, %v8302
      %v8417 = vadd.f32 %v7947, %v8305
      %v8418 = vadd.f32 %v7948, %v8310
      %v8419 = vadd.f32 %v7949, %v8313
      %v8420 = vadd.f32 %v7950, %v8318
      %v8421 = vadd.f32 %v7951, %v8321
      %v8422 = vadd.f32 %v7952, %v8326
      %v8423 = vadd.f32 %v7953, %v8329
      %v8424 = vadd.f32 %v7954, %v8334
      %v8425 = vadd.f32 %v7955, %v8337
      %v8426 = vadd.f32 %v7956, %v8342
      %v8427 = vadd.f32 %v7957, %v8345
      %v8428 = vadd.f32 %v7958, %v8350
      %v8429 = vadd.f32 %v7959, %v8353
      %v8430 = vadd.f32 %v7960, %v8358
      %v8431 = vadd.f32 %v7961, %v8361
      %v8432 = vadd.f32 %v7962, %v8366
      %v8433 = vadd.f32 %v7963, %v8369
      %v8434 = vadd.f32 %v7964, %v8374
      %v8435 = vadd.f32 %v7965, %v8377
      %v8436 = vadd.f32 %v7966, %v8382
      %v8437 = vadd.f32 %v7967, %v8385
      %v8438 = vadd.f32 %v7968, %v8390
      %v8439 = vadd.f32 %v7969, %v8393
      %v8440 = vadd.f32 %v7970, %v8398
      %v8441 = vadd.f32 %v7971, %v8401
      %v8442 = vadd.f32 %v7972, %v8406
      %v8443 = vadd.f32 %v7973, %v8409
      %s8444 = scalar_lea.vmem [#allocation2], 24
      %v8445 = vld [vmem:[%s8444] sm:$0xf]
      %v8446 = vld [vmem:[%s8444 + $0x4] sm:$0xf]
      %v8447 = vld [vmem:[%s8444 + $0xc] sm:$0xf]
      %v8448 = vld [vmem:[%s8444 + $0x10] sm:$0xf]
      %v8449 = vld [vmem:[%s8444 + $0x18] sm:$0xf]
      %v8450 = vld [vmem:[%s8444 + $0x1c] sm:$0xf]
      %v8451 = vld [vmem:[%s8444 + $0x24] sm:$0xf]
      %v8452 = vld [vmem:[%s8444 + $0x28] sm:$0xf]
      %v8453 = vld [vmem:[%s8444 + $0x30] sm:$0xf]
      %v8454 = vld [vmem:[%s8444 + $0x34] sm:$0xf]
      %v8455 = vld [vmem:[%s8444 + $0x3c] sm:$0xf]
      %v8456 = vld [vmem:[%s8444 + $0x40] sm:$0xf]
      %v8457 = vld [vmem:[%s8444 + $0x48] sm:$0xf]
      %v8458 = vld [vmem:[%s8444 + $0x4c] sm:$0xf]
      %v8459 = vld [vmem:[%s8444 + $0x54] sm:$0xf]
      %v8460 = vld [vmem:[%s8444 + $0x58] sm:$0xf]
      %v8461 = vld [vmem:[%s8444 + $0x60] sm:$0xf]
      %v8462 = vld [vmem:[%s8444 + $0x64] sm:$0xf]
      %v8463 = vld [vmem:[%s8444 + $0x6c] sm:$0xf]
      %v8464 = vld [vmem:[%s8444 + $0x70] sm:$0xf]
      %v8465 = vld [vmem:[%s8444 + $0x78] sm:$0xf]
      %v8466 = vld [vmem:[%s8444 + $0x7c] sm:$0xf]
      %v8467 = vld [vmem:[%s8444 + $0x84] sm:$0xf]
      %v8468 = vld [vmem:[%s8444 + $0x88] sm:$0xf]
      %v8469 = vld [vmem:[%s8444 + $0x90] sm:$0xf]
      %v8470 = vld [vmem:[%s8444 + $0x94] sm:$0xf]
      %v8471 = vld [vmem:[%s8444 + $0x9c] sm:$0xf]
      %v8472 = vld [vmem:[%s8444 + $0xa0] sm:$0xf]
      %v8473 = vld [vmem:[%s8444 + $0xa8] sm:$0xf]
      %v8474 = vld [vmem:[%s8444 + $0xac] sm:$0xf]
      %v8475 = vld [vmem:[%s8444 + $0xb4] sm:$0xf]
      %v8476 = vld [vmem:[%s8444 + $0xb8] sm:$0xf]
      %s8477 = scalar_lea.vmem %s3, 12
      %v8478 = vld [vmem:[%s8477] sm:$0x3]
      %v8511 = vunpack.c.l.b16 %v8445
      %v8512 = vunpack.c.l.b16 %v8446
      %v8513 = vunpack.c.l.b16 %v8447
      %v8514 = vunpack.c.l.b16 %v8448
      %v8515 = vunpack.c.l.b16 %v8449
      %v8516 = vunpack.c.l.b16 %v8450
      %v8517 = vunpack.c.l.b16 %v8451
      %v8518 = vunpack.c.l.b16 %v8452
      %v8519 = vunpack.c.l.b16 %v8453
      %v8520 = vunpack.c.l.b16 %v8454
      %v8521 = vunpack.c.l.b16 %v8455
      %v8522 = vunpack.c.l.b16 %v8456
      %v8523 = vunpack.c.l.b16 %v8457
      %v8524 = vunpack.c.l.b16 %v8458
      %v8525 = vunpack.c.l.b16 %v8459
      %v8526 = vunpack.c.l.b16 %v8460
      %v8527 = vunpack.c.l.b16 %v8461
      %v8528 = vunpack.c.l.b16 %v8462
      %v8529 = vunpack.c.l.b16 %v8463
      %v8530 = vunpack.c.l.b16 %v8464
      %v8531 = vunpack.c.l.b16 %v8465
      %v8532 = vunpack.c.l.b16 %v8466
      %v8533 = vunpack.c.l.b16 %v8467
      %v8534 = vunpack.c.l.b16 %v8468
      %v8535 = vunpack.c.l.b16 %v8469
      %v8536 = vunpack.c.l.b16 %v8470
      %v8537 = vunpack.c.l.b16 %v8471
      %v8538 = vunpack.c.l.b16 %v8472
      %v8539 = vunpack.c.l.b16 %v8473
      %v8540 = vunpack.c.l.b16 %v8474
      %v8541 = vunpack.c.l.b16 %v8475
      %v8542 = vunpack.c.l.b16 %v8476
      %v8543 = vpack.c.b16 %v8512, %v8511
      %v8544 = vpack.c.b16 %v8514, %v8513
      %v8545 = vpack.c.b16 %v8516, %v8515
      %v8546 = vpack.c.b16 %v8518, %v8517
      %v8547 = vpack.c.b16 %v8520, %v8519
      %v8548 = vpack.c.b16 %v8522, %v8521
      %v8549 = vpack.c.b16 %v8524, %v8523
      %v8550 = vpack.c.b16 %v8526, %v8525
      %v8551 = vpack.c.b16 %v8528, %v8527
      %v8552 = vpack.c.b16 %v8530, %v8529
      %v8553 = vpack.c.b16 %v8532, %v8531
      %v8554 = vpack.c.b16 %v8534, %v8533
      %v8555 = vpack.c.b16 %v8536, %v8535
      %v8556 = vpack.c.b16 %v8538, %v8537
      %v8557 = vpack.c.b16 %v8540, %v8539
      %v8558 = vpack.c.b16 %v8542, %v8541
      %v8560 = vsel %vm712, %v8543, 0
      %v8563 = vsel %vm712, %v8544, 0
      %v8566 = vsel %vm712, %v8545, 0
      %v8569 = vsel %vm712, %v8546, 0
      %v8572 = vsel %vm712, %v8547, 0
      %v8575 = vsel %vm712, %v8548, 0
      %v8578 = vsel %vm712, %v8549, 0
      %v8581 = vsel %vm712, %v8550, 0
      %v8584 = vsel %vm712, %v8551, 0
      %v8587 = vsel %vm712, %v8552, 0
      %v8590 = vsel %vm712, %v8553, 0
      %v8593 = vsel %vm712, %v8554, 0
      %v8596 = vsel %vm712, %v8555, 0
      %v8599 = vsel %vm712, %v8556, 0
      %v8602 = vsel %vm712, %v8557, 0
      %v8605 = vsel %vm712, %v8558, 0
      %v8608 = vsel %vm761, %v8478, 0
      %8610 = vmatprep.subr.bf16.mxu0 0
      %8611 = vmatpush1.bf16.msra.mxu0 %v8608
      %8612 = vmatprep.subr.bf16.mxu0 0
      %8613 = vmatpush1.bf16.msra.mxu0 0
      %8614 = vmatprep.subr.bf16.mxu0 0
      %8615 = vmatpush1.bf16.msra.mxu0 0
      %8616 = vmatprep.subr.bf16.mxu0 0
      %8617 = vmatpush1.bf16.msra.mxu0 0
      %8618 = vmatprep.subr.bf16.mxu0 0
      %8619 = vmatpush1.bf16.msra.mxu0 0
      %8620 = vmatprep.subr.bf16.mxu0 0
      %8621 = vmatpush1.bf16.msra.mxu0 0
      %8622 = vmatprep.subr.bf16.mxu0 0
      %8623 = vmatpush1.bf16.msra.mxu0 0
      %8624 = vmatprep.subr.bf16.mxu0 0
      %8625 = vmatpush1.bf16.msra.mxu0 0
      %8626 = vmatprep.subr.bf16.mxu0 0
      %8627 = vmatpush1.bf16.msra.mxu0 0
      %8628 = vmatprep.subr.bf16.mxu0 0
      %8629 = vmatpush1.bf16.msra.mxu0 0
      %8630 = vmatprep.subr.bf16.mxu0 0
      %8631 = vmatpush1.bf16.msra.mxu0 0
      %8632 = vmatprep.subr.bf16.mxu0 0
      %8633 = vmatpush1.bf16.msra.mxu0 0
      %8634 = vmatprep.subr.bf16.mxu0 0
      %8635 = vmatpush1.bf16.msra.mxu0 0
      %8636 = vmatprep.subr.bf16.mxu0 0
      %8637 = vmatpush1.bf16.msra.mxu0 0
      %8638 = vmatprep.subr.bf16.mxu0 0
      %8639 = vmatpush1.bf16.msra.mxu0 0
      %8640 = vmatprep.subr.bf16.mxu0 0
      %8641 = vmatpush1.bf16.msra.mxu0 0
      %8642 = vmatprep.mubr.bf16.mxu0 0
      %8643 = vmatmul.mubr.bf16.gmra.mrb[0].mxu0 %v8560
      %v8644 = vpop.f32.mrb[0].mxu0
      %v8645 = vadd.f32 0.0, %v8644
      %v8646 = vpop.f32.mrb[0].mxu0
      %v8647 = vpop.f32.mrb[0].mxu0
      %v8648 = vadd.f32 0.0, %v8647
      %v8649 = vpop.f32.mrb[0].mxu0
      %8650 = vmatprep.mubr.bf16.mxu0 0
      %8651 = vmatmul.mubr.bf16.gmra.mrb[0].mxu0 %v8563
      %v8652 = vpop.f32.mrb[0].mxu0
      %v8653 = vadd.f32 0.0, %v8652
      %v8654 = vpop.f32.mrb[0].mxu0
      %v8655 = vpop.f32.mrb[0].mxu0
      %v8656 = vadd.f32 0.0, %v8655
      %v8657 = vpop.f32.mrb[0].mxu0
      %8658 = vmatprep.mubr.bf16.mxu0 0
      %8659 = vmatmul.mubr.bf16.gmra.mrb[0].mxu0 %v8566
      %v8660 = vpop.f32.mrb[0].mxu0
      %v8661 = vadd.f32 0.0, %v8660
      %v8662 = vpop.f32.mrb[0].mxu0
      %v8663 = vpop.f32.mrb[0].mxu0
      %v8664 = vadd.f32 0.0, %v8663
      %v8665 = vpop.f32.mrb[0].mxu0
      %8666 = vmatprep.mubr.bf16.mxu0 0
      %8667 = vmatmul.mubr.bf16.gmra.mrb[0].mxu0 %v8569
      %v8668 = vpop.f32.mrb[0].mxu0
      %v8669 = vadd.f32 0.0, %v8668
      %v8670 = vpop.f32.mrb[0].mxu0
      %v8671 = vpop.f32.mrb[0].mxu0
      %v8672 = vadd.f32 0.0, %v8671
      %v8673 = vpop.f32.mrb[0].mxu0
      %8674 = vmatprep.mubr.bf16.mxu0 0
      %8675 = vmatmul.mubr.bf16.gmra.mrb[0].mxu0 %v8572
      %v8676 = vpop.f32.mrb[0].mxu0
      %v8677 = vadd.f32 0.0, %v8676
      %v8678 = vpop.f32.mrb[0].mxu0
      %v8679 = vpop.f32.mrb[0].mxu0
      %v8680 = vadd.f32 0.0, %v8679
      %v8681 = vpop.f32.mrb[0].mxu0
      %8682 = vmatprep.mubr.bf16.mxu0 0
      %8683 = vmatmul.mubr.bf16.gmra.mrb[0].mxu0 %v8575
      %v8684 = vpop.f32.mrb[0].mxu0
      %v8685 = vadd.f32 0.0, %v8684
      %v8686 = vpop.f32.mrb[0].mxu0
      %v8687 = vpop.f32.mrb[0].mxu0
      %v8688 = vadd.f32 0.0, %v8687
      %v8689 = vpop.f32.mrb[0].mxu0
      %8690 = vmatprep.mubr.bf16.mxu0 0
      %8691 = vmatmul.mubr.bf16.gmra.mrb[0].mxu0 %v8578
      %v8692 = vpop.f32.mrb[0].mxu0
      %v8693 = vadd.f32 0.0, %v8692
      %v8694 = vpop.f32.mrb[0].mxu0
      %v8695 = vpop.f32.mrb[0].mxu0
      %v8696 = vadd.f32 0.0, %v8695
      %v8697 = vpop.f32.mrb[0].mxu0
      %8698 = vmatprep.mubr.bf16.mxu0 0
      %8699 = vmatmul.mubr.bf16.gmra.mrb[0].mxu0 %v8581
      %v8700 = vpop.f32.mrb[0].mxu0
      %v8701 = vadd.f32 0.0, %v8700
      %v8702 = vpop.f32.mrb[0].mxu0
      %v8703 = vpop.f32.mrb[0].mxu0
      %v8704 = vadd.f32 0.0, %v8703
      %v8705 = vpop.f32.mrb[0].mxu0
      %8706 = vmatprep.mubr.bf16.mxu0 0
      %8707 = vmatmul.mubr.bf16.gmra.mrb[0].mxu0 %v8584
      %v8708 = vpop.f32.mrb[0].mxu0
      %v8709 = vadd.f32 0.0, %v8708
      %v8710 = vpop.f32.mrb[0].mxu0
      %v8711 = vpop.f32.mrb[0].mxu0
      %v8712 = vadd.f32 0.0, %v8711
      %v8713 = vpop.f32.mrb[0].mxu0
      %8714 = vmatprep.mubr.bf16.mxu0 0
      %8715 = vmatmul.mubr.bf16.gmra.mrb[0].mxu0 %v8587
      %v8716 = vpop.f32.mrb[0].mxu0
      %v8717 = vadd.f32 0.0, %v8716
      %v8718 = vpop.f32.mrb[0].mxu0
      %v8719 = vpop.f32.mrb[0].mxu0
      %v8720 = vadd.f32 0.0, %v8719
      %v8721 = vpop.f32.mrb[0].mxu0
      %8722 = vmatprep.mubr.bf16.mxu0 0
      %8723 = vmatmul.mubr.bf16.gmra.mrb[0].mxu0 %v8590
      %v8724 = vpop.f32.mrb[0].mxu0
      %v8725 = vadd.f32 0.0, %v8724
      %v8726 = vpop.f32.mrb[0].mxu0
      %v8727 = vpop.f32.mrb[0].mxu0
      %v8728 = vadd.f32 0.0, %v8727
      %v8729 = vpop.f32.mrb[0].mxu0
      %8730 = vmatprep.mubr.bf16.mxu0 0
      %8731 = vmatmul.mubr.bf16.gmra.mrb[0].mxu0 %v8593
      %v8732 = vpop.f32.mrb[0].mxu0
      %v8733 = vadd.f32 0.0, %v8732
      %v8734 = vpop.f32.mrb[0].mxu0
      %v8735 = vpop.f32.mrb[0].mxu0
      %v8736 = vadd.f32 0.0, %v8735
      %v8737 = vpop.f32.mrb[0].mxu0
      %8738 = vmatprep.mubr.bf16.mxu0 0
      %8739 = vmatmul.mubr.bf16.gmra.mrb[0].mxu0 %v8596
      %v8740 = vpop.f32.mrb[0].mxu0
      %v8741 = vadd.f32 0.0, %v8740
      %v8742 = vpop.f32.mrb[0].mxu0
      %v8743 = vpop.f32.mrb[0].mxu0
      %v8744 = vadd.f32 0.0, %v8743
      %v8745 = vpop.f32.mrb[0].mxu0
      %8746 = vmatprep.mubr.bf16.mxu0 0
      %8747 = vmatmul.mubr.bf16.gmra.mrb[0].mxu0 %v8599
      %v8748 = vpop.f32.mrb[0].mxu0
      %v8749 = vadd.f32 0.0, %v8748
      %v8750 = vpop.f32.mrb[0].mxu0
      %v8751 = vpop.f32.mrb[0].mxu0
      %v8752 = vadd.f32 0.0, %v8751
      %v8753 = vpop.f32.mrb[0].mxu0
      %8754 = vmatprep.mubr.bf16.mxu0 0
      %8755 = vmatmul.mubr.bf16.gmra.mrb[0].mxu0 %v8602
      %v8756 = vpop.f32.mrb[0].mxu0
      %v8757 = vadd.f32 0.0, %v8756
      %v8758 = vpop.f32.mrb[0].mxu0
      %v8759 = vpop.f32.mrb[0].mxu0
      %v8760 = vadd.f32 0.0, %v8759
      %v8761 = vpop.f32.mrb[0].mxu0
      %8762 = vmatprep.mubr.bf16.mxu0 0
      %8763 = vmatmul.mubr.bf16.gmra.mrb[0].mxu0 %v8605
      %v8764 = vpop.f32.mrb[0].mxu0
      %v8765 = vadd.f32 0.0, %v8764
      %v8766 = vpop.f32.mrb[0].mxu0
      %v8767 = vpop.f32.mrb[0].mxu0
      %v8768 = vadd.f32 0.0, %v8767
      %v8769 = vpop.f32.mrb[0].mxu0
      %8770 = vdwg.mxu0
      %v8771 = vadd.f32 %v8412, %v8645
      %v8772 = vadd.f32 %v8413, %v8648
      %v8773 = vadd.f32 %v8414, %v8653
      %v8774 = vadd.f32 %v8415, %v8656
      %v8775 = vadd.f32 %v8416, %v8661
      %v8776 = vadd.f32 %v8417, %v8664
      %v8777 = vadd.f32 %v8418, %v8669
      %v8778 = vadd.f32 %v8419, %v8672
      %v8779 = vadd.f32 %v8420, %v8677
      %v8780 = vadd.f32 %v8421, %v8680
      %v8781 = vadd.f32 %v8422, %v8685
      %v8782 = vadd.f32 %v8423, %v8688
      %v8783 = vadd.f32 %v8424, %v8693
      %v8784 = vadd.f32 %v8425, %v8696
      %v8785 = vadd.f32 %v8426, %v8701
      %v8786 = vadd.f32 %v8427, %v8704
      %v8787 = vadd.f32 %v8428, %v8709
      %v8788 = vadd.f32 %v8429, %v8712
      %v8789 = vadd.f32 %v8430, %v8717
      %v8790 = vadd.f32 %v8431, %v8720
      %v8791 = vadd.f32 %v8432, %v8725
      %v8792 = vadd.f32 %v8433, %v8728
      %v8793 = vadd.f32 %v8434, %v8733
      %v8794 = vadd.f32 %v8435, %v8736
      %v8795 = vadd.f32 %v8436, %v8741
      %v8796 = vadd.f32 %v8437, %v8744
      %v8797 = vadd.f32 %v8438, %v8749
      %v8798 = vadd.f32 %v8439, %v8752
      %v8799 = vadd.f32 %v8440, %v8757
      %v8800 = vadd.f32 %v8441, %v8760
      %v8801 = vadd.f32 %v8442, %v8765
      %v8802 = vadd.f32 %v8443, %v8768
      %v8803 = vld [vmem:[%s8444] sm:$0xf]
      %v8804 = vld [vmem:[%s8444 + $0x4] sm:$0xf]
      %v8805 = vld [vmem:[%s8444 + $0x8] sm:$0x1]
      %v8806 = vld [vmem:[%s8444 + $0xc] sm:$0xf]
      %v8807 = vld [vmem:[%s8444 + $0x10] sm:$0xf]
      %v8808 = vld [vmem:[%s8444 + $0x14] sm:$0x1]
      %v8809 = vld [vmem:[%s8444 + $0x18] sm:$0xf]
      %v8810 = vld [vmem:[%s8444 + $0x1c] sm:$0xf]
      %v8811 = vld [vmem:[%s8444 + $0x20] sm:$0x1]
      %v8812 = vld [vmem:[%s8444 + $0x24] sm:$0xf]
      %v8813 = vld [vmem:[%s8444 + $0x28] sm:$0xf]
      %v8814 = vld [vmem:[%s8444 + $0x2c] sm:$0x1]
      %v8815 = vld [vmem:[%s8444 + $0x30] sm:$0xf]
      %v8816 = vld [vmem:[%s8444 + $0x34] sm:$0xf]
      %v8817 = vld [vmem:[%s8444 + $0x38] sm:$0x1]
      %v8818 = vld [vmem:[%s8444 + $0x3c] sm:$0xf]
      %v8819 = vld [vmem:[%s8444 + $0x40] sm:$0xf]
      %v8820 = vld [vmem:[%s8444 + $0x44] sm:$0x1]
      %v8821 = vld [vmem:[%s8444 + $0x48] sm:$0xf]
      %v8822 = vld [vmem:[%s8444 + $0x4c] sm:$0xf]
      %v8823 = vld [vmem:[%s8444 + $0x50] sm:$0x1]
      %v8824 = vld [vmem:[%s8444 + $0x54] sm:$0xf]
      %v8825 = vld [vmem:[%s8444 + $0x58] sm:$0xf]
      %v8826 = vld [vmem:[%s8444 + $0x5c] sm:$0x1]
      %v8827 = vld [vmem:[%s8444 + $0x60] sm:$0xf]
      %v8828 = vld [vmem:[%s8444 + $0x64] sm:$0xf]
      %v8829 = vld [vmem:[%s8444 + $0x68] sm:$0x1]
      %v8830 = vld [vmem:[%s8444 + $0x6c] sm:$0xf]
      %v8831 = vld [vmem:[%s8444 + $0x70] sm:$0xf]
      %v8832 = vld [vmem:[%s8444 + $0x74] sm:$0x1]
      %v8833 = vld [vmem:[%s8444 + $0x78] sm:$0xf]
      %v8834 = vld [vmem:[%s8444 + $0x7c] sm:$0xf]
      %v8835 = vld [vmem:[%s8444 + $0x80] sm:$0x1]
      %v8836 = vld [vmem:[%s8444 + $0x84] sm:$0xf]
      %v8837 = vld [vmem:[%s8444 + $0x88] sm:$0xf]
      %v8838 = vld [vmem:[%s8444 + $0x8c] sm:$0x1]
      %v8839 = vld [vmem:[%s8444 + $0x90] sm:$0xf]
      %v8840 = vld [vmem:[%s8444 + $0x94] sm:$0xf]
      %v8841 = vld [vmem:[%s8444 + $0x98] sm:$0x1]
      %v8842 = vld [vmem:[%s8444 + $0x9c] sm:$0xf]
      %v8843 = vld [vmem:[%s8444 + $0xa0] sm:$0xf]
      %v8844 = vld [vmem:[%s8444 + $0xa4] sm:$0x1]
      %v8845 = vld [vmem:[%s8444 + $0xa8] sm:$0xf]
      %v8846 = vld [vmem:[%s8444 + $0xac] sm:$0xf]
      %v8847 = vld [vmem:[%s8444 + $0xb0] sm:$0x1]
      %v8848 = vld [vmem:[%s8444 + $0xb4] sm:$0xf]
      %v8849 = vld [vmem:[%s8444 + $0xb8] sm:$0xf]
      %v8850 = vld [vmem:[%s8444 + $0xbc] sm:$0x1]
      %v8852 = vshrl.u32 %v8803, 16
      %v8854 = vrot.slane %v8852, 4
      %v8855 = vshll.u32 %v8803, 16
      %v8857 = vrot.slane %v8855, 5
      %v8858 = vor.u32 %v8854, %v8857
      %v8859 = vrot.slane %v8858, 4
      %v8861 = vshll.u32 %v8804, 16
      %v8863 = vrot.slane %v8861, 5
      %v8864 = vsel %vm277, %v8859, %v8863
      %v8865 = vshrl.u32 %v8804, 16
      %v8867 = vrot.slane %v8865, 4
      %v8868 = vor.u32 %v8867, %v8863
      %v8869 = vrot.slane %v8868, 4
      %v8871 = vshll.u32 %v8805, 16
      %v8873 = vrot.slane %v8871, 5
      %v8874 = vsel %vm277, %v8869, %v8873
      %v8876 = vshrl.u32 %v8806, 16
      %v8878 = vrot.slane %v8876, 4
      %v8879 = vshll.u32 %v8806, 16
      %v8881 = vrot.slane %v8879, 5
      %v8882 = vor.u32 %v8878, %v8881
      %v8883 = vrot.slane %v8882, 4
      %v8885 = vshll.u32 %v8807, 16
      %v8887 = vrot.slane %v8885, 5
      %v8888 = vsel %vm277, %v8883, %v8887
      %v8889 = vshrl.u32 %v8807, 16
      %v8891 = vrot.slane %v8889, 4
      %v8892 = vor.u32 %v8891, %v8887
      %v8893 = vrot.slane %v8892, 4
      %v8895 = vshll.u32 %v8808, 16
      %v8897 = vrot.slane %v8895, 5
      %v8898 = vsel %vm277, %v8893, %v8897
      %v8900 = vshrl.u32 %v8809, 16
      %v8902 = vrot.slane %v8900, 4
      %v8903 = vshll.u32 %v8809, 16
      %v8905 = vrot.slane %v8903, 5
      %v8906 = vor.u32 %v8902, %v8905
      %v8907 = vrot.slane %v8906, 4
      %v8909 = vshll.u32 %v8810, 16
      %v8911 = vrot.slane %v8909, 5
      %v8912 = vsel %vm277, %v8907, %v8911
      %v8913 = vshrl.u32 %v8810, 16
      %v8915 = vrot.slane %v8913, 4
      %v8916 = vor.u32 %v8915, %v8911
      %v8917 = vrot.slane %v8916, 4
      %v8919 = vshll.u32 %v8811, 16
      %v8921 = vrot.slane %v8919, 5
      %v8922 = vsel %vm277, %v8917, %v8921
      %v8924 = vshrl.u32 %v8812, 16
      %v8926 = vrot.slane %v8924, 4
      %v8927 = vshll.u32 %v8812, 16
      %v8929 = vrot.slane %v8927, 5
      %v8930 = vor.u32 %v8926, %v8929
      %v8931 = vrot.slane %v8930, 4
      %v8933 = vshll.u32 %v8813, 16
      %v8935 = vrot.slane %v8933, 5
      %v8936 = vsel %vm277, %v8931, %v8935
      %v8937 = vshrl.u32 %v8813, 16
      %v8939 = vrot.slane %v8937, 4
      %v8940 = vor.u32 %v8939, %v8935
      %v8941 = vrot.slane %v8940, 4
      %v8943 = vshll.u32 %v8814, 16
      %v8945 = vrot.slane %v8943, 5
      %v8946 = vsel %vm277, %v8941, %v8945
      %v8948 = vshrl.u32 %v8815, 16
      %v8950 = vrot.slane %v8948, 4
      %v8951 = vshll.u32 %v8815, 16
      %v8953 = vrot.slane %v8951, 5
      %v8954 = vor.u32 %v8950, %v8953
      %v8955 = vrot.slane %v8954, 4
      %v8957 = vshll.u32 %v8816, 16
      %v8959 = vrot.slane %v8957, 5
      %v8960 = vsel %vm277, %v8955, %v8959
      %v8961 = vshrl.u32 %v8816, 16
      %v8963 = vrot.slane %v8961, 4
      %v8964 = vor.u32 %v8963, %v8959
      %v8965 = vrot.slane %v8964, 4
      %v8967 = vshll.u32 %v8817, 16
      %v8969 = vrot.slane %v8967, 5
      %v8970 = vsel %vm277, %v8965, %v8969
      %v8972 = vshrl.u32 %v8818, 16
      %v8974 = vrot.slane %v8972, 4
      %v8975 = vshll.u32 %v8818, 16
      %v8977 = vrot.slane %v8975, 5
      %v8978 = vor.u32 %v8974, %v8977
      %v8979 = vrot.slane %v8978, 4
      %v8981 = vshll.u32 %v8819, 16
      %v8983 = vrot.slane %v8981, 5
      %v8984 = vsel %vm277, %v8979, %v8983
      %v8985 = vshrl.u32 %v8819, 16
      %v8987 = vrot.slane %v8985, 4
      %v8988 = vor.u32 %v8987, %v8983
      %v8989 = vrot.slane %v8988, 4
      %v8991 = vshll.u32 %v8820, 16
      %v8993 = vrot.slane %v8991, 5
      %v8994 = vsel %vm277, %v8989, %v8993
      %v8996 = vshrl.u32 %v8821, 16
      %v8998 = vrot.slane %v8996, 4
      %v8999 = vshll.u32 %v8821, 16
      %v9001 = vrot.slane %v8999, 5
      %v9002 = vor.u32 %v8998, %v9001
      %v9003 = vrot.slane %v9002, 4
      %v9005 = vshll.u32 %v8822, 16
      %v9007 = vrot.slane %v9005, 5
      %v9008 = vsel %vm277, %v9003, %v9007
      %v9009 = vshrl.u32 %v8822, 16
      %v9011 = vrot.slane %v9009, 4
      %v9012 = vor.u32 %v9011, %v9007
      %v9013 = vrot.slane %v9012, 4
      %v9015 = vshll.u32 %v8823, 16
      %v9017 = vrot.slane %v9015, 5
      %v9018 = vsel %vm277, %v9013, %v9017
      %v9020 = vshrl.u32 %v8824, 16
      %v9022 = vrot.slane %v9020, 4
      %v9023 = vshll.u32 %v8824, 16
      %v9025 = vrot.slane %v9023, 5
      %v9026 = vor.u32 %v9022, %v9025
      %v9027 = vrot.slane %v9026, 4
      %v9029 = vshll.u32 %v8825, 16
      %v9031 = vrot.slane %v9029, 5
      %v9032 = vsel %vm277, %v9027, %v9031
      %v9033 = vshrl.u32 %v8825, 16
      %v9035 = vrot.slane %v9033, 4
      %v9036 = vor.u32 %v9035, %v9031
      %v9037 = vrot.slane %v9036, 4
      %v9039 = vshll.u32 %v8826, 16
      %v9041 = vrot.slane %v9039, 5
      %v9042 = vsel %vm277, %v9037, %v9041
      %v9044 = vshrl.u32 %v8827, 16
      %v9046 = vrot.slane %v9044, 4
      %v9047 = vshll.u32 %v8827, 16
      %v9049 = vrot.slane %v9047, 5
      %v9050 = vor.u32 %v9046, %v9049
      %v9051 = vrot.slane %v9050, 4
      %v9053 = vshll.u32 %v8828, 16
      %v9055 = vrot.slane %v9053, 5
      %v9056 = vsel %vm277, %v9051, %v9055
      %v9057 = vshrl.u32 %v8828, 16
      %v9059 = vrot.slane %v9057, 4
      %v9060 = vor.u32 %v9059, %v9055
      %v9061 = vrot.slane %v9060, 4
      %v9063 = vshll.u32 %v8829, 16
      %v9065 = vrot.slane %v9063, 5
      %v9066 = vsel %vm277, %v9061, %v9065
      %v9068 = vshrl.u32 %v8830, 16
      %v9070 = vrot.slane %v9068, 4
      %v9071 = vshll.u32 %v8830, 16
      %v9073 = vrot.slane %v9071, 5
      %v9074 = vor.u32 %v9070, %v9073
      %v9075 = vrot.slane %v9074, 4
      %v9077 = vshll.u32 %v8831, 16
      %v9079 = vrot.slane %v9077, 5
      %v9080 = vsel %vm277, %v9075, %v9079
      %v9081 = vshrl.u32 %v8831, 16
      %v9083 = vrot.slane %v9081, 4
      %v9084 = vor.u32 %v9083, %v9079
      %v9085 = vrot.slane %v9084, 4
      %v9087 = vshll.u32 %v8832, 16
      %v9089 = vrot.slane %v9087, 5
      %v9090 = vsel %vm277, %v9085, %v9089
      %v9092 = vshrl.u32 %v8833, 16
      %v9094 = vrot.slane %v9092, 4
      %v9095 = vshll.u32 %v8833, 16
      %v9097 = vrot.slane %v9095, 5
      %v9098 = vor.u32 %v9094, %v9097
      %v9099 = vrot.slane %v9098, 4
      %v9101 = vshll.u32 %v8834, 16
      %v9103 = vrot.slane %v9101, 5
      %v9104 = vsel %vm277, %v9099, %v9103
      %v9105 = vshrl.u32 %v8834, 16
      %v9107 = vrot.slane %v9105, 4
      %v9108 = vor.u32 %v9107, %v9103
      %v9109 = vrot.slane %v9108, 4
      %v9111 = vshll.u32 %v8835, 16
      %v9113 = vrot.slane %v9111, 5
      %v9114 = vsel %vm277, %v9109, %v9113
      %v9116 = vshrl.u32 %v8836, 16
      %v9118 = vrot.slane %v9116, 4
      %v9119 = vshll.u32 %v8836, 16
      %v9121 = vrot.slane %v9119, 5
      %v9122 = vor.u32 %v9118, %v9121
      %v9123 = vrot.slane %v9122, 4
      %v9125 = vshll.u32 %v8837, 16
      %v9127 = vrot.slane %v9125, 5
      %v9128 = vsel %vm277, %v9123, %v9127
      %v9129 = vshrl.u32 %v8837, 16
      %v9131 = vrot.slane %v9129, 4
      %v9132 = vor.u32 %v9131, %v9127
      %v9133 = vrot.slane %v9132, 4
      %v9135 = vshll.u32 %v8838, 16
      %v9137 = vrot.slane %v9135, 5
      %v9138 = vsel %vm277, %v9133, %v9137
      %v9140 = vshrl.u32 %v8839, 16
      %v9142 = vrot.slane %v9140, 4
      %v9143 = vshll.u32 %v8839, 16
      %v9145 = vrot.slane %v9143, 5
      %v9146 = vor.u32 %v9142, %v9145
      %v9147 = vrot.slane %v9146, 4
      %v9149 = vshll.u32 %v8840, 16
      %v9151 = vrot.slane %v9149, 5
      %v9152 = vsel %vm277, %v9147, %v9151
      %v9153 = vshrl.u32 %v8840, 16
      %v9155 = vrot.slane %v9153, 4
      %v9156 = vor.u32 %v9155, %v9151
      %v9157 = vrot.slane %v9156, 4
      %v9159 = vshll.u32 %v8841, 16
      %v9161 = vrot.slane %v9159, 5
      %v9162 = vsel %vm277, %v9157, %v9161
      %v9164 = vshrl.u32 %v8842, 16
      %v9166 = vrot.slane %v9164, 4
      %v9167 = vshll.u32 %v8842, 16
      %v9169 = vrot.slane %v9167, 5
      %v9170 = vor.u32 %v9166, %v9169
      %v9171 = vrot.slane %v9170, 4
      %v9173 = vshll.u32 %v8843, 16
      %v9175 = vrot.slane %v9173, 5
      %v9176 = vsel %vm277, %v9171, %v9175
      %v9177 = vshrl.u32 %v8843, 16
      %v9179 = vrot.slane %v9177, 4
      %v9180 = vor.u32 %v9179, %v9175
      %v9181 = vrot.slane %v9180, 4
      %v9183 = vshll.u32 %v8844, 16
      %v9185 = vrot.slane %v9183, 5
      %v9186 = vsel %vm277, %v9181, %v9185
      %v9188 = vshrl.u32 %v8845, 16
      %v9190 = vrot.slane %v9188, 4
      %v9191 = vshll.u32 %v8845, 16
      %v9193 = vrot.slane %v9191, 5
      %v9194 = vor.u32 %v9190, %v9193
      %v9195 = vrot.slane %v9194, 4
      %v9197 = vshll.u32 %v8846, 16
      %v9199 = vrot.slane %v9197, 5
      %v9200 = vsel %vm277, %v9195, %v9199
      %v9201 = vshrl.u32 %v8846, 16
      %v9203 = vrot.slane %v9201, 4
      %v9204 = vor.u32 %v9203, %v9199
      %v9205 = vrot.slane %v9204, 4
      %v9207 = vshll.u32 %v8847, 16
      %v9209 = vrot.slane %v9207, 5
      %v9210 = vsel %vm277, %v9205, %v9209
      %v9212 = vshrl.u32 %v8848, 16
      %v9214 = vrot.slane %v9212, 4
      %v9215 = vshll.u32 %v8848, 16
      %v9217 = vrot.slane %v9215, 5
      %v9218 = vor.u32 %v9214, %v9217
      %v9219 = vrot.slane %v9218, 4
      %v9221 = vshll.u32 %v8849, 16
      %v9223 = vrot.slane %v9221, 5
      %v9224 = vsel %vm277, %v9219, %v9223
      %v9225 = vshrl.u32 %v8849, 16
      %v9227 = vrot.slane %v9225, 4
      %v9228 = vor.u32 %v9227, %v9223
      %v9229 = vrot.slane %v9228, 4
      %v9231 = vshll.u32 %v8850, 16
      %v9233 = vrot.slane %v9231, 5
      %v9234 = vsel %vm277, %v9229, %v9233
      %s9235 = scalar_lea.vmem %s3, 14
      %v9236 = vld [vmem:[%s9235] sm:$0x3]
      %v9237 = vunpack.c.l.b16 %v8864
      %v9238 = vunpack.c.l.b16 %v8874
      %v9239 = vunpack.c.l.b16 %v8888
      %v9240 = vunpack.c.l.b16 %v8898
      %v9241 = vunpack.c.l.b16 %v8912
      %v9242 = vunpack.c.l.b16 %v8922
      %v9243 = vunpack.c.l.b16 %v8936
      %v9244 = vunpack.c.l.b16 %v8946
      %v9245 = vunpack.c.l.b16 %v8960
      %v9246 = vunpack.c.l.b16 %v8970
      %v9247 = vunpack.c.l.b16 %v8984
      %v9248 = vunpack.c.l.b16 %v8994
      %v9249 = vunpack.c.l.b16 %v9008
      %v9250 = vunpack.c.l.b16 %v9018
      %v9251 = vunpack.c.l.b16 %v9032
      %v9252 = vunpack.c.l.b16 %v9042
      %v9253 = vunpack.c.l.b16 %v9056
      %v9254 = vunpack.c.l.b16 %v9066
      %v9255 = vunpack.c.l.b16 %v9080
      %v9256 = vunpack.c.l.b16 %v9090
      %v9257 = vunpack.c.l.b16 %v9104
      %v9258 = vunpack.c.l.b16 %v9114
      %v9259 = vunpack.c.l.b16 %v9128
      %v9260 = vunpack.c.l.b16 %v9138
      %v9261 = vunpack.c.l.b16 %v9152
      %v9262 = vunpack.c.l.b16 %v9162
      %v9263 = vunpack.c.l.b16 %v9176
      %v9264 = vunpack.c.l.b16 %v9186
      %v9265 = vunpack.c.l.b16 %v9200
      %v9266 = vunpack.c.l.b16 %v9210
      %v9267 = vunpack.c.l.b16 %v9224
      %v9268 = vunpack.c.l.b16 %v9234
      %v9269 = vpack.c.b16 %v9238, %v9237
      %v9270 = vpack.c.b16 %v9240, %v9239
      %v9271 = vpack.c.b16 %v9242, %v9241
      %v9272 = vpack.c.b16 %v9244, %v9243
      %v9273 = vpack.c.b16 %v9246, %v9245
      %v9274 = vpack.c.b16 %v9248, %v9247
      %v9275 = vpack.c.b16 %v9250, %v9249
      %v9276 = vpack.c.b16 %v9252, %v9251
      %v9277 = vpack.c.b16 %v9254, %v9253
      %v9278 = vpack.c.b16 %v9256, %v9255
      %v9279 = vpack.c.b16 %v9258, %v9257
      %v9280 = vpack.c.b16 %v9260, %v9259
      %v9281 = vpack.c.b16 %v9262, %v9261
      %v9282 = vpack.c.b16 %v9264, %v9263
      %v9283 = vpack.c.b16 %v9266, %v9265
      %v9284 = vpack.c.b16 %v9268, %v9267
      %v9286 = vsel %vm712, %v9269, 0
      %v9289 = vsel %vm712, %v9270, 0
      %v9292 = vsel %vm712, %v9271, 0
      %v9295 = vsel %vm712, %v9272, 0
      %v9298 = vsel %vm712, %v9273, 0
      %v9301 = vsel %vm712, %v9274, 0
      %v9304 = vsel %vm712, %v9275, 0
      %v9307 = vsel %vm712, %v9276, 0
      %v9310 = vsel %vm712, %v9277, 0
      %v9313 = vsel %vm712, %v9278, 0
      %v9316 = vsel %vm712, %v9279, 0
      %v9319 = vsel %vm712, %v9280, 0
      %v9322 = vsel %vm712, %v9281, 0
      %v9325 = vsel %vm712, %v9282, 0
      %v9328 = vsel %vm712, %v9283, 0
      %v9331 = vsel %vm712, %v9284, 0
      %v9334 = vsel %vm761, %v9236, 0
      %9336 = vmatprep.subr.bf16.mxu0 0
      %9337 = vmatpush1.bf16.msra.mxu0 %v9334
      %9338 = vmatprep.subr.bf16.mxu0 0
      %9339 = vmatpush1.bf16.msra.mxu0 0
      %9340 = vmatprep.subr.bf16.mxu0 0
      %9341 = vmatpush1.bf16.msra.mxu0 0
      %9342 = vmatprep.subr.bf16.mxu0 0
      %9343 = vmatpush1.bf16.msra.mxu0 0
      %9344 = vmatprep.subr.bf16.mxu0 0
      %9345 = vmatpush1.bf16.msra.mxu0 0
      %9346 = vmatprep.subr.bf16.mxu0 0
      %9347 = vmatpush1.bf16.msra.mxu0 0
      %9348 = vmatprep.subr.bf16.mxu0 0
      %9349 = vmatpush1.bf16.msra.mxu0 0
      %9350 = vmatprep.subr.bf16.mxu0 0
      %9351 = vmatpush1.bf16.msra.mxu0 0
      %9352 = vmatprep.subr.bf16.mxu0 0
      %9353 = vmatpush1.bf16.msra.mxu0 0
      %9354 = vmatprep.subr.bf16.mxu0 0
      %9355 = vmatpush1.bf16.msra.mxu0 0
      %9356 = vmatprep.subr.bf16.mxu0 0
      %9357 = vmatpush1.bf16.msra.mxu0 0
      %9358 = vmatprep.subr.bf16.mxu0 0
      %9359 = vmatpush1.bf16.msra.mxu0 0
      %9360 = vmatprep.subr.bf16.mxu0 0
      %9361 = vmatpush1.bf16.msra.mxu0 0
      %9362 = vmatprep.subr.bf16.mxu0 0
      %9363 = vmatpush1.bf16.msra.mxu0 0
      %9364 = vmatprep.subr.bf16.mxu0 0
      %9365 = vmatpush1.bf16.msra.mxu0 0
      %9366 = vmatprep.subr.bf16.mxu0 0
      %9367 = vmatpush1.bf16.msra.mxu0 0
      %9368 = vmatprep.mubr.bf16.mxu0 0
      %9369 = vmatmul.mubr.bf16.gmra.mrb[0].mxu0 %v9286
      %v9370 = vpop.f32.mrb[0].mxu0
      %v9371 = vadd.f32 0.0, %v9370
      %v9372 = vpop.f32.mrb[0].mxu0
      %v9373 = vpop.f32.mrb[0].mxu0
      %v9374 = vadd.f32 0.0, %v9373
      %v9375 = vpop.f32.mrb[0].mxu0
      %9376 = vmatprep.mubr.bf16.mxu0 0
      %9377 = vmatmul.mubr.bf16.gmra.mrb[0].mxu0 %v9289
      %v9378 = vpop.f32.mrb[0].mxu0
      %v9379 = vadd.f32 0.0, %v9378
      %v9380 = vpop.f32.mrb[0].mxu0
      %v9381 = vpop.f32.mrb[0].mxu0
      %v9382 = vadd.f32 0.0, %v9381
      %v9383 = vpop.f32.mrb[0].mxu0
      %9384 = vmatprep.mubr.bf16.mxu0 0
      %9385 = vmatmul.mubr.bf16.gmra.mrb[0].mxu0 %v9292
      %v9386 = vpop.f32.mrb[0].mxu0
      %v9387 = vadd.f32 0.0, %v9386
      %v9388 = vpop.f32.mrb[0].mxu0
      %v9389 = vpop.f32.mrb[0].mxu0
      %v9390 = vadd.f32 0.0, %v9389
      %v9391 = vpop.f32.mrb[0].mxu0
      %9392 = vmatprep.mubr.bf16.mxu0 0
      %9393 = vmatmul.mubr.bf16.gmra.mrb[0].mxu0 %v9295
      %v9394 = vpop.f32.mrb[0].mxu0
      %v9395 = vadd.f32 0.0, %v9394
      %v9396 = vpop.f32.mrb[0].mxu0
      %v9397 = vpop.f32.mrb[0].mxu0
      %v9398 = vadd.f32 0.0, %v9397
      %v9399 = vpop.f32.mrb[0].mxu0
      %9400 = vmatprep.mubr.bf16.mxu0 0
      %9401 = vmatmul.mubr.bf16.gmra.mrb[0].mxu0 %v9298
      %v9402 = vpop.f32.mrb[0].mxu0
      %v9403 = vadd.f32 0.0, %v9402
      %v9404 = vpop.f32.mrb[0].mxu0
      %v9405 = vpop.f32.mrb[0].mxu0
      %v9406 = vadd.f32 0.0, %v9405
      %v9407 = vpop.f32.mrb[0].mxu0
      %9408 = vmatprep.mubr.bf16.mxu0 0
      %9409 = vmatmul.mubr.bf16.gmra.mrb[0].mxu0 %v9301
      %v9410 = vpop.f32.mrb[0].mxu0
      %v9411 = vadd.f32 0.0, %v9410
      %v9412 = vpop.f32.mrb[0].mxu0
      %v9413 = vpop.f32.mrb[0].mxu0
      %v9414 = vadd.f32 0.0, %v9413
      %v9415 = vpop.f32.mrb[0].mxu0
      %9416 = vmatprep.mubr.bf16.mxu0 0
      %9417 = vmatmul.mubr.bf16.gmra.mrb[0].mxu0 %v9304
      %v9418 = vpop.f32.mrb[0].mxu0
      %v9419 = vadd.f32 0.0, %v9418
      %v9420 = vpop.f32.mrb[0].mxu0
      %v9421 = vpop.f32.mrb[0].mxu0
      %v9422 = vadd.f32 0.0, %v9421
      %v9423 = vpop.f32.mrb[0].mxu0
      %9424 = vmatprep.mubr.bf16.mxu0 0
      %9425 = vmatmul.mubr.bf16.gmra.mrb[0].mxu0 %v9307
      %v9426 = vpop.f32.mrb[0].mxu0
      %v9427 = vadd.f32 0.0, %v9426
      %v9428 = vpop.f32.mrb[0].mxu0
      %v9429 = vpop.f32.mrb[0].mxu0
      %v9430 = vadd.f32 0.0, %v9429
      %v9431 = vpop.f32.mrb[0].mxu0
      %9432 = vmatprep.mubr.bf16.mxu0 0
      %9433 = vmatmul.mubr.bf16.gmra.mrb[0].mxu0 %v9310
      %v9434 = vpop.f32.mrb[0].mxu0
      %v9435 = vadd.f32 0.0, %v9434
      %v9436 = vpop.f32.mrb[0].mxu0
      %v9437 = vpop.f32.mrb[0].mxu0
      %v9438 = vadd.f32 0.0, %v9437
      %v9439 = vpop.f32.mrb[0].mxu0
      %9440 = vmatprep.mubr.bf16.mxu0 0
      %9441 = vmatmul.mubr.bf16.gmra.mrb[0].mxu0 %v9313
      %v9442 = vpop.f32.mrb[0].mxu0
      %v9443 = vadd.f32 0.0, %v9442
      %v9444 = vpop.f32.mrb[0].mxu0
      %v9445 = vpop.f32.mrb[0].mxu0
      %v9446 = vadd.f32 0.0, %v9445
      %v9447 = vpop.f32.mrb[0].mxu0
      %9448 = vmatprep.mubr.bf16.mxu0 0
      %9449 = vmatmul.mubr.bf16.gmra.mrb[0].mxu0 %v9316
      %v9450 = vpop.f32.mrb[0].mxu0
      %v9451 = vadd.f32 0.0, %v9450
      %v9452 = vpop.f32.mrb[0].mxu0
      %v9453 = vpop.f32.mrb[0].mxu0
      %v9454 = vadd.f32 0.0, %v9453
      %v9455 = vpop.f32.mrb[0].mxu0
      %9456 = vmatprep.mubr.bf16.mxu0 0
      %9457 = vmatmul.mubr.bf16.gmra.mrb[0].mxu0 %v9319
      %v9458 = vpop.f32.mrb[0].mxu0
      %v9459 = vadd.f32 0.0, %v9458
      %v9460 = vpop.f32.mrb[0].mxu0
      %v9461 = vpop.f32.mrb[0].mxu0
      %v9462 = vadd.f32 0.0, %v9461
      %v9463 = vpop.f32.mrb[0].mxu0
      %9464 = vmatprep.mubr.bf16.mxu0 0
      %9465 = vmatmul.mubr.bf16.gmra.mrb[0].mxu0 %v9322
      %v9466 = vpop.f32.mrb[0].mxu0
      %v9467 = vadd.f32 0.0, %v9466
      %v9468 = vpop.f32.mrb[0].mxu0
      %v9469 = vpop.f32.mrb[0].mxu0
      %v9470 = vadd.f32 0.0, %v9469
      %v9471 = vpop.f32.mrb[0].mxu0
      %9472 = vmatprep.mubr.bf16.mxu0 0
      %9473 = vmatmul.mubr.bf16.gmra.mrb[0].mxu0 %v9325
      %v9474 = vpop.f32.mrb[0].mxu0
      %v9475 = vadd.f32 0.0, %v9474
      %v9476 = vpop.f32.mrb[0].mxu0
      %v9477 = vpop.f32.mrb[0].mxu0
      %v9478 = vadd.f32 0.0, %v9477
      %v9479 = vpop.f32.mrb[0].mxu0
      %9480 = vmatprep.mubr.bf16.mxu0 0
      %9481 = vmatmul.mubr.bf16.gmra.mrb[0].mxu0 %v9328
      %v9482 = vpop.f32.mrb[0].mxu0
      %v9483 = vadd.f32 0.0, %v9482
      %v9484 = vpop.f32.mrb[0].mxu0
      %v9485 = vpop.f32.mrb[0].mxu0
      %v9486 = vadd.f32 0.0, %v9485
      %v9487 = vpop.f32.mrb[0].mxu0
      %9488 = vmatprep.mubr.bf16.mxu0 0
      %9489 = vmatmul.mubr.bf16.gmra.mrb[0].mxu0 %v9331
      %v9490 = vpop.f32.mrb[0].mxu0
      %v9491 = vadd.f32 0.0, %v9490
      %v9492 = vpop.f32.mrb[0].mxu0
      %v9493 = vpop.f32.mrb[0].mxu0
      %v9494 = vadd.f32 0.0, %v9493
      %v9495 = vpop.f32.mrb[0].mxu0
      %9496 = vdwg.mxu0
      %v9497 = vadd.f32 %v8771, %v9371
      %v9498 = vadd.f32 %v8772, %v9374
      %v9499 = vadd.f32 %v8773, %v9379
      %v9500 = vadd.f32 %v8774, %v9382
      %v9501 = vadd.f32 %v8775, %v9387
      %v9502 = vadd.f32 %v8776, %v9390
      %v9503 = vadd.f32 %v8777, %v9395
      %v9504 = vadd.f32 %v8778, %v9398
      %v9505 = vadd.f32 %v8779, %v9403
      %v9506 = vadd.f32 %v8780, %v9406
      %v9507 = vadd.f32 %v8781, %v9411
      %v9508 = vadd.f32 %v8782, %v9414
      %v9509 = vadd.f32 %v8783, %v9419
      %v9510 = vadd.f32 %v8784, %v9422
      %v9511 = vadd.f32 %v8785, %v9427
      %v9512 = vadd.f32 %v8786, %v9430
      %v9513 = vadd.f32 %v8787, %v9435
      %v9514 = vadd.f32 %v8788, %v9438
      %v9515 = vadd.f32 %v8789, %v9443
      %v9516 = vadd.f32 %v8790, %v9446
      %v9517 = vadd.f32 %v8791, %v9451
      %v9518 = vadd.f32 %v8792, %v9454
      %v9519 = vadd.f32 %v8793, %v9459
      %v9520 = vadd.f32 %v8794, %v9462
      %v9521 = vadd.f32 %v8795, %v9467
      %v9522 = vadd.f32 %v8796, %v9470
      %v9523 = vadd.f32 %v8797, %v9475
      %v9524 = vadd.f32 %v8798, %v9478
      %v9525 = vadd.f32 %v8799, %v9483
      %v9526 = vadd.f32 %v8800, %v9486
      %v9527 = vadd.f32 %v8801, %v9491
      %v9528 = vadd.f32 %v8802, %v9494
      %v9529 = vld [vmem:[%s8444] sm:$0xe]
      %v9530 = vld [vmem:[%s8444 + $0xc] sm:$0xe]
      %v9531 = vld [vmem:[%s8444 + $0x18] sm:$0xe]
      %v9532 = vld [vmem:[%s8444 + $0x24] sm:$0xe]
      %v9533 = vld [vmem:[%s8444 + $0x30] sm:$0xe]
      %v9534 = vld [vmem:[%s8444 + $0x3c] sm:$0xe]
      %v9535 = vld [vmem:[%s8444 + $0x48] sm:$0xe]
      %v9536 = vld [vmem:[%s8444 + $0x54] sm:$0xe]
      %v9537 = vld [vmem:[%s8444 + $0x60] sm:$0xe]
      %v9538 = vld [vmem:[%s8444 + $0x6c] sm:$0xe]
      %v9539 = vld [vmem:[%s8444 + $0x78] sm:$0xe]
      %v9540 = vld [vmem:[%s8444 + $0x84] sm:$0xe]
      %v9541 = vld [vmem:[%s8444 + $0x90] sm:$0xe]
      %v9542 = vld [vmem:[%s8444 + $0x9c] sm:$0xe]
      %v9543 = vld [vmem:[%s8444 + $0xa8] sm:$0xe]
      %v9544 = vld [vmem:[%s8444 + $0xb4] sm:$0xe]
      %v9593 = vrot.slane %v9529, 5
      %v9594 = vrot.slane %v9593, 4
      %v9595 = vrot.slane %v8804, 5
      %v9596 = vsel %vm1268, %v9594, %v9595
      %v9597 = vrot.slane %v9595, 4
      %v9598 = vrot.slane %v8805, 5
      %v9599 = vsel %vm1268, %v9597, %v9598
      %v9600 = vrot.slane %v9530, 5
      %v9601 = vrot.slane %v9600, 4
      %v9602 = vrot.slane %v8807, 5
      %v9603 = vsel %vm1268, %v9601, %v9602
      %v9604 = vrot.slane %v9602, 4
      %v9605 = vrot.slane %v8808, 5
      %v9606 = vsel %vm1268, %v9604, %v9605
      %v9607 = vrot.slane %v9531, 5
      %v9608 = vrot.slane %v9607, 4
      %v9609 = vrot.slane %v8810, 5
      %v9610 = vsel %vm1268, %v9608, %v9609
      %v9611 = vrot.slane %v9609, 4
      %v9612 = vrot.slane %v8811, 5
      %v9613 = vsel %vm1268, %v9611, %v9612
      %v9614 = vrot.slane %v9532, 5
      %v9615 = vrot.slane %v9614, 4
      %v9616 = vrot.slane %v8813, 5
      %v9617 = vsel %vm1268, %v9615, %v9616
      %v9618 = vrot.slane %v9616, 4
      %v9619 = vrot.slane %v8814, 5
      %v9620 = vsel %vm1268, %v9618, %v9619
      %v9621 = vrot.slane %v9533, 5
      %v9622 = vrot.slane %v9621, 4
      %v9623 = vrot.slane %v8816, 5
      %v9624 = vsel %vm1268, %v9622, %v9623
      %v9625 = vrot.slane %v9623, 4
      %v9626 = vrot.slane %v8817, 5
      %v9627 = vsel %vm1268, %v9625, %v9626
      %v9628 = vrot.slane %v9534, 5
      %v9629 = vrot.slane %v9628, 4
      %v9630 = vrot.slane %v8819, 5
      %v9631 = vsel %vm1268, %v9629, %v9630
      %v9632 = vrot.slane %v9630, 4
      %v9633 = vrot.slane %v8820, 5
      %v9634 = vsel %vm1268, %v9632, %v9633
      %v9635 = vrot.slane %v9535, 5
      %v9636 = vrot.slane %v9635, 4
      %v9637 = vrot.slane %v8822, 5
      %v9638 = vsel %vm1268, %v9636, %v9637
      %v9639 = vrot.slane %v9637, 4
      %v9640 = vrot.slane %v8823, 5
      %v9641 = vsel %vm1268, %v9639, %v9640
      %v9642 = vrot.slane %v9536, 5
      %v9643 = vrot.slane %v9642, 4
      %v9644 = vrot.slane %v8825, 5
      %v9645 = vsel %vm1268, %v9643, %v9644
      %v9646 = vrot.slane %v9644, 4
      %v9647 = vrot.slane %v8826, 5
      %v9648 = vsel %vm1268, %v9646, %v9647
      %v9649 = vrot.slane %v9537, 5
      %v9650 = vrot.slane %v9649, 4
      %v9651 = vrot.slane %v8828, 5
      %v9652 = vsel %vm1268, %v9650, %v9651
      %v9653 = vrot.slane %v9651, 4
      %v9654 = vrot.slane %v8829, 5
      %v9655 = vsel %vm1268, %v9653, %v9654
      %v9656 = vrot.slane %v9538, 5
      %v9657 = vrot.slane %v9656, 4
      %v9658 = vrot.slane %v8831, 5
      %v9659 = vsel %vm1268, %v9657, %v9658
      %v9660 = vrot.slane %v9658, 4
      %v9661 = vrot.slane %v8832, 5
      %v9662 = vsel %vm1268, %v9660, %v9661
      %v9663 = vrot.slane %v9539, 5
      %v9664 = vrot.slane %v9663, 4
      %v9665 = vrot.slane %v8834, 5
      %v9666 = vsel %vm1268, %v9664, %v9665
      %v9667 = vrot.slane %v9665, 4
      %v9668 = vrot.slane %v8835, 5
      %v9669 = vsel %vm1268, %v9667, %v9668
      %v9670 = vrot.slane %v9540, 5
      %v9671 = vrot.slane %v9670, 4
      %v9672 = vrot.slane %v8837, 5
      %v9673 = vsel %vm1268, %v9671, %v9672
      %v9674 = vrot.slane %v9672, 4
      %v9675 = vrot.slane %v8838, 5
      %v9676 = vsel %vm1268, %v9674, %v9675
      %v9677 = vrot.slane %v9541, 5
      %v9678 = vrot.slane %v9677, 4
      %v9679 = vrot.slane %v8840, 5
      %v9680 = vsel %vm1268, %v9678, %v9679
      %v9681 = vrot.slane %v9679, 4
      %v9682 = vrot.slane %v8841, 5
      %v9683 = vsel %vm1268, %v9681, %v9682
      %v9684 = vrot.slane %v9542, 5
      %v9685 = vrot.slane %v9684, 4
      %v9686 = vrot.slane %v8843, 5
      %v9687 = vsel %vm1268, %v9685, %v9686
      %v9688 = vrot.slane %v9686, 4
      %v9689 = vrot.slane %v8844, 5
      %v9690 = vsel %vm1268, %v9688, %v9689
      %v9691 = vrot.slane %v9543, 5
      %v9692 = vrot.slane %v9691, 4
      %v9693 = vrot.slane %v8846, 5
      %v9694 = vsel %vm1268, %v9692, %v9693
      %v9695 = vrot.slane %v9693, 4
      %v9696 = vrot.slane %v8847, 5
      %v9697 = vsel %vm1268, %v9695, %v9696
      %v9698 = vrot.slane %v9544, 5
      %v9699 = vrot.slane %v9698, 4
      %v9700 = vrot.slane %v8849, 5
      %v9701 = vsel %vm1268, %v9699, %v9700
      %v9702 = vrot.slane %v9700, 4
      %v9703 = vrot.slane %v8850, 5
      %v9704 = vsel %vm1268, %v9702, %v9703
      %s9705 = scalar_lea.vmem %s3, 16
      %v9706 = vld [vmem:[%s9705] sm:$0x3]
      %v9707 = vunpack.c.l.b16 %v9596
      %v9708 = vunpack.c.l.b16 %v9599
      %v9709 = vunpack.c.l.b16 %v9603
      %v9710 = vunpack.c.l.b16 %v9606
      %v9711 = vunpack.c.l.b16 %v9610
      %v9712 = vunpack.c.l.b16 %v9613
      %v9713 = vunpack.c.l.b16 %v9617
      %v9714 = vunpack.c.l.b16 %v9620
      %v9715 = vunpack.c.l.b16 %v9624
      %v9716 = vunpack.c.l.b16 %v9627
      %v9717 = vunpack.c.l.b16 %v9631
      %v9718 = vunpack.c.l.b16 %v9634
      %v9719 = vunpack.c.l.b16 %v9638
      %v9720 = vunpack.c.l.b16 %v9641
      %v9721 = vunpack.c.l.b16 %v9645
      %v9722 = vunpack.c.l.b16 %v9648
      %v9723 = vunpack.c.l.b16 %v9652
      %v9724 = vunpack.c.l.b16 %v9655
      %v9725 = vunpack.c.l.b16 %v9659
      %v9726 = vunpack.c.l.b16 %v9662
      %v9727 = vunpack.c.l.b16 %v9666
      %v9728 = vunpack.c.l.b16 %v9669
      %v9729 = vunpack.c.l.b16 %v9673
      %v9730 = vunpack.c.l.b16 %v9676
      %v9731 = vunpack.c.l.b16 %v9680
      %v9732 = vunpack.c.l.b16 %v9683
      %v9733 = vunpack.c.l.b16 %v9687
      %v9734 = vunpack.c.l.b16 %v9690
      %v9735 = vunpack.c.l.b16 %v9694
      %v9736 = vunpack.c.l.b16 %v9697
      %v9737 = vunpack.c.l.b16 %v9701
      %v9738 = vunpack.c.l.b16 %v9704
      %v9739 = vpack.c.b16 %v9708, %v9707
      %v9740 = vpack.c.b16 %v9710, %v9709
      %v9741 = vpack.c.b16 %v9712, %v9711
      %v9742 = vpack.c.b16 %v9714, %v9713
      %v9743 = vpack.c.b16 %v9716, %v9715
      %v9744 = vpack.c.b16 %v9718, %v9717
      %v9745 = vpack.c.b16 %v9720, %v9719
      %v9746 = vpack.c.b16 %v9722, %v9721
      %v9747 = vpack.c.b16 %v9724, %v9723
      %v9748 = vpack.c.b16 %v9726, %v9725
      %v9749 = vpack.c.b16 %v9728, %v9727
      %v9750 = vpack.c.b16 %v9730, %v9729
      %v9751 = vpack.c.b16 %v9732, %v9731
      %v9752 = vpack.c.b16 %v9734, %v9733
      %v9753 = vpack.c.b16 %v9736, %v9735
      %v9754 = vpack.c.b16 %v9738, %v9737
      %v9756 = vsel %vm712, %v9739, 0
      %v9759 = vsel %vm712, %v9740, 0
      %v9762 = vsel %vm712, %v9741, 0
      %v9765 = vsel %vm712, %v9742, 0
      %v9768 = vsel %vm712, %v9743, 0
      %v9771 = vsel %vm712, %v9744, 0
      %v9774 = vsel %vm712, %v9745, 0
      %v9777 = vsel %vm712, %v9746, 0
      %v9780 = vsel %vm712, %v9747, 0
      %v9783 = vsel %vm712, %v9748, 0
      %v9786 = vsel %vm712, %v9749, 0
      %v9789 = vsel %vm712, %v9750, 0
      %v9792 = vsel %vm712, %v9751, 0
      %v9795 = vsel %vm712, %v9752, 0
      %v9798 = vsel %vm712, %v9753, 0
      %v9801 = vsel %vm712, %v9754, 0
      %v9804 = vsel %vm761, %v9706, 0
      %9806 = vmatprep.subr.bf16.mxu0 0
      %9807 = vmatpush1.bf16.msra.mxu0 %v9804
      %9808 = vmatprep.subr.bf16.mxu0 0
      %9809 = vmatpush1.bf16.msra.mxu0 0
      %9810 = vmatprep.subr.bf16.mxu0 0
      %9811 = vmatpush1.bf16.msra.mxu0 0
      %9812 = vmatprep.subr.bf16.mxu0 0
      %9813 = vmatpush1.bf16.msra.mxu0 0
      %9814 = vmatprep.subr.bf16.mxu0 0
      %9815 = vmatpush1.bf16.msra.mxu0 0
      %9816 = vmatprep.subr.bf16.mxu0 0
      %9817 = vmatpush1.bf16.msra.mxu0 0
      %9818 = vmatprep.subr.bf16.mxu0 0
      %9819 = vmatpush1.bf16.msra.mxu0 0
      %9820 = vmatprep.subr.bf16.mxu0 0
      %9821 = vmatpush1.bf16.msra.mxu0 0
      %9822 = vmatprep.subr.bf16.mxu0 0
      %9823 = vmatpush1.bf16.msra.mxu0 0
      %9824 = vmatprep.subr.bf16.mxu0 0
      %9825 = vmatpush1.bf16.msra.mxu0 0
      %9826 = vmatprep.subr.bf16.mxu0 0
      %9827 = vmatpush1.bf16.msra.mxu0 0
      %9828 = vmatprep.subr.bf16.mxu0 0
      %9829 = vmatpush1.bf16.msra.mxu0 0
      %9830 = vmatprep.subr.bf16.mxu0 0
      %9831 = vmatpush1.bf16.msra.mxu0 0
      %9832 = vmatprep.subr.bf16.mxu0 0
      %9833 = vmatpush1.bf16.msra.mxu0 0
      %9834 = vmatprep.subr.bf16.mxu0 0
      %9835 = vmatpush1.bf16.msra.mxu0 0
      %9836 = vmatprep.subr.bf16.mxu0 0
      %9837 = vmatpush1.bf16.msra.mxu0 0
      %9838 = vmatprep.mubr.bf16.mxu0 0
      %9839 = vmatmul.mubr.bf16.gmra.mrb[0].mxu0 %v9756
      %v9840 = vpop.f32.mrb[0].mxu0
      %v9841 = vadd.f32 0.0, %v9840
      %v9842 = vpop.f32.mrb[0].mxu0
      %v9843 = vpop.f32.mrb[0].mxu0
      %v9844 = vadd.f32 0.0, %v9843
      %v9845 = vpop.f32.mrb[0].mxu0
      %9846 = vmatprep.mubr.bf16.mxu0 0
      %9847 = vmatmul.mubr.bf16.gmra.mrb[0].mxu0 %v9759
      %v9848 = vpop.f32.mrb[0].mxu0
      %v9849 = vadd.f32 0.0, %v9848
      %v9850 = vpop.f32.mrb[0].mxu0
      %v9851 = vpop.f32.mrb[0].mxu0
      %v9852 = vadd.f32 0.0, %v9851
      %v9853 = vpop.f32.mrb[0].mxu0
      %9854 = vmatprep.mubr.bf16.mxu0 0
      %9855 = vmatmul.mubr.bf16.gmra.mrb[0].mxu0 %v9762
      %v9856 = vpop.f32.mrb[0].mxu0
      %v9857 = vadd.f32 0.0, %v9856
      %v9858 = vpop.f32.mrb[0].mxu0
      %v9859 = vpop.f32.mrb[0].mxu0
      %v9860 = vadd.f32 0.0, %v9859
      %v9861 = vpop.f32.mrb[0].mxu0
      %9862 = vmatprep.mubr.bf16.mxu0 0
      %9863 = vmatmul.mubr.bf16.gmra.mrb[0].mxu0 %v9765
      %v9864 = vpop.f32.mrb[0].mxu0
      %v9865 = vadd.f32 0.0, %v9864
      %v9866 = vpop.f32.mrb[0].mxu0
      %v9867 = vpop.f32.mrb[0].mxu0
      %v9868 = vadd.f32 0.0, %v9867
      %v9869 = vpop.f32.mrb[0].mxu0
      %9870 = vmatprep.mubr.bf16.mxu0 0
      %9871 = vmatmul.mubr.bf16.gmra.mrb[0].mxu0 %v9768
      %v9872 = vpop.f32.mrb[0].mxu0
      %v9873 = vadd.f32 0.0, %v9872
      %v9874 = vpop.f32.mrb[0].mxu0
      %v9875 = vpop.f32.mrb[0].mxu0
      %v9876 = vadd.f32 0.0, %v9875
      %v9877 = vpop.f32.mrb[0].mxu0
      %9878 = vmatprep.mubr.bf16.mxu0 0
      %9879 = vmatmul.mubr.bf16.gmra.mrb[0].mxu0 %v9771
      %v9880 = vpop.f32.mrb[0].mxu0
      %v9881 = vadd.f32 0.0, %v9880
      %v9882 = vpop.f32.mrb[0].mxu0
      %v9883 = vpop.f32.mrb[0].mxu0
      %v9884 = vadd.f32 0.0, %v9883
      %v9885 = vpop.f32.mrb[0].mxu0
      %9886 = vmatprep.mubr.bf16.mxu0 0
      %9887 = vmatmul.mubr.bf16.gmra.mrb[0].mxu0 %v9774
      %v9888 = vpop.f32.mrb[0].mxu0
      %v9889 = vadd.f32 0.0, %v9888
      %v9890 = vpop.f32.mrb[0].mxu0
      %v9891 = vpop.f32.mrb[0].mxu0
      %v9892 = vadd.f32 0.0, %v9891
      %v9893 = vpop.f32.mrb[0].mxu0
      %9894 = vmatprep.mubr.bf16.mxu0 0
      %9895 = vmatmul.mubr.bf16.gmra.mrb[0].mxu0 %v9777
      %v9896 = vpop.f32.mrb[0].mxu0
      %v9897 = vadd.f32 0.0, %v9896
      %v9898 = vpop.f32.mrb[0].mxu0
      %v9899 = vpop.f32.mrb[0].mxu0
      %v9900 = vadd.f32 0.0, %v9899
      %v9901 = vpop.f32.mrb[0].mxu0
      %9902 = vmatprep.mubr.bf16.mxu0 0
      %9903 = vmatmul.mubr.bf16.gmra.mrb[0].mxu0 %v9780
      %v9904 = vpop.f32.mrb[0].mxu0
      %v9905 = vadd.f32 0.0, %v9904
      %v9906 = vpop.f32.mrb[0].mxu0
      %v9907 = vpop.f32.mrb[0].mxu0
      %v9908 = vadd.f32 0.0, %v9907
      %v9909 = vpop.f32.mrb[0].mxu0
      %9910 = vmatprep.mubr.bf16.mxu0 0
      %9911 = vmatmul.mubr.bf16.gmra.mrb[0].mxu0 %v9783
      %v9912 = vpop.f32.mrb[0].mxu0
      %v9913 = vadd.f32 0.0, %v9912
      %v9914 = vpop.f32.mrb[0].mxu0
      %v9915 = vpop.f32.mrb[0].mxu0
      %v9916 = vadd.f32 0.0, %v9915
      %v9917 = vpop.f32.mrb[0].mxu0
      %9918 = vmatprep.mubr.bf16.mxu0 0
      %9919 = vmatmul.mubr.bf16.gmra.mrb[0].mxu0 %v9786
      %v9920 = vpop.f32.mrb[0].mxu0
      %v9921 = vadd.f32 0.0, %v9920
      %v9922 = vpop.f32.mrb[0].mxu0
      %v9923 = vpop.f32.mrb[0].mxu0
      %v9924 = vadd.f32 0.0, %v9923
      %v9925 = vpop.f32.mrb[0].mxu0
      %9926 = vmatprep.mubr.bf16.mxu0 0
      %9927 = vmatmul.mubr.bf16.gmra.mrb[0].mxu0 %v9789
      %v9928 = vpop.f32.mrb[0].mxu0
      %v9929 = vadd.f32 0.0, %v9928
      %v9930 = vpop.f32.mrb[0].mxu0
      %v9931 = vpop.f32.mrb[0].mxu0
      %v9932 = vadd.f32 0.0, %v9931
      %v9933 = vpop.f32.mrb[0].mxu0
      %9934 = vmatprep.mubr.bf16.mxu0 0
      %9935 = vmatmul.mubr.bf16.gmra.mrb[0].mxu0 %v9792
      %v9936 = vpop.f32.mrb[0].mxu0
      %v9937 = vadd.f32 0.0, %v9936
      %v9938 = vpop.f32.mrb[0].mxu0
      %v9939 = vpop.f32.mrb[0].mxu0
      %v9940 = vadd.f32 0.0, %v9939
      %v9941 = vpop.f32.mrb[0].mxu0
      %9942 = vmatprep.mubr.bf16.mxu0 0
      %9943 = vmatmul.mubr.bf16.gmra.mrb[0].mxu0 %v9795
      %v9944 = vpop.f32.mrb[0].mxu0
      %v9945 = vadd.f32 0.0, %v9944
      %v9946 = vpop.f32.mrb[0].mxu0
      %v9947 = vpop.f32.mrb[0].mxu0
      %v9948 = vadd.f32 0.0, %v9947
      %v9949 = vpop.f32.mrb[0].mxu0
      %9950 = vmatprep.mubr.bf16.mxu0 0
      %9951 = vmatmul.mubr.bf16.gmra.mrb[0].mxu0 %v9798
      %v9952 = vpop.f32.mrb[0].mxu0
      %v9953 = vadd.f32 0.0, %v9952
      %v9954 = vpop.f32.mrb[0].mxu0
      %v9955 = vpop.f32.mrb[0].mxu0
      %v9956 = vadd.f32 0.0, %v9955
      %v9957 = vpop.f32.mrb[0].mxu0
      %9958 = vmatprep.mubr.bf16.mxu0 0
      %9959 = vmatmul.mubr.bf16.gmra.mrb[0].mxu0 %v9801
      %v9960 = vpop.f32.mrb[0].mxu0
      %v9961 = vadd.f32 0.0, %v9960
      %v9962 = vpop.f32.mrb[0].mxu0
      %v9963 = vpop.f32.mrb[0].mxu0
      %v9964 = vadd.f32 0.0, %v9963
      %v9965 = vpop.f32.mrb[0].mxu0
      %9966 = vdwg.mxu0
      %v9967 = vadd.f32 %v9497, %v9841
      %v9968 = vadd.f32 %v9498, %v9844
      %v9969 = vadd.f32 %v9499, %v9849
      %v9970 = vadd.f32 %v9500, %v9852
      %v9971 = vadd.f32 %v9501, %v9857
      %v9972 = vadd.f32 %v9502, %v9860
      %v9973 = vadd.f32 %v9503, %v9865
      %v9974 = vadd.f32 %v9504, %v9868
      %v9975 = vadd.f32 %v9505, %v9873
      %v9976 = vadd.f32 %v9506, %v9876
      %v9977 = vadd.f32 %v9507, %v9881
      %v9978 = vadd.f32 %v9508, %v9884
      %v9979 = vadd.f32 %v9509, %v9889
      %v9980 = vadd.f32 %v9510, %v9892
      %v9981 = vadd.f32 %v9511, %v9897
      %v9982 = vadd.f32 %v9512, %v9900
      %v9983 = vadd.f32 %v9513, %v9905
      %v9984 = vadd.f32 %v9514, %v9908
      %v9985 = vadd.f32 %v9515, %v9913
      %v9986 = vadd.f32 %v9516, %v9916
      %v9987 = vadd.f32 %v9517, %v9921
      %v9988 = vadd.f32 %v9518, %v9924
      %v9989 = vadd.f32 %v9519, %v9929
      %v9990 = vadd.f32 %v9520, %v9932
      %v9991 = vadd.f32 %v9521, %v9937
      %v9992 = vadd.f32 %v9522, %v9940
      %v9993 = vadd.f32 %v9523, %v9945
      %v9994 = vadd.f32 %v9524, %v9948
      %v9995 = vadd.f32 %v9525, %v9953
      %v9996 = vadd.f32 %v9526, %v9956
      %v9997 = vadd.f32 %v9527, %v9961
      %v9998 = vadd.f32 %v9528, %v9964
      %v9999 = vld [vmem:[%s1675] sm:$0xf]
      %v10000 = vld [vmem:[%s1675 + $0x4] sm:$0xf]
      %v10001 = vld [vmem:[%s1675 + $0x8] sm:$0x1]
      %v10002 = vld [vmem:[%s1675 + $0xc] sm:$0xf]
      %v10003 = vld [vmem:[%s1675 + $0x10] sm:$0xf]
      %v10004 = vld [vmem:[%s1675 + $0x14] sm:$0x1]
      %v10005 = vld [vmem:[%s1675 + $0x18] sm:$0xf]
      %v10006 = vld [vmem:[%s1675 + $0x1c] sm:$0xf]
      %v10007 = vld [vmem:[%s1675 + $0x20] sm:$0x1]
      %v10008 = vld [vmem:[%s1675 + $0x24] sm:$0xf]
      %v10009 = vld [vmem:[%s1675 + $0x28] sm:$0xf]
      %v10010 = vld [vmem:[%s1675 + $0x2c] sm:$0x1]
      %v10011 = vld [vmem:[%s1675 + $0x30] sm:$0xf]
      %v10012 = vld [vmem:[%s1675 + $0x34] sm:$0xf]
      %v10013 = vld [vmem:[%s1675 + $0x38] sm:$0x1]
      %v10014 = vld [vmem:[%s1675 + $0x3c] sm:$0xf]
      %v10015 = vld [vmem:[%s1675 + $0x40] sm:$0xf]
      %v10016 = vld [vmem:[%s1675 + $0x44] sm:$0x1]
      %v10017 = vld [vmem:[%s1675 + $0x48] sm:$0xf]
      %v10018 = vld [vmem:[%s1675 + $0x4c] sm:$0xf]
      %v10019 = vld [vmem:[%s1675 + $0x50] sm:$0x1]
      %v10020 = vld [vmem:[%s1675 + $0x54] sm:$0xf]
      %v10021 = vld [vmem:[%s1675 + $0x58] sm:$0xf]
      %v10022 = vld [vmem:[%s1675 + $0x5c] sm:$0x1]
      %v10023 = vld [vmem:[%s1675 + $0x60] sm:$0xf]
      %v10024 = vld [vmem:[%s1675 + $0x64] sm:$0xf]
      %v10025 = vld [vmem:[%s1675 + $0x68] sm:$0x1]
      %v10026 = vld [vmem:[%s1675 + $0x6c] sm:$0xf]
      %v10027 = vld [vmem:[%s1675 + $0x70] sm:$0xf]
      %v10028 = vld [vmem:[%s1675 + $0x74] sm:$0x1]
      %v10029 = vld [vmem:[%s1675 + $0x78] sm:$0xf]
      %v10030 = vld [vmem:[%s1675 + $0x7c] sm:$0xf]
      %v10031 = vld [vmem:[%s1675 + $0x80] sm:$0x1]
      %v10032 = vld [vmem:[%s1675 + $0x84] sm:$0xf]
      %v10033 = vld [vmem:[%s1675 + $0x88] sm:$0xf]
      %v10034 = vld [vmem:[%s1675 + $0x8c] sm:$0x1]
      %v10035 = vld [vmem:[%s1675 + $0x90] sm:$0xf]
      %v10036 = vld [vmem:[%s1675 + $0x94] sm:$0xf]
      %v10037 = vld [vmem:[%s1675 + $0x98] sm:$0x1]
      %v10038 = vld [vmem:[%s1675 + $0x9c] sm:$0xf]
      %v10039 = vld [vmem:[%s1675 + $0xa0] sm:$0xf]
      %v10040 = vld [vmem:[%s1675 + $0xa4] sm:$0x1]
      %v10041 = vld [vmem:[%s1675 + $0xa8] sm:$0xf]
      %v10042 = vld [vmem:[%s1675 + $0xac] sm:$0xf]
      %v10043 = vld [vmem:[%s1675 + $0xb0] sm:$0x1]
      %v10044 = vld [vmem:[%s1675 + $0xb4] sm:$0xf]
      %v10045 = vld [vmem:[%s1675 + $0xb8] sm:$0xf]
      %v10046 = vld [vmem:[%s1675 + $0xbc] sm:$0x1]
      %v10048 = vshrl.u32 %v9999, 16
      %v10050 = vrot.slane %v10048, 4
      %v10051 = vshll.u32 %v9999, 16
      %v10053 = vrot.slane %v10051, 5
      %v10054 = vor.u32 %v10050, %v10053
      %v10055 = vrot.slane %v10054, 4
      %v10057 = vshll.u32 %v10000, 16
      %v10059 = vrot.slane %v10057, 5
      %v10060 = vsel %vm277, %v10055, %v10059
      %v10061 = vshrl.u32 %v10000, 16
      %v10063 = vrot.slane %v10061, 4
      %v10064 = vor.u32 %v10063, %v10059
      %v10065 = vrot.slane %v10064, 4
      %v10067 = vshll.u32 %v10001, 16
      %v10069 = vrot.slane %v10067, 5
      %v10070 = vsel %vm277, %v10065, %v10069
      %v10072 = vshrl.u32 %v10002, 16
      %v10074 = vrot.slane %v10072, 4
      %v10075 = vshll.u32 %v10002, 16
      %v10077 = vrot.slane %v10075, 5
      %v10078 = vor.u32 %v10074, %v10077
      %v10079 = vrot.slane %v10078, 4
      %v10081 = vshll.u32 %v10003, 16
      %v10083 = vrot.slane %v10081, 5
      %v10084 = vsel %vm277, %v10079, %v10083
      %v10085 = vshrl.u32 %v10003, 16
      %v10087 = vrot.slane %v10085, 4
      %v10088 = vor.u32 %v10087, %v10083
      %v10089 = vrot.slane %v10088, 4
      %v10091 = vshll.u32 %v10004, 16
      %v10093 = vrot.slane %v10091, 5
      %v10094 = vsel %vm277, %v10089, %v10093
      %v10096 = vshrl.u32 %v10005, 16
      %v10098 = vrot.slane %v10096, 4
      %v10099 = vshll.u32 %v10005, 16
      %v10101 = vrot.slane %v10099, 5
      %v10102 = vor.u32 %v10098, %v10101
      %v10103 = vrot.slane %v10102, 4
      %v10105 = vshll.u32 %v10006, 16
      %v10107 = vrot.slane %v10105, 5
      %v10108 = vsel %vm277, %v10103, %v10107
      %v10109 = vshrl.u32 %v10006, 16
      %v10111 = vrot.slane %v10109, 4
      %v10112 = vor.u32 %v10111, %v10107
      %v10113 = vrot.slane %v10112, 4
      %v10115 = vshll.u32 %v10007, 16
      %v10117 = vrot.slane %v10115, 5
      %v10118 = vsel %vm277, %v10113, %v10117
      %v10120 = vshrl.u32 %v10008, 16
      %v10122 = vrot.slane %v10120, 4
      %v10123 = vshll.u32 %v10008, 16
      %v10125 = vrot.slane %v10123, 5
      %v10126 = vor.u32 %v10122, %v10125
      %v10127 = vrot.slane %v10126, 4
      %v10129 = vshll.u32 %v10009, 16
      %v10131 = vrot.slane %v10129, 5
      %v10132 = vsel %vm277, %v10127, %v10131
      %v10133 = vshrl.u32 %v10009, 16
      %v10135 = vrot.slane %v10133, 4
      %v10136 = vor.u32 %v10135, %v10131
      %v10137 = vrot.slane %v10136, 4
      %v10139 = vshll.u32 %v10010, 16
      %v10141 = vrot.slane %v10139, 5
      %v10142 = vsel %vm277, %v10137, %v10141
      %v10144 = vshrl.u32 %v10011, 16
      %v10146 = vrot.slane %v10144, 4
      %v10147 = vshll.u32 %v10011, 16
      %v10149 = vrot.slane %v10147, 5
      %v10150 = vor.u32 %v10146, %v10149
      %v10151 = vrot.slane %v10150, 4
      %v10153 = vshll.u32 %v10012, 16
      %v10155 = vrot.slane %v10153, 5
      %v10156 = vsel %vm277, %v10151, %v10155
      %v10157 = vshrl.u32 %v10012, 16
      %v10159 = vrot.slane %v10157, 4
      %v10160 = vor.u32 %v10159, %v10155
      %v10161 = vrot.slane %v10160, 4
      %v10163 = vshll.u32 %v10013, 16
      %v10165 = vrot.slane %v10163, 5
      %v10166 = vsel %vm277, %v10161, %v10165
      %v10168 = vshrl.u32 %v10014, 16
      %v10170 = vrot.slane %v10168, 4
      %v10171 = vshll.u32 %v10014, 16
      %v10173 = vrot.slane %v10171, 5
      %v10174 = vor.u32 %v10170, %v10173
      %v10175 = vrot.slane %v10174, 4
      %v10177 = vshll.u32 %v10015, 16
      %v10179 = vrot.slane %v10177, 5
      %v10180 = vsel %vm277, %v10175, %v10179
      %v10181 = vshrl.u32 %v10015, 16
      %v10183 = vrot.slane %v10181, 4
      %v10184 = vor.u32 %v10183, %v10179
      %v10185 = vrot.slane %v10184, 4
      %v10187 = vshll.u32 %v10016, 16
      %v10189 = vrot.slane %v10187, 5
      %v10190 = vsel %vm277, %v10185, %v10189
      %v10192 = vshrl.u32 %v10017, 16
      %v10194 = vrot.slane %v10192, 4
      %v10195 = vshll.u32 %v10017, 16
      %v10197 = vrot.slane %v10195, 5
      %v10198 = vor.u32 %v10194, %v10197
      %v10199 = vrot.slane %v10198, 4
      %v10201 = vshll.u32 %v10018, 16
      %v10203 = vrot.slane %v10201, 5
      %v10204 = vsel %vm277, %v10199, %v10203
      %v10205 = vshrl.u32 %v10018, 16
      %v10207 = vrot.slane %v10205, 4
      %v10208 = vor.u32 %v10207, %v10203
      %v10209 = vrot.slane %v10208, 4
      %v10211 = vshll.u32 %v10019, 16
      %v10213 = vrot.slane %v10211, 5
      %v10214 = vsel %vm277, %v10209, %v10213
      %v10216 = vshrl.u32 %v10020, 16
      %v10218 = vrot.slane %v10216, 4
      %v10219 = vshll.u32 %v10020, 16
      %v10221 = vrot.slane %v10219, 5
      %v10222 = vor.u32 %v10218, %v10221
      %v10223 = vrot.slane %v10222, 4
      %v10225 = vshll.u32 %v10021, 16
      %v10227 = vrot.slane %v10225, 5
      %v10228 = vsel %vm277, %v10223, %v10227
      %v10229 = vshrl.u32 %v10021, 16
      %v10231 = vrot.slane %v10229, 4
      %v10232 = vor.u32 %v10231, %v10227
      %v10233 = vrot.slane %v10232, 4
      %v10235 = vshll.u32 %v10022, 16
      %v10237 = vrot.slane %v10235, 5
      %v10238 = vsel %vm277, %v10233, %v10237
      %v10240 = vshrl.u32 %v10023, 16
      %v10242 = vrot.slane %v10240, 4
      %v10243 = vshll.u32 %v10023, 16
      %v10245 = vrot.slane %v10243, 5
      %v10246 = vor.u32 %v10242, %v10245
      %v10247 = vrot.slane %v10246, 4
      %v10249 = vshll.u32 %v10024, 16
      %v10251 = vrot.slane %v10249, 5
      %v10252 = vsel %vm277, %v10247, %v10251
      %v10253 = vshrl.u32 %v10024, 16
      %v10255 = vrot.slane %v10253, 4
      %v10256 = vor.u32 %v10255, %v10251
      %v10257 = vrot.slane %v10256, 4
      %v10259 = vshll.u32 %v10025, 16
      %v10261 = vrot.slane %v10259, 5
      %v10262 = vsel %vm277, %v10257, %v10261
      %v10264 = vshrl.u32 %v10026, 16
      %v10266 = vrot.slane %v10264, 4
      %v10267 = vshll.u32 %v10026, 16
      %v10269 = vrot.slane %v10267, 5
      %v10270 = vor.u32 %v10266, %v10269
      %v10271 = vrot.slane %v10270, 4
      %v10273 = vshll.u32 %v10027, 16
      %v10275 = vrot.slane %v10273, 5
      %v10276 = vsel %vm277, %v10271, %v10275
      %v10277 = vshrl.u32 %v10027, 16
      %v10279 = vrot.slane %v10277, 4
      %v10280 = vor.u32 %v10279, %v10275
      %v10281 = vrot.slane %v10280, 4
      %v10283 = vshll.u32 %v10028, 16
      %v10285 = vrot.slane %v10283, 5
      %v10286 = vsel %vm277, %v10281, %v10285
      %v10288 = vshrl.u32 %v10029, 16
      %v10290 = vrot.slane %v10288, 4
      %v10291 = vshll.u32 %v10029, 16
      %v10293 = vrot.slane %v10291, 5
      %v10294 = vor.u32 %v10290, %v10293
      %v10295 = vrot.slane %v10294, 4
      %v10297 = vshll.u32 %v10030, 16
      %v10299 = vrot.slane %v10297, 5
      %v10300 = vsel %vm277, %v10295, %v10299
      %v10301 = vshrl.u32 %v10030, 16
      %v10303 = vrot.slane %v10301, 4
      %v10304 = vor.u32 %v10303, %v10299
      %v10305 = vrot.slane %v10304, 4
      %v10307 = vshll.u32 %v10031, 16
      %v10309 = vrot.slane %v10307, 5
      %v10310 = vsel %vm277, %v10305, %v10309
      %v10312 = vshrl.u32 %v10032, 16
      %v10314 = vrot.slane %v10312, 4
      %v10315 = vshll.u32 %v10032, 16
      %v10317 = vrot.slane %v10315, 5
      %v10318 = vor.u32 %v10314, %v10317
      %v10319 = vrot.slane %v10318, 4
      %v10321 = vshll.u32 %v10033, 16
      %v10323 = vrot.slane %v10321, 5
      %v10324 = vsel %vm277, %v10319, %v10323
      %v10325 = vshrl.u32 %v10033, 16
      %v10327 = vrot.slane %v10325, 4
      %v10328 = vor.u32 %v10327, %v10323
      %v10329 = vrot.slane %v10328, 4
      %v10331 = vshll.u32 %v10034, 16
      %v10333 = vrot.slane %v10331, 5
      %v10334 = vsel %vm277, %v10329, %v10333
      %v10336 = vshrl.u32 %v10035, 16
      %v10338 = vrot.slane %v10336, 4
      %v10339 = vshll.u32 %v10035, 16
      %v10341 = vrot.slane %v10339, 5
      %v10342 = vor.u32 %v10338, %v10341
      %v10343 = vrot.slane %v10342, 4
      %v10345 = vshll.u32 %v10036, 16
      %v10347 = vrot.slane %v10345, 5
      %v10348 = vsel %vm277, %v10343, %v10347
      %v10349 = vshrl.u32 %v10036, 16
      %v10351 = vrot.slane %v10349, 4
      %v10352 = vor.u32 %v10351, %v10347
      %v10353 = vrot.slane %v10352, 4
      %v10355 = vshll.u32 %v10037, 16
      %v10357 = vrot.slane %v10355, 5
      %v10358 = vsel %vm277, %v10353, %v10357
      %v10360 = vshrl.u32 %v10038, 16
      %v10362 = vrot.slane %v10360, 4
      %v10363 = vshll.u32 %v10038, 16
      %v10365 = vrot.slane %v10363, 5
      %v10366 = vor.u32 %v10362, %v10365
      %v10367 = vrot.slane %v10366, 4
      %v10369 = vshll.u32 %v10039, 16
      %v10371 = vrot.slane %v10369, 5
      %v10372 = vsel %vm277, %v10367, %v10371
      %v10373 = vshrl.u32 %v10039, 16
      %v10375 = vrot.slane %v10373, 4
      %v10376 = vor.u32 %v10375, %v10371
      %v10377 = vrot.slane %v10376, 4
      %v10379 = vshll.u32 %v10040, 16
      %v10381 = vrot.slane %v10379, 5
      %v10382 = vsel %vm277, %v10377, %v10381
      %v10384 = vshrl.u32 %v10041, 16
      %v10386 = vrot.slane %v10384, 4
      %v10387 = vshll.u32 %v10041, 16
      %v10389 = vrot.slane %v10387, 5
      %v10390 = vor.u32 %v10386, %v10389
      %v10391 = vrot.slane %v10390, 4
      %v10393 = vshll.u32 %v10042, 16
      %v10395 = vrot.slane %v10393, 5
      %v10396 = vsel %vm277, %v10391, %v10395
      %v10397 = vshrl.u32 %v10042, 16
      %v10399 = vrot.slane %v10397, 4
      %v10400 = vor.u32 %v10399, %v10395
      %v10401 = vrot.slane %v10400, 4
      %v10403 = vshll.u32 %v10043, 16
      %v10405 = vrot.slane %v10403, 5
      %v10406 = vsel %vm277, %v10401, %v10405
      %v10408 = vshrl.u32 %v10044, 16
      %v10410 = vrot.slane %v10408, 4
      %v10411 = vshll.u32 %v10044, 16
      %v10413 = vrot.slane %v10411, 5
      %v10414 = vor.u32 %v10410, %v10413
      %v10415 = vrot.slane %v10414, 4
      %v10417 = vshll.u32 %v10045, 16
      %v10419 = vrot.slane %v10417, 5
      %v10420 = vsel %vm277, %v10415, %v10419
      %v10421 = vshrl.u32 %v10045, 16
      %v10423 = vrot.slane %v10421, 4
      %v10424 = vor.u32 %v10423, %v10419
      %v10425 = vrot.slane %v10424, 4
      %v10427 = vshll.u32 %v10046, 16
      %v10429 = vrot.slane %v10427, 5
      %v10430 = vsel %vm277, %v10425, %v10429
      %v10463 = vunpack.c.l.bf16 %v10060
      %v10464 = vunpack.c.l.bf16 %v10070
      %v10465 = vunpack.c.l.bf16 %v10084
      %v10466 = vunpack.c.l.bf16 %v10094
      %v10467 = vunpack.c.l.bf16 %v10108
      %v10468 = vunpack.c.l.bf16 %v10118
      %v10469 = vunpack.c.l.bf16 %v10132
      %v10470 = vunpack.c.l.bf16 %v10142
      %v10471 = vunpack.c.l.bf16 %v10156
      %v10472 = vunpack.c.l.bf16 %v10166
      %v10473 = vunpack.c.l.bf16 %v10180
      %v10474 = vunpack.c.l.bf16 %v10190
      %v10475 = vunpack.c.l.bf16 %v10204
      %v10476 = vunpack.c.l.bf16 %v10214
      %v10477 = vunpack.c.l.bf16 %v10228
      %v10478 = vunpack.c.l.bf16 %v10238
      %v10479 = vunpack.c.l.bf16 %v10252
      %v10480 = vunpack.c.l.bf16 %v10262
      %v10481 = vunpack.c.l.bf16 %v10276
      %v10482 = vunpack.c.l.bf16 %v10286
      %v10483 = vunpack.c.l.bf16 %v10300
      %v10484 = vunpack.c.l.bf16 %v10310
      %v10485 = vunpack.c.l.bf16 %v10324
      %v10486 = vunpack.c.l.bf16 %v10334
      %v10487 = vunpack.c.l.bf16 %v10348
      %v10488 = vunpack.c.l.bf16 %v10358
      %v10489 = vunpack.c.l.bf16 %v10372
      %v10490 = vunpack.c.l.bf16 %v10382
      %v10491 = vunpack.c.l.bf16 %v10396
      %v10492 = vunpack.c.l.bf16 %v10406
      %v10493 = vunpack.c.l.bf16 %v10420
      %v10494 = vunpack.c.l.bf16 %v10430
      %v10495 = vld [vmem:[%s4] sm:$0x1]
      %v10497 = vlaneseq
      %v10498 = vshrl.u32 %v10497, 7
      %v10499 = vsub.s32 0, %v10498
      %v10500 = vrot.slane %v10495, %v10499
      %v10502 = vadd.f32 %v9967, %v10500
      %v10503 = vadd.f32 %v9968, %v10500
      %v10504 = vadd.f32 %v9969, %v10500
      %v10505 = vadd.f32 %v9970, %v10500
      %v10506 = vadd.f32 %v9971, %v10500
      %v10507 = vadd.f32 %v9972, %v10500
      %v10508 = vadd.f32 %v9973, %v10500
      %v10509 = vadd.f32 %v9974, %v10500
      %v10510 = vadd.f32 %v9975, %v10500
      %v10511 = vadd.f32 %v9976, %v10500
      %v10512 = vadd.f32 %v9977, %v10500
      %v10513 = vadd.f32 %v9978, %v10500
      %v10514 = vadd.f32 %v9979, %v10500
      %v10515 = vadd.f32 %v9980, %v10500
      %v10516 = vadd.f32 %v9981, %v10500
      %v10517 = vadd.f32 %v9982, %v10500
      %v10518 = vadd.f32 %v9983, %v10500
      %v10519 = vadd.f32 %v9984, %v10500
      %v10520 = vadd.f32 %v9985, %v10500
      %v10521 = vadd.f32 %v9986, %v10500
      %v10522 = vadd.f32 %v9987, %v10500
      %v10523 = vadd.f32 %v9988, %v10500
      %v10524 = vadd.f32 %v9989, %v10500
      %v10525 = vadd.f32 %v9990, %v10500
      %v10526 = vadd.f32 %v9991, %v10500
      %v10527 = vadd.f32 %v9992, %v10500
      %v10528 = vadd.f32 %v9993, %v10500
      %v10529 = vadd.f32 %v9994, %v10500
      %v10530 = vadd.f32 %v9995, %v10500
      %v10531 = vadd.f32 %v9996, %v10500
      %v10532 = vadd.f32 %v9997, %v10500
      %v10533 = vadd.f32 %v9998, %v10500
      %v10534 = vadd.f32 %v10502, %v10463
      %v10535 = vadd.f32 %v10503, %v10464
      %v10536 = vadd.f32 %v10504, %v10465
      %v10537 = vadd.f32 %v10505, %v10466
      %v10538 = vadd.f32 %v10506, %v10467
      %v10539 = vadd.f32 %v10507, %v10468
      %v10540 = vadd.f32 %v10508, %v10469
      %v10541 = vadd.f32 %v10509, %v10470
      %v10542 = vadd.f32 %v10510, %v10471
      %v10543 = vadd.f32 %v10511, %v10472
      %v10544 = vadd.f32 %v10512, %v10473
      %v10545 = vadd.f32 %v10513, %v10474
      %v10546 = vadd.f32 %v10514, %v10475
      %v10547 = vadd.f32 %v10515, %v10476
      %v10548 = vadd.f32 %v10516, %v10477
      %v10549 = vadd.f32 %v10517, %v10478
      %v10550 = vadd.f32 %v10518, %v10479
      %v10551 = vadd.f32 %v10519, %v10480
      %v10552 = vadd.f32 %v10520, %v10481
      %v10553 = vadd.f32 %v10521, %v10482
      %v10554 = vadd.f32 %v10522, %v10483
      %v10555 = vadd.f32 %v10523, %v10484
      %v10556 = vadd.f32 %v10524, %v10485
      %v10557 = vadd.f32 %v10525, %v10486
      %v10558 = vadd.f32 %v10526, %v10487
      %v10559 = vadd.f32 %v10527, %v10488
      %v10560 = vadd.f32 %v10528, %v10489
      %v10561 = vadd.f32 %v10529, %v10490
      %v10562 = vadd.f32 %v10530, %v10491
      %v10563 = vadd.f32 %v10531, %v10492
      %v10564 = vadd.f32 %v10532, %v10493
      %v10565 = vadd.f32 %v10533, %v10494
      %v10566 = vmax.f32 %v10534, 0.0
      %v10567 = vmax.f32 %v10535, 0.0
      %v10568 = vmax.f32 %v10536, 0.0
      %v10569 = vmax.f32 %v10537, 0.0
      %v10570 = vmax.f32 %v10538, 0.0
      %v10571 = vmax.f32 %v10539, 0.0
      %v10572 = vmax.f32 %v10540, 0.0
      %v10573 = vmax.f32 %v10541, 0.0
      %v10574 = vmax.f32 %v10542, 0.0
      %v10575 = vmax.f32 %v10543, 0.0
      %v10576 = vmax.f32 %v10544, 0.0
      %v10577 = vmax.f32 %v10545, 0.0
      %v10578 = vmax.f32 %v10546, 0.0
      %v10579 = vmax.f32 %v10547, 0.0
      %v10580 = vmax.f32 %v10548, 0.0
      %v10581 = vmax.f32 %v10549, 0.0
      %v10582 = vmax.f32 %v10550, 0.0
      %v10583 = vmax.f32 %v10551, 0.0
      %v10584 = vmax.f32 %v10552, 0.0
      %v10585 = vmax.f32 %v10553, 0.0
      %v10586 = vmax.f32 %v10554, 0.0
      %v10587 = vmax.f32 %v10555, 0.0
      %v10588 = vmax.f32 %v10556, 0.0
      %v10589 = vmax.f32 %v10557, 0.0
      %v10590 = vmax.f32 %v10558, 0.0
      %v10591 = vmax.f32 %v10559, 0.0
      %v10592 = vmax.f32 %v10560, 0.0
      %v10593 = vmax.f32 %v10561, 0.0
      %v10594 = vmax.f32 %v10562, 0.0
      %v10595 = vmax.f32 %v10563, 0.0
      %v10596 = vmax.f32 %v10564, 0.0
      %v10597 = vmax.f32 %v10565, 0.0
      %10598 = vst.msk [vmem:[%s224] sm:$0xff] %vm712, %v10566
      %10599 = vst.msk [vmem:[%s224 + $0x8] sm:$0xff] %vm712, %v10567
      %10600 = vst.msk [vmem:[%s224 + $0x10] sm:$0xff] %vm712, %v10568
      %10601 = vst.msk [vmem:[%s224 + $0x18] sm:$0xff] %vm712, %v10569
      %10602 = vst.msk [vmem:[%s224 + $0x20] sm:$0xff] %vm712, %v10570
      %10603 = vst.msk [vmem:[%s224 + $0x28] sm:$0xff] %vm712, %v10571
      %10604 = vst.msk [vmem:[%s224 + $0x30] sm:$0xff] %vm712, %v10572
      %10605 = vst.msk [vmem:[%s224 + $0x38] sm:$0xff] %vm712, %v10573
      %10606 = vst.msk [vmem:[%s224 + $0x40] sm:$0xff] %vm712, %v10574
      %10607 = vst.msk [vmem:[%s224 + $0x48] sm:$0xff] %vm712, %v10575
      %10608 = vst.msk [vmem:[%s224 + $0x50] sm:$0xff] %vm712, %v10576
      %10609 = vst.msk [vmem:[%s224 + $0x58] sm:$0xff] %vm712, %v10577
      %10610 = vst.msk [vmem:[%s224 + $0x60] sm:$0xff] %vm712, %v10578
      %10611 = vst.msk [vmem:[%s224 + $0x68] sm:$0xff] %vm712, %v10579
      %10612 = vst.msk [vmem:[%s224 + $0x70] sm:$0xff] %vm712, %v10580
      %10613 = vst.msk [vmem:[%s224 + $0x78] sm:$0xff] %vm712, %v10581
      %10614 = vst.msk [vmem:[%s224 + $0x80] sm:$0xff] %vm712, %v10582
      %10615 = vst.msk [vmem:[%s224 + $0x88] sm:$0xff] %vm712, %v10583
      %10616 = vst.msk [vmem:[%s224 + $0x90] sm:$0xff] %vm712, %v10584
      %10617 = vst.msk [vmem:[%s224 + $0x98] sm:$0xff] %vm712, %v10585
      %10618 = vst.msk [vmem:[%s224 + $0xa0] sm:$0xff] %vm712, %v10586
      %10619 = vst.msk [vmem:[%s224 + $0xa8] sm:$0xff] %vm712, %v10587
      %10620 = vst.msk [vmem:[%s224 + $0xb0] sm:$0xff] %vm712, %v10588
      %10621 = vst.msk [vmem:[%s224 + $0xb8] sm:$0xff] %vm712, %v10589
      %10622 = vst.msk [vmem:[%s224 + $0xc0] sm:$0xff] %vm712, %v10590
      %10623 = vst.msk [vmem:[%s224 + $0xc8] sm:$0xff] %vm712, %v10591
      %10624 = vst.msk [vmem:[%s224 + $0xd0] sm:$0xff] %vm712, %v10592
      %10625 = vst.msk [vmem:[%s224 + $0xd8] sm:$0xff] %vm712, %v10593
      %10626 = vst.msk [vmem:[%s224 + $0xe0] sm:$0xff] %vm712, %v10594
      %10627 = vst.msk [vmem:[%s224 + $0xe8] sm:$0xff] %vm712, %v10595
      %10628 = vst.msk [vmem:[%s224 + $0xf0] sm:$0xff] %vm712, %v10596
      %10629 = vst.msk [vmem:[%s224 + $0xf8] sm:$0xff] %vm712, %v10597
      %p10630 = scmp.lt.s32.totalorder %s16, 1
      %s10631 = scalar_select %p10630, %s16, 1
      %s10632 = smul.addr %s10631, 32
      %s10633 = smul.addr %s10632, 8
      %s10634 = scalar_lea.vmem %s5, %s10633
      // Predicated region
      $region41: #{basic_block_forward.1} parent=39 // pred_check
        %p10635 = pneg %p144
      $region42: #{basic_block_forward.1} parent=39 // pred_check_branch
        %10637 = sbr.rel (%p10635) target = $region44
      $region43: #{basic_block_forward.1} parent=39 // pred_region
        _
      $region44: #{basic_block_forward.1} parent=39 // pred_fallthru
        _
    $region40: #{basic_block_forward.1} parent=5 // pred_fallthru
      _
    %p10638 = scmp.le.s32.totalorder 2, %s11
    // Predicated region
    $region45: #{basic_block_forward.1} parent=5 // pred_check
      %p10639 = pneg %p10638
    $region46: #{basic_block_forward.1} parent=5 // pred_check_branch
      %10641 = sbr.rel (%p10639) target = $region48
    $region47: #{basic_block_forward.1} parent=5 // pred_region
      %s10642 = ssub.s32 %s11, 2
      // Predicated region
      $region49: #{basic_block_forward.1} parent=47 // pred_check
        %p10643 = pneg %p150
      $region50: #{basic_block_forward.1} parent=47 // pred_check_branch
        %10645 = sbr.rel (%p10643) target = $region52
      $region51: #{basic_block_forward.1} parent=47 // pred_region
        %p10646 = scmp.lt.s32.totalorder %s17, 1
        %s10647 = scalar_select %p10646, %s17, 1
        %s10648 = smul.addr %s10647, 32
        %s10649 = smul.addr %s10648, 8
        %s10650 = scalar_lea.vmem %s5, %s10649
      $region52: #{basic_block_forward.1} parent=47 // pred_fallthru
        _
    $region48: #{basic_block_forward.1} parent=5 // pred_fallthru
      _
  $region6: #{basic_block_forward.1} parent=0 // loop_footer
    %s15 = sadd.s32 1, %s11
  $region7: #{basic_block_forward.1} parent=0 // loop_footer_branch
    %10 = sbr.rel target = $region3
  $region8: #{basic_block_forward.1} parent=0 // loop_exit
    _

</llo_original>
